<compile_context>
chip_gen: v7x
topology: tpu7x:2x2x1
jax: 0.10.0
libtpu: 0.0.40
codegen_flags: <defaults>
</compile_context>

<pallas_src>
import math
import numpy as np

import jax
import jax.numpy as jnp
from jax import lax
from jax.experimental import pallas as pl
from jax.experimental.pallas import tpu as pltpu

SELU_ALPHA = 1.6732632423543772
SELU_SCALE = 1.0507009873554805
BN_EPS = 1e-5

FILTS = [70, [1, 32], [32, 32], [32, 64], [64, 64]]
CONV1 = [2, 3, 1, 1, 1, 1]
CONV2 = [3, 3, 1, 1, 1, 2]
CONV2_FIRST = [2, 3, 0, 1, 1, 2]
CONV3 = [1, 3, 0, 1, 1, 2]


def _selu(x):
    neg = SELU_ALPHA * (jnp.exp(jnp.minimum(x, 0.0)) - 1.0)
    return SELU_SCALE * jnp.where(x > 0.0, x, neg)


def _parallel():
    return pltpu.CompilerParams(dimension_semantics=("parallel",))


# ------------------------- front kernel: sinc conv + |.| + maxpool(3,3) + BN + SELU -------------------------

def _front_kernel(xc_ref, w_ref, s_ref, b_ref, o_ref):
    # xc_ref: (1, 3, K, T3) bf16  time-phase-split im2col of the raw waveform
    # w_ref : (3, C3, K)    bf16  sinc filters split into 3 row-pool phases
    # s_ref/b_ref: (1, 1)   f32   first_bn scale/bias (C=1)
    # o_ref : (1, C3, T3)   f32
    m = None
    for g in range(3):              # pooling phase along filter channels (H)
        wg = w_ref[g]
        for p in range(3):          # pooling phase along time (W)
            y = jnp.dot(wg, xc_ref[0, p], preferred_element_type=jnp.float32)
            a = jnp.abs(y)
            m = a if m is None else jnp.maximum(m, a)
    o_ref[0] = _selu(m * s_ref[...] + b_ref[...])


def front(x, filt, bn_s, bn_b):
    # x: (B, 1, L) raw waveform; filt: (70, K) -> (B, 23, (L-K+1)//3)
    B, _, L = x.shape
    C, K = filt.shape
    T = L - K + 1
    T3 = T // 3
    C3 = C // 3
    base = x[:, 0, :]                                                   # (B, L)
    idx = (jnp.arange(3)[:, None, None] + jnp.arange(K)[None, :, None]
           + 3 * jnp.arange(T3)[None, None, :])                         # (3, K, T3)
    xc = base[:, idx].astype(jnp.bfloat16)                              # (B, 3, K, T3)
    wg = jnp.stack([filt[g:3 * C3:3] for g in range(3)], axis=0).astype(jnp.bfloat16)
    s = bn_s.reshape(1, 1).astype(jnp.float32)
    t = bn_b.reshape(1, 1).astype(jnp.float32)
    return pl.pallas_call(
        _front_kernel,
        grid=(B,),
        in_specs=[pl.BlockSpec((1, 3, K, T3), lambda i: (i, 0, 0, 0)),
                  pl.BlockSpec((3, C3, K), lambda i: (0, 0, 0)),
                  pl.BlockSpec((1, 1), lambda i: (0, 0)),
                  pl.BlockSpec((1, 1), lambda i: (0, 0))],
        out_specs=pl.BlockSpec((1, C3, T3), lambda i: (i, 0, 0)),
        out_shape=jax.ShapeDtypeStruct((B, C3, T3), jnp.float32),
        compiler_params=_parallel(),
    )(xc, wg, s, t)


# ------------------------- fused conv kernel: KH matmuls + bias + [SE] + [residual] -------------------------

def _make_conv_kernel(KH, Ho, Wo, has_res, has_se):
    N = Ho * Wo

    def kernel(*refs):
        x_ref, w_ref, b_ref = refs[0], refs[1], refs[2]
        idx = 3
        res_ref = None
        se_refs = None
        if has_res:
            res_ref = refs[idx]
            idx += 1
        if has_se:
            se_refs = refs[idx:idx + 4]
            idx += 4
        o_ref = refs[idx]

        # KH (<=3) big matmuls: (Cout, Cin*KW) x (Cin*KW, Ho*Wo), bf16 in / f32 acc.
        acc = jnp.dot(w_ref[0], x_ref[0, :, 0:N], preferred_element_type=jnp.float32)
        for dh in range(1, KH):
            xs = x_ref[0, :, dh * Wo: dh * Wo + N]
            acc = acc + jnp.dot(w_ref[dh], xs, preferred_element_type=jnp.float32)
        y = acc + b_ref[...]

        if has_se:
            w1_ref, b1_ref, w2_ref, b2_ref = se_refs
            gap = jnp.sum(y, axis=1, keepdims=True) * (1.0 / N)          # (Cout, 1)
            z = jnp.dot(w1_ref[...], gap, preferred_element_type=jnp.float32) + b1_ref[...]
            z = jnp.maximum(z, 0.0)
            g = jax.nn.sigmoid(
                jnp.dot(w2_ref[...], z, preferred_element_type=jnp.float32) + b2_ref[...])
            y = y * g
        if has_res:
            y = y + res_ref[0]
        o_ref[0] = y                                                     # one lane-dense store

    return kernel


def fused_conv(x, w, b, cfg, *, pre=None, residual=None, se=None):
    """conv2d (stride_h=1, stride_w=sw) + bias with fused pre-BN+SELU (folded into the
    XLA im2col prep), SE channel gate and residual add in the kernel epilogue.

    x: (B, Cin, H, W) f32;  w: (Cout, Cin, KH, KW);  b: (Cout,)
    returns (flat output (B, Cout, Ho*Wo) f32, (Ho, Wo))
    """
    kh, kw, ph, pw, _sh, sw = cfg
    B, Cin, H, W = x.shape
    Cout = w.shape[0]
    Wp = W + 2 * pw
    Wo = (Wp - kw) // sw + 1
    Hp = H + 2 * ph
    Ho = Hp - kh + 1

    if pre is not None:                   # BN+SELU pre-activation, fused into the prep
        s, t = pre
        x = _selu(x * s[None, :, None, None] + t[None, :, None, None])

    # Polyphase im2col along W: KW taps + W-stride folded into the channel dim so the
    # kernel only needs contiguous (Cin*KW, Ho*Wo) slices (no garbage, no reshapes).
    xp = jnp.pad(x, ((0, 0), (0, 0), (0, 0), (pw, pw)))
    taps = [lax.slice_in_dim(xp, dw, dw + sw * (Wo - 1) + 1, stride=sw, axis=3)
            for dw in range(kw)]
    xk = jnp.stack(taps, axis=2)                                         # (B,Cin,KW,H,Wo)
    xk = jnp.pad(xk, ((0, 0), (0, 0), (0, 0), (ph, ph), (0, 0)))         # (B,Cin,KW,Hp,Wo)
    xk = xk.reshape(B, Cin * kw, Hp * Wo).astype(jnp.bfloat16)

    wk = jnp.transpose(w, (2, 0, 1, 3)).reshape(kh, Cout, Cin * kw).astype(jnp.bfloat16)
    bk = b.reshape(Cout, 1).astype(jnp.float32)

    in_specs = [pl.BlockSpec((1, Cin * kw, Hp * Wo), lambda i: (i, 0, 0)),
                pl.BlockSpec((kh, Cout, Cin * kw), lambda i: (0, 0, 0)),
                pl.BlockSpec((Cout, 1), lambda i: (0, 0))]
    args = [xk, wk, bk]
    if residual is not None:
        in_specs.append(pl.BlockSpec((1, Cout, Ho * Wo), lambda i: (i, 0, 0)))
        args.append(residual)
    if se is not None:
        w1, b1, w2, b2 = se
        Cr = w1.shape[0]
        in_specs += [pl.BlockSpec((Cr, Cout), lambda i: (0, 0)),
                     pl.BlockSpec((Cr, 1), lambda i: (0, 0)),
                     pl.BlockSpec((Cout, Cr), lambda i: (0, 0)),
                     pl.BlockSpec((Cout, 1), lambda i: (0, 0))]
        args += [w1.astype(jnp.float32), b1.reshape(Cr, 1).astype(jnp.float32),
                 w2.astype(jnp.float32), b2.reshape(Cout, 1).astype(jnp.float32)]

    out = pl.pallas_call(
        _make_conv_kernel(kh, Ho, Wo, residual is not None, se is not None),
        grid=(B,),
        in_specs=in_specs,
        out_specs=pl.BlockSpec((1, Cout, Ho * Wo), lambda i: (i, 0, 0)),
        out_shape=jax.ShapeDtypeStruct((B, Cout, Ho * Wo), jnp.float32),
        compiler_params=_parallel(),
    )(*args)
    return out, (Ho, Wo)


# ------------------------- parameters (deterministic, synthetic) -------------------------

def sinc_band_pass_filters(out_channels=70, kernel_size=128, sample_rate=16000):
    nfft = 512
    f = (sample_rate / 2.0) * np.linspace(0.0, 1.0, nfft // 2 + 1)
    fmel = 2595.0 * np.log10(1.0 + f / 700.0)
    mel_pts = np.linspace(fmel.min(), fmel.max(), out_channels + 1)
    hz_pts = 700.0 * (10.0 ** (mel_pts / 2595.0) - 1.0)
    hsupp = np.arange(-(kernel_size - 1) / 2.0, (kernel_size - 1) / 2.0 + 1.0)
    window = np.hamming(kernel_size)
    filters = np.zeros((out_channels, kernel_size), np.float64)
    for i in range(out_channels):
        fmin, fmax = hz_pts[i], hz_pts[i + 1]
        h_high = (2.0 * fmax / sample_rate) * np.sinc(2.0 * fmax * hsupp / sample_rate)
        h_low = (2.0 * fmin / sample_rate) * np.sinc(2.0 * fmin * hsupp / sample_rate)
        filters[i] = window * (h_high - h_low)
    return jnp.asarray(filters, jnp.float32)


def _conv_init(key, cout, cin, kh, kw):
    kw_, kb_ = jax.random.split(key)
    bound = 1.0 / math.sqrt(cin * kh * kw)
    w = jax.random.uniform(kw_, (cout, cin, kh, kw), jnp.float32, -bound, bound)
    b = jax.random.uniform(kb_, (cout,), jnp.float32, -bound, bound)
    return w, b


def _linear_init(key, cout, cin):
    kw_, kb_ = jax.random.split(key)
    bound = 1.0 / math.sqrt(cin)
    w = jax.random.uniform(kw_, (cout, cin), jnp.float32, -bound, bound)
    b = jax.random.uniform(kb_, (cout,), jnp.float32, -bound, bound)
    return w, b


def _bn_eval_affine(c):
    # TODO(synk): eval-mode BatchNorm with default running stats; training-mode batch
    # statistics are not modeled.
    scale = jnp.full((c,), 1.0 / math.sqrt(1.0 + BN_EPS), jnp.float32)
    bias = jnp.zeros((c,), jnp.float32)
    return scale, bias


def init_residual_block(key, cin, cout):
    k1, k2, k3 = jax.random.split(key, 3)
    w1, b1 = _conv_init(k1, cout, cin, CONV1[0], CONV1[1])
    w2, b2 = _conv_init(k2, cout, cout, CONV2_FIRST[0], CONV2_FIRST[1])
    w3, b3 = _conv_init(k3, cout, cin, CONV3[0], CONV3[1])
    bn2_s, bn2_b = _bn_eval_affine(cout)
    return dict(w1=w1, b1=b1, w2=w2, b2=b2, w3=w3, b3=b3, bn2_s=bn2_s, bn2_b=bn2_b)


def init_seres2net_block(key, cin, cout, se_reduction=4):
    k1, k2, k3, k4, k5 = jax.random.split(key, 5)
    w1, b1 = _conv_init(k1, cout, cin, CONV1[0], CONV1[1])
    w2, b2 = _conv_init(k2, cout, cout, CONV2[0], CONV2[1])
    w3, b3 = _conv_init(k3, cout, cout, CONV3[0], CONV3[1])
    cr = max(cout // se_reduction, 1)
    se_w1, se_b1 = _linear_init(k4, cr, cout)
    se_w2, se_b2 = _linear_init(k5, cout, cr)
    bn1_s, bn1_b = _bn_eval_affine(cin)
    bn2_s, bn2_b = _bn_eval_affine(cout)
    return dict(w1=w1, b1=b1, w2=w2, b2=b2, w3=w3, b3=b3,
                bn1_s=bn1_s, bn1_b=bn1_b, bn2_s=bn2_s, bn2_b=bn2_b,
                se_w1=se_w1, se_b1=se_b1, se_w2=se_w2, se_b2=se_b2)


def init_params(key):
    k1, k2, k3, k4 = jax.random.split(key, 4)
    fbn_s, fbn_b = _bn_eval_affine(1)
    return dict(
        sinc_filters=sinc_band_pass_filters(FILTS[0], 128),
        first_bn_s=fbn_s, first_bn_b=fbn_b,
        blk1=init_residual_block(k1, *FILTS[1]),
        blk2=init_seres2net_block(k2, *FILTS[2]),
        blk3=init_seres2net_block(k3, *FILTS[3]),
        blk4=init_seres2net_block(k4, *FILTS[4]),
    )


# ------------------------- blocks & forward -------------------------

def residual_block_first(x4, p):
    # TODO(synk): My_Residual_block source not provided; reconstructed (first=True: no pre-BN).
    B = x4.shape[0]
    c1 = p["w1"].shape[0]
    h1, (h1h, h1w) = fused_conv(x4, p["w1"], p["b1"], CONV1)
    idn, _ = fused_conv(x4, p["w3"], p["b3"], CONV3)
    h1_4 = h1.reshape(B, c1, h1h, h1w)
    out, (ho, wo) = fused_conv(h1_4, p["w2"], p["b2"], CONV2_FIRST,
                               pre=(p["bn2_s"], p["bn2_b"]), residual=idn)
    return out.reshape(B, p["w2"].shape[0], ho, wo)


def seres2net_block(x4, p):
    # TODO(synk): My_SERes2Net_block source not provided; reconstructed as a SE residual
    # block (the Res2Net multi-scale split cannot be reproduced without the source).
    B = x4.shape[0]
    c1 = p["w1"].shape[0]
    h1, (h1h, h1w) = fused_conv(x4, p["w1"], p["b1"], CONV1,
                                pre=(p["bn1_s"], p["bn1_b"]))
    h1_4 = h1.reshape(B, c1, h1h, h1w)
    idn, _ = fused_conv(h1_4, p["w3"], p["b3"], CONV3)
    out, (ho, wo) = fused_conv(h1_4, p["w2"], p["b2"], CONV2,
                               pre=(p["bn2_s"], p["bn2_b"]),
                               residual=idn,
                               se=(p["se_w1"], p["se_b1"], p["se_w2"], p["se_b2"]))
    return out.reshape(B, p["w2"].shape[0], ho, wo)


def se_rawformer_front(x, params):
    # x: (B, 1, L).  Dropout layers exist in __init__ but are unused in forward.
    # TODO(synk): CONV's Freq_aug=True frequency-masking branch is not implemented.
    y = front(x, params["sinc_filters"], params["first_bn_s"], params["first_bn_b"])
    y4 = y[:, None, :, :]                               # (B, 1, 23, T//3)
    y4 = residual_block_first(y4, params["blk1"])
    y4 = seres2net_block(y4, params["blk2"])
    y4 = seres2net_block(y4, params["blk3"])
    y4 = seres2net_block(y4, params["blk4"])
    return y4


if __name__ == "__main__":
    key = jax.random.PRNGKey(0)
    kx, kp = jax.random.split(key)
    B, L = 2, 223                       # conv_time kernel fixed at 128 taps -> T=96
    x = jax.random.normal(kx, (B, 1, L), jnp.float32)
    params = init_params(kp)
    out = jax.jit(se_rawformer_front)(x, params)
    jax.block_until_ready(out)
    assert out.shape == (B, 64, 26, 2), out.shape
    assert bool(jnp.all(jnp.isfinite(out)))
    print("KERNEL_OK")
</pallas_src>

<mosaic_0001>
module attributes {stable_mosaic.version = 11 : i64} {
  func.func @_front_kernel(%arg0: i32, %arg1: memref<1x3x128x32xbf16, #tpu.memory_space<vmem>>, %arg2: memref<3x23x128xbf16, #tpu.memory_space<vmem>>, %arg3: memref<1x1xf32, #tpu.memory_space<vmem>>, %arg4: memref<1x1xf32, #tpu.memory_space<vmem>>, %arg5: memref<1x23x32xf32, #tpu.memory_space<vmem>>) attributes {dimension_semantics = [#tpu.dimension_semantics<parallel>], iteration_bounds = array<i64: 2>, scalar_prefetch = 0 : i64, scratch_operands = 0 : i64, tpu.core_type = #tpu.core_type<tc>, window_params = [{transform_indices = @transform_0, window_bounds = array<i64: 1, 3, 128, 32>}, {pipeline_mode = #tpu.pipeline_mode<synchronous>, transform_indices = @transform_1, window_bounds = array<i64: 3, 23, 128>}, {pipeline_mode = #tpu.pipeline_mode<synchronous>, transform_indices = @transform_2, window_bounds = array<i64: 1, 1>}, {pipeline_mode = #tpu.pipeline_mode<synchronous>, transform_indices = @transform_3, window_bounds = array<i64: 1, 1>}, {transform_indices = @transform_4, window_bounds = array<i64: 1, 23, 32>}]} {
    %c0 = arith.constant 0 : index
    %c0_0 = arith.constant 0 : index
    %c0_1 = arith.constant 0 : index
    %0 = vector.load %arg2[%c0, %c0_0, %c0_1] : memref<3x23x128xbf16, #tpu.memory_space<vmem>>, vector<1x23x128xbf16>
    %1 = vector.shape_cast %0 : vector<1x23x128xbf16> to vector<23x128xbf16>
    %c0_2 = arith.constant 0 : index
    %c0_3 = arith.constant 0 : index
    %c0_4 = arith.constant 0 : index
    %c0_5 = arith.constant 0 : index
    %2 = vector.load %arg1[%c0_2, %c0_3, %c0_4, %c0_5] : memref<1x3x128x32xbf16, #tpu.memory_space<vmem>>, vector<1x1x128x32xbf16>
    %3 = vector.shape_cast %2 : vector<1x1x128x32xbf16> to vector<128x32xbf16>
    %cst = arith.constant dense<0.000000e+00> : vector<23x32xf32>
    %4 = tpu.matmul %1, %3, %cst {dimension_numbers = #tpu.dot_dimension_numbers<[1], [0], [0], [1], [0, 0, 1, 1], [], []>} : vector<23x128xbf16>, vector<128x32xbf16>, vector<23x32xf32> -> vector<23x32xf32>
    %5 = math.absf %4 : vector<23x32xf32>
    %c0_6 = arith.constant 0 : index
    %c1 = arith.constant 1 : index
    %c0_7 = arith.constant 0 : index
    %c0_8 = arith.constant 0 : index
    %6 = vector.load %arg1[%c0_6, %c1, %c0_7, %c0_8] : memref<1x3x128x32xbf16, #tpu.memory_space<vmem>>, vector<1x1x128x32xbf16>
    %7 = vector.shape_cast %6 : vector<1x1x128x32xbf16> to vector<128x32xbf16>
    %cst_9 = arith.constant dense<0.000000e+00> : vector<23x32xf32>
    %8 = tpu.matmul %1, %7, %cst_9 {dimension_numbers = #tpu.dot_dimension_numbers<[1], [0], [0], [1], [0, 0, 1, 1], [], []>} : vector<23x128xbf16>, vector<128x32xbf16>, vector<23x32xf32> -> vector<23x32xf32>
    %9 = math.absf %8 : vector<23x32xf32>
    %10 = arith.maximumf %5, %9 : vector<23x32xf32>
    %c0_10 = arith.constant 0 : index
    %c2 = arith.constant 2 : index
    %c0_11 = arith.constant 0 : index
    %c0_12 = arith.constant 0 : index
    %11 = vector.load %arg1[%c0_10, %c2, %c0_11, %c0_12] : memref<1x3x128x32xbf16, #tpu.memory_space<vmem>>, vector<1x1x128x32xbf16>
    %12 = vector.shape_cast %11 : vector<1x1x128x32xbf16> to vector<128x32xbf16>
    %cst_13 = arith.constant dense<0.000000e+00> : vector<23x32xf32>
    %13 = tpu.matmul %1, %12, %cst_13 {dimension_numbers = #tpu.dot_dimension_numbers<[1], [0], [0], [1], [0, 0, 1, 1], [], []>} : vector<23x128xbf16>, vector<128x32xbf16>, vector<23x32xf32> -> vector<23x32xf32>
    %14 = math.absf %13 : vector<23x32xf32>
    %15 = arith.maximumf %10, %14 : vector<23x32xf32>
    %c1_14 = arith.constant 1 : index
    %c0_15 = arith.constant 0 : index
    %c0_16 = arith.constant 0 : index
    %16 = vector.load %arg2[%c1_14, %c0_15, %c0_16] : memref<3x23x128xbf16, #tpu.memory_space<vmem>>, vector<1x23x128xbf16>
    %17 = vector.shape_cast %16 : vector<1x23x128xbf16> to vector<23x128xbf16>
    %c0_17 = arith.constant 0 : index
    %c0_18 = arith.constant 0 : index
    %c0_19 = arith.constant 0 : index
    %c0_20 = arith.constant 0 : index
    %18 = vector.load %arg1[%c0_17, %c0_18, %c0_19, %c0_20] : memref<1x3x128x32xbf16, #tpu.memory_space<vmem>>, vector<1x1x128x32xbf16>
    %19 = vector.shape_cast %18 : vector<1x1x128x32xbf16> to vector<128x32xbf16>
    %cst_21 = arith.constant dense<0.000000e+00> : vector<23x32xf32>
    %20 = tpu.matmul %17, %19, %cst_21 {dimension_numbers = #tpu.dot_dimension_numbers<[1], [0], [0], [1], [0, 0, 1, 1], [], []>} : vector<23x128xbf16>, vector<128x32xbf16>, vector<23x32xf32> -> vector<23x32xf32>
    %21 = math.absf %20 : vector<23x32xf32>
    %22 = arith.maximumf %15, %21 : vector<23x32xf32>
    %c0_22 = arith.constant 0 : index
    %c1_23 = arith.constant 1 : index
    %c0_24 = arith.constant 0 : index
    %c0_25 = arith.constant 0 : index
    %23 = vector.load %arg1[%c0_22, %c1_23, %c0_24, %c0_25] : memref<1x3x128x32xbf16, #tpu.memory_space<vmem>>, vector<1x1x128x32xbf16>
    %24 = vector.shape_cast %23 : vector<1x1x128x32xbf16> to vector<128x32xbf16>
    %cst_26 = arith.constant dense<0.000000e+00> : vector<23x32xf32>
    %25 = tpu.matmul %17, %24, %cst_26 {dimension_numbers = #tpu.dot_dimension_numbers<[1], [0], [0], [1], [0, 0, 1, 1], [], []>} : vector<23x128xbf16>, vector<128x32xbf16>, vector<23x32xf32> -> vector<23x32xf32>
    %26 = math.absf %25 : vector<23x32xf32>
    %27 = arith.maximumf %22, %26 : vector<23x32xf32>
    %c0_27 = arith.constant 0 : index
    %c2_28 = arith.constant 2 : index
    %c0_29 = arith.constant 0 : index
    %c0_30 = arith.constant 0 : index
    %28 = vector.load %arg1[%c0_27, %c2_28, %c0_29, %c0_30] : memref<1x3x128x32xbf16, #tpu.memory_space<vmem>>, vector<1x1x128x32xbf16>
    %29 = vector.shape_cast %28 : vector<1x1x128x32xbf16> to vector<128x32xbf16>
    %cst_31 = arith.constant dense<0.000000e+00> : vector<23x32xf32>
    %30 = tpu.matmul %17, %29, %cst_31 {dimension_numbers = #tpu.dot_dimension_numbers<[1], [0], [0], [1], [0, 0, 1, 1], [], []>} : vector<23x128xbf16>, vector<128x32xbf16>, vector<23x32xf32> -> vector<23x32xf32>
    %31 = math.absf %30 : vector<23x32xf32>
    %32 = arith.maximumf %27, %31 : vector<23x32xf32>
    %c2_32 = arith.constant 2 : index
    %c0_33 = arith.constant 0 : index
    %c0_34 = arith.constant 0 : index
    %33 = vector.load %arg2[%c2_32, %c0_33, %c0_34] : memref<3x23x128xbf16, #tpu.memory_space<vmem>>, vector<1x23x128xbf16>
    %34 = vector.shape_cast %33 : vector<1x23x128xbf16> to vector<23x128xbf16>
    %c0_35 = arith.constant 0 : index
    %c0_36 = arith.constant 0 : index
    %c0_37 = arith.constant 0 : index
    %c0_38 = arith.constant 0 : index
    %35 = vector.load %arg1[%c0_35, %c0_36, %c0_37, %c0_38] : memref<1x3x128x32xbf16, #tpu.memory_space<vmem>>, vector<1x1x128x32xbf16>
    %36 = vector.shape_cast %35 : vector<1x1x128x32xbf16> to vector<128x32xbf16>
    %cst_39 = arith.constant dense<0.000000e+00> : vector<23x32xf32>
    %37 = tpu.matmul %34, %36, %cst_39 {dimension_numbers = #tpu.dot_dimension_numbers<[1], [0], [0], [1], [0, 0, 1, 1], [], []>} : vector<23x128xbf16>, vector<128x32xbf16>, vector<23x32xf32> -> vector<23x32xf32>
    %38 = math.absf %37 : vector<23x32xf32>
    %39 = arith.maximumf %32, %38 : vector<23x32xf32>
    %c0_40 = arith.constant 0 : index
    %c1_41 = arith.constant 1 : index
    %c0_42 = arith.constant 0 : index
    %c0_43 = arith.constant 0 : index
    %40 = vector.load %arg1[%c0_40, %c1_41, %c0_42, %c0_43] : memref<1x3x128x32xbf16, #tpu.memory_space<vmem>>, vector<1x1x128x32xbf16>
    %41 = vector.shape_cast %40 : vector<1x1x128x32xbf16> to vector<128x32xbf16>
    %cst_44 = arith.constant dense<0.000000e+00> : vector<23x32xf32>
    %42 = tpu.matmul %34, %41, %cst_44 {dimension_numbers = #tpu.dot_dimension_numbers<[1], [0], [0], [1], [0, 0, 1, 1], [], []>} : vector<23x128xbf16>, vector<128x32xbf16>, vector<23x32xf32> -> vector<23x32xf32>
    %43 = math.absf %42 : vector<23x32xf32>
    %44 = arith.maximumf %39, %43 : vector<23x32xf32>
    %c0_45 = arith.constant 0 : index
    %c2_46 = arith.constant 2 : index
    %c0_47 = arith.constant 0 : index
    %c0_48 = arith.constant 0 : index
    %45 = vector.load %arg1[%c0_45, %c2_46, %c0_47, %c0_48] : memref<1x3x128x32xbf16, #tpu.memory_space<vmem>>, vector<1x1x128x32xbf16>
    %46 = vector.shape_cast %45 : vector<1x1x128x32xbf16> to vector<128x32xbf16>
    %cst_49 = arith.constant dense<0.000000e+00> : vector<23x32xf32>
    %47 = tpu.matmul %34, %46, %cst_49 {dimension_numbers = #tpu.dot_dimension_numbers<[1], [0], [0], [1], [0, 0, 1, 1], [], []>} : vector<23x128xbf16>, vector<128x32xbf16>, vector<23x32xf32> -> vector<23x32xf32>
    %48 = math.absf %47 : vector<23x32xf32>
    %49 = arith.maximumf %44, %48 : vector<23x32xf32>
    %c0_50 = arith.constant 0 : index
    %c0_51 = arith.constant 0 : index
    %50 = vector.load %arg3[%c0_50, %c0_51] : memref<1x1xf32, #tpu.memory_space<vmem>>, vector<1x1xf32>
    %51 = vector.broadcast %50 : vector<1x1xf32> to vector<23x32xf32>
    %52 = arith.mulf %49, %51 : vector<23x32xf32>
    %c0_52 = arith.constant 0 : index
    %c0_53 = arith.constant 0 : index
    %53 = vector.load %arg4[%c0_52, %c0_53] : memref<1x1xf32, #tpu.memory_space<vmem>>, vector<1x1xf32>
    %54 = vector.broadcast %53 : vector<1x1xf32> to vector<23x32xf32>
    %55 = arith.addf %52, %54 : vector<23x32xf32>
    %cst_54 = arith.constant 0.000000e+00 : f32
    %56 = vector.broadcast %cst_54 : f32 to vector<23x32xf32>
    %57 = arith.minimumf %55, %56 : vector<23x32xf32>
    %58 = math.exp %57 : vector<23x32xf32>
    %cst_55 = arith.constant 1.000000e+00 : f32
    %59 = vector.broadcast %cst_55 : f32 to vector<23x32xf32>
    %60 = arith.subf %58, %59 : vector<23x32xf32>
    %cst_56 = arith.constant 1.67326319 : f32
    %61 = vector.broadcast %cst_56 : f32 to vector<23x32xf32>
    %62 = arith.mulf %61, %60 : vector<23x32xf32>
    %cst_57 = arith.constant 0.000000e+00 : f32
    %63 = vector.broadcast %cst_57 : f32 to vector<23x32xf32>
    %64 = arith.cmpf ogt, %55, %63 : vector<23x32xf32>
    %65 = arith.select %64, %55, %62 : vector<23x32xi1>, vector<23x32xf32>
    %cst_58 = arith.constant 1.05070102 : f32
    %66 = vector.broadcast %cst_58 : f32 to vector<23x32xf32>
    %67 = arith.mulf %66, %65 : vector<23x32xf32>
    %c0_59 = arith.constant 0 : index
    %c0_60 = arith.constant 0 : index
    %c0_61 = arith.constant 0 : index
    %68 = vector.load %arg5[%c0_59, %c0_60, %c0_61] : memref<1x23x32xf32, #tpu.memory_space<vmem>>, vector<1x23x32xf32>
    %69 = vector.shape_cast %68 : vector<1x23x32xf32> to vector<23x32xf32>
    %70 = vector.shape_cast %67 : vector<23x32xf32> to vector<1x23x32xf32>
    tpu.vector_store %arg5[%c0_59, %c0_60, %c0_61], %70 {strides = array<i32>} : memref<1x23x32xf32, #tpu.memory_space<vmem>>, vector<1x23x32xf32>,
    return
  }
  func.func @transform_0(%arg0: i32) -> (i32, i32, i32, i32) {
    %c0_i32 = arith.constant 0 : i32
    %c0_i32_0 = arith.constant 0 : i32
    %c0_i32_1 = arith.constant 0 : i32
    %c0_i32_2 = arith.constant 0 : i32
    return %arg0, %c0_i32, %c0_i32_0, %c0_i32_1 : i32, i32, i32, i32
  }
  func.func @transform_1(%arg0: i32) -> (i32, i32, i32) {
    %c0_i32 = arith.constant 0 : i32
    %c0_i32_0 = arith.constant 0 : i32
    %c0_i32_1 = arith.constant 0 : i32
    %c0_i32_2 = arith.constant 0 : i32
    return %c0_i32, %c0_i32_0, %c0_i32_1 : i32, i32, i32
  }
  func.func @transform_2(%arg0: i32) -> (i32, i32) {
    %c0_i32 = arith.constant 0 : i32
    %c0_i32_0 = arith.constant 0 : i32
    %c0_i32_1 = arith.constant 0 : i32
    return %c0_i32, %c0_i32_0 : i32, i32
  }
  func.func @transform_3(%arg0: i32) -> (i32, i32) {
    %c0_i32 = arith.constant 0 : i32
    %c0_i32_0 = arith.constant 0 : i32
    %c0_i32_1 = arith.constant 0 : i32
    return %c0_i32, %c0_i32_0 : i32, i32
  }
  func.func @transform_4(%arg0: i32) -> (i32, i32, i32) {
    %c0_i32 = arith.constant 0 : i32
    %c0_i32_0 = arith.constant 0 : i32
    %c0_i32_1 = arith.constant 0 : i32
    return %arg0, %c0_i32, %c0_i32_0 : i32, i32, i32
  }
}

module attributes {stable_mosaic.version = 11 : i64} {
  func.func @kernel(%arg0: i32, %arg1: memref<1x3x800xbf16, #tpu.memory_space<vmem>>, %arg2: memref<2x32x3xbf16, #tpu.memory_space<vmem>>, %arg3: memref<32x1xf32, #tpu.memory_space<vmem>>, %arg4: memref<1x32x768xf32, #tpu.memory_space<vmem>>) attributes {dimension_semantics = [#tpu.dimension_semantics<parallel>], iteration_bounds = array<i64: 2>, scalar_prefetch = 0 : i64, scratch_operands = 0 : i64, tpu.core_type = #tpu.core_type<tc>, window_params = [{transform_indices = @transform_0, window_bounds = array<i64: 1, 3, 800>}, {pipeline_mode = #tpu.pipeline_mode<synchronous>, transform_indices = @transform_1, window_bounds = array<i64: 2, 32, 3>}, {pipeline_mode = #tpu.pipeline_mode<synchronous>, transform_indices = @transform_2, window_bounds = array<i64: 32, 1>}, {transform_indices = @transform_3, window_bounds = array<i64: 1, 32, 768>}]} {
    %c0 = arith.constant 0 : index
    %c0_0 = arith.constant 0 : index
    %c0_1 = arith.constant 0 : index
    %0 = vector.load %arg2[%c0, %c0_0, %c0_1] : memref<2x32x3xbf16, #tpu.memory_space<vmem>>, vector<1x32x3xbf16>
    %1 = vector.shape_cast %0 : vector<1x32x3xbf16> to vector<32x3xbf16>
    %c0_2 = arith.constant 0 : index
    %c0_3 = arith.constant 0 : index
    %c0_4 = arith.constant 0 : index
    %2 = vector.load %arg1[%c0_2, %c0_3, %c0_4] : memref<1x3x800xbf16, #tpu.memory_space<vmem>>, vector<1x3x768xbf16>
    %3 = vector.shape_cast %2 : vector<1x3x768xbf16> to vector<3x768xbf16>
    %cst = arith.constant dense<0.000000e+00> : vector<32x768xf32>
    %4 = tpu.matmul %1, %3, %cst {dimension_numbers = #tpu.dot_dimension_numbers<[1], [0], [0], [1], [0, 0, 1, 1], [], []>} : vector<32x3xbf16>, vector<3x768xbf16>, vector<32x768xf32> -> vector<32x768xf32>
    %c0_5 = arith.constant 0 : index
    %c0_6 = arith.constant 0 : index
    %c32 = arith.constant 32 : index
    %5 = vector.load %arg1[%c0_5, %c0_6, %c32] : memref<1x3x800xbf16, #tpu.memory_space<vmem>>, vector<1x3x768xbf16>
    %6 = vector.shape_cast %5 : vector<1x3x768xbf16> to vector<3x768xbf16>
    %c1 = arith.constant 1 : index
    %c0_7 = arith.constant 0 : index
    %c0_8 = arith.constant 0 : index
    %7 = vector.load %arg2[%c1, %c0_7, %c0_8] : memref<2x32x3xbf16, #tpu.memory_space<vmem>>, vector<1x32x3xbf16>
    %8 = vector.shape_cast %7 : vector<1x32x3xbf16> to vector<32x3xbf16>
    %cst_9 = arith.constant dense<0.000000e+00> : vector<32x768xf32>
    %9 = tpu.matmul %8, %6, %cst_9 {dimension_numbers = #tpu.dot_dimension_numbers<[1], [0], [0], [1], [0, 0, 1, 1], [], []>} : vector<32x3xbf16>, vector<3x768xbf16>, vector<32x768xf32> -> vector<32x768xf32>
    %10 = arith.addf %4, %9 : vector<32x768xf32>
    %c0_10 = arith.constant 0 : index
    %c0_11 = arith.constant 0 : index
    %11 = vector.load %arg3[%c0_10, %c0_11] : memref<32x1xf32, #tpu.memory_space<vmem>>, vector<32x1xf32>
    %12 = vector.broadcast %11 : vector<32x1xf32> to vector<32x768xf32>
    %13 = arith.addf %10, %12 : vector<32x768xf32>
    %c0_12 = arith.constant 0 : index
    %c0_13 = arith.constant 0 : index
    %c0_14 = arith.constant 0 : index
    %14 = vector.load %arg4[%c0_12, %c0_13, %c0_14] : memref<1x32x768xf32, #tpu.memory_space<vmem>>, vector<1x32x768xf32>
    %15 = vector.shape_cast %14 : vector<1x32x768xf32> to vector<32x768xf32>
    %16 = vector.shape_cast %13 : vector<32x768xf32> to vector<1x32x768xf32>
    tpu.vector_store %arg4[%c0_12, %c0_13, %c0_14], %16 {strides = array<i32>} : memref<1x32x768xf32, #tpu.memory_space<vmem>>, vector<1x32x768xf32>,
    return
  }
  func.func @transform_0(%arg0: i32) -> (i32, i32, i32) {
    %c0_i32 = arith.constant 0 : i32
    %c0_i32_0 = arith.constant 0 : i32
    %c0_i32_1 = arith.constant 0 : i32
    return %arg0, %c0_i32, %c0_i32_0 : i32, i32, i32
  }
  func.func @transform_1(%arg0: i32) -> (i32, i32, i32) {
    %c0_i32 = arith.constant 0 : i32
    %c0_i32_0 = arith.constant 0 : i32
    %c0_i32_1 = arith.constant 0 : i32
    %c0_i32_2 = arith.constant 0 : i32
    return %c0_i32, %c0_i32_0, %c0_i32_1 : i32, i32, i32
  }
  func.func @transform_2(%arg0: i32) -> (i32, i32) {
    %c0_i32 = arith.constant 0 : i32
    %c0_i32_0 = arith.constant 0 : i32
    %c0_i32_1 = arith.constant 0 : i32
    return %c0_i32, %c0_i32_0 : i32, i32
  }
  func.func @transform_3(%arg0: i32) -> (i32, i32, i32) {
    %c0_i32 = arith.constant 0 : i32
    %c0_i32_0 = arith.constant 0 : i32
    %c0_i32_1 = arith.constant 0 : i32
    return %arg0, %c0_i32, %c0_i32_0 : i32, i32, i32
  }
}

module attributes {stable_mosaic.version = 11 : i64} {
  func.func @kernel(%arg0: i32, %arg1: memref<1x3x368xbf16, #tpu.memory_space<vmem>>, %arg2: memref<1x32x3xbf16, #tpu.memory_space<vmem>>, %arg3: memref<32x1xf32, #tpu.memory_space<vmem>>, %arg4: memref<1x32x368xf32, #tpu.memory_space<vmem>>) attributes {dimension_semantics = [#tpu.dimension_semantics<parallel>], iteration_bounds = array<i64: 2>, scalar_prefetch = 0 : i64, scratch_operands = 0 : i64, tpu.core_type = #tpu.core_type<tc>, window_params = [{transform_indices = @transform_0, window_bounds = array<i64: 1, 3, 368>}, {pipeline_mode = #tpu.pipeline_mode<synchronous>, transform_indices = @transform_1, window_bounds = array<i64: 1, 32, 3>}, {pipeline_mode = #tpu.pipeline_mode<synchronous>, transform_indices = @transform_2, window_bounds = array<i64: 32, 1>}, {transform_indices = @transform_3, window_bounds = array<i64: 1, 32, 368>}]} {
    %c0 = arith.constant 0 : index
    %c0_0 = arith.constant 0 : index
    %c0_1 = arith.constant 0 : index
    %0 = vector.load %arg2[%c0, %c0_0, %c0_1] : memref<1x32x3xbf16, #tpu.memory_space<vmem>>, vector<1x32x3xbf16>
    %1 = vector.shape_cast %0 : vector<1x32x3xbf16> to vector<32x3xbf16>
    %c0_2 = arith.constant 0 : index
    %c0_3 = arith.constant 0 : index
    %c0_4 = arith.constant 0 : index
    %2 = vector.load %arg1[%c0_2, %c0_3, %c0_4] : memref<1x3x368xbf16, #tpu.memory_space<vmem>>, vector<1x3x368xbf16>
    %3 = vector.shape_cast %2 : vector<1x3x368xbf16> to vector<3x368xbf16>
    %cst = arith.constant dense<0.000000e+00> : vector<32x368xf32>
    %4 = tpu.matmul %1, %3, %cst {dimension_numbers = #tpu.dot_dimension_numbers<[1], [0], [0], [1], [0, 0, 1, 1], [], []>} : vector<32x3xbf16>, vector<3x368xbf16>, vector<32x368xf32> -> vector<32x368xf32>
    %c0_5 = arith.constant 0 : index
    %c0_6 = arith.constant 0 : index
    %5 = vector.load %arg3[%c0_5, %c0_6] : memref<32x1xf32, #tpu.memory_space<vmem>>, vector<32x1xf32>
    %6 = vector.broadcast %5 : vector<32x1xf32> to vector<32x368xf32>
    %7 = arith.addf %4, %6 : vector<32x368xf32>
    %c0_7 = arith.constant 0 : index
    %c0_8 = arith.constant 0 : index
    %c0_9 = arith.constant 0 : index
    %8 = vector.load %arg4[%c0_7, %c0_8, %c0_9] : memref<1x32x368xf32, #tpu.memory_space<vmem>>, vector<1x32x368xf32>
    %9 = vector.shape_cast %8 : vector<1x32x368xf32> to vector<32x368xf32>
    %10 = vector.shape_cast %7 : vector<32x368xf32> to vector<1x32x368xf32>
    tpu.vector_store %arg4[%c0_7, %c0_8, %c0_9], %10 {strides = array<i32>} : memref<1x32x368xf32, #tpu.memory_space<vmem>>, vector<1x32x368xf32>,
    return
  }
  func.func @transform_0(%arg0: i32) -> (i32, i32, i32) {
    %c0_i32 = arith.constant 0 : i32
    %c0_i32_0 = arith.constant 0 : i32
    %c0_i32_1 = arith.constant 0 : i32
    return %arg0, %c0_i32, %c0_i32_0 : i32, i32, i32
  }
  func.func @transform_1(%arg0: i32) -> (i32, i32, i32) {
    %c0_i32 = arith.constant 0 : i32
    %c0_i32_0 = arith.constant 0 : i32
    %c0_i32_1 = arith.constant 0 : i32
    %c0_i32_2 = arith.constant 0 : i32
    return %c0_i32, %c0_i32_0, %c0_i32_1 : i32, i32, i32
  }
  func.func @transform_2(%arg0: i32) -> (i32, i32) {
    %c0_i32 = arith.constant 0 : i32
    %c0_i32_0 = arith.constant 0 : i32
    %c0_i32_1 = arith.constant 0 : i32
    return %c0_i32, %c0_i32_0 : i32, i32
  }
  func.func @transform_3(%arg0: i32) -> (i32, i32, i32) {
    %c0_i32 = arith.constant 0 : i32
    %c0_i32_0 = arith.constant 0 : i32
    %c0_i32_1 = arith.constant 0 : i32
    return %arg0, %c0_i32, %c0_i32_0 : i32, i32, i32
  }
}

module attributes {stable_mosaic.version = 11 : i64} {
  func.func @kernel(%arg0: i32, %arg1: memref<1x96x384xbf16, #tpu.memory_space<vmem>>, %arg2: memref<2x32x96xbf16, #tpu.memory_space<vmem>>, %arg3: memref<32x1xf32, #tpu.memory_space<vmem>>, %arg4: memref<1x32x368xf32, #tpu.memory_space<vmem>>, %arg5: memref<1x32x368xf32, #tpu.memory_space<vmem>>) attributes {dimension_semantics = [#tpu.dimension_semantics<parallel>], iteration_bounds = array<i64: 2>, scalar_prefetch = 0 : i64, scratch_operands = 0 : i64, tpu.core_type = #tpu.core_type<tc>, window_params = [{transform_indices = @transform_0, window_bounds = array<i64: 1, 96, 384>}, {pipeline_mode = #tpu.pipeline_mode<synchronous>, transform_indices = @transform_1, window_bounds = array<i64: 2, 32, 96>}, {pipeline_mode = #tpu.pipeline_mode<synchronous>, transform_indices = @transform_2, window_bounds = array<i64: 32, 1>}, {transform_indices = @transform_3, window_bounds = array<i64: 1, 32, 368>}, {transform_indices = @transform_4, window_bounds = array<i64: 1, 32, 368>}]} {
    %c0 = arith.constant 0 : index
    %c0_0 = arith.constant 0 : index
    %c0_1 = arith.constant 0 : index
    %0 = vector.load %arg2[%c0, %c0_0, %c0_1] : memref<2x32x96xbf16, #tpu.memory_space<vmem>>, vector<1x32x96xbf16>
    %1 = vector.shape_cast %0 : vector<1x32x96xbf16> to vector<32x96xbf16>
    %c0_2 = arith.constant 0 : index
    %c0_3 = arith.constant 0 : index
    %c0_4 = arith.constant 0 : index
    %2 = vector.load %arg1[%c0_2, %c0_3, %c0_4] : memref<1x96x384xbf16, #tpu.memory_space<vmem>>, vector<1x96x368xbf16>
    %3 = vector.shape_cast %2 : vector<1x96x368xbf16> to vector<96x368xbf16>
    %cst = arith.constant dense<0.000000e+00> : vector<32x368xf32>
    %4 = tpu.matmul %1, %3, %cst {dimension_numbers = #tpu.dot_dimension_numbers<[1], [0], [0], [1], [0, 0, 1, 1], [], []>} : vector<32x96xbf16>, vector<96x368xbf16>, vector<32x368xf32> -> vector<32x368xf32>
    %c0_5 = arith.constant 0 : index
    %c0_6 = arith.constant 0 : index
    %c16 = arith.constant 16 : index
    %5 = vector.load %arg1[%c0_5, %c0_6, %c16] : memref<1x96x384xbf16, #tpu.memory_space<vmem>>, vector<1x96x368xbf16>
    %6 = vector.shape_cast %5 : vector<1x96x368xbf16> to vector<96x368xbf16>
    %c1 = arith.constant 1 : index
    %c0_7 = arith.constant 0 : index
    %c0_8 = arith.constant 0 : index
    %7 = vector.load %arg2[%c1, %c0_7, %c0_8] : memref<2x32x96xbf16, #tpu.memory_space<vmem>>, vector<1x32x96xbf16>
    %8 = vector.shape_cast %7 : vector<1x32x96xbf16> to vector<32x96xbf16>
    %cst_9 = arith.constant dense<0.000000e+00> : vector<32x368xf32>
    %9 = tpu.matmul %8, %6, %cst_9 {dimension_numbers = #tpu.dot_dimension_numbers<[1], [0], [0], [1], [0, 0, 1, 1], [], []>} : vector<32x96xbf16>, vector<96x368xbf16>, vector<32x368xf32> -> vector<32x368xf32>
    %10 = arith.addf %4, %9 : vector<32x368xf32>
    %c0_10 = arith.constant 0 : index
    %c0_11 = arith.constant 0 : index
    %11 = vector.load %arg3[%c0_10, %c0_11] : memref<32x1xf32, #tpu.memory_space<vmem>>, vector<32x1xf32>
    %12 = vector.broadcast %11 : vector<32x1xf32> to vector<32x368xf32>
    %13 = arith.addf %10, %12 : vector<32x368xf32>
    %c0_12 = arith.constant 0 : index
    %c0_13 = arith.constant 0 : index
    %c0_14 = arith.constant 0 : index
    %14 = vector.load %arg4[%c0_12, %c0_13, %c0_14] : memref<1x32x368xf32, #tpu.memory_space<vmem>>, vector<1x32x368xf32>
    %15 = vector.shape_cast %14 : vector<1x32x368xf32> to vector<32x368xf32>
    %16 = arith.addf %13, %15 : vector<32x368xf32>
    %c0_15 = arith.constant 0 : index
    %c0_16 = arith.constant 0 : index
    %c0_17 = arith.constant 0 : index
    %17 = vector.load %arg5[%c0_15, %c0_16, %c0_17] : memref<1x32x368xf32, #tpu.memory_space<vmem>>, vector<1x32x368xf32>
    %18 = vector.shape_cast %17 : vector<1x32x368xf32> to vector<32x368xf32>
    %19 = vector.shape_cast %16 : vector<32x368xf32> to vector<1x32x368xf32>
    tpu.vector_store %arg5[%c0_15, %c0_16, %c0_17], %19 {strides = array<i32>} : memref<1x32x368xf32, #tpu.memory_space<vmem>>, vector<1x32x368xf32>,
    return
  }
  func.func @transform_0(%arg0: i32) -> (i32, i32, i32) {
    %c0_i32 = arith.constant 0 : i32
    %c0_i32_0 = arith.constant 0 : i32
    %c0_i32_1 = arith.constant 0 : i32
    return %arg0, %c0_i32, %c0_i32_0 : i32, i32, i32
  }
  func.func @transform_1(%arg0: i32) -> (i32, i32, i32) {
    %c0_i32 = arith.constant 0 : i32
    %c0_i32_0 = arith.constant 0 : i32
    %c0_i32_1 = arith.constant 0 : i32
    %c0_i32_2 = arith.constant 0 : i32
    return %c0_i32, %c0_i32_0, %c0_i32_1 : i32, i32, i32
  }
  func.func @transform_2(%arg0: i32) -> (i32, i32) {
    %c0_i32 = arith.constant 0 : i32
    %c0_i32_0 = arith.constant 0 : i32
    %c0_i32_1 = arith.constant 0 : i32
    return %c0_i32, %c0_i32_0 : i32, i32
  }
  func.func @transform_3(%arg0: i32) -> (i32, i32, i32) {
    %c0_i32 = arith.constant 0 : i32
    %c0_i32_0 = arith.constant 0 : i32
    %c0_i32_1 = arith.constant 0 : i32
    return %arg0, %c0_i32, %c0_i32_0 : i32, i32, i32
  }
  func.func @transform_4(%arg0: i32) -> (i32, i32, i32) {
    %c0_i32 = arith.constant 0 : i32
    %c0_i32_0 = arith.constant 0 : i32
    %c0_i32_1 = arith.constant 0 : i32
    return %arg0, %c0_i32, %c0_i32_0 : i32, i32, i32
  }
}

module attributes {stable_mosaic.version = 11 : i64} {
  func.func @kernel(%arg0: i32, %arg1: memref<1x96x400xbf16, #tpu.memory_space<vmem>>, %arg2: memref<2x32x96xbf16, #tpu.memory_space<vmem>>, %arg3: memref<32x1xf32, #tpu.memory_space<vmem>>, %arg4: memref<1x32x384xf32, #tpu.memory_space<vmem>>) attributes {dimension_semantics = [#tpu.dimension_semantics<parallel>], iteration_bounds = array<i64: 2>, scalar_prefetch = 0 : i64, scratch_operands = 0 : i64, tpu.core_type = #tpu.core_type<tc>, window_params = [{transform_indices = @transform_0, window_bounds = array<i64: 1, 96, 400>}, {pipeline_mode = #tpu.pipeline_mode<synchronous>, transform_indices = @transform_1, window_bounds = array<i64: 2, 32, 96>}, {pipeline_mode = #tpu.pipeline_mode<synchronous>, transform_indices = @transform_2, window_bounds = array<i64: 32, 1>}, {transform_indices = @transform_3, window_bounds = array<i64: 1, 32, 384>}]} {
    %c0 = arith.constant 0 : index
    %c0_0 = arith.constant 0 : index
    %c0_1 = arith.constant 0 : index
    %0 = vector.load %arg2[%c0, %c0_0, %c0_1] : memref<2x32x96xbf16, #tpu.memory_space<vmem>>, vector<1x32x96xbf16>
    %1 = vector.shape_cast %0 : vector<1x32x96xbf16> to vector<32x96xbf16>
    %c0_2 = arith.constant 0 : index
    %c0_3 = arith.constant 0 : index
    %c0_4 = arith.constant 0 : index
    %2 = vector.load %arg1[%c0_2, %c0_3, %c0_4] : memref<1x96x400xbf16, #tpu.memory_space<vmem>>, vector<1x96x384xbf16>
    %3 = vector.shape_cast %2 : vector<1x96x384xbf16> to vector<96x384xbf16>
    %cst = arith.constant dense<0.000000e+00> : vector<32x384xf32>
    %4 = tpu.matmul %1, %3, %cst {dimension_numbers = #tpu.dot_dimension_numbers<[1], [0], [0], [1], [0, 0, 1, 1], [], []>} : vector<32x96xbf16>, vector<96x384xbf16>, vector<32x384xf32> -> vector<32x384xf32>
    %c0_5 = arith.constant 0 : index
    %c0_6 = arith.constant 0 : index
    %c16 = arith.constant 16 : index
    %5 = vector.load %arg1[%c0_5, %c0_6, %c16] : memref<1x96x400xbf16, #tpu.memory_space<vmem>>, vector<1x96x384xbf16>
    %6 = vector.shape_cast %5 : vector<1x96x384xbf16> to vector<96x384xbf16>
    %c1 = arith.constant 1 : index
    %c0_7 = arith.constant 0 : index
    %c0_8 = arith.constant 0 : index
    %7 = vector.load %arg2[%c1, %c0_7, %c0_8] : memref<2x32x96xbf16, #tpu.memory_space<vmem>>, vector<1x32x96xbf16>
    %8 = vector.shape_cast %7 : vector<1x32x96xbf16> to vector<32x96xbf16>
    %cst_9 = arith.constant dense<0.000000e+00> : vector<32x384xf32>
    %9 = tpu.matmul %8, %6, %cst_9 {dimension_numbers = #tpu.dot_dimension_numbers<[1], [0], [0], [1], [0, 0, 1, 1], [], []>} : vector<32x96xbf16>, vector<96x384xbf16>, vector<32x384xf32> -> vector<32x384xf32>
    %10 = arith.addf %4, %9 : vector<32x384xf32>
    %c0_10 = arith.constant 0 : index
    %c0_11 = arith.constant 0 : index
    %11 = vector.load %arg3[%c0_10, %c0_11] : memref<32x1xf32, #tpu.memory_space<vmem>>, vector<32x1xf32>
    %12 = vector.broadcast %11 : vector<32x1xf32> to vector<32x384xf32>
    %13 = arith.addf %10, %12 : vector<32x384xf32>
    %c0_12 = arith.constant 0 : index
    %c0_13 = arith.constant 0 : index
    %c0_14 = arith.constant 0 : index
    %14 = vector.load %arg4[%c0_12, %c0_13, %c0_14] : memref<1x32x384xf32, #tpu.memory_space<vmem>>, vector<1x32x384xf32>
    %15 = vector.shape_cast %14 : vector<1x32x384xf32> to vector<32x384xf32>
    %16 = vector.shape_cast %13 : vector<32x384xf32> to vector<1x32x384xf32>
    tpu.vector_store %arg4[%c0_12, %c0_13, %c0_14], %16 {strides = array<i32>} : memref<1x32x384xf32, #tpu.memory_space<vmem>>, vector<1x32x384xf32>,
    return
  }
  func.func @transform_0(%arg0: i32) -> (i32, i32, i32) {
    %c0_i32 = arith.constant 0 : i32
    %c0_i32_0 = arith.constant 0 : i32
    %c0_i32_1 = arith.constant 0 : i32
    return %arg0, %c0_i32, %c0_i32_0 : i32, i32, i32
  }
  func.func @transform_1(%arg0: i32) -> (i32, i32, i32) {
    %c0_i32 = arith.constant 0 : i32
    %c0_i32_0 = arith.constant 0 : i32
    %c0_i32_1 = arith.constant 0 : i32
    %c0_i32_2 = arith.constant 0 : i32
    return %c0_i32, %c0_i32_0, %c0_i32_1 : i32, i32, i32
  }
  func.func @transform_2(%arg0: i32) -> (i32, i32) {
    %c0_i32 = arith.constant 0 : i32
    %c0_i32_0 = arith.constant 0 : i32
    %c0_i32_1 = arith.constant 0 : i32
    return %c0_i32, %c0_i32_0 : i32, i32
  }
  func.func @transform_3(%arg0: i32) -> (i32, i32, i32) {
    %c0_i32 = arith.constant 0 : i32
    %c0_i32_0 = arith.constant 0 : i32
    %c0_i32_1 = arith.constant 0 : i32
    return %arg0, %c0_i32, %c0_i32_0 : i32, i32, i32
  }
}

module attributes {stable_mosaic.version = 11 : i64} {
  func.func @kernel(%arg0: i32, %arg1: memref<1x96x192xbf16, #tpu.memory_space<vmem>>, %arg2: memref<1x32x96xbf16, #tpu.memory_space<vmem>>, %arg3: memref<32x1xf32, #tpu.memory_space<vmem>>, %arg4: memref<1x32x192xf32, #tpu.memory_space<vmem>>) attributes {dimension_semantics = [#tpu.dimension_semantics<parallel>], iteration_bounds = array<i64: 2>, scalar_prefetch = 0 : i64, scratch_operands = 0 : i64, tpu.core_type = #tpu.core_type<tc>, window_params = [{transform_indices = @transform_0, window_bounds = array<i64: 1, 96, 192>}, {pipeline_mode = #tpu.pipeline_mode<synchronous>, transform_indices = @transform_1, window_bounds = array<i64: 1, 32, 96>}, {pipeline_mode = #tpu.pipeline_mode<synchronous>, transform_indices = @transform_2, window_bounds = array<i64: 32, 1>}, {transform_indices = @transform_3, window_bounds = array<i64: 1, 32, 192>}]} {
    %c0 = arith.constant 0 : index
    %c0_0 = arith.constant 0 : index
    %c0_1 = arith.constant 0 : index
    %0 = vector.load %arg2[%c0, %c0_0, %c0_1] : memref<1x32x96xbf16, #tpu.memory_space<vmem>>, vector<1x32x96xbf16>
    %1 = vector.shape_cast %0 : vector<1x32x96xbf16> to vector<32x96xbf16>
    %c0_2 = arith.constant 0 : index
    %c0_3 = arith.constant 0 : index
    %c0_4 = arith.constant 0 : index
    %2 = vector.load %arg1[%c0_2, %c0_3, %c0_4] : memref<1x96x192xbf16, #tpu.memory_space<vmem>>, vector<1x96x192xbf16>
    %3 = vector.shape_cast %2 : vector<1x96x192xbf16> to vector<96x192xbf16>
    %cst = arith.constant dense<0.000000e+00> : vector<32x192xf32>
    %4 = tpu.matmul %1, %3, %cst {dimension_numbers = #tpu.dot_dimension_numbers<[1], [0], [0], [1], [0, 0, 1, 1], [], []>} : vector<32x96xbf16>, vector<96x192xbf16>, vector<32x192xf32> -> vector<32x192xf32>
    %c0_5 = arith.constant 0 : index
    %c0_6 = arith.constant 0 : index
    %5 = vector.load %arg3[%c0_5, %c0_6] : memref<32x1xf32, #tpu.memory_space<vmem>>, vector<32x1xf32>
    %6 = vector.broadcast %5 : vector<32x1xf32> to vector<32x192xf32>
    %7 = arith.addf %4, %6 : vector<32x192xf32>
    %c0_7 = arith.constant 0 : index
    %c0_8 = arith.constant 0 : index
    %c0_9 = arith.constant 0 : index
    %8 = vector.load %arg4[%c0_7, %c0_8, %c0_9] : memref<1x32x192xf32, #tpu.memory_space<vmem>>, vector<1x32x192xf32>
    %9 = vector.shape_cast %8 : vector<1x32x192xf32> to vector<32x192xf32>
    %10 = vector.shape_cast %7 : vector<32x192xf32> to vector<1x32x192xf32>
    tpu.vector_store %arg4[%c0_7, %c0_8, %c0_9], %10 {strides = array<i32>} : memref<1x32x192xf32, #tpu.memory_space<vmem>>, vector<1x32x192xf32>,
    return
  }
  func.func @transform_0(%arg0: i32) -> (i32, i32, i32) {
    %c0_i32 = arith.constant 0 : i32
    %c0_i32_0 = arith.constant 0 : i32
    %c0_i32_1 = arith.constant 0 : i32
    return %arg0, %c0_i32, %c0_i32_0 : i32, i32, i32
  }
  func.func @transform_1(%arg0: i32) -> (i32, i32, i32) {
    %c0_i32 = arith.constant 0 : i32
    %c0_i32_0 = arith.constant 0 : i32
    %c0_i32_1 = arith.constant 0 : i32
    %c0_i32_2 = arith.constant 0 : i32
    return %c0_i32, %c0_i32_0, %c0_i32_1 : i32, i32, i32
  }
  func.func @transform_2(%arg0: i32) -> (i32, i32) {
    %c0_i32 = arith.constant 0 : i32
    %c0_i32_0 = arith.constant 0 : i32
    %c0_i32_1 = arith.constant 0 : i32
    return %c0_i32, %c0_i32_0 : i32, i32
  }
  func.func @transform_3(%arg0: i32) -> (i32, i32, i32) {
    %c0_i32 = arith.constant 0 : i32
    %c0_i32_0 = arith.constant 0 : i32
    %c0_i32_1 = arith.constant 0 : i32
    return %arg0, %c0_i32, %c0_i32_0 : i32, i32, i32
  }
}

module attributes {stable_mosaic.version = 11 : i64} {
  func.func @kernel(%arg0: i32, %arg1: memref<1x96x208xbf16, #tpu.memory_space<vmem>>, %arg2: memref<3x32x96xbf16, #tpu.memory_space<vmem>>, %arg3: memref<32x1xf32, #tpu.memory_space<vmem>>, %arg4: memref<1x32x192xf32, #tpu.memory_space<vmem>>, %arg5: memref<8x32xf32, #tpu.memory_space<vmem>>, %arg6: memref<8x1xf32, #tpu.memory_space<vmem>>, %arg7: memref<32x8xf32, #tpu.memory_space<vmem>>, %arg8: memref<32x1xf32, #tpu.memory_space<vmem>>, %arg9: memref<1x32x192xf32, #tpu.memory_space<vmem>>) attributes {dimension_semantics = [#tpu.dimension_semantics<parallel>], iteration_bounds = array<i64: 2>, scalar_prefetch = 0 : i64, scratch_operands = 0 : i64, tpu.core_type = #tpu.core_type<tc>, window_params = [{transform_indices = @transform_0, window_bounds = array<i64: 1, 96, 208>}, {pipeline_mode = #tpu.pipeline_mode<synchronous>, transform_indices = @transform_1, window_bounds = array<i64: 3, 32, 96>}, {pipeline_mode = #tpu.pipeline_mode<synchronous>, transform_indices = @transform_2, window_bounds = array<i64: 32, 1>}, {transform_indices = @transform_3, window_bounds = array<i64: 1, 32, 192>}, {pipeline_mode = #tpu.pipeline_mode<synchronous>, transform_indices = @transform_4, window_bounds = array<i64: 8, 32>}, {pipeline_mode = #tpu.pipeline_mode<synchronous>, transform_indices = @transform_5, window_bounds = array<i64: 8, 1>}, {pipeline_mode = #tpu.pipeline_mode<synchronous>, transform_indices = @transform_6, window_bounds = array<i64: 32, 8>}, {pipeline_mode = #tpu.pipeline_mode<synchronous>, transform_indices = @transform_7, window_bounds = array<i64: 32, 1>}, {transform_indices = @transform_8, window_bounds = array<i64: 1, 32, 192>}]} {
    %c0 = arith.constant 0 : index
    %c0_0 = arith.constant 0 : index
    %c0_1 = arith.constant 0 : index
    %0 = vector.load %arg2[%c0, %c0_0, %c0_1] : memref<3x32x96xbf16, #tpu.memory_space<vmem>>, vector<1x32x96xbf16>
    %1 = vector.shape_cast %0 : vector<1x32x96xbf16> to vector<32x96xbf16>
    %c0_2 = arith.constant 0 : index
    %c0_3 = arith.constant 0 : index
    %c0_4 = arith.constant 0 : index
    %2 = vector.load %arg1[%c0_2, %c0_3, %c0_4] : memref<1x96x208xbf16, #tpu.memory_space<vmem>>, vector<1x96x192xbf16>
    %3 = vector.shape_cast %2 : vector<1x96x192xbf16> to vector<96x192xbf16>
    %cst = arith.constant dense<0.000000e+00> : vector<32x192xf32>
    %4 = tpu.matmul %1, %3, %cst {dimension_numbers = #tpu.dot_dimension_numbers<[1], [0], [0], [1], [0, 0, 1, 1], [], []>} : vector<32x96xbf16>, vector<96x192xbf16>, vector<32x192xf32> -> vector<32x192xf32>
    %c0_5 = arith.constant 0 : index
    %c0_6 = arith.constant 0 : index
    %c8 = arith.constant 8 : index
    %5 = vector.load %arg1[%c0_5, %c0_6, %c8] : memref<1x96x208xbf16, #tpu.memory_space<vmem>>, vector<1x96x192xbf16>
    %6 = vector.shape_cast %5 : vector<1x96x192xbf16> to vector<96x192xbf16>
    %c1 = arith.constant 1 : index
    %c0_7 = arith.constant 0 : index
    %c0_8 = arith.constant 0 : index
    %7 = vector.load %arg2[%c1, %c0_7, %c0_8] : memref<3x32x96xbf16, #tpu.memory_space<vmem>>, vector<1x32x96xbf16>
    %8 = vector.shape_cast %7 : vector<1x32x96xbf16> to vector<32x96xbf16>
    %cst_9 = arith.constant dense<0.000000e+00> : vector<32x192xf32>
    %9 = tpu.matmul %8, %6, %cst_9 {dimension_numbers = #tpu.dot_dimension_numbers<[1], [0], [0], [1], [0, 0, 1, 1], [], []>} : vector<32x96xbf16>, vector<96x192xbf16>, vector<32x192xf32> -> vector<32x192xf32>
    %10 = arith.addf %4, %9 : vector<32x192xf32>
    %c0_10 = arith.constant 0 : index
    %c0_11 = arith.constant 0 : index
    %c16 = arith.constant 16 : index
    %11 = vector.load %arg1[%c0_10, %c0_11, %c16] : memref<1x96x208xbf16, #tpu.memory_space<vmem>>, vector<1x96x192xbf16>
    %12 = vector.shape_cast %11 : vector<1x96x192xbf16> to vector<96x192xbf16>
    %c2 = arith.constant 2 : index
    %c0_12 = arith.constant 0 : index
    %c0_13 = arith.constant 0 : index
    %13 = vector.load %arg2[%c2, %c0_12, %c0_13] : memref<3x32x96xbf16, #tpu.memory_space<vmem>>, vector<1x32x96xbf16>
    %14 = vector.shape_cast %13 : vector<1x32x96xbf16> to vector<32x96xbf16>
    %cst_14 = arith.constant dense<0.000000e+00> : vector<32x192xf32>
    %15 = tpu.matmul %14, %12, %cst_14 {dimension_numbers = #tpu.dot_dimension_numbers<[1], [0], [0], [1], [0, 0, 1, 1], [], []>} : vector<32x96xbf16>, vector<96x192xbf16>, vector<32x192xf32> -> vector<32x192xf32>
    %16 = arith.addf %10, %15 : vector<32x192xf32>
    %c0_15 = arith.constant 0 : index
    %c0_16 = arith.constant 0 : index
    %17 = vector.load %arg3[%c0_15, %c0_16] : memref<32x1xf32, #tpu.memory_space<vmem>>, vector<32x1xf32>
    %18 = vector.broadcast %17 : vector<32x1xf32> to vector<32x192xf32>
    %19 = arith.addf %16, %18 : vector<32x192xf32>
    %cst_17 = arith.constant dense<0.000000e+00> : vector<32xf32>
    %20 = vector.multi_reduction <add>, %19, %cst_17 [1] : vector<32x192xf32> to vector<32xf32>
    %21 = vector.shape_cast %20 : vector<32xf32> to vector<32x1xf32>
    %cst_18 = arith.constant 0.00520833349 : f32
    %22 = vector.broadcast %cst_18 : f32 to vector<32x1xf32>
    %23 = arith.mulf %21, %22 : vector<32x1xf32>
    %c0_19 = arith.constant 0 : index
    %c0_20 = arith.constant 0 : index
    %24 = vector.load %arg5[%c0_19, %c0_20] : memref<8x32xf32, #tpu.memory_space<vmem>>, vector<8x32xf32>
    %cst_21 = arith.constant dense<0.000000e+00> : vector<8x1xf32>
    %25 = tpu.matmul %24, %23, %cst_21 {dimension_numbers = #tpu.dot_dimension_numbers<[1], [0], [0], [1], [0, 0, 1, 1], [], []>} : vector<8x32xf32>, vector<32x1xf32>, vector<8x1xf32> -> vector<8x1xf32>
    %c0_22 = arith.constant 0 : index
    %c0_23 = arith.constant 0 : index
    %26 = vector.load %arg6[%c0_22, %c0_23] : memref<8x1xf32, #tpu.memory_space<vmem>>, vector<8x1xf32>
    %27 = arith.addf %25, %26 : vector<8x1xf32>
    %cst_24 = arith.constant 0.000000e+00 : f32
    %28 = vector.broadcast %cst_24 : f32 to vector<8x1xf32>
    %29 = arith.maximumf %27, %28 : vector<8x1xf32>
    %c0_25 = arith.constant 0 : index
    %c0_26 = arith.constant 0 : index
    %30 = vector.load %arg7[%c0_25, %c0_26] : memref<32x8xf32, #tpu.memory_space<vmem>>, vector<32x8xf32>
    %cst_27 = arith.constant dense<0.000000e+00> : vector<32x1xf32>
    %31 = tpu.matmul %30, %29, %cst_27 {dimension_numbers = #tpu.dot_dimension_numbers<[1], [0], [0], [1], [0, 0, 1, 1], [], []>} : vector<32x8xf32>, vector<8x1xf32>, vector<32x1xf32> -> vector<32x1xf32>
    %c0_28 = arith.constant 0 : index
    %c0_29 = arith.constant 0 : index
    %32 = vector.load %arg8[%c0_28, %c0_29] : memref<32x1xf32, #tpu.memory_space<vmem>>, vector<32x1xf32>
    %33 = arith.addf %31, %32 : vector<32x1xf32>
    %34 = arith.negf %33 : vector<32x1xf32>
    %35 = math.exp %34 : vector<32x1xf32>
    %cst_30 = arith.constant 1.000000e+00 : f32
    %36 = vector.broadcast %cst_30 : f32 to vector<32x1xf32>
    %37 = arith.addf %36, %35 : vector<32x1xf32>
    %38 = arith.divf %36, %37 : vector<32x1xf32>
    %39 = vector.broadcast %38 : vector<32x1xf32> to vector<32x192xf32>
    %40 = arith.mulf %19, %39 : vector<32x192xf32>
    %c0_31 = arith.constant 0 : index
    %c0_32 = arith.constant 0 : index
    %c0_33 = arith.constant 0 : index
    %41 = vector.load %arg4[%c0_31, %c0_32, %c0_33] : memref<1x32x192xf32, #tpu.memory_space<vmem>>, vector<1x32x192xf32>
    %42 = vector.shape_cast %41 : vector<1x32x192xf32> to vector<32x192xf32>
    %43 = arith.addf %40, %42 : vector<32x192xf32>
    %c0_34 = arith.constant 0 : index
    %c0_35 = arith.constant 0 : index
    %c0_36 = arith.constant 0 : index
    %44 = vector.load %arg9[%c0_34, %c0_35, %c0_36] : memref<1x32x192xf32, #tpu.memory_space<vmem>>, vector<1x32x192xf32>
    %45 = vector.shape_cast %44 : vector<1x32x192xf32> to vector<32x192xf32>
    %46 = vector.shape_cast %43 : vector<32x192xf32> to vector<1x32x192xf32>
    tpu.vector_store %arg9[%c0_34, %c0_35, %c0_36], %46 {strides = array<i32>} : memref<1x32x192xf32, #tpu.memory_space<vmem>>, vector<1x32x192xf32>,
    return
  }
  func.func @transform_0(%arg0: i32) -> (i32, i32, i32) {
    %c0_i32 = arith.constant 0 : i32
    %c0_i32_0 = arith.constant 0 : i32
    %c0_i32_1 = arith.constant 0 : i32
    return %arg0, %c0_i32, %c0_i32_0 : i32, i32, i32
  }
  func.func @transform_1(%arg0: i32) -> (i32, i32, i32) {
    %c0_i32 = arith.constant 0 : i32
    %c0_i32_0 = arith.constant 0 : i32
    %c0_i32_1 = arith.constant 0 : i32
    %c0_i32_2 = arith.constant 0 : i32
    return %c0_i32, %c0_i32_0, %c0_i32_1 : i32, i32, i32
  }
  func.func @transform_2(%arg0: i32) -> (i32, i32) {
    %c0_i32 = arith.constant 0 : i32
    %c0_i32_0 = arith.constant 0 : i32
    %c0_i32_1 = arith.constant 0 : i32
    return %c0_i32, %c0_i32_0 : i32, i32
  }
  func.func @transform_3(%arg0: i32) -> (i32, i32, i32) {
    %c0_i32 = arith.constant 0 : i32
    %c0_i32_0 = arith.constant 0 : i32
    %c0_i32_1 = arith.constant 0 : i32
    return %arg0, %c0_i32, %c0_i32_0 : i32, i32, i32
  }
  func.func @transform_4(%arg0: i32) -> (i32, i32) {
    %c0_i32 = arith.constant 0 : i32
    %c0_i32_0 = arith.constant 0 : i32
    %c0_i32_1 = arith.constant 0 : i32
    return %c0_i32, %c0_i32_0 : i32, i32
  }
  func.func @transform_5(%arg0: i32) -> (i32, i32) {
    %c0_i32 = arith.constant 0 : i32
    %c0_i32_0 = arith.constant 0 : i32
    %c0_i32_1 = arith.constant 0 : i32
    return %c0_i32, %c0_i32_0 : i32, i32
  }
  func.func @transform_6(%arg0: i32) -> (i32, i32) {
    %c0_i32 = arith.constant 0 : i32
    %c0_i32_0 = arith.constant 0 : i32
    %c0_i32_1 = arith.constant 0 : i32
    return %c0_i32, %c0_i32_0 : i32, i32
  }
  func.func @transform_7(%arg0: i32) -> (i32, i32) {
    %c0_i32 = arith.constant 0 : i32
    %c0_i32_0 = arith.constant 0 : i32
    %c0_i32_1 = arith.constant 0 : i32
    return %c0_i32, %c0_i32_0 : i32, i32
  }
  func.func @transform_8(%arg0: i32) -> (i32, i32, i32) {
    %c0_i32 = arith.constant 0 : i32
    %c0_i32_0 = arith.constant 0 : i32
    %c0_i32_1 = arith.constant 0 : i32
    return %arg0, %c0_i32, %c0_i32_0 : i32, i32, i32
  }
}

module attributes {stable_mosaic.version = 11 : i64} {
  func.func @kernel(%arg0: i32, %arg1: memref<1x96x208xbf16, #tpu.memory_space<vmem>>, %arg2: memref<2x64x96xbf16, #tpu.memory_space<vmem>>, %arg3: memref<64x1xf32, #tpu.memory_space<vmem>>, %arg4: memref<1x64x200xf32, #tpu.memory_space<vmem>>) attributes {dimension_semantics = [#tpu.dimension_semantics<parallel>], iteration_bounds = array<i64: 2>, scalar_prefetch = 0 : i64, scratch_operands = 0 : i64, tpu.core_type = #tpu.core_type<tc>, window_params = [{transform_indices = @transform_0, window_bounds = array<i64: 1, 96, 208>}, {pipeline_mode = #tpu.pipeline_mode<synchronous>, transform_indices = @transform_1, window_bounds = array<i64: 2, 64, 96>}, {pipeline_mode = #tpu.pipeline_mode<synchronous>, transform_indices = @transform_2, window_bounds = array<i64: 64, 1>}, {transform_indices = @transform_3, window_bounds = array<i64: 1, 64, 200>}]} {
    %c0 = arith.constant 0 : index
    %c0_0 = arith.constant 0 : index
    %c0_1 = arith.constant 0 : index
    %0 = vector.load %arg2[%c0, %c0_0, %c0_1] : memref<2x64x96xbf16, #tpu.memory_space<vmem>>, vector<1x64x96xbf16>
    %1 = vector.shape_cast %0 : vector<1x64x96xbf16> to vector<64x96xbf16>
    %c0_2 = arith.constant 0 : index
    %c0_3 = arith.constant 0 : index
    %c0_4 = arith.constant 0 : index
    %2 = vector.load %arg1[%c0_2, %c0_3, %c0_4] : memref<1x96x208xbf16, #tpu.memory_space<vmem>>, vector<1x96x200xbf16>
    %3 = vector.shape_cast %2 : vector<1x96x200xbf16> to vector<96x200xbf16>
    %cst = arith.constant dense<0.000000e+00> : vector<64x200xf32>
    %4 = tpu.matmul %1, %3, %cst {dimension_numbers = #tpu.dot_dimension_numbers<[1], [0], [0], [1], [0, 0, 1, 1], [], []>} : vector<64x96xbf16>, vector<96x200xbf16>, vector<64x200xf32> -> vector<64x200xf32>
    %c0_5 = arith.constant 0 : index
    %c0_6 = arith.constant 0 : index
    %c8 = arith.constant 8 : index
    %5 = vector.load %arg1[%c0_5, %c0_6, %c8] : memref<1x96x208xbf16, #tpu.memory_space<vmem>>, vector<1x96x200xbf16>
    %6 = vector.shape_cast %5 : vector<1x96x200xbf16> to vector<96x200xbf16>
    %c1 = arith.constant 1 : index
    %c0_7 = arith.constant 0 : index
    %c0_8 = arith.constant 0 : index
    %7 = vector.load %arg2[%c1, %c0_7, %c0_8] : memref<2x64x96xbf16, #tpu.memory_space<vmem>>, vector<1x64x96xbf16>
    %8 = vector.shape_cast %7 : vector<1x64x96xbf16> to vector<64x96xbf16>
    %cst_9 = arith.constant dense<0.000000e+00> : vector<64x200xf32>
    %9 = tpu.matmul %8, %6, %cst_9 {dimension_numbers = #tpu.dot_dimension_numbers<[1], [0], [0], [1], [0, 0, 1, 1], [], []>} : vector<64x96xbf16>, vector<96x200xbf16>, vector<64x200xf32> -> vector<64x200xf32>
    %10 = arith.addf %4, %9 : vector<64x200xf32>
    %c0_10 = arith.constant 0 : index
    %c0_11 = arith.constant 0 : index
    %11 = vector.load %arg3[%c0_10, %c0_11] : memref<64x1xf32, #tpu.memory_space<vmem>>, vector<64x1xf32>
    %12 = vector.broadcast %11 : vector<64x1xf32> to vector<64x200xf32>
    %13 = arith.addf %10, %12 : vector<64x200xf32>
    %c0_12 = arith.constant 0 : index
    %c0_13 = arith.constant 0 : index
    %c0_14 = arith.constant 0 : index
    %14 = vector.load %arg4[%c0_12, %c0_13, %c0_14] : memref<1x64x200xf32, #tpu.memory_space<vmem>>, vector<1x64x200xf32>
    %15 = vector.shape_cast %14 : vector<1x64x200xf32> to vector<64x200xf32>
    %16 = vector.shape_cast %13 : vector<64x200xf32> to vector<1x64x200xf32>
    tpu.vector_store %arg4[%c0_12, %c0_13, %c0_14], %16 {strides = array<i32>} : memref<1x64x200xf32, #tpu.memory_space<vmem>>, vector<1x64x200xf32>,
    return
  }
  func.func @transform_0(%arg0: i32) -> (i32, i32, i32) {
    %c0_i32 = arith.constant 0 : i32
    %c0_i32_0 = arith.constant 0 : i32
    %c0_i32_1 = arith.constant 0 : i32
    return %arg0, %c0_i32, %c0_i32_0 : i32, i32, i32
  }
  func.func @transform_1(%arg0: i32) -> (i32, i32, i32) {
    %c0_i32 = arith.constant 0 : i32
    %c0_i32_0 = arith.constant 0 : i32
    %c0_i32_1 = arith.constant 0 : i32
    %c0_i32_2 = arith.constant 0 : i32
    return %c0_i32, %c0_i32_0, %c0_i32_1 : i32, i32, i32
  }
  func.func @transform_2(%arg0: i32) -> (i32, i32) {
    %c0_i32 = arith.constant 0 : i32
    %c0_i32_0 = arith.constant 0 : i32
    %c0_i32_1 = arith.constant 0 : i32
    return %c0_i32, %c0_i32_0 : i32, i32
  }
  func.func @transform_3(%arg0: i32) -> (i32, i32, i32) {
    %c0_i32 = arith.constant 0 : i32
    %c0_i32_0 = arith.constant 0 : i32
    %c0_i32_1 = arith.constant 0 : i32
    return %arg0, %c0_i32, %c0_i32_0 : i32, i32, i32
  }
}

module attributes {stable_mosaic.version = 11 : i64} {
  func.func @kernel(%arg0: i32, %arg1: memref<1x192x100xbf16, #tpu.memory_space<vmem>>, %arg2: memref<1x64x192xbf16, #tpu.memory_space<vmem>>, %arg3: memref<64x1xf32, #tpu.memory_space<vmem>>, %arg4: memref<1x64x100xf32, #tpu.memory_space<vmem>>) attributes {dimension_semantics = [#tpu.dimension_semantics<parallel>], iteration_bounds = array<i64: 2>, scalar_prefetch = 0 : i64, scratch_operands = 0 : i64, tpu.core_type = #tpu.core_type<tc>, window_params = [{transform_indices = @transform_0, window_bounds = array<i64: 1, 192, 100>}, {pipeline_mode = #tpu.pipeline_mode<synchronous>, transform_indices = @transform_1, window_bounds = array<i64: 1, 64, 192>}, {pipeline_mode = #tpu.pipeline_mode<synchronous>, transform_indices = @transform_2, window_bounds = array<i64: 64, 1>}, {transform_indices = @transform_3, window_bounds = array<i64: 1, 64, 100>}]} {
    %c0 = arith.constant 0 : index
    %c0_0 = arith.constant 0 : index
    %c0_1 = arith.constant 0 : index
    %0 = vector.load %arg2[%c0, %c0_0, %c0_1] : memref<1x64x192xbf16, #tpu.memory_space<vmem>>, vector<1x64x192xbf16>
    %1 = vector.shape_cast %0 : vector<1x64x192xbf16> to vector<64x192xbf16>
    %c0_2 = arith.constant 0 : index
    %c0_3 = arith.constant 0 : index
    %c0_4 = arith.constant 0 : index
    %2 = vector.load %arg1[%c0_2, %c0_3, %c0_4] : memref<1x192x100xbf16, #tpu.memory_space<vmem>>, vector<1x192x100xbf16>
    %3 = vector.shape_cast %2 : vector<1x192x100xbf16> to vector<192x100xbf16>
    %cst = arith.constant dense<0.000000e+00> : vector<64x100xf32>
    %4 = tpu.matmul %1, %3, %cst {dimension_numbers = #tpu.dot_dimension_numbers<[1], [0], [0], [1], [0, 0, 1, 1], [], []>} : vector<64x192xbf16>, vector<192x100xbf16>, vector<64x100xf32> -> vector<64x100xf32>
    %c0_5 = arith.constant 0 : index
    %c0_6 = arith.constant 0 : index
    %5 = vector.load %arg3[%c0_5, %c0_6] : memref<64x1xf32, #tpu.memory_space<vmem>>, vector<64x1xf32>
    %6 = vector.broadcast %5 : vector<64x1xf32> to vector<64x100xf32>
    %7 = arith.addf %4, %6 : vector<64x100xf32>
    %c0_7 = arith.constant 0 : index
    %c0_8 = arith.constant 0 : index
    %c0_9 = arith.constant 0 : index
    %8 = vector.load %arg4[%c0_7, %c0_8, %c0_9] : memref<1x64x100xf32, #tpu.memory_space<vmem>>, vector<1x64x100xf32>
    %9 = vector.shape_cast %8 : vector<1x64x100xf32> to vector<64x100xf32>
    %10 = vector.shape_cast %7 : vector<64x100xf32> to vector<1x64x100xf32>
    tpu.vector_store %arg4[%c0_7, %c0_8, %c0_9], %10 {strides = array<i32>} : memref<1x64x100xf32, #tpu.memory_space<vmem>>, vector<1x64x100xf32>,
    return
  }
  func.func @transform_0(%arg0: i32) -> (i32, i32, i32) {
    %c0_i32 = arith.constant 0 : i32
    %c0_i32_0 = arith.constant 0 : i32
    %c0_i32_1 = arith.constant 0 : i32
    return %arg0, %c0_i32, %c0_i32_0 : i32, i32, i32
  }
  func.func @transform_1(%arg0: i32) -> (i32, i32, i32) {
    %c0_i32 = arith.constant 0 : i32
    %c0_i32_0 = arith.constant 0 : i32
    %c0_i32_1 = arith.constant 0 : i32
    %c0_i32_2 = arith.constant 0 : i32
    return %c0_i32, %c0_i32_0, %c0_i32_1 : i32, i32, i32
  }
  func.func @transform_2(%arg0: i32) -> (i32, i32) {
    %c0_i32 = arith.constant 0 : i32
    %c0_i32_0 = arith.constant 0 : i32
    %c0_i32_1 = arith.constant 0 : i32
    return %c0_i32, %c0_i32_0 : i32, i32
  }
  func.func @transform_3(%arg0: i32) -> (i32, i32, i32) {
    %c0_i32 = arith.constant 0 : i32
    %c0_i32_0 = arith.constant 0 : i32
    %c0_i32_1 = arith.constant 0 : i32
    return %arg0, %c0_i32, %c0_i32_0 : i32, i32, i32
  }
}

module attributes {stable_mosaic.version = 11 : i64} {
  func.func @kernel(%arg0: i32, %arg1: memref<1x192x108xbf16, #tpu.memory_space<vmem>>, %arg2: memref<3x64x192xbf16, #tpu.memory_space<vmem>>, %arg3: memref<64x1xf32, #tpu.memory_space<vmem>>, %arg4: memref<1x64x100xf32, #tpu.memory_space<vmem>>, %arg5: memref<16x64xf32, #tpu.memory_space<vmem>>, %arg6: memref<16x1xf32, #tpu.memory_space<vmem>>, %arg7: memref<64x16xf32, #tpu.memory_space<vmem>>, %arg8: memref<64x1xf32, #tpu.memory_space<vmem>>, %arg9: memref<1x64x100xf32, #tpu.memory_space<vmem>>) attributes {dimension_semantics = [#tpu.dimension_semantics<parallel>], iteration_bounds = array<i64: 2>, scalar_prefetch = 0 : i64, scratch_operands = 0 : i64, tpu.core_type = #tpu.core_type<tc>, window_params = [{transform_indices = @transform_0, window_bounds = array<i64: 1, 192, 108>}, {pipeline_mode = #tpu.pipeline_mode<synchronous>, transform_indices = @transform_1, window_bounds = array<i64: 3, 64, 192>}, {pipeline_mode = #tpu.pipeline_mode<synchronous>, transform_indices = @transform_2, window_bounds = array<i64: 64, 1>}, {transform_indices = @transform_3, window_bounds = array<i64: 1, 64, 100>}, {pipeline_mode = #tpu.pipeline_mode<synchronous>, transform_indices = @transform_4, window_bounds = array<i64: 16, 64>}, {pipeline_mode = #tpu.pipeline_mode<synchronous>, transform_indices = @transform_5, window_bounds = array<i64: 16, 1>}, {pipeline_mode = #tpu.pipeline_mode<synchronous>, transform_indices = @transform_6, window_bounds = array<i64: 64, 16>}, {pipeline_mode = #tpu.pipeline_mode<synchronous>, transform_indices = @transform_7, window_bounds = array<i64: 64, 1>}, {transform_indices = @transform_8, window_bounds = array<i64: 1, 64, 100>}]} {
    %c0 = arith.constant 0 : index
    %c0_0 = arith.constant 0 : index
    %c0_1 = arith.constant 0 : index
    %0 = vector.load %arg2[%c0, %c0_0, %c0_1] : memref<3x64x192xbf16, #tpu.memory_space<vmem>>, vector<1x64x192xbf16>
    %1 = vector.shape_cast %0 : vector<1x64x192xbf16> to vector<64x192xbf16>
    %c0_2 = arith.constant 0 : index
    %c0_3 = arith.constant 0 : index
    %c0_4 = arith.constant 0 : index
    %2 = vector.load %arg1[%c0_2, %c0_3, %c0_4] : memref<1x192x108xbf16, #tpu.memory_space<vmem>>, vector<1x192x100xbf16>
    %3 = vector.shape_cast %2 : vector<1x192x100xbf16> to vector<192x100xbf16>
    %cst = arith.constant dense<0.000000e+00> : vector<64x100xf32>
    %4 = tpu.matmul %1, %3, %cst {dimension_numbers = #tpu.dot_dimension_numbers<[1], [0], [0], [1], [0, 0, 1, 1], [], []>} : vector<64x192xbf16>, vector<192x100xbf16>, vector<64x100xf32> -> vector<64x100xf32>
    %c0_5 = arith.constant 0 : index
    %c0_6 = arith.constant 0 : index
    %c4 = arith.constant 4 : index
    %5 = vector.load %arg1[%c0_5, %c0_6, %c4] : memref<1x192x108xbf16, #tpu.memory_space<vmem>>, vector<1x192x100xbf16>
    %6 = vector.shape_cast %5 : vector<1x192x100xbf16> to vector<192x100xbf16>
    %c1 = arith.constant 1 : index
    %c0_7 = arith.constant 0 : index
    %c0_8 = arith.constant 0 : index
    %7 = vector.load %arg2[%c1, %c0_7, %c0_8] : memref<3x64x192xbf16, #tpu.memory_space<vmem>>, vector<1x64x192xbf16>
    %8 = vector.shape_cast %7 : vector<1x64x192xbf16> to vector<64x192xbf16>
    %cst_9 = arith.constant dense<0.000000e+00> : vector<64x100xf32>
    %9 = tpu.matmul %8, %6, %cst_9 {dimension_numbers = #tpu.dot_dimension_numbers<[1], [0], [0], [1], [0, 0, 1, 1], [], []>} : vector<64x192xbf16>, vector<192x100xbf16>, vector<64x100xf32> -> vector<64x100xf32>
    %10 = arith.addf %4, %9 : vector<64x100xf32>
    %c0_10 = arith.constant 0 : index
    %c0_11 = arith.constant 0 : index
    %c8 = arith.constant 8 : index
    %11 = vector.load %arg1[%c0_10, %c0_11, %c8] : memref<1x192x108xbf16, #tpu.memory_space<vmem>>, vector<1x192x100xbf16>
    %12 = vector.shape_cast %11 : vector<1x192x100xbf16> to vector<192x100xbf16>
    %c2 = arith.constant 2 : index
    %c0_12 = arith.constant 0 : index
    %c0_13 = arith.constant 0 : index
    %13 = vector.load %arg2[%c2, %c0_12, %c0_13] : memref<3x64x192xbf16, #tpu.memory_space<vmem>>, vector<1x64x192xbf16>
    %14 = vector.shape_cast %13 : vector<1x64x192xbf16> to vector<64x192xbf16>
    %cst_14 = arith.constant dense<0.000000e+00> : vector<64x100xf32>
    %15 = tpu.matmul %14, %12, %cst_14 {dimension_numbers = #tpu.dot_dimension_numbers<[1], [0], [0], [1], [0, 0, 1, 1], [], []>} : vector<64x192xbf16>, vector<192x100xbf16>, vector<64x100xf32> -> vector<64x100xf32>
    %16 = arith.addf %10, %15 : vector<64x100xf32>
    %c0_15 = arith.constant 0 : index
    %c0_16 = arith.constant 0 : index
    %17 = vector.load %arg3[%c0_15, %c0_16] : memref<64x1xf32, #tpu.memory_space<vmem>>, vector<64x1xf32>
    %18 = vector.broadcast %17 : vector<64x1xf32> to vector<64x100xf32>
    %19 = arith.addf %16, %18 : vector<64x100xf32>
    %cst_17 = arith.constant dense<0.000000e+00> : vector<64xf32>
    %20 = vector.multi_reduction <add>, %19, %cst_17 [1] : vector<64x100xf32> to vector<64xf32>
    %21 = vector.shape_cast %20 : vector<64xf32> to vector<64x1xf32>
    %cst_18 = arith.constant 0.00999999977 : f32
    %22 = vector.broadcast %cst_18 : f32 to vector<64x1xf32>
    %23 = arith.mulf %21, %22 : vector<64x1xf32>
    %c0_19 = arith.constant 0 : index
    %c0_20 = arith.constant 0 : index
    %24 = vector.load %arg5[%c0_19, %c0_20] : memref<16x64xf32, #tpu.memory_space<vmem>>, vector<16x64xf32>
    %cst_21 = arith.constant dense<0.000000e+00> : vector<16x1xf32>
    %25 = tpu.matmul %24, %23, %cst_21 {dimension_numbers = #tpu.dot_dimension_numbers<[1], [0], [0], [1], [0, 0, 1, 1], [], []>} : vector<16x64xf32>, vector<64x1xf32>, vector<16x1xf32> -> vector<16x1xf32>
    %c0_22 = arith.constant 0 : index
    %c0_23 = arith.constant 0 : index
    %26 = vector.load %arg6[%c0_22, %c0_23] : memref<16x1xf32, #tpu.memory_space<vmem>>, vector<16x1xf32>
    %27 = arith.addf %25, %26 : vector<16x1xf32>
    %cst_24 = arith.constant 0.000000e+00 : f32
    %28 = vector.broadcast %cst_24 : f32 to vector<16x1xf32>
    %29 = arith.maximumf %27, %28 : vector<16x1xf32>
    %c0_25 = arith.constant 0 : index
    %c0_26 = arith.constant 0 : index
    %30 = vector.load %arg7[%c0_25, %c0_26] : memref<64x16xf32, #tpu.memory_space<vmem>>, vector<64x16xf32>
    %cst_27 = arith.constant dense<0.000000e+00> : vector<64x1xf32>
    %31 = tpu.matmul %30, %29, %cst_27 {dimension_numbers = #tpu.dot_dimension_numbers<[1], [0], [0], [1], [0, 0, 1, 1], [], []>} : vector<64x16xf32>, vector<16x1xf32>, vector<64x1xf32> -> vector<64x1xf32>
    %c0_28 = arith.constant 0 : index
    %c0_29 = arith.constant 0 : index
    %32 = vector.load %arg8[%c0_28, %c0_29] : memref<64x1xf32, #tpu.memory_space<vmem>>, vector<64x1xf32>
    %33 = arith.addf %31, %32 : vector<64x1xf32>
    %34 = arith.negf %33 : vector<64x1xf32>
    %35 = math.exp %34 : vector<64x1xf32>
    %cst_30 = arith.constant 1.000000e+00 : f32
    %36 = vector.broadcast %cst_30 : f32 to vector<64x1xf32>
    %37 = arith.addf %36, %35 : vector<64x1xf32>
    %38 = arith.divf %36, %37 : vector<64x1xf32>
    %39 = vector.broadcast %38 : vector<64x1xf32> to vector<64x100xf32>
    %40 = arith.mulf %19, %39 : vector<64x100xf32>
    %c0_31 = arith.constant 0 : index
    %c0_32 = arith.constant 0 : index
    %c0_33 = arith.constant 0 : index
    %41 = vector.load %arg4[%c0_31, %c0_32, %c0_33] : memref<1x64x100xf32, #tpu.memory_space<vmem>>, vector<1x64x100xf32>
    %42 = vector.shape_cast %41 : vector<1x64x100xf32> to vector<64x100xf32>
    %43 = arith.addf %40, %42 : vector<64x100xf32>
    %c0_34 = arith.constant 0 : index
    %c0_35 = arith.constant 0 : index
    %c0_36 = arith.constant 0 : index
    %44 = vector.load %arg9[%c0_34, %c0_35, %c0_36] : memref<1x64x100xf32, #tpu.memory_space<vmem>>, vector<1x64x100xf32>
    %45 = vector.shape_cast %44 : vector<1x64x100xf32> to vector<64x100xf32>
    %46 = vector.shape_cast %43 : vector<64x100xf32> to vector<1x64x100xf32>
    tpu.vector_store %arg9[%c0_34, %c0_35, %c0_36], %46 {strides = array<i32>} : memref<1x64x100xf32, #tpu.memory_space<vmem>>, vector<1x64x100xf32>,
    return
  }
  func.func @transform_0(%arg0: i32) -> (i32, i32, i32) {
    %c0_i32 = arith.constant 0 : i32
    %c0_i32_0 = arith.constant 0 : i32
    %c0_i32_1 = arith.constant 0 : i32
    return %arg0, %c0_i32, %c0_i32_0 : i32, i32, i32
  }
  func.func @transform_1(%arg0: i32) -> (i32, i32, i32) {
    %c0_i32 = arith.constant 0 : i32
    %c0_i32_0 = arith.constant 0 : i32
    %c0_i32_1 = arith.constant 0 : i32
    %c0_i32_2 = arith.constant 0 : i32
    return %c0_i32, %c0_i32_0, %c0_i32_1 : i32, i32, i32
  }
  func.func @transform_2(%arg0: i32) -> (i32, i32) {
    %c0_i32 = arith.constant 0 : i32
    %c0_i32_0 = arith.constant 0 : i32
    %c0_i32_1 = arith.constant 0 : i32
    return %c0_i32, %c0_i32_0 : i32, i32
  }
  func.func @transform_3(%arg0: i32) -> (i32, i32, i32) {
    %c0_i32 = arith.constant 0 : i32
    %c0_i32_0 = arith.constant 0 : i32
    %c0_i32_1 = arith.constant 0 : i32
    return %arg0, %c0_i32, %c0_i32_0 : i32, i32, i32
  }
  func.func @transform_4(%arg0: i32) -> (i32, i32) {
    %c0_i32 = arith.constant 0 : i32
    %c0_i32_0 = arith.constant 0 : i32
    %c0_i32_1 = arith.constant 0 : i32
    return %c0_i32, %c0_i32_0 : i32, i32
  }
  func.func @transform_5(%arg0: i32) -> (i32, i32) {
    %c0_i32 = arith.constant 0 : i32
    %c0_i32_0 = arith.constant 0 : i32
    %c0_i32_1 = arith.constant 0 : i32
    return %c0_i32, %c0_i32_0 : i32, i32
  }
  func.func @transform_6(%arg0: i32) -> (i32, i32) {
    %c0_i32 = arith.constant 0 : i32
    %c0_i32_0 = arith.constant 0 : i32
    %c0_i32_1 = arith.constant 0 : i32
    return %c0_i32, %c0_i32_0 : i32, i32
  }
  func.func @transform_7(%arg0: i32) -> (i32, i32) {
    %c0_i32 = arith.constant 0 : i32
    %c0_i32_0 = arith.constant 0 : i32
    %c0_i32_1 = arith.constant 0 : i32
    return %c0_i32, %c0_i32_0 : i32, i32
  }
  func.func @transform_8(%arg0: i32) -> (i32, i32, i32) {
    %c0_i32 = arith.constant 0 : i32
    %c0_i32_0 = arith.constant 0 : i32
    %c0_i32_1 = arith.constant 0 : i32
    return %arg0, %c0_i32, %c0_i32_0 : i32, i32, i32
  }
}

module attributes {stable_mosaic.version = 11 : i64} {
  func.func @kernel(%arg0: i32, %arg1: memref<1x192x108xbf16, #tpu.memory_space<vmem>>, %arg2: memref<2x64x192xbf16, #tpu.memory_space<vmem>>, %arg3: memref<64x1xf32, #tpu.memory_space<vmem>>, %arg4: memref<1x64x104xf32, #tpu.memory_space<vmem>>) attributes {dimension_semantics = [#tpu.dimension_semantics<parallel>], iteration_bounds = array<i64: 2>, scalar_prefetch = 0 : i64, scratch_operands = 0 : i64, tpu.core_type = #tpu.core_type<tc>, window_params = [{transform_indices = @transform_0, window_bounds = array<i64: 1, 192, 108>}, {pipeline_mode = #tpu.pipeline_mode<synchronous>, transform_indices = @transform_1, window_bounds = array<i64: 2, 64, 192>}, {pipeline_mode = #tpu.pipeline_mode<synchronous>, transform_indices = @transform_2, window_bounds = array<i64: 64, 1>}, {transform_indices = @transform_3, window_bounds = array<i64: 1, 64, 104>}]} {
    %c0 = arith.constant 0 : index
    %c0_0 = arith.constant 0 : index
    %c0_1 = arith.constant 0 : index
    %0 = vector.load %arg2[%c0, %c0_0, %c0_1] : memref<2x64x192xbf16, #tpu.memory_space<vmem>>, vector<1x64x192xbf16>
    %1 = vector.shape_cast %0 : vector<1x64x192xbf16> to vector<64x192xbf16>
    %c0_2 = arith.constant 0 : index
    %c0_3 = arith.constant 0 : index
    %c0_4 = arith.constant 0 : index
    %2 = vector.load %arg1[%c0_2, %c0_3, %c0_4] : memref<1x192x108xbf16, #tpu.memory_space<vmem>>, vector<1x192x104xbf16>
    %3 = vector.shape_cast %2 : vector<1x192x104xbf16> to vector<192x104xbf16>
    %cst = arith.constant dense<0.000000e+00> : vector<64x104xf32>
    %4 = tpu.matmul %1, %3, %cst {dimension_numbers = #tpu.dot_dimension_numbers<[1], [0], [0], [1], [0, 0, 1, 1], [], []>} : vector<64x192xbf16>, vector<192x104xbf16>, vector<64x104xf32> -> vector<64x104xf32>
    %c0_5 = arith.constant 0 : index
    %c0_6 = arith.constant 0 : index
    %c4 = arith.constant 4 : index
    %5 = vector.load %arg1[%c0_5, %c0_6, %c4] : memref<1x192x108xbf16, #tpu.memory_space<vmem>>, vector<1x192x104xbf16>
    %6 = vector.shape_cast %5 : vector<1x192x104xbf16> to vector<192x104xbf16>
    %c1 = arith.constant 1 : index
    %c0_7 = arith.constant 0 : index
    %c0_8 = arith.constant 0 : index
    %7 = vector.load %arg2[%c1, %c0_7, %c0_8] : memref<2x64x192xbf16, #tpu.memory_space<vmem>>, vector<1x64x192xbf16>
    %8 = vector.shape_cast %7 : vector<1x64x192xbf16> to vector<64x192xbf16>
    %cst_9 = arith.constant dense<0.000000e+00> : vector<64x104xf32>
    %9 = tpu.matmul %8, %6, %cst_9 {dimension_numbers = #tpu.dot_dimension_numbers<[1], [0], [0], [1], [0, 0, 1, 1], [], []>} : vector<64x192xbf16>, vector<192x104xbf16>, vector<64x104xf32> -> vector<64x104xf32>
    %10 = arith.addf %4, %9 : vector<64x104xf32>
    %c0_10 = arith.constant 0 : index
    %c0_11 = arith.constant 0 : index
    %11 = vector.load %arg3[%c0_10, %c0_11] : memref<64x1xf32, #tpu.memory_space<vmem>>, vector<64x1xf32>
    %12 = vector.broadcast %11 : vector<64x1xf32> to vector<64x104xf32>
    %13 = arith.addf %10, %12 : vector<64x104xf32>
    %c0_12 = arith.constant 0 : index
    %c0_13 = arith.constant 0 : index
    %c0_14 = arith.constant 0 : index
    %14 = vector.load %arg4[%c0_12, %c0_13, %c0_14] : memref<1x64x104xf32, #tpu.memory_space<vmem>>, vector<1x64x104xf32>
    %15 = vector.shape_cast %14 : vector<1x64x104xf32> to vector<64x104xf32>
    %16 = vector.shape_cast %13 : vector<64x104xf32> to vector<1x64x104xf32>
    tpu.vector_store %arg4[%c0_12, %c0_13, %c0_14], %16 {strides = array<i32>} : memref<1x64x104xf32, #tpu.memory_space<vmem>>, vector<1x64x104xf32>,
    return
  }
  func.func @transform_0(%arg0: i32) -> (i32, i32, i32) {
    %c0_i32 = arith.constant 0 : i32
    %c0_i32_0 = arith.constant 0 : i32
    %c0_i32_1 = arith.constant 0 : i32
    return %arg0, %c0_i32, %c0_i32_0 : i32, i32, i32
  }
  func.func @transform_1(%arg0: i32) -> (i32, i32, i32) {
    %c0_i32 = arith.constant 0 : i32
    %c0_i32_0 = arith.constant 0 : i32
    %c0_i32_1 = arith.constant 0 : i32
    %c0_i32_2 = arith.constant 0 : i32
    return %c0_i32, %c0_i32_0, %c0_i32_1 : i32, i32, i32
  }
  func.func @transform_2(%arg0: i32) -> (i32, i32) {
    %c0_i32 = arith.constant 0 : i32
    %c0_i32_0 = arith.constant 0 : i32
    %c0_i32_1 = arith.constant 0 : i32
    return %c0_i32, %c0_i32_0 : i32, i32
  }
  func.func @transform_3(%arg0: i32) -> (i32, i32, i32) {
    %c0_i32 = arith.constant 0 : i32
    %c0_i32_0 = arith.constant 0 : i32
    %c0_i32_1 = arith.constant 0 : i32
    return %arg0, %c0_i32, %c0_i32_0 : i32, i32, i32
  }
}

module attributes {stable_mosaic.version = 11 : i64} {
  func.func @kernel(%arg0: i32, %arg1: memref<1x192x52xbf16, #tpu.memory_space<vmem>>, %arg2: memref<1x64x192xbf16, #tpu.memory_space<vmem>>, %arg3: memref<64x1xf32, #tpu.memory_space<vmem>>, %arg4: memref<1x64x52xf32, #tpu.memory_space<vmem>>) attributes {dimension_semantics = [#tpu.dimension_semantics<parallel>], iteration_bounds = array<i64: 2>, scalar_prefetch = 0 : i64, scratch_operands = 0 : i64, tpu.core_type = #tpu.core_type<tc>, window_params = [{transform_indices = @transform_0, window_bounds = array<i64: 1, 192, 52>}, {pipeline_mode = #tpu.pipeline_mode<synchronous>, transform_indices = @transform_1, window_bounds = array<i64: 1, 64, 192>}, {pipeline_mode = #tpu.pipeline_mode<synchronous>, transform_indices = @transform_2, window_bounds = array<i64: 64, 1>}, {transform_indices = @transform_3, window_bounds = array<i64: 1, 64, 52>}]} {
    %c0 = arith.constant 0 : index
    %c0_0 = arith.constant 0 : index
    %c0_1 = arith.constant 0 : index
    %0 = vector.load %arg2[%c0, %c0_0, %c0_1] : memref<1x64x192xbf16, #tpu.memory_space<vmem>>, vector<1x64x192xbf16>
    %1 = vector.shape_cast %0 : vector<1x64x192xbf16> to vector<64x192xbf16>
    %c0_2 = arith.constant 0 : index
    %c0_3 = arith.constant 0 : index
    %c0_4 = arith.constant 0 : index
    %2 = vector.load %arg1[%c0_2, %c0_3, %c0_4] : memref<1x192x52xbf16, #tpu.memory_space<vmem>>, vector<1x192x52xbf16>
    %3 = vector.shape_cast %2 : vector<1x192x52xbf16> to vector<192x52xbf16>
    %cst = arith.constant dense<0.000000e+00> : vector<64x52xf32>
    %4 = tpu.matmul %1, %3, %cst {dimension_numbers = #tpu.dot_dimension_numbers<[1], [0], [0], [1], [0, 0, 1, 1], [], []>} : vector<64x192xbf16>, vector<192x52xbf16>, vector<64x52xf32> -> vector<64x52xf32>
    %c0_5 = arith.constant 0 : index
    %c0_6 = arith.constant 0 : index
    %5 = vector.load %arg3[%c0_5, %c0_6] : memref<64x1xf32, #tpu.memory_space<vmem>>, vector<64x1xf32>
    %6 = vector.broadcast %5 : vector<64x1xf32> to vector<64x52xf32>
    %7 = arith.addf %4, %6 : vector<64x52xf32>
    %c0_7 = arith.constant 0 : index
    %c0_8 = arith.constant 0 : index
    %c0_9 = arith.constant 0 : index
    %8 = vector.load %arg4[%c0_7, %c0_8, %c0_9] : memref<1x64x52xf32, #tpu.memory_space<vmem>>, vector<1x64x52xf32>
    %9 = vector.shape_cast %8 : vector<1x64x52xf32> to vector<64x52xf32>
    %10 = vector.shape_cast %7 : vector<64x52xf32> to vector<1x64x52xf32>
    tpu.vector_store %arg4[%c0_7, %c0_8, %c0_9], %10 {strides = array<i32>} : memref<1x64x52xf32, #tpu.memory_space<vmem>>, vector<1x64x52xf32>,
    return
  }
  func.func @transform_0(%arg0: i32) -> (i32, i32, i32) {
    %c0_i32 = arith.constant 0 : i32
    %c0_i32_0 = arith.constant 0 : i32
    %c0_i32_1 = arith.constant 0 : i32
    return %arg0, %c0_i32, %c0_i32_0 : i32, i32, i32
  }
  func.func @transform_1(%arg0: i32) -> (i32, i32, i32) {
    %c0_i32 = arith.constant 0 : i32
    %c0_i32_0 = arith.constant 0 : i32
    %c0_i32_1 = arith.constant 0 : i32
    %c0_i32_2 = arith.constant 0 : i32
    return %c0_i32, %c0_i32_0, %c0_i32_1 : i32, i32, i32
  }
  func.func @transform_2(%arg0: i32) -> (i32, i32) {
    %c0_i32 = arith.constant 0 : i32
    %c0_i32_0 = arith.constant 0 : i32
    %c0_i32_1 = arith.constant 0 : i32
    return %c0_i32, %c0_i32_0 : i32, i32
  }
  func.func @transform_3(%arg0: i32) -> (i32, i32, i32) {
    %c0_i32 = arith.constant 0 : i32
    %c0_i32_0 = arith.constant 0 : i32
    %c0_i32_1 = arith.constant 0 : i32
    return %arg0, %c0_i32, %c0_i32_0 : i32, i32, i32
  }
}

module attributes {stable_mosaic.version = 11 : i64} {
  func.func @kernel(%arg0: i32, %arg1: memref<1x192x56xbf16, #tpu.memory_space<vmem>>, %arg2: memref<3x64x192xbf16, #tpu.memory_space<vmem>>, %arg3: memref<64x1xf32, #tpu.memory_space<vmem>>, %arg4: memref<1x64x52xf32, #tpu.memory_space<vmem>>, %arg5: memref<16x64xf32, #tpu.memory_space<vmem>>, %arg6: memref<16x1xf32, #tpu.memory_space<vmem>>, %arg7: memref<64x16xf32, #tpu.memory_space<vmem>>, %arg8: memref<64x1xf32, #tpu.memory_space<vmem>>, %arg9: memref<1x64x52xf32, #tpu.memory_space<vmem>>) attributes {dimension_semantics = [#tpu.dimension_semantics<parallel>], iteration_bounds = array<i64: 2>, scalar_prefetch = 0 : i64, scratch_operands = 0 : i64, tpu.core_type = #tpu.core_type<tc>, window_params = [{transform_indices = @transform_0, window_bounds = array<i64: 1, 192, 56>}, {pipeline_mode = #tpu.pipeline_mode<synchronous>, transform_indices = @transform_1, window_bounds = array<i64: 3, 64, 192>}, {pipeline_mode = #tpu.pipeline_mode<synchronous>, transform_indices = @transform_2, window_bounds = array<i64: 64, 1>}, {transform_indices = @transform_3, window_bounds = array<i64: 1, 64, 52>}, {pipeline_mode = #tpu.pipeline_mode<synchronous>, transform_indices = @transform_4, window_bounds = array<i64: 16, 64>}, {pipeline_mode = #tpu.pipeline_mode<synchronous>, transform_indices = @transform_5, window_bounds = array<i64: 16, 1>}, {pipeline_mode = #tpu.pipeline_mode<synchronous>, transform_indices = @transform_6, window_bounds = array<i64: 64, 16>}, {pipeline_mode = #tpu.pipeline_mode<synchronous>, transform_indices = @transform_7, window_bounds = array<i64: 64, 1>}, {transform_indices = @transform_8, window_bounds = array<i64: 1, 64, 52>}]} {
    %c0 = arith.constant 0 : index
    %c0_0 = arith.constant 0 : index
    %c0_1 = arith.constant 0 : index
    %0 = vector.load %arg2[%c0, %c0_0, %c0_1] : memref<3x64x192xbf16, #tpu.memory_space<vmem>>, vector<1x64x192xbf16>
    %1 = vector.shape_cast %0 : vector<1x64x192xbf16> to vector<64x192xbf16>
    %c0_2 = arith.constant 0 : index
    %c0_3 = arith.constant 0 : index
    %c0_4 = arith.constant 0 : index
    %2 = vector.load %arg1[%c0_2, %c0_3, %c0_4] : memref<1x192x56xbf16, #tpu.memory_space<vmem>>, vector<1x192x52xbf16>
    %3 = vector.shape_cast %2 : vector<1x192x52xbf16> to vector<192x52xbf16>
    %cst = arith.constant dense<0.000000e+00> : vector<64x52xf32>
    %4 = tpu.matmul %1, %3, %cst {dimension_numbers = #tpu.dot_dimension_numbers<[1], [0], [0], [1], [0, 0, 1, 1], [], []>} : vector<64x192xbf16>, vector<192x52xbf16>, vector<64x52xf32> -> vector<64x52xf32>
    %c0_5 = arith.constant 0 : index
    %c0_6 = arith.constant 0 : index
    %c2 = arith.constant 2 : index
    %5 = vector.load %arg1[%c0_5, %c0_6, %c2] : memref<1x192x56xbf16, #tpu.memory_space<vmem>>, vector<1x192x52xbf16>
    %6 = vector.shape_cast %5 : vector<1x192x52xbf16> to vector<192x52xbf16>
    %c1 = arith.constant 1 : index
    %c0_7 = arith.constant 0 : index
    %c0_8 = arith.constant 0 : index
    %7 = vector.load %arg2[%c1, %c0_7, %c0_8] : memref<3x64x192xbf16, #tpu.memory_space<vmem>>, vector<1x64x192xbf16>
    %8 = vector.shape_cast %7 : vector<1x64x192xbf16> to vector<64x192xbf16>
    %cst_9 = arith.constant dense<0.000000e+00> : vector<64x52xf32>
    %9 = tpu.matmul %8, %6, %cst_9 {dimension_numbers = #tpu.dot_dimension_numbers<[1], [0], [0], [1], [0, 0, 1, 1], [], []>} : vector<64x192xbf16>, vector<192x52xbf16>, vector<64x52xf32> -> vector<64x52xf32>
    %10 = arith.addf %4, %9 : vector<64x52xf32>
    %c0_10 = arith.constant 0 : index
    %c0_11 = arith.constant 0 : index
    %c4 = arith.constant 4 : index
    %11 = vector.load %arg1[%c0_10, %c0_11, %c4] : memref<1x192x56xbf16, #tpu.memory_space<vmem>>, vector<1x192x52xbf16>
    %12 = vector.shape_cast %11 : vector<1x192x52xbf16> to vector<192x52xbf16>
    %c2_12 = arith.constant 2 : index
    %c0_13 = arith.constant 0 : index
    %c0_14 = arith.constant 0 : index
    %13 = vector.load %arg2[%c2_12, %c0_13, %c0_14] : memref<3x64x192xbf16, #tpu.memory_space<vmem>>, vector<1x64x192xbf16>
    %14 = vector.shape_cast %13 : vector<1x64x192xbf16> to vector<64x192xbf16>
    %cst_15 = arith.constant dense<0.000000e+00> : vector<64x52xf32>
    %15 = tpu.matmul %14, %12, %cst_15 {dimension_numbers = #tpu.dot_dimension_numbers<[1], [0], [0], [1], [0, 0, 1, 1], [], []>} : vector<64x192xbf16>, vector<192x52xbf16>, vector<64x52xf32> -> vector<64x52xf32>
    %16 = arith.addf %10, %15 : vector<64x52xf32>
    %c0_16 = arith.constant 0 : index
    %c0_17 = arith.constant 0 : index
    %17 = vector.load %arg3[%c0_16, %c0_17] : memref<64x1xf32, #tpu.memory_space<vmem>>, vector<64x1xf32>
    %18 = vector.broadcast %17 : vector<64x1xf32> to vector<64x52xf32>
    %19 = arith.addf %16, %18 : vector<64x52xf32>
    %cst_18 = arith.constant dense<0.000000e+00> : vector<64xf32>
    %20 = vector.multi_reduction <add>, %19, %cst_18 [1] : vector<64x52xf32> to vector<64xf32>
    %21 = vector.shape_cast %20 : vector<64xf32> to vector<64x1xf32>
    %cst_19 = arith.constant 0.0192307699 : f32
    %22 = vector.broadcast %cst_19 : f32 to vector<64x1xf32>
    %23 = arith.mulf %21, %22 : vector<64x1xf32>
    %c0_20 = arith.constant 0 : index
    %c0_21 = arith.constant 0 : index
    %24 = vector.load %arg5[%c0_20, %c0_21] : memref<16x64xf32, #tpu.memory_space<vmem>>, vector<16x64xf32>
    %cst_22 = arith.constant dense<0.000000e+00> : vector<16x1xf32>
    %25 = tpu.matmul %24, %23, %cst_22 {dimension_numbers = #tpu.dot_dimension_numbers<[1], [0], [0], [1], [0, 0, 1, 1], [], []>} : vector<16x64xf32>, vector<64x1xf32>, vector<16x1xf32> -> vector<16x1xf32>
    %c0_23 = arith.constant 0 : index
    %c0_24 = arith.constant 0 : index
    %26 = vector.load %arg6[%c0_23, %c0_24] : memref<16x1xf32, #tpu.memory_space<vmem>>, vector<16x1xf32>
    %27 = arith.addf %25, %26 : vector<16x1xf32>
    %cst_25 = arith.constant 0.000000e+00 : f32
    %28 = vector.broadcast %cst_25 : f32 to vector<16x1xf32>
    %29 = arith.maximumf %27, %28 : vector<16x1xf32>
    %c0_26 = arith.constant 0 : index
    %c0_27 = arith.constant 0 : index
    %30 = vector.load %arg7[%c0_26, %c0_27] : memref<64x16xf32, #tpu.memory_space<vmem>>, vector<64x16xf32>
    %cst_28 = arith.constant dense<0.000000e+00> : vector<64x1xf32>
    %31 = tpu.matmul %30, %29, %cst_28 {dimension_numbers = #tpu.dot_dimension_numbers<[1], [0], [0], [1], [0, 0, 1, 1], [], []>} : vector<64x16xf32>, vector<16x1xf32>, vector<64x1xf32> -> vector<64x1xf32>
    %c0_29 = arith.constant 0 : index
    %c0_30 = arith.constant 0 : index
    %32 = vector.load %arg8[%c0_29, %c0_30] : memref<64x1xf32, #tpu.memory_space<vmem>>, vector<64x1xf32>
    %33 = arith.addf %31, %32 : vector<64x1xf32>
    %34 = arith.negf %33 : vector<64x1xf32>
    %35 = math.exp %34 : vector<64x1xf32>
    %cst_31 = arith.constant 1.000000e+00 : f32
    %36 = vector.broadcast %cst_31 : f32 to vector<64x1xf32>
    %37 = arith.addf %36, %35 : vector<64x1xf32>
    %38 = arith.divf %36, %37 : vector<64x1xf32>
    %39 = vector.broadcast %38 : vector<64x1xf32> to vector<64x52xf32>
    %40 = arith.mulf %19, %39 : vector<64x52xf32>
    %c0_32 = arith.constant 0 : index
    %c0_33 = arith.constant 0 : index
    %c0_34 = arith.constant 0 : index
    %41 = vector.load %arg4[%c0_32, %c0_33, %c0_34] : memref<1x64x52xf32, #tpu.memory_space<vmem>>, vector<1x64x52xf32>
    %42 = vector.shape_cast %41 : vector<1x64x52xf32> to vector<64x52xf32>
    %43 = arith.addf %40, %42 : vector<64x52xf32>
    %c0_35 = arith.constant 0 : index
    %c0_36 = arith.constant 0 : index
    %c0_37 = arith.constant 0 : index
    %44 = vector.load %arg9[%c0_35, %c0_36, %c0_37] : memref<1x64x52xf32, #tpu.memory_space<vmem>>, vector<1x64x52xf32>
    %45 = vector.shape_cast %44 : vector<1x64x52xf32> to vector<64x52xf32>
    %46 = vector.shape_cast %43 : vector<64x52xf32> to vector<1x64x52xf32>
    tpu.vector_store %arg9[%c0_35, %c0_36, %c0_37], %46 {strides = array<i32>} : memref<1x64x52xf32, #tpu.memory_space<vmem>>, vector<1x64x52xf32>,
    return
  }
  func.func @transform_0(%arg0: i32) -> (i32, i32, i32) {
    %c0_i32 = arith.constant 0 : i32
    %c0_i32_0 = arith.constant 0 : i32
    %c0_i32_1 = arith.constant 0 : i32
    return %arg0, %c0_i32, %c0_i32_0 : i32, i32, i32
  }
  func.func @transform_1(%arg0: i32) -> (i32, i32, i32) {
    %c0_i32 = arith.constant 0 : i32
    %c0_i32_0 = arith.constant 0 : i32
    %c0_i32_1 = arith.constant 0 : i32
    %c0_i32_2 = arith.constant 0 : i32
    return %c0_i32, %c0_i32_0, %c0_i32_1 : i32, i32, i32
  }
  func.func @transform_2(%arg0: i32) -> (i32, i32) {
    %c0_i32 = arith.constant 0 : i32
    %c0_i32_0 = arith.constant 0 : i32
    %c0_i32_1 = arith.constant 0 : i32
    return %c0_i32, %c0_i32_0 : i32, i32
  }
  func.func @transform_3(%arg0: i32) -> (i32, i32, i32) {
    %c0_i32 = arith.constant 0 : i32
    %c0_i32_0 = arith.constant 0 : i32
    %c0_i32_1 = arith.constant 0 : i32
    return %arg0, %c0_i32, %c0_i32_0 : i32, i32, i32
  }
  func.func @transform_4(%arg0: i32) -> (i32, i32) {
    %c0_i32 = arith.constant 0 : i32
    %c0_i32_0 = arith.constant 0 : i32
    %c0_i32_1 = arith.constant 0 : i32
    return %c0_i32, %c0_i32_0 : i32, i32
  }
  func.func @transform_5(%arg0: i32) -> (i32, i32) {
    %c0_i32 = arith.constant 0 : i32
    %c0_i32_0 = arith.constant 0 : i32
    %c0_i32_1 = arith.constant 0 : i32
    return %c0_i32, %c0_i32_0 : i32, i32
  }
  func.func @transform_6(%arg0: i32) -> (i32, i32) {
    %c0_i32 = arith.constant 0 : i32
    %c0_i32_0 = arith.constant 0 : i32
    %c0_i32_1 = arith.constant 0 : i32
    return %c0_i32, %c0_i32_0 : i32, i32
  }
  func.func @transform_7(%arg0: i32) -> (i32, i32) {
    %c0_i32 = arith.constant 0 : i32
    %c0_i32_0 = arith.constant 0 : i32
    %c0_i32_1 = arith.constant 0 : i32
    return %c0_i32, %c0_i32_0 : i32, i32
  }
  func.func @transform_8(%arg0: i32) -> (i32, i32, i32) {
    %c0_i32 = arith.constant 0 : i32
    %c0_i32_0 = arith.constant 0 : i32
    %c0_i32_1 = arith.constant 0 : i32
    return %arg0, %c0_i32, %c0_i32_0 : i32, i32, i32
  }
}

</mosaic_0001>

<llo_original>
// kernel: se_rawformer_front.13
$region0: #{se_rawformer_front.13}
  #allocation0 [shape = 'u32[]', space=smem, size = 0x4, offset = 0x4, fixed_abs, tag = 'smem constant byte address 0x4 - core index']
  #allocation1 [shape = 'u32[144,128]{1,0:T(1,128)}', space=vmem, size = 0x12000, scoped, tag = 'internal scratch']
  #allocation2 [shape = 'f32[1,1]{1,0:T(1,128)S(1)}', space=vmem, size = 0x200, scoped, tag = 'scoped memory for se_rawformer_front.13']
  #allocation3 [shape = 'f32[1,1]{1,0:T(1,128)S(1)}', space=vmem, size = 0x200, scoped, tag = 'scoped memory for se_rawformer_front.13']
  %s0 = inlined_call_operand.vmem [shape: bf16[2,3,128,32], index: 0, kind: input, shape index: {}]
  %s1 = inlined_call_operand.vmem [shape: bf16[3,23,128], index: 1, kind: input, shape index: {}]
  %s2 = inlined_call_operand.<no memory space> [shape: f32[1,1], index: 2, kind: input, shape index: {}]
  %s3 = inlined_call_operand.<no memory space> [shape: f32[1,1], index: 3, kind: input, shape index: {}]
  %s4 = inlined_call_operand.vmem [shape: f32[2,23,32], index: 4, kind: output, shape index: {}]
  %s5 = sld [smem:[#allocation0]]
  $region49: #{se_rawformer_front.13} parent=0
    _
  %s7 = ssub.s32 1, %s5
  %s8 = scalar_select 0, %s7, %s5
  %v9 = vstv %s2
  %10 = vst [vmem:[#allocation2] sm:$0x1] %v9
  %v11 = vstv %s3
  %12 = vst [vmem:[#allocation3] sm:$0x1] %v11
  loop: start=0, step=1, limit=4
  $region2: #{se_rawformer_front.13} parent=0 // loop_pre_header
    _
  $region3: #{se_rawformer_front.13} parent=0 // loop_header
    %s14 = sphi 0, %s18
    %p15 = scmp.ge.s32.totalorder %s14, 4
    %s24 = sphi 0, %s26
    %s27 = sphi 0, %s24
    %s28 = sphi 0, %s27
    %s44 = sphi 0, %s28
    %s48 = sphi 0, %s48
    %s50 = sphi 0, %s48
    %s51 = sphi 0, %s50
    %s65 = sphi 0, %s51
    %s69 = sphi 0, %s69
    %s71 = sphi 0, %s69
    %s72 = sphi 0, %s71
    %s86 = sphi 0, %s72
    %s90 = sphi 0, %s90
    %s92 = sphi 0, %s90
    %s93 = sphi 0, %s92
    %s107 = sphi 0, %s93
    %s113 = sphi 0, %s115
    %s116 = sphi 0, %s113
    %s117 = sphi 0, %s116
    %s133 = sphi 0, %s117
  $region4: #{se_rawformer_front.13} parent=0 // loop_header_branch
    %17 = sbr.rel (%p15) target = $region8
  $region5: #{se_rawformer_front.13} parent=0 // loop_body
    %s19 = ssub.s32 %s14, 1
    %s20 = ssub.s32 %s14, 2
    %s21 = sadd.s32 %s14, 1
    %s22 = ssub.s32 %s14, %s21
    %p23 = scmp.eq.s32.totalorder %s22, 0
    %s25 = sadd.s32 %s24, 1
    %s26 = scalar_select %p23, %s24, %s25
    %p29 = pneg %p23
    %p30 = scmp.eq.s32.totalorder %s14, 1
    %p31 = por %p29, %p30
    %p32 = scmp.ne.s32.totalorder %s24, %s27
    %p33 = scmp.eq.s32.totalorder %s14, 0
    %p34 = por %p32, %p33
    %p35 = scmp.ne.s32.totalorder %s24, %s27
    %p36 = scmp.eq.s32.totalorder %s19, 1
    %p37 = por %p35, %p36
    %p38 = scmp.ne.s32.totalorder %s27, %s28
    %p39 = scmp.eq.s32.totalorder %s19, 0
    %p40 = por %p38, %p39
    %p41 = scmp.ne.s32.totalorder %s27, %s28
    %p42 = scmp.eq.s32.totalorder %s20, 1
    %p43 = por %p41, %p42
    %p45 = scmp.ne.s32.totalorder %s28, %s44
    %p46 = scmp.eq.s32.totalorder %s20, 0
    %p47 = por %p45, %p46
    %s49 = sadd.s32 %s48, 1
    %p52 = scmp.eq.s32.totalorder %s14, 1
    %p53 = scmp.ne.s32.totalorder %s48, %s50
    %p54 = scmp.eq.s32.totalorder %s14, 0
    %p55 = por %p53, %p54
    %p56 = scmp.ne.s32.totalorder %s48, %s50
    %p57 = scmp.eq.s32.totalorder %s19, 1
    %p58 = por %p56, %p57
    %p59 = scmp.ne.s32.totalorder %s50, %s51
    %p60 = scmp.eq.s32.totalorder %s19, 0
    %p61 = por %p59, %p60
    %p62 = scmp.ne.s32.totalorder %s50, %s51
    %p63 = scmp.eq.s32.totalorder %s20, 1
    %p64 = por %p62, %p63
    %p66 = scmp.ne.s32.totalorder %s51, %s65
    %p67 = scmp.eq.s32.totalorder %s20, 0
    %p68 = por %p66, %p67
    %s70 = sadd.s32 %s69, 1
    %p73 = scmp.eq.s32.totalorder %s14, 1
    %p74 = scmp.ne.s32.totalorder %s69, %s71
    %p75 = scmp.eq.s32.totalorder %s14, 0
    %p76 = por %p74, %p75
    %p77 = scmp.ne.s32.totalorder %s69, %s71
    %p78 = scmp.eq.s32.totalorder %s19, 1
    %p79 = por %p77, %p78
    %p80 = scmp.ne.s32.totalorder %s71, %s72
    %p81 = scmp.eq.s32.totalorder %s19, 0
    %p82 = por %p80, %p81
    %p83 = scmp.ne.s32.totalorder %s71, %s72
    %p84 = scmp.eq.s32.totalorder %s20, 1
    %p85 = por %p83, %p84
    %p87 = scmp.ne.s32.totalorder %s72, %s86
    %p88 = scmp.eq.s32.totalorder %s20, 0
    %p89 = por %p87, %p88
    %s91 = sadd.s32 %s90, 1
    %p94 = scmp.eq.s32.totalorder %s14, 1
    %p95 = scmp.ne.s32.totalorder %s90, %s92
    %p96 = scmp.eq.s32.totalorder %s14, 0
    %p97 = por %p95, %p96
    %p98 = scmp.ne.s32.totalorder %s90, %s92
    %p99 = scmp.eq.s32.totalorder %s19, 1
    %p100 = por %p98, %p99
    %p101 = scmp.ne.s32.totalorder %s92, %s93
    %p102 = scmp.eq.s32.totalorder %s19, 0
    %p103 = por %p101, %p102
    %p104 = scmp.ne.s32.totalorder %s92, %s93
    %p105 = scmp.eq.s32.totalorder %s20, 1
    %p106 = por %p104, %p105
    %p108 = scmp.ne.s32.totalorder %s93, %s107
    %p109 = scmp.eq.s32.totalorder %s20, 0
    %p110 = por %p108, %p109
    %s111 = ssub.s32 %s14, %s21
    %p112 = scmp.eq.s32.totalorder %s111, 0
    %s114 = sadd.s32 %s113, 1
    %s115 = scalar_select %p112, %s113, %s114
    %p118 = pneg %p112
    %p119 = scmp.eq.s32.totalorder %s14, 1
    %p120 = por %p118, %p119
    %p121 = scmp.ne.s32.totalorder %s113, %s116
    %p122 = scmp.eq.s32.totalorder %s14, 0
    %p123 = por %p121, %p122
    %p124 = scmp.ne.s32.totalorder %s113, %s116
    %p125 = scmp.eq.s32.totalorder %s19, 1
    %p126 = por %p124, %p125
    %p127 = scmp.ne.s32.totalorder %s116, %s117
    %p128 = scmp.eq.s32.totalorder %s19, 0
    %p129 = por %p127, %p128
    %p130 = scmp.ne.s32.totalorder %s116, %s117
    %p131 = scmp.eq.s32.totalorder %s20, 1
    %p132 = por %p130, %p131
    %p134 = scmp.ne.s32.totalorder %s117, %s133
    %p135 = scmp.eq.s32.totalorder %s20, 0
    %p136 = por %p134, %p135
    %p137 = scmp.le.s32.totalorder 1, %s14
    %p138 = scmp.lt.s32.totalorder %s14, 3
    %p139 = pnand %p137, %p138
    %p140 = pneg %p139
    // Predicated region
    $region9: #{se_rawformer_front.13} parent=5 // pred_check
      _
    $region10: #{se_rawformer_front.13} parent=5 // pred_check_branch
      %142 = sbr.rel (%p139) target = $region12
    $region11: #{se_rawformer_front.13} parent=5 // pred_region
      %s143 = ssub.s32 %s14, 1
      // Predicated region
      $region13: #{se_rawformer_front.13} parent=11 // pred_check
        %p144 = pneg %p61
      $region14: #{se_rawformer_front.13} parent=11 // pred_check_branch
        %146 = sbr.rel (%p144) target = $region16
      $region15: #{se_rawformer_front.13} parent=11 // pred_region
        _
      $region16: #{se_rawformer_front.13} parent=11 // pred_fallthru
        _
      // Predicated region
      $region17: #{se_rawformer_front.13} parent=11 // pred_check
        %p147 = pneg %p82
      $region18: #{se_rawformer_front.13} parent=11 // pred_check_branch
        %149 = sbr.rel (%p147) target = $region20
      $region19: #{se_rawformer_front.13} parent=11 // pred_region
        _
      $region20: #{se_rawformer_front.13} parent=11 // pred_fallthru
        _
      // Predicated region
      $region21: #{se_rawformer_front.13} parent=11 // pred_check
        %p150 = pneg %p103
      $region22: #{se_rawformer_front.13} parent=11 // pred_check_branch
        %152 = sbr.rel (%p150) target = $region24
      $region23: #{se_rawformer_front.13} parent=11 // pred_region
        _
      $region24: #{se_rawformer_front.13} parent=11 // pred_fallthru
        _
    $region12: #{se_rawformer_front.13} parent=5 // pred_fallthru
      _
    %p153 = scmp.lt.s32.totalorder %s14, 2
    // Predicated region
    $region25: #{se_rawformer_front.13} parent=5 // pred_check
      %p154 = pneg %p153
    $region26: #{se_rawformer_front.13} parent=5 // pred_check_branch
      %156 = sbr.rel (%p154) target = $region28
    $region27: #{se_rawformer_front.13} parent=5 // pred_region
      // Predicated region
      $region29: #{se_rawformer_front.13} parent=27 // pred_check
        %p157 = pneg %p34
      $region30: #{se_rawformer_front.13} parent=27 // pred_check_branch
        %159 = sbr.rel (%p157) target = $region32
      $region31: #{se_rawformer_front.13} parent=27 // pred_region
        %p160 = scmp.lt.s32.totalorder %s14, 1
        %s161 = scalar_select %p160, %s14, 1
        %s162 = smul.addr %s161, 48
        %s163 = smul.addr %s162, 4
        %s164 = scalar_lea.vmem %s0, %s163
      $region32: #{se_rawformer_front.13} parent=27 // pred_fallthru
        _
    $region28: #{se_rawformer_front.13} parent=5 // pred_fallthru
      _
    %p165 = scmp.le.s32.totalorder 1, %s14
    %p166 = scmp.lt.s32.totalorder %s14, 3
    %p167 = pnand %p165, %p166
    %p168 = pneg %p167
    // Predicated region
    $region33: #{se_rawformer_front.13} parent=5 // pred_check
      _
    $region34: #{se_rawformer_front.13} parent=5 // pred_check_branch
      %170 = sbr.rel (%p167) target = $region36
    $region35: #{se_rawformer_front.13} parent=5 // pred_region
      %s171 = ssub.s32 %s14, 1
      %p172 = scmp.lt.s32.totalorder %s19, 1
      %s173 = scalar_select %p172, %s19, 1
      %s174 = smul.addr %s173, 48
      %s175 = smul.addr %s174, 4
      %s176 = scalar_lea.vmem %s0, %s175
      %p177 = pneg %p40
      %p178 = pneg %p37
      %p179 = pneg %p61
      %p180 = pneg %p58
      %p181 = pneg %p82
      %p182 = pneg %p79
      %p183 = pneg %p103
      %p184 = pneg %p100
      %p185 = pneg %p129
      %p186 = pneg %p126
      %p187 = scmp.lt.s32.totalorder %s19, 1
      %s188 = scalar_select %p187, %s19, 1
      %s189 = smul.addr %s188, 3
      %s190 = smul.addr %s189, 8
      %s191 = scalar_lea.vmem %s4, %s190
      %p192 = scmp.lt.s32.totalorder %s19, 1
      %s193 = scalar_select %p192, %s19, 1
      %s194 = smul.addr %s193, 48
      %s195 = smul.addr %s194, 4
      %s196 = scalar_lea.vmem %s0, %s195
      %p197 = scmp.lt.s32.totalorder %s19, 1
      %s198 = scalar_select %p197, %s19, 1
      %s199 = smul.addr %s198, 3
      %s200 = smul.addr %s199, 8
      %s201 = scalar_lea.vmem %s4, %s200
      %v203 = vld [vmem:[%s1] sm:$0xf]
      %v204 = vld [vmem:[%s1 + $0x4] sm:$0xf]
      %v205 = vld [vmem:[%s1 + $0x8] sm:$0xf]
      %v206 = vld [vmem:[%s196] sm:$0xf]
      %v207 = vld [vmem:[%s196 + $0x4] sm:$0xf]
      %v208 = vld [vmem:[%s196 + $0x8] sm:$0xf]
      %v209 = vld [vmem:[%s196 + $0xc] sm:$0xf]
      %v210 = vld [vmem:[%s196 + $0x10] sm:$0xf]
      %v211 = vld [vmem:[%s196 + $0x14] sm:$0xf]
      %v212 = vld [vmem:[%s196 + $0x18] sm:$0xf]
      %v213 = vld [vmem:[%s196 + $0x1c] sm:$0xf]
      %v214 = vld [vmem:[%s196 + $0x20] sm:$0xf]
      %v215 = vld [vmem:[%s196 + $0x24] sm:$0xf]
      %v216 = vld [vmem:[%s196 + $0x28] sm:$0xf]
      %v217 = vld [vmem:[%s196 + $0x2c] sm:$0xf]
      %v218 = vld [vmem:[%s196 + $0x30] sm:$0xf]
      %v219 = vld [vmem:[%s196 + $0x34] sm:$0xf]
      %v220 = vld [vmem:[%s196 + $0x38] sm:$0xf]
      %v221 = vld [vmem:[%s196 + $0x3c] sm:$0xf]
      %v225 = vunpack.c.l.b16 %v203
      %v226 = vunpack.c.l.b16 %v204
      %v227 = vunpack.c.l.b16 %v205
      %v228 = vpack.c.b16 %v226, %v225
      %v229 = vpack.c.b16 %v227, %v227
      %v248 = vunpack.c.l.b16 %v206
      %v249 = vunpack.c.l.b16 %v207
      %v250 = vunpack.c.l.b16 %v208
      %v251 = vunpack.c.l.b16 %v209
      %v252 = vunpack.c.l.b16 %v210
      %v253 = vunpack.c.l.b16 %v211
      %v254 = vunpack.c.l.b16 %v212
      %v255 = vunpack.c.l.b16 %v213
      %v256 = vunpack.c.l.b16 %v214
      %v257 = vunpack.c.l.b16 %v215
      %v258 = vunpack.c.l.b16 %v216
      %v259 = vunpack.c.l.b16 %v217
      %v260 = vunpack.c.l.b16 %v218
      %v261 = vunpack.c.l.b16 %v219
      %v262 = vunpack.c.l.b16 %v220
      %v263 = vunpack.c.l.b16 %v221
      %v264 = vpack.c.b16 %v249, %v248
      %v265 = vpack.c.b16 %v251, %v250
      %v266 = vpack.c.b16 %v253, %v252
      %v267 = vpack.c.b16 %v255, %v254
      %v268 = vpack.c.b16 %v257, %v256
      %v269 = vpack.c.b16 %v259, %v258
      %v270 = vpack.c.b16 %v261, %v260
      %v271 = vpack.c.b16 %v263, %v262
      %280 = vmatprep.subr.bf16.mxu0 0
      %281 = vmatpush1.bf16.msra.mxu0 %v264
      %282 = vmatprep.subr.bf16.mxu0 0
      %283 = vmatpush1.bf16.msra.mxu0 %v265
      %284 = vmatprep.subr.bf16.mxu0 0
      %285 = vmatpush1.bf16.msra.mxu0 %v266
      %286 = vmatprep.subr.bf16.mxu0 0
      %287 = vmatpush1.bf16.msra.mxu0 %v267
      %288 = vmatprep.subr.bf16.mxu0 0
      %289 = vmatpush1.bf16.msra.mxu0 %v268
      %290 = vmatprep.subr.bf16.mxu0 0
      %291 = vmatpush1.bf16.msra.mxu0 %v269
      %292 = vmatprep.subr.bf16.mxu0 0
      %293 = vmatpush1.bf16.msra.mxu0 %v270
      %294 = vmatprep.subr.bf16.mxu0 0
      %295 = vmatpush1.bf16.msra.mxu0 %v271
      %296 = vmatprep.subr.bf16.mxu0 0
      %297 = vmatpush1.bf16.msra.mxu0 0
      %298 = vmatprep.subr.bf16.mxu0 0
      %299 = vmatpush1.bf16.msra.mxu0 0
      %300 = vmatprep.subr.bf16.mxu0 0
      %301 = vmatpush1.bf16.msra.mxu0 0
      %302 = vmatprep.subr.bf16.mxu0 0
      %303 = vmatpush1.bf16.msra.mxu0 0
      %304 = vmatprep.subr.bf16.mxu0 0
      %305 = vmatpush1.bf16.msra.mxu0 0
      %306 = vmatprep.subr.bf16.mxu0 0
      %307 = vmatpush1.bf16.msra.mxu0 0
      %308 = vmatprep.subr.bf16.mxu0 0
      %309 = vmatpush1.bf16.msra.mxu0 0
      %310 = vmatprep.subr.bf16.mxu0 0
      %311 = vmatpush1.bf16.msra.mxu0 0
      %312 = vmatprep.mubr.bf16.mxu0 0
      %313 = vmatmul.mubr.bf16.gmra.mrb[0].mxu0 %v228
      %v314 = vpop.f32.mrb[0].mxu0
      %v315 = vadd.f32 0.0, %v314
      %v316 = vpop.f32.mrb[0].mxu0
      %v317 = vpop.f32.mrb[0].mxu0
      %v318 = vadd.f32 0.0, %v317
      %v319 = vpop.f32.mrb[0].mxu0
      %320 = vmatprep.mubr.bf16.mxu0 0
      %321 = vmatmul.mubr.bf16.gmra.mrb[0].mxu0 %v229
      %v322 = vpop.f32.mrb[0].mxu0
      %v323 = vadd.f32 0.0, %v322
      %v324 = vpop.f32.mrb[0].mxu0
      %v325 = vpop.f32.mrb[0].mxu0
      %v326 = vpop.f32.mrb[0].mxu0
      %327 = vdwg.mxu0
      %v328 = vand.u32 2147483647, %v315
      %v329 = vand.u32 2147483647, %v318
      %v330 = vand.u32 2147483647, %v323
      %s331 = scalar_lea.vmem %s196, 64
      %v332 = vld [vmem:[%s331] sm:$0xf]
      %v333 = vld [vmem:[%s331 + $0x4] sm:$0xf]
      %v334 = vld [vmem:[%s331 + $0x8] sm:$0xf]
      %v335 = vld [vmem:[%s331 + $0xc] sm:$0xf]
      %v336 = vld [vmem:[%s331 + $0x10] sm:$0xf]
      %v337 = vld [vmem:[%s331 + $0x14] sm:$0xf]
      %v338 = vld [vmem:[%s331 + $0x18] sm:$0xf]
      %v339 = vld [vmem:[%s331 + $0x1c] sm:$0xf]
      %v340 = vld [vmem:[%s331 + $0x20] sm:$0xf]
      %v341 = vld [vmem:[%s331 + $0x24] sm:$0xf]
      %v342 = vld [vmem:[%s331 + $0x28] sm:$0xf]
      %v343 = vld [vmem:[%s331 + $0x2c] sm:$0xf]
      %v344 = vld [vmem:[%s331 + $0x30] sm:$0xf]
      %v345 = vld [vmem:[%s331 + $0x34] sm:$0xf]
      %v346 = vld [vmem:[%s331 + $0x38] sm:$0xf]
      %v347 = vld [vmem:[%s331 + $0x3c] sm:$0xf]
      %v364 = vunpack.c.l.b16 %v332
      %v365 = vunpack.c.l.b16 %v333
      %v366 = vunpack.c.l.b16 %v334
      %v367 = vunpack.c.l.b16 %v335
      %v368 = vunpack.c.l.b16 %v336
      %v369 = vunpack.c.l.b16 %v337
      %v370 = vunpack.c.l.b16 %v338
      %v371 = vunpack.c.l.b16 %v339
      %v372 = vunpack.c.l.b16 %v340
      %v373 = vunpack.c.l.b16 %v341
      %v374 = vunpack.c.l.b16 %v342
      %v375 = vunpack.c.l.b16 %v343
      %v376 = vunpack.c.l.b16 %v344
      %v377 = vunpack.c.l.b16 %v345
      %v378 = vunpack.c.l.b16 %v346
      %v379 = vunpack.c.l.b16 %v347
      %v380 = vpack.c.b16 %v365, %v364
      %v381 = vpack.c.b16 %v367, %v366
      %v382 = vpack.c.b16 %v369, %v368
      %v383 = vpack.c.b16 %v371, %v370
      %v384 = vpack.c.b16 %v373, %v372
      %v385 = vpack.c.b16 %v375, %v374
      %v386 = vpack.c.b16 %v377, %v376
      %v387 = vpack.c.b16 %v379, %v378
      %396 = vmatprep.subr.bf16.mxu0 0
      %397 = vmatpush1.bf16.msra.mxu0 %v380
      %398 = vmatprep.subr.bf16.mxu0 0
      %399 = vmatpush1.bf16.msra.mxu0 %v381
      %400 = vmatprep.subr.bf16.mxu0 0
      %401 = vmatpush1.bf16.msra.mxu0 %v382
      %402 = vmatprep.subr.bf16.mxu0 0
      %403 = vmatpush1.bf16.msra.mxu0 %v383
      %404 = vmatprep.subr.bf16.mxu0 0
      %405 = vmatpush1.bf16.msra.mxu0 %v384
      %406 = vmatprep.subr.bf16.mxu0 0
      %407 = vmatpush1.bf16.msra.mxu0 %v385
      %408 = vmatprep.subr.bf16.mxu0 0
      %409 = vmatpush1.bf16.msra.mxu0 %v386
      %410 = vmatprep.subr.bf16.mxu0 0
      %411 = vmatpush1.bf16.msra.mxu0 %v387
      %412 = vmatprep.subr.bf16.mxu0 0
      %413 = vmatpush1.bf16.msra.mxu0 0
      %414 = vmatprep.subr.bf16.mxu0 0
      %415 = vmatpush1.bf16.msra.mxu0 0
      %416 = vmatprep.subr.bf16.mxu0 0
      %417 = vmatpush1.bf16.msra.mxu0 0
      %418 = vmatprep.subr.bf16.mxu0 0
      %419 = vmatpush1.bf16.msra.mxu0 0
      %420 = vmatprep.subr.bf16.mxu0 0
      %421 = vmatpush1.bf16.msra.mxu0 0
      %422 = vmatprep.subr.bf16.mxu0 0
      %423 = vmatpush1.bf16.msra.mxu0 0
      %424 = vmatprep.subr.bf16.mxu0 0
      %425 = vmatpush1.bf16.msra.mxu0 0
      %426 = vmatprep.subr.bf16.mxu0 0
      %427 = vmatpush1.bf16.msra.mxu0 0
      %428 = vmatprep.mubr.bf16.mxu0 0
      %429 = vmatmul.mubr.bf16.gmra.mrb[0].mxu0 %v228
      %v430 = vpop.f32.mrb[0].mxu0
      %v431 = vadd.f32 0.0, %v430
      %v432 = vpop.f32.mrb[0].mxu0
      %v433 = vpop.f32.mrb[0].mxu0
      %v434 = vadd.f32 0.0, %v433
      %v435 = vpop.f32.mrb[0].mxu0
      %436 = vmatprep.mubr.bf16.mxu0 0
      %437 = vmatmul.mubr.bf16.gmra.mrb[0].mxu0 %v229
      %v438 = vpop.f32.mrb[0].mxu0
      %v439 = vadd.f32 0.0, %v438
      %v440 = vpop.f32.mrb[0].mxu0
      %v441 = vpop.f32.mrb[0].mxu0
      %v442 = vpop.f32.mrb[0].mxu0
      %443 = vdwg.mxu0
      %v444 = vand.u32 2147483647, %v431
      %v445 = vand.u32 2147483647, %v434
      %v446 = vand.u32 2147483647, %v439
      %v447 = vmax.f32 %v328, %v444
      %v448 = vmax.f32 %v329, %v445
      %v449 = vmax.f32 %v330, %v446
      %s450 = scalar_lea.vmem %s196, 128
      %v451 = vld [vmem:[%s450] sm:$0xf]
      %v452 = vld [vmem:[%s450 + $0x4] sm:$0xf]
      %v453 = vld [vmem:[%s450 + $0x8] sm:$0xf]
      %v454 = vld [vmem:[%s450 + $0xc] sm:$0xf]
      %v455 = vld [vmem:[%s450 + $0x10] sm:$0xf]
      %v456 = vld [vmem:[%s450 + $0x14] sm:$0xf]
      %v457 = vld [vmem:[%s450 + $0x18] sm:$0xf]
      %v458 = vld [vmem:[%s450 + $0x1c] sm:$0xf]
      %v459 = vld [vmem:[%s450 + $0x20] sm:$0xf]
      %v460 = vld [vmem:[%s450 + $0x24] sm:$0xf]
      %v461 = vld [vmem:[%s450 + $0x28] sm:$0xf]
      %v462 = vld [vmem:[%s450 + $0x2c] sm:$0xf]
      %v463 = vld [vmem:[%s450 + $0x30] sm:$0xf]
      %v464 = vld [vmem:[%s450 + $0x34] sm:$0xf]
      %v465 = vld [vmem:[%s450 + $0x38] sm:$0xf]
      %v466 = vld [vmem:[%s450 + $0x3c] sm:$0xf]
      %v483 = vunpack.c.l.b16 %v451
      %v484 = vunpack.c.l.b16 %v452
      %v485 = vunpack.c.l.b16 %v453
      %v486 = vunpack.c.l.b16 %v454
      %v487 = vunpack.c.l.b16 %v455
      %v488 = vunpack.c.l.b16 %v456
      %v489 = vunpack.c.l.b16 %v457
      %v490 = vunpack.c.l.b16 %v458
      %v491 = vunpack.c.l.b16 %v459
      %v492 = vunpack.c.l.b16 %v460
      %v493 = vunpack.c.l.b16 %v461
      %v494 = vunpack.c.l.b16 %v462
      %v495 = vunpack.c.l.b16 %v463
      %v496 = vunpack.c.l.b16 %v464
      %v497 = vunpack.c.l.b16 %v465
      %v498 = vunpack.c.l.b16 %v466
      %v499 = vpack.c.b16 %v484, %v483
      %v500 = vpack.c.b16 %v486, %v485
      %v501 = vpack.c.b16 %v488, %v487
      %v502 = vpack.c.b16 %v490, %v489
      %v503 = vpack.c.b16 %v492, %v491
      %v504 = vpack.c.b16 %v494, %v493
      %v505 = vpack.c.b16 %v496, %v495
      %v506 = vpack.c.b16 %v498, %v497
      %515 = vmatprep.subr.bf16.mxu0 0
      %516 = vmatpush1.bf16.msra.mxu0 %v499
      %517 = vmatprep.subr.bf16.mxu0 0
      %518 = vmatpush1.bf16.msra.mxu0 %v500
      %519 = vmatprep.subr.bf16.mxu0 0
      %520 = vmatpush1.bf16.msra.mxu0 %v501
      %521 = vmatprep.subr.bf16.mxu0 0
      %522 = vmatpush1.bf16.msra.mxu0 %v502
      %523 = vmatprep.subr.bf16.mxu0 0
      %524 = vmatpush1.bf16.msra.mxu0 %v503
      %525 = vmatprep.subr.bf16.mxu0 0
      %526 = vmatpush1.bf16.msra.mxu0 %v504
      %527 = vmatprep.subr.bf16.mxu0 0
      %528 = vmatpush1.bf16.msra.mxu0 %v505
      %529 = vmatprep.subr.bf16.mxu0 0
      %530 = vmatpush1.bf16.msra.mxu0 %v506
      %531 = vmatprep.subr.bf16.mxu0 0
      %532 = vmatpush1.bf16.msra.mxu0 0
      %533 = vmatprep.subr.bf16.mxu0 0
      %534 = vmatpush1.bf16.msra.mxu0 0
      %535 = vmatprep.subr.bf16.mxu0 0
      %536 = vmatpush1.bf16.msra.mxu0 0
      %537 = vmatprep.subr.bf16.mxu0 0
      %538 = vmatpush1.bf16.msra.mxu0 0
      %539 = vmatprep.subr.bf16.mxu0 0
      %540 = vmatpush1.bf16.msra.mxu0 0
      %541 = vmatprep.subr.bf16.mxu0 0
      %542 = vmatpush1.bf16.msra.mxu0 0
      %543 = vmatprep.subr.bf16.mxu0 0
      %544 = vmatpush1.bf16.msra.mxu0 0
      %545 = vmatprep.subr.bf16.mxu0 0
      %546 = vmatpush1.bf16.msra.mxu0 0
      %547 = vmatprep.mubr.bf16.mxu0 0
      %548 = vmatmul.mubr.bf16.gmra.mrb[0].mxu0 %v228
      %v549 = vpop.f32.mrb[0].mxu0
      %v550 = vadd.f32 0.0, %v549
      %v551 = vpop.f32.mrb[0].mxu0
      %v552 = vpop.f32.mrb[0].mxu0
      %v553 = vadd.f32 0.0, %v552
      %v554 = vpop.f32.mrb[0].mxu0
      %555 = vmatprep.mubr.bf16.mxu0 0
      %556 = vmatmul.mubr.bf16.gmra.mrb[0].mxu0 %v229
      %v557 = vpop.f32.mrb[0].mxu0
      %v558 = vadd.f32 0.0, %v557
      %v559 = vpop.f32.mrb[0].mxu0
      %v560 = vpop.f32.mrb[0].mxu0
      %v561 = vpop.f32.mrb[0].mxu0
      %562 = vdwg.mxu0
      %v563 = vand.u32 2147483647, %v550
      %v564 = vand.u32 2147483647, %v553
      %v565 = vand.u32 2147483647, %v558
      %v566 = vmax.f32 %v447, %v563
      %v567 = vmax.f32 %v448, %v564
      %v568 = vmax.f32 %v449, %v565
      %s569 = scalar_lea.vmem %s1, 12
      %v570 = vld [vmem:[%s569] sm:$0xf]
      %v571 = vld [vmem:[%s569 + $0x4] sm:$0xf]
      %v572 = vld [vmem:[%s569 + $0x8] sm:$0xf]
      %v576 = vunpack.c.l.b16 %v570
      %v577 = vunpack.c.l.b16 %v571
      %v578 = vunpack.c.l.b16 %v572
      %v579 = vpack.c.b16 %v577, %v576
      %v580 = vpack.c.b16 %v578, %v578
      %583 = vmatprep.subr.bf16.mxu0 0
      %584 = vmatpush1.bf16.msra.mxu0 %v264
      %585 = vmatprep.subr.bf16.mxu0 0
      %586 = vmatpush1.bf16.msra.mxu0 %v265
      %587 = vmatprep.subr.bf16.mxu0 0
      %588 = vmatpush1.bf16.msra.mxu0 %v266
      %589 = vmatprep.subr.bf16.mxu0 0
      %590 = vmatpush1.bf16.msra.mxu0 %v267
      %591 = vmatprep.subr.bf16.mxu0 0
      %592 = vmatpush1.bf16.msra.mxu0 %v268
      %593 = vmatprep.subr.bf16.mxu0 0
      %594 = vmatpush1.bf16.msra.mxu0 %v269
      %595 = vmatprep.subr.bf16.mxu0 0
      %596 = vmatpush1.bf16.msra.mxu0 %v270
      %597 = vmatprep.subr.bf16.mxu0 0
      %598 = vmatpush1.bf16.msra.mxu0 %v271
      %599 = vmatprep.subr.bf16.mxu0 0
      %600 = vmatpush1.bf16.msra.mxu0 0
      %601 = vmatprep.subr.bf16.mxu0 0
      %602 = vmatpush1.bf16.msra.mxu0 0
      %603 = vmatprep.subr.bf16.mxu0 0
      %604 = vmatpush1.bf16.msra.mxu0 0
      %605 = vmatprep.subr.bf16.mxu0 0
      %606 = vmatpush1.bf16.msra.mxu0 0
      %607 = vmatprep.subr.bf16.mxu0 0
      %608 = vmatpush1.bf16.msra.mxu0 0
      %609 = vmatprep.subr.bf16.mxu0 0
      %610 = vmatpush1.bf16.msra.mxu0 0
      %611 = vmatprep.subr.bf16.mxu0 0
      %612 = vmatpush1.bf16.msra.mxu0 0
      %613 = vmatprep.subr.bf16.mxu0 0
      %614 = vmatpush1.bf16.msra.mxu0 0
      %615 = vmatprep.mubr.bf16.mxu0 0
      %616 = vmatmul.mubr.bf16.gmra.mrb[0].mxu0 %v579
      %v617 = vpop.f32.mrb[0].mxu0
      %v618 = vadd.f32 0.0, %v617
      %v619 = vpop.f32.mrb[0].mxu0
      %v620 = vpop.f32.mrb[0].mxu0
      %v621 = vadd.f32 0.0, %v620
      %v622 = vpop.f32.mrb[0].mxu0
      %623 = vmatprep.mubr.bf16.mxu0 0
      %624 = vmatmul.mubr.bf16.gmra.mrb[0].mxu0 %v580
      %v625 = vpop.f32.mrb[0].mxu0
      %v626 = vadd.f32 0.0, %v625
      %v627 = vpop.f32.mrb[0].mxu0
      %v628 = vpop.f32.mrb[0].mxu0
      %v629 = vpop.f32.mrb[0].mxu0
      %630 = vdwg.mxu0
      %v631 = vand.u32 2147483647, %v618
      %v632 = vand.u32 2147483647, %v621
      %v633 = vand.u32 2147483647, %v626
      %v634 = vmax.f32 %v566, %v631
      %v635 = vmax.f32 %v567, %v632
      %v636 = vmax.f32 %v568, %v633
      %637 = vmatprep.subr.bf16.mxu0 0
      %638 = vmatpush1.bf16.msra.mxu0 %v380
      %639 = vmatprep.subr.bf16.mxu0 0
      %640 = vmatpush1.bf16.msra.mxu0 %v381
      %641 = vmatprep.subr.bf16.mxu0 0
      %642 = vmatpush1.bf16.msra.mxu0 %v382
      %643 = vmatprep.subr.bf16.mxu0 0
      %644 = vmatpush1.bf16.msra.mxu0 %v383
      %645 = vmatprep.subr.bf16.mxu0 0
      %646 = vmatpush1.bf16.msra.mxu0 %v384
      %647 = vmatprep.subr.bf16.mxu0 0
      %648 = vmatpush1.bf16.msra.mxu0 %v385
      %649 = vmatprep.subr.bf16.mxu0 0
      %650 = vmatpush1.bf16.msra.mxu0 %v386
      %651 = vmatprep.subr.bf16.mxu0 0
      %652 = vmatpush1.bf16.msra.mxu0 %v387
      %653 = vmatprep.subr.bf16.mxu0 0
      %654 = vmatpush1.bf16.msra.mxu0 0
      %655 = vmatprep.subr.bf16.mxu0 0
      %656 = vmatpush1.bf16.msra.mxu0 0
      %657 = vmatprep.subr.bf16.mxu0 0
      %658 = vmatpush1.bf16.msra.mxu0 0
      %659 = vmatprep.subr.bf16.mxu0 0
      %660 = vmatpush1.bf16.msra.mxu0 0
      %661 = vmatprep.subr.bf16.mxu0 0
      %662 = vmatpush1.bf16.msra.mxu0 0
      %663 = vmatprep.subr.bf16.mxu0 0
      %664 = vmatpush1.bf16.msra.mxu0 0
      %665 = vmatprep.subr.bf16.mxu0 0
      %666 = vmatpush1.bf16.msra.mxu0 0
      %667 = vmatprep.subr.bf16.mxu0 0
      %668 = vmatpush1.bf16.msra.mxu0 0
      %669 = vmatprep.mubr.bf16.mxu0 0
      %670 = vmatmul.mubr.bf16.gmra.mrb[0].mxu0 %v579
      %v671 = vpop.f32.mrb[0].mxu0
      %v672 = vadd.f32 0.0, %v671
      %v673 = vpop.f32.mrb[0].mxu0
      %v674 = vpop.f32.mrb[0].mxu0
      %v675 = vadd.f32 0.0, %v674
      %v676 = vpop.f32.mrb[0].mxu0
      %677 = vmatprep.mubr.bf16.mxu0 0
      %678 = vmatmul.mubr.bf16.gmra.mrb[0].mxu0 %v580
      %v679 = vpop.f32.mrb[0].mxu0
      %v680 = vadd.f32 0.0, %v679
      %v681 = vpop.f32.mrb[0].mxu0
      %v682 = vpop.f32.mrb[0].mxu0
      %v683 = vpop.f32.mrb[0].mxu0
      %684 = vdwg.mxu0
      %v685 = vand.u32 2147483647, %v672
      %v686 = vand.u32 2147483647, %v675
      %v687 = vand.u32 2147483647, %v680
      %v688 = vmax.f32 %v634, %v685
      %v689 = vmax.f32 %v635, %v686
      %v690 = vmax.f32 %v636, %v687
      %691 = vmatprep.subr.bf16.mxu0 0
      %692 = vmatpush1.bf16.msra.mxu0 %v499
      %693 = vmatprep.subr.bf16.mxu0 0
      %694 = vmatpush1.bf16.msra.mxu0 %v500
      %695 = vmatprep.subr.bf16.mxu0 0
      %696 = vmatpush1.bf16.msra.mxu0 %v501
      %697 = vmatprep.subr.bf16.mxu0 0
      %698 = vmatpush1.bf16.msra.mxu0 %v502
      %699 = vmatprep.subr.bf16.mxu0 0
      %700 = vmatpush1.bf16.msra.mxu0 %v503
      %701 = vmatprep.subr.bf16.mxu0 0
      %702 = vmatpush1.bf16.msra.mxu0 %v504
      %703 = vmatprep.subr.bf16.mxu0 0
      %704 = vmatpush1.bf16.msra.mxu0 %v505
      %705 = vmatprep.subr.bf16.mxu0 0
      %706 = vmatpush1.bf16.msra.mxu0 %v506
      %707 = vmatprep.subr.bf16.mxu0 0
      %708 = vmatpush1.bf16.msra.mxu0 0
      %709 = vmatprep.subr.bf16.mxu0 0
      %710 = vmatpush1.bf16.msra.mxu0 0
      %711 = vmatprep.subr.bf16.mxu0 0
      %712 = vmatpush1.bf16.msra.mxu0 0
      %713 = vmatprep.subr.bf16.mxu0 0
      %714 = vmatpush1.bf16.msra.mxu0 0
      %715 = vmatprep.subr.bf16.mxu0 0
      %716 = vmatpush1.bf16.msra.mxu0 0
      %717 = vmatprep.subr.bf16.mxu0 0
      %718 = vmatpush1.bf16.msra.mxu0 0
      %719 = vmatprep.subr.bf16.mxu0 0
      %720 = vmatpush1.bf16.msra.mxu0 0
      %721 = vmatprep.subr.bf16.mxu0 0
      %722 = vmatpush1.bf16.msra.mxu0 0
      %723 = vmatprep.mubr.bf16.mxu0 0
      %724 = vmatmul.mubr.bf16.gmra.mrb[0].mxu0 %v579
      %v725 = vpop.f32.mrb[0].mxu0
      %v726 = vadd.f32 0.0, %v725
      %v727 = vpop.f32.mrb[0].mxu0
      %v728 = vpop.f32.mrb[0].mxu0
      %v729 = vadd.f32 0.0, %v728
      %v730 = vpop.f32.mrb[0].mxu0
      %731 = vmatprep.mubr.bf16.mxu0 0
      %732 = vmatmul.mubr.bf16.gmra.mrb[0].mxu0 %v580
      %v733 = vpop.f32.mrb[0].mxu0
      %v734 = vadd.f32 0.0, %v733
      %v735 = vpop.f32.mrb[0].mxu0
      %v736 = vpop.f32.mrb[0].mxu0
      %v737 = vpop.f32.mrb[0].mxu0
      %738 = vdwg.mxu0
      %v739 = vand.u32 2147483647, %v726
      %v740 = vand.u32 2147483647, %v729
      %v741 = vand.u32 2147483647, %v734
      %v742 = vmax.f32 %v688, %v739
      %v743 = vmax.f32 %v689, %v740
      %v744 = vmax.f32 %v690, %v741
      %s745 = scalar_lea.vmem %s1, 24
      %v746 = vld [vmem:[%s745] sm:$0xf]
      %v747 = vld [vmem:[%s745 + $0x4] sm:$0xf]
      %v748 = vld [vmem:[%s745 + $0x8] sm:$0xf]
      %v752 = vunpack.c.l.b16 %v746
      %v753 = vunpack.c.l.b16 %v747
      %v754 = vunpack.c.l.b16 %v748
      %v755 = vpack.c.b16 %v753, %v752
      %v756 = vpack.c.b16 %v754, %v754
      %759 = vmatprep.subr.bf16.mxu0 0
      %760 = vmatpush1.bf16.msra.mxu0 %v264
      %761 = vmatprep.subr.bf16.mxu0 0
      %762 = vmatpush1.bf16.msra.mxu0 %v265
      %763 = vmatprep.subr.bf16.mxu0 0
      %764 = vmatpush1.bf16.msra.mxu0 %v266
      %765 = vmatprep.subr.bf16.mxu0 0
      %766 = vmatpush1.bf16.msra.mxu0 %v267
      %767 = vmatprep.subr.bf16.mxu0 0
      %768 = vmatpush1.bf16.msra.mxu0 %v268
      %769 = vmatprep.subr.bf16.mxu0 0
      %770 = vmatpush1.bf16.msra.mxu0 %v269
      %771 = vmatprep.subr.bf16.mxu0 0
      %772 = vmatpush1.bf16.msra.mxu0 %v270
      %773 = vmatprep.subr.bf16.mxu0 0
      %774 = vmatpush1.bf16.msra.mxu0 %v271
      %775 = vmatprep.subr.bf16.mxu0 0
      %776 = vmatpush1.bf16.msra.mxu0 0
      %777 = vmatprep.subr.bf16.mxu0 0
      %778 = vmatpush1.bf16.msra.mxu0 0
      %779 = vmatprep.subr.bf16.mxu0 0
      %780 = vmatpush1.bf16.msra.mxu0 0
      %781 = vmatprep.subr.bf16.mxu0 0
      %782 = vmatpush1.bf16.msra.mxu0 0
      %783 = vmatprep.subr.bf16.mxu0 0
      %784 = vmatpush1.bf16.msra.mxu0 0
      %785 = vmatprep.subr.bf16.mxu0 0
      %786 = vmatpush1.bf16.msra.mxu0 0
      %787 = vmatprep.subr.bf16.mxu0 0
      %788 = vmatpush1.bf16.msra.mxu0 0
      %789 = vmatprep.subr.bf16.mxu0 0
      %790 = vmatpush1.bf16.msra.mxu0 0
      %791 = vmatprep.mubr.bf16.mxu0 0
      %792 = vmatmul.mubr.bf16.gmra.mrb[0].mxu0 %v755
      %v793 = vpop.f32.mrb[0].mxu0
      %v794 = vadd.f32 0.0, %v793
      %v795 = vpop.f32.mrb[0].mxu0
      %v796 = vpop.f32.mrb[0].mxu0
      %v797 = vadd.f32 0.0, %v796
      %v798 = vpop.f32.mrb[0].mxu0
      %799 = vmatprep.mubr.bf16.mxu0 0
      %800 = vmatmul.mubr.bf16.gmra.mrb[0].mxu0 %v756
      %v801 = vpop.f32.mrb[0].mxu0
      %v802 = vadd.f32 0.0, %v801
      %v803 = vpop.f32.mrb[0].mxu0
      %v804 = vpop.f32.mrb[0].mxu0
      %v805 = vpop.f32.mrb[0].mxu0
      %806 = vdwg.mxu0
      %v807 = vand.u32 2147483647, %v794
      %v808 = vand.u32 2147483647, %v797
      %v809 = vand.u32 2147483647, %v802
      %v810 = vmax.f32 %v742, %v807
      %v811 = vmax.f32 %v743, %v808
      %v812 = vmax.f32 %v744, %v809
      %813 = vmatprep.subr.bf16.mxu0 0
      %814 = vmatpush1.bf16.msra.mxu0 %v380
      %815 = vmatprep.subr.bf16.mxu0 0
      %816 = vmatpush1.bf16.msra.mxu0 %v381
      %817 = vmatprep.subr.bf16.mxu0 0
      %818 = vmatpush1.bf16.msra.mxu0 %v382
      %819 = vmatprep.subr.bf16.mxu0 0
      %820 = vmatpush1.bf16.msra.mxu0 %v383
      %821 = vmatprep.subr.bf16.mxu0 0
      %822 = vmatpush1.bf16.msra.mxu0 %v384
      %823 = vmatprep.subr.bf16.mxu0 0
      %824 = vmatpush1.bf16.msra.mxu0 %v385
      %825 = vmatprep.subr.bf16.mxu0 0
      %826 = vmatpush1.bf16.msra.mxu0 %v386
      %827 = vmatprep.subr.bf16.mxu0 0
      %828 = vmatpush1.bf16.msra.mxu0 %v387
      %829 = vmatprep.subr.bf16.mxu0 0
      %830 = vmatpush1.bf16.msra.mxu0 0
      %831 = vmatprep.subr.bf16.mxu0 0
      %832 = vmatpush1.bf16.msra.mxu0 0
      %833 = vmatprep.subr.bf16.mxu0 0
      %834 = vmatpush1.bf16.msra.mxu0 0
      %835 = vmatprep.subr.bf16.mxu0 0
      %836 = vmatpush1.bf16.msra.mxu0 0
      %837 = vmatprep.subr.bf16.mxu0 0
      %838 = vmatpush1.bf16.msra.mxu0 0
      %839 = vmatprep.subr.bf16.mxu0 0
      %840 = vmatpush1.bf16.msra.mxu0 0
      %841 = vmatprep.subr.bf16.mxu0 0
      %842 = vmatpush1.bf16.msra.mxu0 0
      %843 = vmatprep.subr.bf16.mxu0 0
      %844 = vmatpush1.bf16.msra.mxu0 0
      %845 = vmatprep.mubr.bf16.mxu0 0
      %846 = vmatmul.mubr.bf16.gmra.mrb[0].mxu0 %v755
      %v847 = vpop.f32.mrb[0].mxu0
      %v848 = vadd.f32 0.0, %v847
      %v849 = vpop.f32.mrb[0].mxu0
      %v850 = vpop.f32.mrb[0].mxu0
      %v851 = vadd.f32 0.0, %v850
      %v852 = vpop.f32.mrb[0].mxu0
      %853 = vmatprep.mubr.bf16.mxu0 0
      %854 = vmatmul.mubr.bf16.gmra.mrb[0].mxu0 %v756
      %v855 = vpop.f32.mrb[0].mxu0
      %v856 = vadd.f32 0.0, %v855
      %v857 = vpop.f32.mrb[0].mxu0
      %v858 = vpop.f32.mrb[0].mxu0
      %v859 = vpop.f32.mrb[0].mxu0
      %860 = vdwg.mxu0
      %v861 = vand.u32 2147483647, %v848
      %v862 = vand.u32 2147483647, %v851
      %v863 = vand.u32 2147483647, %v856
      %v864 = vmax.f32 %v810, %v861
      %v865 = vmax.f32 %v811, %v862
      %v866 = vmax.f32 %v812, %v863
      %867 = vmatprep.subr.bf16.mxu0 0
      %868 = vmatpush1.bf16.msra.mxu0 %v499
      %869 = vmatprep.subr.bf16.mxu0 0
      %870 = vmatpush1.bf16.msra.mxu0 %v500
      %871 = vmatprep.subr.bf16.mxu0 0
      %872 = vmatpush1.bf16.msra.mxu0 %v501
      %873 = vmatprep.subr.bf16.mxu0 0
      %874 = vmatpush1.bf16.msra.mxu0 %v502
      %875 = vmatprep.subr.bf16.mxu0 0
      %876 = vmatpush1.bf16.msra.mxu0 %v503
      %877 = vmatprep.subr.bf16.mxu0 0
      %878 = vmatpush1.bf16.msra.mxu0 %v504
      %879 = vmatprep.subr.bf16.mxu0 0
      %880 = vmatpush1.bf16.msra.mxu0 %v505
      %881 = vmatprep.subr.bf16.mxu0 0
      %882 = vmatpush1.bf16.msra.mxu0 %v506
      %883 = vmatprep.subr.bf16.mxu0 0
      %884 = vmatpush1.bf16.msra.mxu0 0
      %885 = vmatprep.subr.bf16.mxu0 0
      %886 = vmatpush1.bf16.msra.mxu0 0
      %887 = vmatprep.subr.bf16.mxu0 0
      %888 = vmatpush1.bf16.msra.mxu0 0
      %889 = vmatprep.subr.bf16.mxu0 0
      %890 = vmatpush1.bf16.msra.mxu0 0
      %891 = vmatprep.subr.bf16.mxu0 0
      %892 = vmatpush1.bf16.msra.mxu0 0
      %893 = vmatprep.subr.bf16.mxu0 0
      %894 = vmatpush1.bf16.msra.mxu0 0
      %895 = vmatprep.subr.bf16.mxu0 0
      %896 = vmatpush1.bf16.msra.mxu0 0
      %897 = vmatprep.subr.bf16.mxu0 0
      %898 = vmatpush1.bf16.msra.mxu0 0
      %899 = vmatprep.mubr.bf16.mxu0 0
      %900 = vmatmul.mubr.bf16.gmra.mrb[0].mxu0 %v755
      %v901 = vpop.f32.mrb[0].mxu0
      %v902 = vadd.f32 0.0, %v901
      %v903 = vpop.f32.mrb[0].mxu0
      %v904 = vpop.f32.mrb[0].mxu0
      %v905 = vadd.f32 0.0, %v904
      %v906 = vpop.f32.mrb[0].mxu0
      %907 = vmatprep.mubr.bf16.mxu0 0
      %908 = vmatmul.mubr.bf16.gmra.mrb[0].mxu0 %v756
      %v909 = vpop.f32.mrb[0].mxu0
      %v910 = vadd.f32 0.0, %v909
      %v911 = vpop.f32.mrb[0].mxu0
      %v912 = vpop.f32.mrb[0].mxu0
      %v913 = vpop.f32.mrb[0].mxu0
      %914 = vdwg.mxu0
      %v915 = vand.u32 2147483647, %v902
      %v916 = vand.u32 2147483647, %v905
      %v917 = vand.u32 2147483647, %v910
      %v918 = vmax.f32 %v864, %v915
      %v919 = vmax.f32 %v865, %v916
      %v920 = vmax.f32 %v866, %v917
      %v921 = vld [vmem:[#allocation2] sm:$0x1]
      %v923 = vlaneseq
      %v924 = vshrl.u32 %v923, 7
      %v925 = vsub.s32 0, %v924
      %v926 = vrot.slane %v921, %v925
      %927 = vset.pattern.permute.xlu0 0
      %928 = vperm.xlu0 %927, %v926
      %v929 = vpop.permute.xlu0 %928
      %v931 = vmul.f32 %v918, %v929
      %v932 = vmul.f32 %v919, %v929
      %v933 = vmul.f32 %v920, %v929
      %v934 = vld [vmem:[#allocation3] sm:$0x1]
      %v936 = vlaneseq
      %v937 = vshrl.u32 %v936, 7
      %v938 = vsub.s32 0, %v937
      %v939 = vrot.slane %v934, %v938
      %940 = vset.pattern.permute.xlu0 0
      %941 = vperm.xlu0 %940, %v939
      %v942 = vpop.permute.xlu0 %941
      %v944 = vadd.f32 %v931, %v942
      %v945 = vadd.f32 %v932, %v942
      %v946 = vadd.f32 %v933, %v942
      %v947 = vmin.f32 %v944, 0.0
      %v948 = vmin.f32 %v945, 0.0
      %v949 = vmin.f32 %v946, 0.0
      %v950 = vmul.f32 %v947, 1.442695
      %v951 = vpow.pop %v950
      %v952 = vmul.f32 %v948, 1.442695
      %v953 = vpow.pop %v952
      %v954 = vmul.f32 %v949, 1.442695
      %v955 = vpow.pop %v954
      %v956 = vsub.f32 %v951, 1.0
      %v957 = vsub.f32 %v953, 1.0
      %v958 = vsub.f32 %v955, 1.0
      %v959 = vmul.f32 %v956, 1.6732632
      %v960 = vmul.f32 %v957, 1.6732632
      %v961 = vmul.f32 %v958, 1.6732632
      %vm962 = vcmp.gt.f32.partialorder %v944, 0.0
      %vm963 = vcmp.gt.f32.partialorder %v945, 0.0
      %vm964 = vcmp.gt.f32.partialorder %v946, 0.0
      %v965 = vsel %vm962, %v944, %v959
      %v966 = vsel %vm963, %v945, %v960
      %v967 = vsel %vm964, %v946, %v961
      %v968 = vmul.f32 %v965, 1.050701
      %v969 = vmul.f32 %v966, 1.050701
      %v970 = vmul.f32 %v967, 1.050701
      %vm971 = vcmask 261120
      %972 = vst.msk [vmem:[%s201] sm:$0xff] %vm971, %v968
      %973 = vst.msk [vmem:[%s201 + $0x8] sm:$0xff] %vm971, %v969
      %vm974 = vcmask 260096
      %975 = vst.msk [vmem:[%s201 + $0x10] sm:$0x7f] %vm974, %v970
      %p976 = scmp.lt.s32.totalorder %s19, 1
      %s977 = scalar_select %p976, %s19, 1
      %s978 = smul.addr %s977, 3
      %s979 = smul.addr %s978, 8
      %s980 = scalar_lea.vmem %s4, %s979
      // Predicated region
      $region37: #{se_rawformer_front.13} parent=35 // pred_check
        %p981 = pneg %p126
      $region38: #{se_rawformer_front.13} parent=35 // pred_check_branch
        %983 = sbr.rel (%p981) target = $region40
      $region39: #{se_rawformer_front.13} parent=35 // pred_region
        _
      $region40: #{se_rawformer_front.13} parent=35 // pred_fallthru
        _
    $region36: #{se_rawformer_front.13} parent=5 // pred_fallthru
      _
    %p984 = scmp.le.s32.totalorder 2, %s14
    // Predicated region
    $region41: #{se_rawformer_front.13} parent=5 // pred_check
      %p985 = pneg %p984
    $region42: #{se_rawformer_front.13} parent=5 // pred_check_branch
      %987 = sbr.rel (%p985) target = $region44
    $region43: #{se_rawformer_front.13} parent=5 // pred_region
      %s988 = ssub.s32 %s14, 2
      // Predicated region
      $region45: #{se_rawformer_front.13} parent=43 // pred_check
        %p989 = pneg %p132
      $region46: #{se_rawformer_front.13} parent=43 // pred_check_branch
        %991 = sbr.rel (%p989) target = $region48
      $region47: #{se_rawformer_front.13} parent=43 // pred_region
        %p992 = scmp.lt.s32.totalorder %s20, 1
        %s993 = scalar_select %p992, %s20, 1
        %s994 = smul.addr %s993, 3
        %s995 = smul.addr %s994, 8
        %s996 = scalar_lea.vmem %s4, %s995
      $region48: #{se_rawformer_front.13} parent=43 // pred_fallthru
        _
    $region44: #{se_rawformer_front.13} parent=5 // pred_fallthru
      _
  $region6: #{se_rawformer_front.13} parent=0 // loop_footer
    %s18 = sadd.s32 1, %s14
  $region7: #{se_rawformer_front.13} parent=0 // loop_footer_branch
    %13 = sbr.rel target = $region3
  $region8: #{se_rawformer_front.13} parent=0 // loop_exit
    _

// kernel: se_rawformer_front.14
$region0: #{se_rawformer_front.14}
  #allocation0 [shape = 'u32[]', space=smem, size = 0x4, offset = 0x4, fixed_abs, tag = 'smem constant byte address 0x4 - core index']
  #allocation1 [shape = 'u32[144,128]{1,0:T(1,128)}', space=vmem, size = 0x12000, scoped, tag = 'internal scratch']
  %s0 = inlined_call_operand.vmem [shape: bf16[2,3,800], index: 0, kind: input, shape index: {}]
  %s1 = inlined_call_operand.vmem [shape: bf16[2,32,3], index: 1, kind: input, shape index: {}]
  %s2 = inlined_call_operand.vmem [shape: f32[32,1], index: 2, kind: input, shape index: {}]
  %s3 = inlined_call_operand.vmem [shape: f32[2,32,768], index: 3, kind: output, shape index: {}]
  %s4 = sld [smem:[#allocation0]]
  $region45: #{se_rawformer_front.14} parent=0
    _
  %s6 = ssub.s32 1, %s4
  %s7 = scalar_select 0, %s6, %s4
  loop: start=0, step=1, limit=4
  $region2: #{se_rawformer_front.14} parent=0 // loop_pre_header
    _
  $region3: #{se_rawformer_front.14} parent=0 // loop_header
    %s9 = sphi 0, %s13
    %p10 = scmp.ge.s32.totalorder %s9, 4
    %s19 = sphi 0, %s21
    %s22 = sphi 0, %s19
    %s23 = sphi 0, %s22
    %s39 = sphi 0, %s23
    %s43 = sphi 0, %s43
    %s45 = sphi 0, %s43
    %s46 = sphi 0, %s45
    %s60 = sphi 0, %s46
    %s64 = sphi 0, %s64
    %s66 = sphi 0, %s64
    %s67 = sphi 0, %s66
    %s81 = sphi 0, %s67
    %s87 = sphi 0, %s89
    %s90 = sphi 0, %s87
    %s91 = sphi 0, %s90
    %s107 = sphi 0, %s91
  $region4: #{se_rawformer_front.14} parent=0 // loop_header_branch
    %12 = sbr.rel (%p10) target = $region8
  $region5: #{se_rawformer_front.14} parent=0 // loop_body
    %s14 = ssub.s32 %s9, 1
    %s15 = ssub.s32 %s9, 2
    %s16 = sadd.s32 %s9, 1
    %s17 = ssub.s32 %s9, %s16
    %p18 = scmp.eq.s32.totalorder %s17, 0
    %s20 = sadd.s32 %s19, 1
    %s21 = scalar_select %p18, %s19, %s20
    %p24 = pneg %p18
    %p25 = scmp.eq.s32.totalorder %s9, 1
    %p26 = por %p24, %p25
    %p27 = scmp.ne.s32.totalorder %s19, %s22
    %p28 = scmp.eq.s32.totalorder %s9, 0
    %p29 = por %p27, %p28
    %p30 = scmp.ne.s32.totalorder %s19, %s22
    %p31 = scmp.eq.s32.totalorder %s14, 1
    %p32 = por %p30, %p31
    %p33 = scmp.ne.s32.totalorder %s22, %s23
    %p34 = scmp.eq.s32.totalorder %s14, 0
    %p35 = por %p33, %p34
    %p36 = scmp.ne.s32.totalorder %s22, %s23
    %p37 = scmp.eq.s32.totalorder %s15, 1
    %p38 = por %p36, %p37
    %p40 = scmp.ne.s32.totalorder %s23, %s39
    %p41 = scmp.eq.s32.totalorder %s15, 0
    %p42 = por %p40, %p41
    %s44 = sadd.s32 %s43, 1
    %p47 = scmp.eq.s32.totalorder %s9, 1
    %p48 = scmp.ne.s32.totalorder %s43, %s45
    %p49 = scmp.eq.s32.totalorder %s9, 0
    %p50 = por %p48, %p49
    %p51 = scmp.ne.s32.totalorder %s43, %s45
    %p52 = scmp.eq.s32.totalorder %s14, 1
    %p53 = por %p51, %p52
    %p54 = scmp.ne.s32.totalorder %s45, %s46
    %p55 = scmp.eq.s32.totalorder %s14, 0
    %p56 = por %p54, %p55
    %p57 = scmp.ne.s32.totalorder %s45, %s46
    %p58 = scmp.eq.s32.totalorder %s15, 1
    %p59 = por %p57, %p58
    %p61 = scmp.ne.s32.totalorder %s46, %s60
    %p62 = scmp.eq.s32.totalorder %s15, 0
    %p63 = por %p61, %p62
    %s65 = sadd.s32 %s64, 1
    %p68 = scmp.eq.s32.totalorder %s9, 1
    %p69 = scmp.ne.s32.totalorder %s64, %s66
    %p70 = scmp.eq.s32.totalorder %s9, 0
    %p71 = por %p69, %p70
    %p72 = scmp.ne.s32.totalorder %s64, %s66
    %p73 = scmp.eq.s32.totalorder %s14, 1
    %p74 = por %p72, %p73
    %p75 = scmp.ne.s32.totalorder %s66, %s67
    %p76 = scmp.eq.s32.totalorder %s14, 0
    %p77 = por %p75, %p76
    %p78 = scmp.ne.s32.totalorder %s66, %s67
    %p79 = scmp.eq.s32.totalorder %s15, 1
    %p80 = por %p78, %p79
    %p82 = scmp.ne.s32.totalorder %s67, %s81
    %p83 = scmp.eq.s32.totalorder %s15, 0
    %p84 = por %p82, %p83
    %s85 = ssub.s32 %s9, %s16
    %p86 = scmp.eq.s32.totalorder %s85, 0
    %s88 = sadd.s32 %s87, 1
    %s89 = scalar_select %p86, %s87, %s88
    %p92 = pneg %p86
    %p93 = scmp.eq.s32.totalorder %s9, 1
    %p94 = por %p92, %p93
    %p95 = scmp.ne.s32.totalorder %s87, %s90
    %p96 = scmp.eq.s32.totalorder %s9, 0
    %p97 = por %p95, %p96
    %p98 = scmp.ne.s32.totalorder %s87, %s90
    %p99 = scmp.eq.s32.totalorder %s14, 1
    %p100 = por %p98, %p99
    %p101 = scmp.ne.s32.totalorder %s90, %s91
    %p102 = scmp.eq.s32.totalorder %s14, 0
    %p103 = por %p101, %p102
    %p104 = scmp.ne.s32.totalorder %s90, %s91
    %p105 = scmp.eq.s32.totalorder %s15, 1
    %p106 = por %p104, %p105
    %p108 = scmp.ne.s32.totalorder %s91, %s107
    %p109 = scmp.eq.s32.totalorder %s15, 0
    %p110 = por %p108, %p109
    %p111 = scmp.le.s32.totalorder 1, %s9
    %p112 = scmp.lt.s32.totalorder %s9, 3
    %p113 = pnand %p111, %p112
    %p114 = pneg %p113
    // Predicated region
    $region9: #{se_rawformer_front.14} parent=5 // pred_check
      _
    $region10: #{se_rawformer_front.14} parent=5 // pred_check_branch
      %116 = sbr.rel (%p113) target = $region12
    $region11: #{se_rawformer_front.14} parent=5 // pred_region
      %s117 = ssub.s32 %s9, 1
      // Predicated region
      $region13: #{se_rawformer_front.14} parent=11 // pred_check
        %p118 = pneg %p56
      $region14: #{se_rawformer_front.14} parent=11 // pred_check_branch
        %120 = sbr.rel (%p118) target = $region16
      $region15: #{se_rawformer_front.14} parent=11 // pred_region
        _
      $region16: #{se_rawformer_front.14} parent=11 // pred_fallthru
        _
      // Predicated region
      $region17: #{se_rawformer_front.14} parent=11 // pred_check
        %p121 = pneg %p77
      $region18: #{se_rawformer_front.14} parent=11 // pred_check_branch
        %123 = sbr.rel (%p121) target = $region20
      $region19: #{se_rawformer_front.14} parent=11 // pred_region
        _
      $region20: #{se_rawformer_front.14} parent=11 // pred_fallthru
        _
    $region12: #{se_rawformer_front.14} parent=5 // pred_fallthru
      _
    %p124 = scmp.lt.s32.totalorder %s9, 2
    // Predicated region
    $region21: #{se_rawformer_front.14} parent=5 // pred_check
      %p125 = pneg %p124
    $region22: #{se_rawformer_front.14} parent=5 // pred_check_branch
      %127 = sbr.rel (%p125) target = $region24
    $region23: #{se_rawformer_front.14} parent=5 // pred_region
      // Predicated region
      $region25: #{se_rawformer_front.14} parent=23 // pred_check
        %p128 = pneg %p29
      $region26: #{se_rawformer_front.14} parent=23 // pred_check_branch
        %130 = sbr.rel (%p128) target = $region28
      $region27: #{se_rawformer_front.14} parent=23 // pred_region
        %p131 = scmp.lt.s32.totalorder %s9, 1
        %s132 = scalar_select %p131, %s9, 1
        %s133 = smul.addr %s132, 7
        %s134 = smul.addr %s133, 2
        %s135 = scalar_lea.vmem %s0, %s134
      $region28: #{se_rawformer_front.14} parent=23 // pred_fallthru
        _
    $region24: #{se_rawformer_front.14} parent=5 // pred_fallthru
      _
    %p136 = scmp.le.s32.totalorder 1, %s9
    %p137 = scmp.lt.s32.totalorder %s9, 3
    %p138 = pnand %p136, %p137
    %p139 = pneg %p138
    // Predicated region
    $region29: #{se_rawformer_front.14} parent=5 // pred_check
      _
    $region30: #{se_rawformer_front.14} parent=5 // pred_check_branch
      %141 = sbr.rel (%p138) target = $region32
    $region31: #{se_rawformer_front.14} parent=5 // pred_region
      %s142 = ssub.s32 %s9, 1
      %p143 = scmp.lt.s32.totalorder %s14, 1
      %s144 = scalar_select %p143, %s14, 1
      %s145 = smul.addr %s144, 7
      %s146 = smul.addr %s145, 2
      %s147 = scalar_lea.vmem %s0, %s146
      %p148 = pneg %p35
      %p149 = pneg %p32
      %p150 = pneg %p56
      %p151 = pneg %p53
      %p152 = pneg %p77
      %p153 = pneg %p74
      %p154 = pneg %p103
      %p155 = pneg %p100
      %p156 = scmp.lt.s32.totalorder %s14, 1
      %s157 = scalar_select %p156, %s14, 1
      %s158 = smul.addr %s157, 24
      %s159 = smul.addr %s158, 8
      %s160 = scalar_lea.vmem %s3, %s159
      %p161 = scmp.lt.s32.totalorder %s14, 1
      %s162 = scalar_select %p161, %s14, 1
      %s163 = smul.addr %s162, 7
      %s164 = smul.addr %s163, 2
      %s165 = scalar_lea.vmem %s0, %s164
      %p166 = scmp.lt.s32.totalorder %s14, 1
      %s167 = scalar_select %p166, %s14, 1
      %s168 = smul.addr %s167, 24
      %s169 = smul.addr %s168, 8
      %s170 = scalar_lea.vmem %s3, %s169
      %v172 = vld [vmem:[%s1] sm:$0xf]
      %v173 = vld [vmem:[%s1 + $0x4] sm:$0xf]
      %v174 = vld [vmem:[%s1 + $0x8] sm:$0xf]
      %v175 = vld [vmem:[%s1 + $0xc] sm:$0xf]
      %v176 = vld [vmem:[%s165] sm:$0xff]
      %v177 = vld [vmem:[%s165 + $0x8] sm:$0xf]
      %v178 = vld [vmem:[%s165 + $0x8] sm:$0x3f]
      %s179 = scalar_lea.vmem %s1, 16
      %v180 = vld [vmem:[%s179] sm:$0xf]
      %v181 = vld [vmem:[%s179 + $0x4] sm:$0xf]
      %v182 = vld [vmem:[%s179 + $0x8] sm:$0xf]
      %v183 = vld [vmem:[%s179 + $0xc] sm:$0xf]
      %v188 = vunpack.c.l.b16 %v180
      %v189 = vunpack.c.l.b16 %v181
      %v190 = vunpack.c.l.b16 %v182
      %v191 = vunpack.c.l.b16 %v183
      %v192 = vpack.c.b16 %v189, %v188
      %v193 = vpack.c.b16 %v191, %v190
      %v196 = vcombine.high %v176, %v176
      %v198 = vunpack.c.l.s4 1983009808
      %v199 = vunpack.c.0.s8 %v198
      %v200 = vlaneseq
      %v201 = vshrl.u32 %v200, 7
      %v202 = vsub.s32 %v199, %v201
      %v203 = vrot.slane %v176, %v202
      %v205 = vunpack.c.l.s4 1983009808
      %v206 = vunpack.c.0.s8 %v205
      %v207 = vlaneseq
      %v208 = vshrl.u32 %v207, 7
      %v209 = vsub.s32 %v206, %v208
      %v210 = vrot.slane %v196, %v209
      %v211 = vcombine.high %v203, %v203
      %v212 = vcombine.high %v210, %v210
      %v213 = vcombine.high %v178, %v178
      %v215 = vunpack.c.l.s4 1983009808
      %v216 = vunpack.c.0.s8 %v215
      %v217 = vlaneseq
      %v218 = vshrl.u32 %v217, 7
      %v219 = vsub.s32 %v216, %v218
      %v220 = vrot.slane %v178, %v219
      %v222 = vunpack.c.l.s4 1983009808
      %v223 = vunpack.c.0.s8 %v222
      %v224 = vlaneseq
      %v225 = vshrl.u32 %v224, 7
      %v226 = vsub.s32 %v223, %v225
      %v227 = vrot.slane %v213, %v226
      %v228 = vcombine.high %v220, %v220
      %229 = vrot.lane.b32.xlu0 %v203, 96
      %v230 = vpop.permute.xlu0 %229
      %231 = vrot.lane.b32.xlu0 %v211, 96
      %v232 = vpop.permute.xlu0 %231
      %233 = vrot.lane.b32.xlu0 %v210, 96
      %v234 = vpop.permute.xlu0 %233
      %235 = vrot.lane.b32.xlu0 %v212, 96
      %v236 = vpop.permute.xlu0 %235
      %237 = vrot.lane.b32.xlu0 %v220, 96
      %v238 = vpop.permute.xlu0 %237
      %239 = vrot.lane.b32.xlu0 %v228, 96
      %v240 = vpop.permute.xlu0 %239
      %241 = vrot.lane.b32.xlu0 %v227, 96
      %v242 = vpop.permute.xlu0 %241
      %vm243 = vcmask 785408
      %v244 = vsel %vm243, %v230, %v232
      %v245 = vsel %vm243, %v232, %v234
      %v246 = vsel %vm243, %v234, %v236
      %v247 = vsel %vm243, %v236, %v238
      %v248 = vsel %vm243, %v238, %v240
      %v249 = vsel %vm243, %v240, %v242
      %vm250 = vcmask 23552
      %v252 = vsel %vm250, %v192, 0
      %v255 = vsel %vm250, %v193, 0
      %vm257 = vcmask 1040384
      %vm258 = vcmask 1041408
      %v259 = vsel %vm257, 4294967295, 65535
      %v260 = vsel %vm258, %v259, 0
      %v262 = vand.u32 %v244, %v260
      %v265 = vand.u32 %v245, %v260
      %v268 = vand.u32 %v246, %v260
      %v271 = vand.u32 %v247, %v260
      %v274 = vand.u32 %v248, %v260
      %v277 = vand.u32 %v249, %v260
      %279 = vmatprep.subr.bf16.mxu0 %v265
      %280 = vmatpush1.bf16.msra.mxu0 %v262
      %281 = vmatprep.subr.bf16.mxu0 0
      %282 = vmatpush1.bf16.msra.mxu0 0
      %283 = vmatprep.subr.bf16.mxu0 0
      %284 = vmatpush1.bf16.msra.mxu0 0
      %285 = vmatprep.subr.bf16.mxu0 0
      %286 = vmatpush1.bf16.msra.mxu0 0
      %287 = vmatprep.subr.bf16.mxu0 0
      %288 = vmatpush1.bf16.msra.mxu0 0
      %289 = vmatprep.subr.bf16.mxu0 0
      %290 = vmatpush1.bf16.msra.mxu0 0
      %291 = vmatprep.subr.bf16.mxu0 0
      %292 = vmatpush1.bf16.msra.mxu0 0
      %293 = vmatprep.subr.bf16.mxu0 0
      %294 = vmatpush1.bf16.msra.mxu0 0
      %295 = vmatprep.subr.bf16.mxu0 0
      %296 = vmatpush1.bf16.msra.mxu0 0
      %297 = vmatprep.subr.bf16.mxu0 0
      %298 = vmatpush1.bf16.msra.mxu0 0
      %299 = vmatprep.subr.bf16.mxu0 0
      %300 = vmatpush1.bf16.msra.mxu0 0
      %301 = vmatprep.subr.bf16.mxu0 0
      %302 = vmatpush1.bf16.msra.mxu0 0
      %303 = vmatprep.subr.bf16.mxu0 0
      %304 = vmatpush1.bf16.msra.mxu0 0
      %305 = vmatprep.subr.bf16.mxu0 0
      %306 = vmatpush1.bf16.msra.mxu0 0
      %307 = vmatprep.subr.bf16.mxu0 0
      %308 = vmatpush1.bf16.msra.mxu0 0
      %309 = vmatprep.subr.bf16.mxu0 0
      %310 = vmatpush1.bf16.msra.mxu0 0
      %311 = vmatprep.mubr.bf16.mxu0 0
      %312 = vmatmul.mubr.bf16.gmra.mrb[0].mxu0 %v252
      %v313 = vpop.f32.mrb[0].mxu0
      %v314 = vadd.f32 0.0, %v313
      %v315 = vpop.f32.mrb[0].mxu0
      %v316 = vadd.f32 0.0, %v315
      %v317 = vpop.f32.mrb[0].mxu0
      %v318 = vadd.f32 0.0, %v317
      %v319 = vpop.f32.mrb[0].mxu0
      %v320 = vadd.f32 0.0, %v319
      %321 = vmatprep.mubr.bf16.mxu0 0
      %322 = vmatmul.mubr.bf16.gmra.mrb[0].mxu0 %v255
      %v323 = vpop.f32.mrb[0].mxu0
      %v324 = vadd.f32 0.0, %v323
      %v325 = vpop.f32.mrb[0].mxu0
      %v326 = vadd.f32 0.0, %v325
      %v327 = vpop.f32.mrb[0].mxu0
      %v328 = vadd.f32 0.0, %v327
      %v329 = vpop.f32.mrb[0].mxu0
      %v330 = vadd.f32 0.0, %v329
      %331 = vdwg.mxu0
      %332 = vmatprep.subr.bf16.mxu0 %v271
      %333 = vmatpush1.bf16.msra.mxu0 %v268
      %334 = vmatprep.subr.bf16.mxu0 0
      %335 = vmatpush1.bf16.msra.mxu0 0
      %336 = vmatprep.subr.bf16.mxu0 0
      %337 = vmatpush1.bf16.msra.mxu0 0
      %338 = vmatprep.subr.bf16.mxu0 0
      %339 = vmatpush1.bf16.msra.mxu0 0
      %340 = vmatprep.subr.bf16.mxu0 0
      %341 = vmatpush1.bf16.msra.mxu0 0
      %342 = vmatprep.subr.bf16.mxu0 0
      %343 = vmatpush1.bf16.msra.mxu0 0
      %344 = vmatprep.subr.bf16.mxu0 0
      %345 = vmatpush1.bf16.msra.mxu0 0
      %346 = vmatprep.subr.bf16.mxu0 0
      %347 = vmatpush1.bf16.msra.mxu0 0
      %348 = vmatprep.subr.bf16.mxu0 0
      %349 = vmatpush1.bf16.msra.mxu0 0
      %350 = vmatprep.subr.bf16.mxu0 0
      %351 = vmatpush1.bf16.msra.mxu0 0
      %352 = vmatprep.subr.bf16.mxu0 0
      %353 = vmatpush1.bf16.msra.mxu0 0
      %354 = vmatprep.subr.bf16.mxu0 0
      %355 = vmatpush1.bf16.msra.mxu0 0
      %356 = vmatprep.subr.bf16.mxu0 0
      %357 = vmatpush1.bf16.msra.mxu0 0
      %358 = vmatprep.subr.bf16.mxu0 0
      %359 = vmatpush1.bf16.msra.mxu0 0
      %360 = vmatprep.subr.bf16.mxu0 0
      %361 = vmatpush1.bf16.msra.mxu0 0
      %362 = vmatprep.subr.bf16.mxu0 0
      %363 = vmatpush1.bf16.msra.mxu0 0
      %364 = vmatprep.mubr.bf16.mxu0 0
      %365 = vmatmul.mubr.bf16.gmra.mrb[0].mxu0 %v252
      %v366 = vpop.f32.mrb[0].mxu0
      %v367 = vadd.f32 0.0, %v366
      %v368 = vpop.f32.mrb[0].mxu0
      %v369 = vadd.f32 0.0, %v368
      %v370 = vpop.f32.mrb[0].mxu0
      %v371 = vadd.f32 0.0, %v370
      %v372 = vpop.f32.mrb[0].mxu0
      %v373 = vadd.f32 0.0, %v372
      %374 = vmatprep.mubr.bf16.mxu0 0
      %375 = vmatmul.mubr.bf16.gmra.mrb[0].mxu0 %v255
      %v376 = vpop.f32.mrb[0].mxu0
      %v377 = vadd.f32 0.0, %v376
      %v378 = vpop.f32.mrb[0].mxu0
      %v379 = vadd.f32 0.0, %v378
      %v380 = vpop.f32.mrb[0].mxu0
      %v381 = vadd.f32 0.0, %v380
      %v382 = vpop.f32.mrb[0].mxu0
      %v383 = vadd.f32 0.0, %v382
      %384 = vdwg.mxu0
      %385 = vmatprep.subr.bf16.mxu0 %v277
      %386 = vmatpush1.bf16.msra.mxu0 %v274
      %387 = vmatprep.subr.bf16.mxu0 0
      %388 = vmatpush1.bf16.msra.mxu0 0
      %389 = vmatprep.subr.bf16.mxu0 0
      %390 = vmatpush1.bf16.msra.mxu0 0
      %391 = vmatprep.subr.bf16.mxu0 0
      %392 = vmatpush1.bf16.msra.mxu0 0
      %393 = vmatprep.subr.bf16.mxu0 0
      %394 = vmatpush1.bf16.msra.mxu0 0
      %395 = vmatprep.subr.bf16.mxu0 0
      %396 = vmatpush1.bf16.msra.mxu0 0
      %397 = vmatprep.subr.bf16.mxu0 0
      %398 = vmatpush1.bf16.msra.mxu0 0
      %399 = vmatprep.subr.bf16.mxu0 0
      %400 = vmatpush1.bf16.msra.mxu0 0
      %401 = vmatprep.subr.bf16.mxu0 0
      %402 = vmatpush1.bf16.msra.mxu0 0
      %403 = vmatprep.subr.bf16.mxu0 0
      %404 = vmatpush1.bf16.msra.mxu0 0
      %405 = vmatprep.subr.bf16.mxu0 0
      %406 = vmatpush1.bf16.msra.mxu0 0
      %407 = vmatprep.subr.bf16.mxu0 0
      %408 = vmatpush1.bf16.msra.mxu0 0
      %409 = vmatprep.subr.bf16.mxu0 0
      %410 = vmatpush1.bf16.msra.mxu0 0
      %411 = vmatprep.subr.bf16.mxu0 0
      %412 = vmatpush1.bf16.msra.mxu0 0
      %413 = vmatprep.subr.bf16.mxu0 0
      %414 = vmatpush1.bf16.msra.mxu0 0
      %415 = vmatprep.subr.bf16.mxu0 0
      %416 = vmatpush1.bf16.msra.mxu0 0
      %417 = vmatprep.mubr.bf16.mxu0 0
      %418 = vmatmul.mubr.bf16.gmra.mrb[0].mxu0 %v252
      %v419 = vpop.f32.mrb[0].mxu0
      %v420 = vadd.f32 0.0, %v419
      %v421 = vpop.f32.mrb[0].mxu0
      %v422 = vadd.f32 0.0, %v421
      %v423 = vpop.f32.mrb[0].mxu0
      %v424 = vadd.f32 0.0, %v423
      %v425 = vpop.f32.mrb[0].mxu0
      %v426 = vadd.f32 0.0, %v425
      %427 = vmatprep.mubr.bf16.mxu0 0
      %428 = vmatmul.mubr.bf16.gmra.mrb[0].mxu0 %v255
      %v429 = vpop.f32.mrb[0].mxu0
      %v430 = vadd.f32 0.0, %v429
      %v431 = vpop.f32.mrb[0].mxu0
      %v432 = vadd.f32 0.0, %v431
      %v433 = vpop.f32.mrb[0].mxu0
      %v434 = vadd.f32 0.0, %v433
      %v435 = vpop.f32.mrb[0].mxu0
      %v436 = vadd.f32 0.0, %v435
      %437 = vdwg.mxu0
      %v442 = vunpack.c.l.b16 %v172
      %v443 = vunpack.c.l.b16 %v173
      %v444 = vunpack.c.l.b16 %v174
      %v445 = vunpack.c.l.b16 %v175
      %v446 = vpack.c.b16 %v443, %v442
      %v447 = vpack.c.b16 %v445, %v444
      %v450 = vunpack.c.l.s4 1983009808
      %v451 = vunpack.c.0.s8 %v450
      %v452 = vlaneseq
      %v453 = vshrl.u32 %v452, 7
      %v454 = vsub.s32 %v451, %v453
      %v455 = vrot.slane %v177, %v454
      %v456 = vcombine.high %v455, %v455
      %v458 = vsel %vm250, %v446, 0
      %v461 = vsel %vm250, %v447, 0
      %v464 = vand.u32 %v203, %v260
      %v467 = vand.u32 %v211, %v260
      %v470 = vand.u32 %v210, %v260
      %v473 = vand.u32 %v212, %v260
      %v476 = vand.u32 %v455, %v260
      %v479 = vand.u32 %v456, %v260
      %481 = vmatprep.subr.bf16.mxu0 %v467
      %482 = vmatpush1.bf16.msra.mxu0 %v464
      %483 = vmatprep.subr.bf16.mxu0 0
      %484 = vmatpush1.bf16.msra.mxu0 0
      %485 = vmatprep.subr.bf16.mxu0 0
      %486 = vmatpush1.bf16.msra.mxu0 0
      %487 = vmatprep.subr.bf16.mxu0 0
      %488 = vmatpush1.bf16.msra.mxu0 0
      %489 = vmatprep.subr.bf16.mxu0 0
      %490 = vmatpush1.bf16.msra.mxu0 0
      %491 = vmatprep.subr.bf16.mxu0 0
      %492 = vmatpush1.bf16.msra.mxu0 0
      %493 = vmatprep.subr.bf16.mxu0 0
      %494 = vmatpush1.bf16.msra.mxu0 0
      %495 = vmatprep.subr.bf16.mxu0 0
      %496 = vmatpush1.bf16.msra.mxu0 0
      %497 = vmatprep.subr.bf16.mxu0 0
      %498 = vmatpush1.bf16.msra.mxu0 0
      %499 = vmatprep.subr.bf16.mxu0 0
      %500 = vmatpush1.bf16.msra.mxu0 0
      %501 = vmatprep.subr.bf16.mxu0 0
      %502 = vmatpush1.bf16.msra.mxu0 0
      %503 = vmatprep.subr.bf16.mxu0 0
      %504 = vmatpush1.bf16.msra.mxu0 0
      %505 = vmatprep.subr.bf16.mxu0 0
      %506 = vmatpush1.bf16.msra.mxu0 0
      %507 = vmatprep.subr.bf16.mxu0 0
      %508 = vmatpush1.bf16.msra.mxu0 0
      %509 = vmatprep.subr.bf16.mxu0 0
      %510 = vmatpush1.bf16.msra.mxu0 0
      %511 = vmatprep.subr.bf16.mxu0 0
      %512 = vmatpush1.bf16.msra.mxu0 0
      %513 = vmatprep.mubr.bf16.mxu0 0
      %514 = vmatmul.mubr.bf16.gmra.mrb[0].mxu0 %v458
      %v515 = vpop.f32.mrb[0].mxu0
      %v516 = vadd.f32 %v314, %v515
      %v517 = vpop.f32.mrb[0].mxu0
      %v518 = vadd.f32 %v316, %v517
      %v519 = vpop.f32.mrb[0].mxu0
      %v520 = vadd.f32 %v318, %v519
      %v521 = vpop.f32.mrb[0].mxu0
      %v522 = vadd.f32 %v320, %v521
      %523 = vmatprep.mubr.bf16.mxu0 0
      %524 = vmatmul.mubr.bf16.gmra.mrb[0].mxu0 %v461
      %v525 = vpop.f32.mrb[0].mxu0
      %v526 = vadd.f32 %v324, %v525
      %v527 = vpop.f32.mrb[0].mxu0
      %v528 = vadd.f32 %v326, %v527
      %v529 = vpop.f32.mrb[0].mxu0
      %v530 = vadd.f32 %v328, %v529
      %v531 = vpop.f32.mrb[0].mxu0
      %v532 = vadd.f32 %v330, %v531
      %533 = vdwg.mxu0
      %534 = vmatprep.subr.bf16.mxu0 %v473
      %535 = vmatpush1.bf16.msra.mxu0 %v470
      %536 = vmatprep.subr.bf16.mxu0 0
      %537 = vmatpush1.bf16.msra.mxu0 0
      %538 = vmatprep.subr.bf16.mxu0 0
      %539 = vmatpush1.bf16.msra.mxu0 0
      %540 = vmatprep.subr.bf16.mxu0 0
      %541 = vmatpush1.bf16.msra.mxu0 0
      %542 = vmatprep.subr.bf16.mxu0 0
      %543 = vmatpush1.bf16.msra.mxu0 0
      %544 = vmatprep.subr.bf16.mxu0 0
      %545 = vmatpush1.bf16.msra.mxu0 0
      %546 = vmatprep.subr.bf16.mxu0 0
      %547 = vmatpush1.bf16.msra.mxu0 0
      %548 = vmatprep.subr.bf16.mxu0 0
      %549 = vmatpush1.bf16.msra.mxu0 0
      %550 = vmatprep.subr.bf16.mxu0 0
      %551 = vmatpush1.bf16.msra.mxu0 0
      %552 = vmatprep.subr.bf16.mxu0 0
      %553 = vmatpush1.bf16.msra.mxu0 0
      %554 = vmatprep.subr.bf16.mxu0 0
      %555 = vmatpush1.bf16.msra.mxu0 0
      %556 = vmatprep.subr.bf16.mxu0 0
      %557 = vmatpush1.bf16.msra.mxu0 0
      %558 = vmatprep.subr.bf16.mxu0 0
      %559 = vmatpush1.bf16.msra.mxu0 0
      %560 = vmatprep.subr.bf16.mxu0 0
      %561 = vmatpush1.bf16.msra.mxu0 0
      %562 = vmatprep.subr.bf16.mxu0 0
      %563 = vmatpush1.bf16.msra.mxu0 0
      %564 = vmatprep.subr.bf16.mxu0 0
      %565 = vmatpush1.bf16.msra.mxu0 0
      %566 = vmatprep.mubr.bf16.mxu0 0
      %567 = vmatmul.mubr.bf16.gmra.mrb[0].mxu0 %v458
      %v568 = vpop.f32.mrb[0].mxu0
      %v569 = vadd.f32 %v367, %v568
      %v570 = vpop.f32.mrb[0].mxu0
      %v571 = vadd.f32 %v369, %v570
      %v572 = vpop.f32.mrb[0].mxu0
      %v573 = vadd.f32 %v371, %v572
      %v574 = vpop.f32.mrb[0].mxu0
      %v575 = vadd.f32 %v373, %v574
      %576 = vmatprep.mubr.bf16.mxu0 0
      %577 = vmatmul.mubr.bf16.gmra.mrb[0].mxu0 %v461
      %v578 = vpop.f32.mrb[0].mxu0
      %v579 = vadd.f32 %v377, %v578
      %v580 = vpop.f32.mrb[0].mxu0
      %v581 = vadd.f32 %v379, %v580
      %v582 = vpop.f32.mrb[0].mxu0
      %v583 = vadd.f32 %v381, %v582
      %v584 = vpop.f32.mrb[0].mxu0
      %v585 = vadd.f32 %v383, %v584
      %586 = vdwg.mxu0
      %587 = vmatprep.subr.bf16.mxu0 %v479
      %588 = vmatpush1.bf16.msra.mxu0 %v476
      %589 = vmatprep.subr.bf16.mxu0 0
      %590 = vmatpush1.bf16.msra.mxu0 0
      %591 = vmatprep.subr.bf16.mxu0 0
      %592 = vmatpush1.bf16.msra.mxu0 0
      %593 = vmatprep.subr.bf16.mxu0 0
      %594 = vmatpush1.bf16.msra.mxu0 0
      %595 = vmatprep.subr.bf16.mxu0 0
      %596 = vmatpush1.bf16.msra.mxu0 0
      %597 = vmatprep.subr.bf16.mxu0 0
      %598 = vmatpush1.bf16.msra.mxu0 0
      %599 = vmatprep.subr.bf16.mxu0 0
      %600 = vmatpush1.bf16.msra.mxu0 0
      %601 = vmatprep.subr.bf16.mxu0 0
      %602 = vmatpush1.bf16.msra.mxu0 0
      %603 = vmatprep.subr.bf16.mxu0 0
      %604 = vmatpush1.bf16.msra.mxu0 0
      %605 = vmatprep.subr.bf16.mxu0 0
      %606 = vmatpush1.bf16.msra.mxu0 0
      %607 = vmatprep.subr.bf16.mxu0 0
      %608 = vmatpush1.bf16.msra.mxu0 0
      %609 = vmatprep.subr.bf16.mxu0 0
      %610 = vmatpush1.bf16.msra.mxu0 0
      %611 = vmatprep.subr.bf16.mxu0 0
      %612 = vmatpush1.bf16.msra.mxu0 0
      %613 = vmatprep.subr.bf16.mxu0 0
      %614 = vmatpush1.bf16.msra.mxu0 0
      %615 = vmatprep.subr.bf16.mxu0 0
      %616 = vmatpush1.bf16.msra.mxu0 0
      %617 = vmatprep.subr.bf16.mxu0 0
      %618 = vmatpush1.bf16.msra.mxu0 0
      %619 = vmatprep.mubr.bf16.mxu0 0
      %620 = vmatmul.mubr.bf16.gmra.mrb[0].mxu0 %v458
      %v621 = vpop.f32.mrb[0].mxu0
      %v622 = vadd.f32 %v420, %v621
      %v623 = vpop.f32.mrb[0].mxu0
      %v624 = vadd.f32 %v422, %v623
      %v625 = vpop.f32.mrb[0].mxu0
      %v626 = vadd.f32 %v424, %v625
      %v627 = vpop.f32.mrb[0].mxu0
      %v628 = vadd.f32 %v426, %v627
      %629 = vmatprep.mubr.bf16.mxu0 0
      %630 = vmatmul.mubr.bf16.gmra.mrb[0].mxu0 %v461
      %v631 = vpop.f32.mrb[0].mxu0
      %v632 = vadd.f32 %v430, %v631
      %v633 = vpop.f32.mrb[0].mxu0
      %v634 = vadd.f32 %v432, %v633
      %v635 = vpop.f32.mrb[0].mxu0
      %v636 = vadd.f32 %v434, %v635
      %v637 = vpop.f32.mrb[0].mxu0
      %v638 = vadd.f32 %v436, %v637
      %639 = vdwg.mxu0
      %v640 = vld [vmem:[%s2] sm:$0xff]
      %v641 = vld [vmem:[%s2 + $0x8] sm:$0xff]
      %v642 = vld [vmem:[%s2 + $0x10] sm:$0xff]
      %v643 = vld [vmem:[%s2 + $0x18] sm:$0xff]
      %645 = vset.pattern.permute.xlu0 0
      %646 = vperm.xlu0 %645, %v640
      %v647 = vpop.permute.xlu0 %646
      %650 = vset.pattern.permute.xlu0 0
      %651 = vperm.xlu0 %650, %v641
      %v652 = vpop.permute.xlu0 %651
      %655 = vset.pattern.permute.xlu0 0
      %656 = vperm.xlu0 %655, %v642
      %v657 = vpop.permute.xlu0 %656
      %660 = vset.pattern.permute.xlu0 0
      %661 = vperm.xlu0 %660, %v643
      %v662 = vpop.permute.xlu0 %661
      %v664 = vadd.f32 %v516, %v647
      %v665 = vadd.f32 %v518, %v647
      %v666 = vadd.f32 %v569, %v647
      %v667 = vadd.f32 %v571, %v647
      %v668 = vadd.f32 %v622, %v647
      %v669 = vadd.f32 %v624, %v647
      %v670 = vadd.f32 %v520, %v652
      %v671 = vadd.f32 %v522, %v652
      %v672 = vadd.f32 %v573, %v652
      %v673 = vadd.f32 %v575, %v652
      %v674 = vadd.f32 %v626, %v652
      %v675 = vadd.f32 %v628, %v652
      %v676 = vadd.f32 %v526, %v657
      %v677 = vadd.f32 %v528, %v657
      %v678 = vadd.f32 %v579, %v657
      %v679 = vadd.f32 %v581, %v657
      %v680 = vadd.f32 %v632, %v657
      %v681 = vadd.f32 %v634, %v657
      %v682 = vadd.f32 %v530, %v662
      %v683 = vadd.f32 %v532, %v662
      %v684 = vadd.f32 %v583, %v662
      %v685 = vadd.f32 %v585, %v662
      %v686 = vadd.f32 %v636, %v662
      %v687 = vadd.f32 %v638, %v662
      %688 = vst [vmem:[%s170] sm:$0xff] %v664
      %689 = vst [vmem:[%s170 + $0x8] sm:$0xff] %v665
      %690 = vst [vmem:[%s170 + $0x10] sm:$0xff] %v666
      %691 = vst [vmem:[%s170 + $0x18] sm:$0xff] %v667
      %692 = vst [vmem:[%s170 + $0x20] sm:$0xff] %v668
      %693 = vst [vmem:[%s170 + $0x28] sm:$0xff] %v669
      %694 = vst [vmem:[%s170 + $0x30] sm:$0xff] %v670
      %695 = vst [vmem:[%s170 + $0x38] sm:$0xff] %v671
      %696 = vst [vmem:[%s170 + $0x40] sm:$0xff] %v672
      %697 = vst [vmem:[%s170 + $0x48] sm:$0xff] %v673
      %698 = vst [vmem:[%s170 + $0x50] sm:$0xff] %v674
      %699 = vst [vmem:[%s170 + $0x58] sm:$0xff] %v675
      %700 = vst [vmem:[%s170 + $0x60] sm:$0xff] %v676
      %701 = vst [vmem:[%s170 + $0x68] sm:$0xff] %v677
      %702 = vst [vmem:[%s170 + $0x70] sm:$0xff] %v678
      %703 = vst [vmem:[%s170 + $0x78] sm:$0xff] %v679
      %704 = vst [vmem:[%s170 + $0x80] sm:$0xff] %v680
      %705 = vst [vmem:[%s170 + $0x88] sm:$0xff] %v681
      %706 = vst [vmem:[%s170 + $0x90] sm:$0xff] %v682
      %707 = vst [vmem:[%s170 + $0x98] sm:$0xff] %v683
      %708 = vst [vmem:[%s170 + $0xa0] sm:$0xff] %v684
      %709 = vst [vmem:[%s170 + $0xa8] sm:$0xff] %v685
      %710 = vst [vmem:[%s170 + $0xb0] sm:$0xff] %v686
      %711 = vst [vmem:[%s170 + $0xb8] sm:$0xff] %v687
      %p712 = scmp.lt.s32.totalorder %s14, 1
      %s713 = scalar_select %p712, %s14, 1
      %s714 = smul.addr %s713, 24
      %s715 = smul.addr %s714, 8
      %s716 = scalar_lea.vmem %s3, %s715
      // Predicated region
      $region33: #{se_rawformer_front.14} parent=31 // pred_check
        %p717 = pneg %p100
      $region34: #{se_rawformer_front.14} parent=31 // pred_check_branch
        %719 = sbr.rel (%p717) target = $region36
      $region35: #{se_rawformer_front.14} parent=31 // pred_region
        _
      $region36: #{se_rawformer_front.14} parent=31 // pred_fallthru
        _
    $region32: #{se_rawformer_front.14} parent=5 // pred_fallthru
      _
    %p720 = scmp.le.s32.totalorder 2, %s9
    // Predicated region
    $region37: #{se_rawformer_front.14} parent=5 // pred_check
      %p721 = pneg %p720
    $region38: #{se_rawformer_front.14} parent=5 // pred_check_branch
      %723 = sbr.rel (%p721) target = $region40
    $region39: #{se_rawformer_front.14} parent=5 // pred_region
      %s724 = ssub.s32 %s9, 2
      // Predicated region
      $region41: #{se_rawformer_front.14} parent=39 // pred_check
        %p725 = pneg %p106
      $region42: #{se_rawformer_front.14} parent=39 // pred_check_branch
        %727 = sbr.rel (%p725) target = $region44
      $region43: #{se_rawformer_front.14} parent=39 // pred_region
        %p728 = scmp.lt.s32.totalorder %s15, 1
        %s729 = scalar_select %p728, %s15, 1
        %s730 = smul.addr %s729, 24
        %s731 = smul.addr %s730, 8
        %s732 = scalar_lea.vmem %s3, %s731
      $region44: #{se_rawformer_front.14} parent=39 // pred_fallthru
        _
    $region40: #{se_rawformer_front.14} parent=5 // pred_fallthru
      _
  $region6: #{se_rawformer_front.14} parent=0 // loop_footer
    %s13 = sadd.s32 1, %s9
  $region7: #{se_rawformer_front.14} parent=0 // loop_footer_branch
    %8 = sbr.rel target = $region3
  $region8: #{se_rawformer_front.14} parent=0 // loop_exit
    _

// kernel: se_rawformer_front.15
$region0: #{se_rawformer_front.15}
  #allocation0 [shape = 'u32[]', space=smem, size = 0x4, offset = 0x4, fixed_abs, tag = 'smem constant byte address 0x4 - core index']
  #allocation1 [shape = 'u32[144,128]{1,0:T(1,128)}', space=vmem, size = 0x12000, scoped, tag = 'internal scratch']
  %s0 = inlined_call_operand.vmem [shape: bf16[2,3,368], index: 0, kind: input, shape index: {}]
  %s1 = inlined_call_operand.vmem [shape: bf16[1,32,3], index: 1, kind: input, shape index: {}]
  %s2 = inlined_call_operand.vmem [shape: f32[32,1], index: 2, kind: input, shape index: {}]
  %s3 = inlined_call_operand.vmem [shape: f32[2,32,368], index: 3, kind: output, shape index: {}]
  %s4 = sld [smem:[#allocation0]]
  $region45: #{se_rawformer_front.15} parent=0
    _
  %s6 = ssub.s32 1, %s4
  %s7 = scalar_select 0, %s6, %s4
  loop: start=0, step=1, limit=4
  $region2: #{se_rawformer_front.15} parent=0 // loop_pre_header
    _
  $region3: #{se_rawformer_front.15} parent=0 // loop_header
    %s9 = sphi 0, %s13
    %p10 = scmp.ge.s32.totalorder %s9, 4
    %s19 = sphi 0, %s21
    %s22 = sphi 0, %s19
    %s23 = sphi 0, %s22
    %s39 = sphi 0, %s23
    %s43 = sphi 0, %s43
    %s45 = sphi 0, %s43
    %s46 = sphi 0, %s45
    %s60 = sphi 0, %s46
    %s64 = sphi 0, %s64
    %s66 = sphi 0, %s64
    %s67 = sphi 0, %s66
    %s81 = sphi 0, %s67
    %s87 = sphi 0, %s89
    %s90 = sphi 0, %s87
    %s91 = sphi 0, %s90
    %s107 = sphi 0, %s91
  $region4: #{se_rawformer_front.15} parent=0 // loop_header_branch
    %12 = sbr.rel (%p10) target = $region8
  $region5: #{se_rawformer_front.15} parent=0 // loop_body
    %s14 = ssub.s32 %s9, 1
    %s15 = ssub.s32 %s9, 2
    %s16 = sadd.s32 %s9, 1
    %s17 = ssub.s32 %s9, %s16
    %p18 = scmp.eq.s32.totalorder %s17, 0
    %s20 = sadd.s32 %s19, 1
    %s21 = scalar_select %p18, %s19, %s20
    %p24 = pneg %p18
    %p25 = scmp.eq.s32.totalorder %s9, 1
    %p26 = por %p24, %p25
    %p27 = scmp.ne.s32.totalorder %s19, %s22
    %p28 = scmp.eq.s32.totalorder %s9, 0
    %p29 = por %p27, %p28
    %p30 = scmp.ne.s32.totalorder %s19, %s22
    %p31 = scmp.eq.s32.totalorder %s14, 1
    %p32 = por %p30, %p31
    %p33 = scmp.ne.s32.totalorder %s22, %s23
    %p34 = scmp.eq.s32.totalorder %s14, 0
    %p35 = por %p33, %p34
    %p36 = scmp.ne.s32.totalorder %s22, %s23
    %p37 = scmp.eq.s32.totalorder %s15, 1
    %p38 = por %p36, %p37
    %p40 = scmp.ne.s32.totalorder %s23, %s39
    %p41 = scmp.eq.s32.totalorder %s15, 0
    %p42 = por %p40, %p41
    %s44 = sadd.s32 %s43, 1
    %p47 = scmp.eq.s32.totalorder %s9, 1
    %p48 = scmp.ne.s32.totalorder %s43, %s45
    %p49 = scmp.eq.s32.totalorder %s9, 0
    %p50 = por %p48, %p49
    %p51 = scmp.ne.s32.totalorder %s43, %s45
    %p52 = scmp.eq.s32.totalorder %s14, 1
    %p53 = por %p51, %p52
    %p54 = scmp.ne.s32.totalorder %s45, %s46
    %p55 = scmp.eq.s32.totalorder %s14, 0
    %p56 = por %p54, %p55
    %p57 = scmp.ne.s32.totalorder %s45, %s46
    %p58 = scmp.eq.s32.totalorder %s15, 1
    %p59 = por %p57, %p58
    %p61 = scmp.ne.s32.totalorder %s46, %s60
    %p62 = scmp.eq.s32.totalorder %s15, 0
    %p63 = por %p61, %p62
    %s65 = sadd.s32 %s64, 1
    %p68 = scmp.eq.s32.totalorder %s9, 1
    %p69 = scmp.ne.s32.totalorder %s64, %s66
    %p70 = scmp.eq.s32.totalorder %s9, 0
    %p71 = por %p69, %p70
    %p72 = scmp.ne.s32.totalorder %s64, %s66
    %p73 = scmp.eq.s32.totalorder %s14, 1
    %p74 = por %p72, %p73
    %p75 = scmp.ne.s32.totalorder %s66, %s67
    %p76 = scmp.eq.s32.totalorder %s14, 0
    %p77 = por %p75, %p76
    %p78 = scmp.ne.s32.totalorder %s66, %s67
    %p79 = scmp.eq.s32.totalorder %s15, 1
    %p80 = por %p78, %p79
    %p82 = scmp.ne.s32.totalorder %s67, %s81
    %p83 = scmp.eq.s32.totalorder %s15, 0
    %p84 = por %p82, %p83
    %s85 = ssub.s32 %s9, %s16
    %p86 = scmp.eq.s32.totalorder %s85, 0
    %s88 = sadd.s32 %s87, 1
    %s89 = scalar_select %p86, %s87, %s88
    %p92 = pneg %p86
    %p93 = scmp.eq.s32.totalorder %s9, 1
    %p94 = por %p92, %p93
    %p95 = scmp.ne.s32.totalorder %s87, %s90
    %p96 = scmp.eq.s32.totalorder %s9, 0
    %p97 = por %p95, %p96
    %p98 = scmp.ne.s32.totalorder %s87, %s90
    %p99 = scmp.eq.s32.totalorder %s14, 1
    %p100 = por %p98, %p99
    %p101 = scmp.ne.s32.totalorder %s90, %s91
    %p102 = scmp.eq.s32.totalorder %s14, 0
    %p103 = por %p101, %p102
    %p104 = scmp.ne.s32.totalorder %s90, %s91
    %p105 = scmp.eq.s32.totalorder %s15, 1
    %p106 = por %p104, %p105
    %p108 = scmp.ne.s32.totalorder %s91, %s107
    %p109 = scmp.eq.s32.totalorder %s15, 0
    %p110 = por %p108, %p109
    %p111 = scmp.le.s32.totalorder 1, %s9
    %p112 = scmp.lt.s32.totalorder %s9, 3
    %p113 = pnand %p111, %p112
    %p114 = pneg %p113
    // Predicated region
    $region9: #{se_rawformer_front.15} parent=5 // pred_check
      _
    $region10: #{se_rawformer_front.15} parent=5 // pred_check_branch
      %116 = sbr.rel (%p113) target = $region12
    $region11: #{se_rawformer_front.15} parent=5 // pred_region
      %s117 = ssub.s32 %s9, 1
      // Predicated region
      $region13: #{se_rawformer_front.15} parent=11 // pred_check
        %p118 = pneg %p56
      $region14: #{se_rawformer_front.15} parent=11 // pred_check_branch
        %120 = sbr.rel (%p118) target = $region16
      $region15: #{se_rawformer_front.15} parent=11 // pred_region
        _
      $region16: #{se_rawformer_front.15} parent=11 // pred_fallthru
        _
      // Predicated region
      $region17: #{se_rawformer_front.15} parent=11 // pred_check
        %p121 = pneg %p77
      $region18: #{se_rawformer_front.15} parent=11 // pred_check_branch
        %123 = sbr.rel (%p121) target = $region20
      $region19: #{se_rawformer_front.15} parent=11 // pred_region
        _
      $region20: #{se_rawformer_front.15} parent=11 // pred_fallthru
        _
    $region12: #{se_rawformer_front.15} parent=5 // pred_fallthru
      _
    %p124 = scmp.lt.s32.totalorder %s9, 2
    // Predicated region
    $region21: #{se_rawformer_front.15} parent=5 // pred_check
      %p125 = pneg %p124
    $region22: #{se_rawformer_front.15} parent=5 // pred_check_branch
      %127 = sbr.rel (%p125) target = $region24
    $region23: #{se_rawformer_front.15} parent=5 // pred_region
      // Predicated region
      $region25: #{se_rawformer_front.15} parent=23 // pred_check
        %p128 = pneg %p29
      $region26: #{se_rawformer_front.15} parent=23 // pred_check_branch
        %130 = sbr.rel (%p128) target = $region28
      $region27: #{se_rawformer_front.15} parent=23 // pred_region
        %p131 = scmp.lt.s32.totalorder %s9, 1
        %s132 = scalar_select %p131, %s9, 1
        %s133 = smul.addr %s132, 3
        %s134 = smul.addr %s133, 2
        %s135 = scalar_lea.vmem %s0, %s134
      $region28: #{se_rawformer_front.15} parent=23 // pred_fallthru
        _
    $region24: #{se_rawformer_front.15} parent=5 // pred_fallthru
      _
    %p136 = scmp.le.s32.totalorder 1, %s9
    %p137 = scmp.lt.s32.totalorder %s9, 3
    %p138 = pnand %p136, %p137
    %p139 = pneg %p138
    // Predicated region
    $region29: #{se_rawformer_front.15} parent=5 // pred_check
      _
    $region30: #{se_rawformer_front.15} parent=5 // pred_check_branch
      %141 = sbr.rel (%p138) target = $region32
    $region31: #{se_rawformer_front.15} parent=5 // pred_region
      %s142 = ssub.s32 %s9, 1
      %p143 = scmp.lt.s32.totalorder %s14, 1
      %s144 = scalar_select %p143, %s14, 1
      %s145 = smul.addr %s144, 3
      %s146 = smul.addr %s145, 2
      %s147 = scalar_lea.vmem %s0, %s146
      %p148 = pneg %p35
      %p149 = pneg %p32
      %p150 = pneg %p56
      %p151 = pneg %p53
      %p152 = pneg %p77
      %p153 = pneg %p74
      %p154 = pneg %p103
      %p155 = pneg %p100
      %p156 = scmp.lt.s32.totalorder %s14, 1
      %s157 = scalar_select %p156, %s14, 1
      %s158 = smul.addr %s157, 12
      %s159 = smul.addr %s158, 8
      %s160 = scalar_lea.vmem %s3, %s159
      %p161 = scmp.lt.s32.totalorder %s14, 1
      %s162 = scalar_select %p161, %s14, 1
      %s163 = smul.addr %s162, 3
      %s164 = smul.addr %s163, 2
      %s165 = scalar_lea.vmem %s0, %s164
      %p166 = scmp.lt.s32.totalorder %s14, 1
      %s167 = scalar_select %p166, %s14, 1
      %s168 = smul.addr %s167, 12
      %s169 = smul.addr %s168, 8
      %s170 = scalar_lea.vmem %s3, %s169
      %v172 = vld [vmem:[%s1] sm:$0xf]
      %v173 = vld [vmem:[%s1 + $0x4] sm:$0xf]
      %v174 = vld [vmem:[%s1 + $0x8] sm:$0xf]
      %v175 = vld [vmem:[%s1 + $0xc] sm:$0xf]
      %v176 = vld [vmem:[%s165] sm:$0x3f]
      %v177 = vld [vmem:[%s2] sm:$0xff]
      %v178 = vld [vmem:[%s2 + $0x8] sm:$0xff]
      %v179 = vld [vmem:[%s2 + $0x10] sm:$0xff]
      %v180 = vld [vmem:[%s2 + $0x18] sm:$0xff]
      %182 = vset.pattern.permute.xlu0 0
      %183 = vperm.xlu0 %182, %v177
      %v184 = vpop.permute.xlu0 %183
      %187 = vset.pattern.permute.xlu0 0
      %188 = vperm.xlu0 %187, %v178
      %v189 = vpop.permute.xlu0 %188
      %192 = vset.pattern.permute.xlu0 0
      %193 = vperm.xlu0 %192, %v179
      %v194 = vpop.permute.xlu0 %193
      %197 = vset.pattern.permute.xlu0 0
      %198 = vperm.xlu0 %197, %v180
      %v199 = vpop.permute.xlu0 %198
      %v205 = vunpack.c.l.b16 %v172
      %v206 = vunpack.c.l.b16 %v173
      %v207 = vunpack.c.l.b16 %v174
      %v208 = vunpack.c.l.b16 %v175
      %v209 = vpack.c.b16 %v206, %v205
      %v210 = vpack.c.b16 %v208, %v207
      %v212 = vcombine.high %v176, %v176
      %v214 = vunpack.c.l.s4 1983009808
      %v215 = vunpack.c.0.s8 %v214
      %v216 = vlaneseq
      %v217 = vshrl.u32 %v216, 7
      %v218 = vsub.s32 %v215, %v217
      %v219 = vrot.slane %v176, %v218
      %v221 = vunpack.c.l.s4 1983009808
      %v222 = vunpack.c.0.s8 %v221
      %v223 = vlaneseq
      %v224 = vshrl.u32 %v223, 7
      %v225 = vsub.s32 %v222, %v224
      %v226 = vrot.slane %v212, %v225
      %v227 = vcombine.high %v219, %v219
      %vm228 = vcmask 23552
      %v230 = vsel %vm228, %v209, 0
      %v233 = vsel %vm228, %v210, 0
      %vm235 = vcmask 1040384
      %vm236 = vcmask 1041408
      %v237 = vsel %vm235, 4294967295, 65535
      %v238 = vsel %vm236, %v237, 0
      %v240 = vand.u32 %v219, %v238
      %v243 = vand.u32 %v227, %v238
      %v246 = vand.u32 %v226, %v238
      %248 = vmatprep.subr.bf16.mxu0 %v243
      %249 = vmatpush1.bf16.msra.mxu0 %v240
      %250 = vmatprep.subr.bf16.mxu0 0
      %251 = vmatpush1.bf16.msra.mxu0 0
      %252 = vmatprep.subr.bf16.mxu0 0
      %253 = vmatpush1.bf16.msra.mxu0 0
      %254 = vmatprep.subr.bf16.mxu0 0
      %255 = vmatpush1.bf16.msra.mxu0 0
      %256 = vmatprep.subr.bf16.mxu0 0
      %257 = vmatpush1.bf16.msra.mxu0 0
      %258 = vmatprep.subr.bf16.mxu0 0
      %259 = vmatpush1.bf16.msra.mxu0 0
      %260 = vmatprep.subr.bf16.mxu0 0
      %261 = vmatpush1.bf16.msra.mxu0 0
      %262 = vmatprep.subr.bf16.mxu0 0
      %263 = vmatpush1.bf16.msra.mxu0 0
      %264 = vmatprep.subr.bf16.mxu0 0
      %265 = vmatpush1.bf16.msra.mxu0 0
      %266 = vmatprep.subr.bf16.mxu0 0
      %267 = vmatpush1.bf16.msra.mxu0 0
      %268 = vmatprep.subr.bf16.mxu0 0
      %269 = vmatpush1.bf16.msra.mxu0 0
      %270 = vmatprep.subr.bf16.mxu0 0
      %271 = vmatpush1.bf16.msra.mxu0 0
      %272 = vmatprep.subr.bf16.mxu0 0
      %273 = vmatpush1.bf16.msra.mxu0 0
      %274 = vmatprep.subr.bf16.mxu0 0
      %275 = vmatpush1.bf16.msra.mxu0 0
      %276 = vmatprep.subr.bf16.mxu0 0
      %277 = vmatpush1.bf16.msra.mxu0 0
      %278 = vmatprep.subr.bf16.mxu0 0
      %279 = vmatpush1.bf16.msra.mxu0 0
      %280 = vmatprep.mubr.bf16.mxu0 0
      %281 = vmatmul.mubr.bf16.gmra.mrb[0].mxu0 %v230
      %v282 = vpop.f32.mrb[0].mxu0
      %v283 = vadd.f32 %v184, %v282
      %v284 = vpop.f32.mrb[0].mxu0
      %v285 = vadd.f32 %v184, %v284
      %v286 = vpop.f32.mrb[0].mxu0
      %v287 = vadd.f32 %v189, %v286
      %v288 = vpop.f32.mrb[0].mxu0
      %v289 = vadd.f32 %v189, %v288
      %290 = vmatprep.mubr.bf16.mxu0 0
      %291 = vmatmul.mubr.bf16.gmra.mrb[0].mxu0 %v233
      %v292 = vpop.f32.mrb[0].mxu0
      %v293 = vadd.f32 %v194, %v292
      %v294 = vpop.f32.mrb[0].mxu0
      %v295 = vadd.f32 %v194, %v294
      %v296 = vpop.f32.mrb[0].mxu0
      %v297 = vadd.f32 %v199, %v296
      %v298 = vpop.f32.mrb[0].mxu0
      %v299 = vadd.f32 %v199, %v298
      %300 = vdwg.mxu0
      %301 = vmatprep.subr.bf16.mxu0 0
      %302 = vmatpush1.bf16.msra.mxu0 %v246
      %303 = vmatprep.subr.bf16.mxu0 0
      %304 = vmatpush1.bf16.msra.mxu0 0
      %305 = vmatprep.subr.bf16.mxu0 0
      %306 = vmatpush1.bf16.msra.mxu0 0
      %307 = vmatprep.subr.bf16.mxu0 0
      %308 = vmatpush1.bf16.msra.mxu0 0
      %309 = vmatprep.subr.bf16.mxu0 0
      %310 = vmatpush1.bf16.msra.mxu0 0
      %311 = vmatprep.subr.bf16.mxu0 0
      %312 = vmatpush1.bf16.msra.mxu0 0
      %313 = vmatprep.subr.bf16.mxu0 0
      %314 = vmatpush1.bf16.msra.mxu0 0
      %315 = vmatprep.subr.bf16.mxu0 0
      %316 = vmatpush1.bf16.msra.mxu0 0
      %317 = vmatprep.subr.bf16.mxu0 0
      %318 = vmatpush1.bf16.msra.mxu0 0
      %319 = vmatprep.subr.bf16.mxu0 0
      %320 = vmatpush1.bf16.msra.mxu0 0
      %321 = vmatprep.subr.bf16.mxu0 0
      %322 = vmatpush1.bf16.msra.mxu0 0
      %323 = vmatprep.subr.bf16.mxu0 0
      %324 = vmatpush1.bf16.msra.mxu0 0
      %325 = vmatprep.subr.bf16.mxu0 0
      %326 = vmatpush1.bf16.msra.mxu0 0
      %327 = vmatprep.subr.bf16.mxu0 0
      %328 = vmatpush1.bf16.msra.mxu0 0
      %329 = vmatprep.subr.bf16.mxu0 0
      %330 = vmatpush1.bf16.msra.mxu0 0
      %331 = vmatprep.subr.bf16.mxu0 0
      %332 = vmatpush1.bf16.msra.mxu0 0
      %333 = vmatprep.mubr.bf16.mxu0 0
      %334 = vmatmul.mubr.bf16.gmra.mrb[0].mxu0 %v230
      %v335 = vpop.f32.mrb[0].mxu0
      %v336 = vadd.f32 %v184, %v335
      %v337 = vpop.f32.mrb[0].mxu0
      %v338 = vpop.f32.mrb[0].mxu0
      %v339 = vadd.f32 %v189, %v338
      %v340 = vpop.f32.mrb[0].mxu0
      %341 = vmatprep.mubr.bf16.mxu0 0
      %342 = vmatmul.mubr.bf16.gmra.mrb[0].mxu0 %v233
      %v343 = vpop.f32.mrb[0].mxu0
      %v344 = vadd.f32 %v194, %v343
      %v345 = vpop.f32.mrb[0].mxu0
      %v346 = vpop.f32.mrb[0].mxu0
      %v347 = vadd.f32 %v199, %v346
      %v348 = vpop.f32.mrb[0].mxu0
      %349 = vdwg.mxu0
      %350 = vst [vmem:[%s170] sm:$0xff] %v283
      %351 = vst [vmem:[%s170 + $0x8] sm:$0xff] %v285
      %vm352 = vcmask 916480
      %353 = vst.msk [vmem:[%s170 + $0x10] sm:$0xff] %vm352, %v336
      %354 = vst [vmem:[%s170 + $0x18] sm:$0xff] %v287
      %355 = vst [vmem:[%s170 + $0x20] sm:$0xff] %v289
      %356 = vst.msk [vmem:[%s170 + $0x28] sm:$0xff] %vm352, %v339
      %357 = vst [vmem:[%s170 + $0x30] sm:$0xff] %v293
      %358 = vst [vmem:[%s170 + $0x38] sm:$0xff] %v295
      %359 = vst.msk [vmem:[%s170 + $0x40] sm:$0xff] %vm352, %v344
      %360 = vst [vmem:[%s170 + $0x48] sm:$0xff] %v297
      %361 = vst [vmem:[%s170 + $0x50] sm:$0xff] %v299
      %362 = vst.msk [vmem:[%s170 + $0x58] sm:$0xff] %vm352, %v347
      %p363 = scmp.lt.s32.totalorder %s14, 1
      %s364 = scalar_select %p363, %s14, 1
      %s365 = smul.addr %s364, 12
      %s366 = smul.addr %s365, 8
      %s367 = scalar_lea.vmem %s3, %s366
      // Predicated region
      $region33: #{se_rawformer_front.15} parent=31 // pred_check
        %p368 = pneg %p100
      $region34: #{se_rawformer_front.15} parent=31 // pred_check_branch
        %370 = sbr.rel (%p368) target = $region36
      $region35: #{se_rawformer_front.15} parent=31 // pred_region
        _
      $region36: #{se_rawformer_front.15} parent=31 // pred_fallthru
        _
    $region32: #{se_rawformer_front.15} parent=5 // pred_fallthru
      _
    %p371 = scmp.le.s32.totalorder 2, %s9
    // Predicated region
    $region37: #{se_rawformer_front.15} parent=5 // pred_check
      %p372 = pneg %p371
    $region38: #{se_rawformer_front.15} parent=5 // pred_check_branch
      %374 = sbr.rel (%p372) target = $region40
    $region39: #{se_rawformer_front.15} parent=5 // pred_region
      %s375 = ssub.s32 %s9, 2
      // Predicated region
      $region41: #{se_rawformer_front.15} parent=39 // pred_check
        %p376 = pneg %p106
      $region42: #{se_rawformer_front.15} parent=39 // pred_check_branch
        %378 = sbr.rel (%p376) target = $region44
      $region43: #{se_rawformer_front.15} parent=39 // pred_region
        %p379 = scmp.lt.s32.totalorder %s15, 1
        %s380 = scalar_select %p379, %s15, 1
        %s381 = smul.addr %s380, 12
        %s382 = smul.addr %s381, 8
        %s383 = scalar_lea.vmem %s3, %s382
      $region44: #{se_rawformer_front.15} parent=39 // pred_fallthru
        _
    $region40: #{se_rawformer_front.15} parent=5 // pred_fallthru
      _
  $region6: #{se_rawformer_front.15} parent=0 // loop_footer
    %s13 = sadd.s32 1, %s9
  $region7: #{se_rawformer_front.15} parent=0 // loop_footer_branch
    %8 = sbr.rel target = $region3
  $region8: #{se_rawformer_front.15} parent=0 // loop_exit
    _

// kernel: se_rawformer_front.16
$region0: #{se_rawformer_front.16}
  #allocation0 [shape = 'u32[]', space=smem, size = 0x4, offset = 0x4, fixed_abs, tag = 'smem constant byte address 0x4 - core index']
  #allocation1 [shape = 'u32[144,128]{1,0:T(1,128)}', space=vmem, size = 0x12000, scoped, tag = 'internal scratch']
  %s0 = inlined_call_operand.vmem [shape: bf16[2,96,384], index: 0, kind: input, shape index: {}]
  %s1 = inlined_call_operand.vmem [shape: bf16[2,32,96], index: 1, kind: input, shape index: {}]
  %s2 = inlined_call_operand.vmem [shape: f32[32,1], index: 2, kind: input, shape index: {}]
  %s3 = inlined_call_operand.vmem [shape: f32[2,32,368], index: 3, kind: input, shape index: {}]
  %s4 = inlined_call_operand.vmem [shape: f32[2,32,368], index: 4, kind: output, shape index: {}]
  %s5 = sld [smem:[#allocation0]]
  $region49: #{se_rawformer_front.16} parent=0
    _
  %s7 = ssub.s32 1, %s5
  %s8 = scalar_select 0, %s7, %s5
  loop: start=0, step=1, limit=4
  $region2: #{se_rawformer_front.16} parent=0 // loop_pre_header
    _
  $region3: #{se_rawformer_front.16} parent=0 // loop_header
    %s10 = sphi 0, %s14
    %p11 = scmp.ge.s32.totalorder %s10, 4
    %s20 = sphi 0, %s22
    %s23 = sphi 0, %s20
    %s24 = sphi 0, %s23
    %s40 = sphi 0, %s24
    %s44 = sphi 0, %s44
    %s46 = sphi 0, %s44
    %s47 = sphi 0, %s46
    %s61 = sphi 0, %s47
    %s65 = sphi 0, %s65
    %s67 = sphi 0, %s65
    %s68 = sphi 0, %s67
    %s82 = sphi 0, %s68
    %s88 = sphi 0, %s90
    %s91 = sphi 0, %s88
    %s92 = sphi 0, %s91
    %s108 = sphi 0, %s92
    %s114 = sphi 0, %s116
    %s117 = sphi 0, %s114
    %s118 = sphi 0, %s117
    %s134 = sphi 0, %s118
  $region4: #{se_rawformer_front.16} parent=0 // loop_header_branch
    %13 = sbr.rel (%p11) target = $region8
  $region5: #{se_rawformer_front.16} parent=0 // loop_body
    %s15 = ssub.s32 %s10, 1
    %s16 = ssub.s32 %s10, 2
    %s17 = sadd.s32 %s10, 1
    %s18 = ssub.s32 %s10, %s17
    %p19 = scmp.eq.s32.totalorder %s18, 0
    %s21 = sadd.s32 %s20, 1
    %s22 = scalar_select %p19, %s20, %s21
    %p25 = pneg %p19
    %p26 = scmp.eq.s32.totalorder %s10, 1
    %p27 = por %p25, %p26
    %p28 = scmp.ne.s32.totalorder %s20, %s23
    %p29 = scmp.eq.s32.totalorder %s10, 0
    %p30 = por %p28, %p29
    %p31 = scmp.ne.s32.totalorder %s20, %s23
    %p32 = scmp.eq.s32.totalorder %s15, 1
    %p33 = por %p31, %p32
    %p34 = scmp.ne.s32.totalorder %s23, %s24
    %p35 = scmp.eq.s32.totalorder %s15, 0
    %p36 = por %p34, %p35
    %p37 = scmp.ne.s32.totalorder %s23, %s24
    %p38 = scmp.eq.s32.totalorder %s16, 1
    %p39 = por %p37, %p38
    %p41 = scmp.ne.s32.totalorder %s24, %s40
    %p42 = scmp.eq.s32.totalorder %s16, 0
    %p43 = por %p41, %p42
    %s45 = sadd.s32 %s44, 1
    %p48 = scmp.eq.s32.totalorder %s10, 1
    %p49 = scmp.ne.s32.totalorder %s44, %s46
    %p50 = scmp.eq.s32.totalorder %s10, 0
    %p51 = por %p49, %p50
    %p52 = scmp.ne.s32.totalorder %s44, %s46
    %p53 = scmp.eq.s32.totalorder %s15, 1
    %p54 = por %p52, %p53
    %p55 = scmp.ne.s32.totalorder %s46, %s47
    %p56 = scmp.eq.s32.totalorder %s15, 0
    %p57 = por %p55, %p56
    %p58 = scmp.ne.s32.totalorder %s46, %s47
    %p59 = scmp.eq.s32.totalorder %s16, 1
    %p60 = por %p58, %p59
    %p62 = scmp.ne.s32.totalorder %s47, %s61
    %p63 = scmp.eq.s32.totalorder %s16, 0
    %p64 = por %p62, %p63
    %s66 = sadd.s32 %s65, 1
    %p69 = scmp.eq.s32.totalorder %s10, 1
    %p70 = scmp.ne.s32.totalorder %s65, %s67
    %p71 = scmp.eq.s32.totalorder %s10, 0
    %p72 = por %p70, %p71
    %p73 = scmp.ne.s32.totalorder %s65, %s67
    %p74 = scmp.eq.s32.totalorder %s15, 1
    %p75 = por %p73, %p74
    %p76 = scmp.ne.s32.totalorder %s67, %s68
    %p77 = scmp.eq.s32.totalorder %s15, 0
    %p78 = por %p76, %p77
    %p79 = scmp.ne.s32.totalorder %s67, %s68
    %p80 = scmp.eq.s32.totalorder %s16, 1
    %p81 = por %p79, %p80
    %p83 = scmp.ne.s32.totalorder %s68, %s82
    %p84 = scmp.eq.s32.totalorder %s16, 0
    %p85 = por %p83, %p84
    %s86 = ssub.s32 %s10, %s17
    %p87 = scmp.eq.s32.totalorder %s86, 0
    %s89 = sadd.s32 %s88, 1
    %s90 = scalar_select %p87, %s88, %s89
    %p93 = pneg %p87
    %p94 = scmp.eq.s32.totalorder %s10, 1
    %p95 = por %p93, %p94
    %p96 = scmp.ne.s32.totalorder %s88, %s91
    %p97 = scmp.eq.s32.totalorder %s10, 0
    %p98 = por %p96, %p97
    %p99 = scmp.ne.s32.totalorder %s88, %s91
    %p100 = scmp.eq.s32.totalorder %s15, 1
    %p101 = por %p99, %p100
    %p102 = scmp.ne.s32.totalorder %s91, %s92
    %p103 = scmp.eq.s32.totalorder %s15, 0
    %p104 = por %p102, %p103
    %p105 = scmp.ne.s32.totalorder %s91, %s92
    %p106 = scmp.eq.s32.totalorder %s16, 1
    %p107 = por %p105, %p106
    %p109 = scmp.ne.s32.totalorder %s92, %s108
    %p110 = scmp.eq.s32.totalorder %s16, 0
    %p111 = por %p109, %p110
    %s112 = ssub.s32 %s10, %s17
    %p113 = scmp.eq.s32.totalorder %s112, 0
    %s115 = sadd.s32 %s114, 1
    %s116 = scalar_select %p113, %s114, %s115
    %p119 = pneg %p113
    %p120 = scmp.eq.s32.totalorder %s10, 1
    %p121 = por %p119, %p120
    %p122 = scmp.ne.s32.totalorder %s114, %s117
    %p123 = scmp.eq.s32.totalorder %s10, 0
    %p124 = por %p122, %p123
    %p125 = scmp.ne.s32.totalorder %s114, %s117
    %p126 = scmp.eq.s32.totalorder %s15, 1
    %p127 = por %p125, %p126
    %p128 = scmp.ne.s32.totalorder %s117, %s118
    %p129 = scmp.eq.s32.totalorder %s15, 0
    %p130 = por %p128, %p129
    %p131 = scmp.ne.s32.totalorder %s117, %s118
    %p132 = scmp.eq.s32.totalorder %s16, 1
    %p133 = por %p131, %p132
    %p135 = scmp.ne.s32.totalorder %s118, %s134
    %p136 = scmp.eq.s32.totalorder %s16, 0
    %p137 = por %p135, %p136
    %p138 = scmp.le.s32.totalorder 1, %s10
    %p139 = scmp.lt.s32.totalorder %s10, 3
    %p140 = pnand %p138, %p139
    %p141 = pneg %p140
    // Predicated region
    $region9: #{se_rawformer_front.16} parent=5 // pred_check
      _
    $region10: #{se_rawformer_front.16} parent=5 // pred_check_branch
      %143 = sbr.rel (%p140) target = $region12
    $region11: #{se_rawformer_front.16} parent=5 // pred_region
      %s144 = ssub.s32 %s10, 1
      // Predicated region
      $region13: #{se_rawformer_front.16} parent=11 // pred_check
        %p145 = pneg %p57
      $region14: #{se_rawformer_front.16} parent=11 // pred_check_branch
        %147 = sbr.rel (%p145) target = $region16
      $region15: #{se_rawformer_front.16} parent=11 // pred_region
        _
      $region16: #{se_rawformer_front.16} parent=11 // pred_fallthru
        _
      // Predicated region
      $region17: #{se_rawformer_front.16} parent=11 // pred_check
        %p148 = pneg %p78
      $region18: #{se_rawformer_front.16} parent=11 // pred_check_branch
        %150 = sbr.rel (%p148) target = $region20
      $region19: #{se_rawformer_front.16} parent=11 // pred_region
        _
      $region20: #{se_rawformer_front.16} parent=11 // pred_fallthru
        _
    $region12: #{se_rawformer_front.16} parent=5 // pred_fallthru
      _
    %p151 = scmp.lt.s32.totalorder %s10, 2
    // Predicated region
    $region21: #{se_rawformer_front.16} parent=5 // pred_check
      %p152 = pneg %p151
    $region22: #{se_rawformer_front.16} parent=5 // pred_check_branch
      %154 = sbr.rel (%p152) target = $region24
    $region23: #{se_rawformer_front.16} parent=5 // pred_region
      // Predicated region
      $region25: #{se_rawformer_front.16} parent=23 // pred_check
        %p155 = pneg %p30
      $region26: #{se_rawformer_front.16} parent=23 // pred_check_branch
        %157 = sbr.rel (%p155) target = $region28
      $region27: #{se_rawformer_front.16} parent=23 // pred_region
        %p158 = scmp.lt.s32.totalorder %s10, 1
        %s159 = scalar_select %p158, %s10, 1
        %s160 = smul.addr %s159, 36
        %s161 = smul.addr %s160, 4
        %s162 = scalar_lea.vmem %s0, %s161
      $region28: #{se_rawformer_front.16} parent=23 // pred_fallthru
        _
      // Predicated region
      $region29: #{se_rawformer_front.16} parent=23 // pred_check
        %p163 = pneg %p98
      $region30: #{se_rawformer_front.16} parent=23 // pred_check_branch
        %165 = sbr.rel (%p163) target = $region32
      $region31: #{se_rawformer_front.16} parent=23 // pred_region
        %p166 = scmp.lt.s32.totalorder %s10, 1
        %s167 = scalar_select %p166, %s10, 1
        %s168 = smul.addr %s167, 12
        %s169 = smul.addr %s168, 8
        %s170 = scalar_lea.vmem %s3, %s169
      $region32: #{se_rawformer_front.16} parent=23 // pred_fallthru
        _
    $region24: #{se_rawformer_front.16} parent=5 // pred_fallthru
      _
    %p171 = scmp.le.s32.totalorder 1, %s10
    %p172 = scmp.lt.s32.totalorder %s10, 3
    %p173 = pnand %p171, %p172
    %p174 = pneg %p173
    // Predicated region
    $region33: #{se_rawformer_front.16} parent=5 // pred_check
      _
    $region34: #{se_rawformer_front.16} parent=5 // pred_check_branch
      %176 = sbr.rel (%p173) target = $region36
    $region35: #{se_rawformer_front.16} parent=5 // pred_region
      %s177 = ssub.s32 %s10, 1
      %p178 = scmp.lt.s32.totalorder %s15, 1
      %s179 = scalar_select %p178, %s15, 1
      %s180 = smul.addr %s179, 36
      %s181 = smul.addr %s180, 4
      %s182 = scalar_lea.vmem %s0, %s181
      %p183 = pneg %p36
      %p184 = pneg %p33
      %p185 = pneg %p57
      %p186 = pneg %p54
      %p187 = pneg %p78
      %p188 = pneg %p75
      %p189 = scmp.lt.s32.totalorder %s15, 1
      %s190 = scalar_select %p189, %s15, 1
      %s191 = smul.addr %s190, 12
      %s192 = smul.addr %s191, 8
      %s193 = scalar_lea.vmem %s3, %s192
      %p194 = pneg %p104
      %p195 = pneg %p101
      %p196 = pneg %p130
      %p197 = pneg %p127
      %p198 = scmp.lt.s32.totalorder %s15, 1
      %s199 = scalar_select %p198, %s15, 1
      %s200 = smul.addr %s199, 12
      %s201 = smul.addr %s200, 8
      %s202 = scalar_lea.vmem %s4, %s201
      %p203 = scmp.lt.s32.totalorder %s15, 1
      %s204 = scalar_select %p203, %s15, 1
      %s205 = smul.addr %s204, 36
      %s206 = smul.addr %s205, 4
      %s207 = scalar_lea.vmem %s0, %s206
      %p208 = scmp.lt.s32.totalorder %s15, 1
      %s209 = scalar_select %p208, %s15, 1
      %s210 = smul.addr %s209, 12
      %s211 = smul.addr %s210, 8
      %s212 = scalar_lea.vmem %s3, %s211
      %p213 = scmp.lt.s32.totalorder %s15, 1
      %s214 = scalar_select %p213, %s15, 1
      %s215 = smul.addr %s214, 12
      %s216 = smul.addr %s215, 8
      %s217 = scalar_lea.vmem %s4, %s216
      %v219 = vld [vmem:[%s1] sm:$0xf]
      %v220 = vld [vmem:[%s1 + $0x4] sm:$0xf]
      %v221 = vld [vmem:[%s1 + $0x8] sm:$0xf]
      %v222 = vld [vmem:[%s1 + $0xc] sm:$0xf]
      %v223 = vld [vmem:[%s207] sm:$0xff]
      %v224 = vld [vmem:[%s207 + $0x8] sm:$0xf]
      %v225 = vld [vmem:[%s207 + $0xc] sm:$0xff]
      %v226 = vld [vmem:[%s207 + $0x14] sm:$0xf]
      %v227 = vld [vmem:[%s207 + $0x18] sm:$0xff]
      %v228 = vld [vmem:[%s207 + $0x20] sm:$0xf]
      %v229 = vld [vmem:[%s207 + $0x24] sm:$0xff]
      %v230 = vld [vmem:[%s207 + $0x2c] sm:$0xf]
      %v231 = vld [vmem:[%s207 + $0x30] sm:$0xff]
      %v232 = vld [vmem:[%s207 + $0x38] sm:$0xf]
      %v233 = vld [vmem:[%s207 + $0x3c] sm:$0xff]
      %v234 = vld [vmem:[%s207 + $0x44] sm:$0xf]
      %v235 = vld [vmem:[%s207 + $0x48] sm:$0xff]
      %v236 = vld [vmem:[%s207 + $0x50] sm:$0xf]
      %v237 = vld [vmem:[%s207 + $0x54] sm:$0xff]
      %v238 = vld [vmem:[%s207 + $0x5c] sm:$0xf]
      %v239 = vld [vmem:[%s207 + $0x60] sm:$0xff]
      %v240 = vld [vmem:[%s207 + $0x68] sm:$0xf]
      %v241 = vld [vmem:[%s207 + $0x6c] sm:$0xff]
      %v242 = vld [vmem:[%s207 + $0x74] sm:$0xf]
      %v243 = vld [vmem:[%s207 + $0x78] sm:$0xff]
      %v244 = vld [vmem:[%s207 + $0x80] sm:$0xf]
      %v245 = vld [vmem:[%s207 + $0x84] sm:$0xff]
      %v246 = vld [vmem:[%s207 + $0x8c] sm:$0xf]
      %s247 = scalar_lea.vmem %s1, 16
      %v248 = vld [vmem:[%s247] sm:$0xf]
      %v249 = vld [vmem:[%s247 + $0x4] sm:$0xf]
      %v250 = vld [vmem:[%s247 + $0x8] sm:$0xf]
      %v251 = vld [vmem:[%s247 + $0xc] sm:$0xf]
      %v256 = vunpack.c.l.b16 %v248
      %v257 = vunpack.c.l.b16 %v249
      %v258 = vunpack.c.l.b16 %v250
      %v259 = vunpack.c.l.b16 %v251
      %v260 = vpack.c.b16 %v257, %v256
      %v261 = vpack.c.b16 %v259, %v258
      %v286 = vunpack.c.l.b16 %v223
      %v287 = vunpack.c.h.b16 %v223
      %v288 = vunpack.c.l.b16 %v224
      %v289 = vunpack.c.l.b16 %v225
      %v290 = vunpack.c.h.b16 %v225
      %v291 = vunpack.c.l.b16 %v226
      %v292 = vunpack.c.l.b16 %v227
      %v293 = vunpack.c.h.b16 %v227
      %v294 = vunpack.c.l.b16 %v228
      %v295 = vunpack.c.l.b16 %v229
      %v296 = vunpack.c.h.b16 %v229
      %v297 = vunpack.c.l.b16 %v230
      %v298 = vunpack.c.l.b16 %v231
      %v299 = vunpack.c.h.b16 %v231
      %v300 = vunpack.c.l.b16 %v232
      %v301 = vunpack.c.l.b16 %v233
      %v302 = vunpack.c.h.b16 %v233
      %v303 = vunpack.c.l.b16 %v234
      %v304 = vunpack.c.l.b16 %v235
      %v305 = vunpack.c.h.b16 %v235
      %v306 = vunpack.c.l.b16 %v236
      %v307 = vunpack.c.l.b16 %v237
      %v308 = vunpack.c.h.b16 %v237
      %v309 = vunpack.c.l.b16 %v238
      %v310 = vunpack.c.l.b16 %v239
      %v311 = vunpack.c.h.b16 %v239
      %v312 = vunpack.c.l.b16 %v240
      %v313 = vunpack.c.l.b16 %v241
      %v314 = vunpack.c.h.b16 %v241
      %v315 = vunpack.c.l.b16 %v242
      %v316 = vunpack.c.l.b16 %v243
      %v317 = vunpack.c.h.b16 %v243
      %v318 = vunpack.c.l.b16 %v244
      %v319 = vunpack.c.l.b16 %v245
      %v320 = vunpack.c.h.b16 %v245
      %v321 = vunpack.c.l.b16 %v246
      %v322 = vpack.c.b16 %v289, %v286
      %v323 = vpack.c.b16 %v290, %v287
      %v324 = vpack.c.b16 %v291, %v288
      %v325 = vpack.c.b16 %v295, %v292
      %v326 = vpack.c.b16 %v296, %v293
      %v327 = vpack.c.b16 %v297, %v294
      %v328 = vpack.c.b16 %v301, %v298
      %v329 = vpack.c.b16 %v302, %v299
      %v330 = vpack.c.b16 %v303, %v300
      %v331 = vpack.c.b16 %v307, %v304
      %v332 = vpack.c.b16 %v308, %v305
      %v333 = vpack.c.b16 %v309, %v306
      %v334 = vpack.c.b16 %v313, %v310
      %v335 = vpack.c.b16 %v314, %v311
      %v336 = vpack.c.b16 %v315, %v312
      %v337 = vpack.c.b16 %v319, %v316
      %v338 = vpack.c.b16 %v320, %v317
      %v339 = vpack.c.b16 %v321, %v318
      %340 = vrot.lane.b32.xlu0 %v322, 112
      %v341 = vpop.permute.xlu0 %340
      %342 = vrot.lane.b32.xlu0 %v323, 112
      %v343 = vpop.permute.xlu0 %342
      %344 = vrot.lane.b32.xlu0 %v324, 112
      %v345 = vpop.permute.xlu0 %344
      %346 = vrot.lane.b32.xlu0 %v325, 112
      %v347 = vpop.permute.xlu0 %346
      %348 = vrot.lane.b32.xlu0 %v326, 112
      %v349 = vpop.permute.xlu0 %348
      %350 = vrot.lane.b32.xlu0 %v327, 112
      %v351 = vpop.permute.xlu0 %350
      %352 = vrot.lane.b32.xlu0 %v328, 112
      %v353 = vpop.permute.xlu0 %352
      %354 = vrot.lane.b32.xlu0 %v329, 112
      %v355 = vpop.permute.xlu0 %354
      %356 = vrot.lane.b32.xlu0 %v330, 112
      %v357 = vpop.permute.xlu0 %356
      %358 = vrot.lane.b32.xlu0 %v331, 112
      %v359 = vpop.permute.xlu0 %358
      %360 = vrot.lane.b32.xlu0 %v332, 112
      %v361 = vpop.permute.xlu0 %360
      %362 = vrot.lane.b32.xlu0 %v333, 112
      %v363 = vpop.permute.xlu0 %362
      %364 = vrot.lane.b32.xlu0 %v334, 112
      %v365 = vpop.permute.xlu0 %364
      %366 = vrot.lane.b32.xlu0 %v335, 112
      %v367 = vpop.permute.xlu0 %366
      %368 = vrot.lane.b32.xlu0 %v336, 112
      %v369 = vpop.permute.xlu0 %368
      %370 = vrot.lane.b32.xlu0 %v337, 112
      %v371 = vpop.permute.xlu0 %370
      %372 = vrot.lane.b32.xlu0 %v338, 112
      %v373 = vpop.permute.xlu0 %372
      %374 = vrot.lane.b32.xlu0 %v339, 112
      %v375 = vpop.permute.xlu0 %374
      %vm376 = vcmask 916480
      %v377 = vsel %vm376, %v341, %v343
      %v378 = vsel %vm376, %v343, %v345
      %v379 = vsel %vm376, %v347, %v349
      %v380 = vsel %vm376, %v349, %v351
      %v381 = vsel %vm376, %v353, %v355
      %v382 = vsel %vm376, %v355, %v357
      %v383 = vsel %vm376, %v359, %v361
      %v384 = vsel %vm376, %v361, %v363
      %v385 = vsel %vm376, %v365, %v367
      %v386 = vsel %vm376, %v367, %v369
      %v387 = vsel %vm376, %v371, %v373
      %v388 = vsel %vm376, %v373, %v375
      %vm407 = vcmask 785408
      %v409 = vsel %vm407, %v260, 0
      %v412 = vsel %vm407, %v261, 0
      %414 = vmatprep.subr.bf16.mxu0 %v378
      %415 = vmatpush1.bf16.msra.mxu0 %v377
      %416 = vmatprep.subr.bf16.mxu0 %v380
      %417 = vmatpush1.bf16.msra.mxu0 %v379
      %418 = vmatprep.subr.bf16.mxu0 %v382
      %419 = vmatpush1.bf16.msra.mxu0 %v381
      %420 = vmatprep.subr.bf16.mxu0 %v384
      %421 = vmatpush1.bf16.msra.mxu0 %v383
      %422 = vmatprep.subr.bf16.mxu0 %v386
      %423 = vmatpush1.bf16.msra.mxu0 %v385
      %424 = vmatprep.subr.bf16.mxu0 %v388
      %425 = vmatpush1.bf16.msra.mxu0 %v387
      %426 = vmatprep.subr.bf16.mxu0 0
      %427 = vmatpush1.bf16.msra.mxu0 0
      %428 = vmatprep.subr.bf16.mxu0 0
      %429 = vmatpush1.bf16.msra.mxu0 0
      %430 = vmatprep.subr.bf16.mxu0 0
      %431 = vmatpush1.bf16.msra.mxu0 0
      %432 = vmatprep.subr.bf16.mxu0 0
      %433 = vmatpush1.bf16.msra.mxu0 0
      %434 = vmatprep.subr.bf16.mxu0 0
      %435 = vmatpush1.bf16.msra.mxu0 0
      %436 = vmatprep.subr.bf16.mxu0 0
      %437 = vmatpush1.bf16.msra.mxu0 0
      %438 = vmatprep.subr.bf16.mxu0 0
      %439 = vmatpush1.bf16.msra.mxu0 0
      %440 = vmatprep.subr.bf16.mxu0 0
      %441 = vmatpush1.bf16.msra.mxu0 0
      %442 = vmatprep.subr.bf16.mxu0 0
      %443 = vmatpush1.bf16.msra.mxu0 0
      %444 = vmatprep.subr.bf16.mxu0 0
      %445 = vmatpush1.bf16.msra.mxu0 0
      %446 = vmatprep.mubr.bf16.mxu0 0
      %447 = vmatmul.mubr.bf16.gmra.mrb[0].mxu0 %v409
      %v448 = vpop.f32.mrb[0].mxu0
      %v449 = vadd.f32 0.0, %v448
      %v450 = vpop.f32.mrb[0].mxu0
      %v451 = vadd.f32 0.0, %v450
      %v452 = vpop.f32.mrb[0].mxu0
      %v453 = vadd.f32 0.0, %v452
      %v454 = vpop.f32.mrb[0].mxu0
      %v455 = vadd.f32 0.0, %v454
      %456 = vmatprep.mubr.bf16.mxu0 0
      %457 = vmatmul.mubr.bf16.gmra.mrb[0].mxu0 %v412
      %v458 = vpop.f32.mrb[0].mxu0
      %v459 = vadd.f32 0.0, %v458
      %v460 = vpop.f32.mrb[0].mxu0
      %v461 = vadd.f32 0.0, %v460
      %v462 = vpop.f32.mrb[0].mxu0
      %v463 = vadd.f32 0.0, %v462
      %v464 = vpop.f32.mrb[0].mxu0
      %v465 = vadd.f32 0.0, %v464
      %466 = vdwg.mxu0
      %467 = vmatprep.subr.bf16.mxu0 0
      %468 = vmatpush1.bf16.msra.mxu0 %v345
      %469 = vmatprep.subr.bf16.mxu0 0
      %470 = vmatpush1.bf16.msra.mxu0 %v351
      %471 = vmatprep.subr.bf16.mxu0 0
      %472 = vmatpush1.bf16.msra.mxu0 %v357
      %473 = vmatprep.subr.bf16.mxu0 0
      %474 = vmatpush1.bf16.msra.mxu0 %v363
      %475 = vmatprep.subr.bf16.mxu0 0
      %476 = vmatpush1.bf16.msra.mxu0 %v369
      %477 = vmatprep.subr.bf16.mxu0 0
      %478 = vmatpush1.bf16.msra.mxu0 %v375
      %479 = vmatprep.subr.bf16.mxu0 0
      %480 = vmatpush1.bf16.msra.mxu0 0
      %481 = vmatprep.subr.bf16.mxu0 0
      %482 = vmatpush1.bf16.msra.mxu0 0
      %483 = vmatprep.subr.bf16.mxu0 0
      %484 = vmatpush1.bf16.msra.mxu0 0
      %485 = vmatprep.subr.bf16.mxu0 0
      %486 = vmatpush1.bf16.msra.mxu0 0
      %487 = vmatprep.subr.bf16.mxu0 0
      %488 = vmatpush1.bf16.msra.mxu0 0
      %489 = vmatprep.subr.bf16.mxu0 0
      %490 = vmatpush1.bf16.msra.mxu0 0
      %491 = vmatprep.subr.bf16.mxu0 0
      %492 = vmatpush1.bf16.msra.mxu0 0
      %493 = vmatprep.subr.bf16.mxu0 0
      %494 = vmatpush1.bf16.msra.mxu0 0
      %495 = vmatprep.subr.bf16.mxu0 0
      %496 = vmatpush1.bf16.msra.mxu0 0
      %497 = vmatprep.subr.bf16.mxu0 0
      %498 = vmatpush1.bf16.msra.mxu0 0
      %499 = vmatprep.mubr.bf16.mxu0 0
      %500 = vmatmul.mubr.bf16.gmra.mrb[0].mxu0 %v409
      %v501 = vpop.f32.mrb[0].mxu0
      %v502 = vadd.f32 0.0, %v501
      %v503 = vpop.f32.mrb[0].mxu0
      %v504 = vpop.f32.mrb[0].mxu0
      %v505 = vadd.f32 0.0, %v504
      %v506 = vpop.f32.mrb[0].mxu0
      %507 = vmatprep.mubr.bf16.mxu0 0
      %508 = vmatmul.mubr.bf16.gmra.mrb[0].mxu0 %v412
      %v509 = vpop.f32.mrb[0].mxu0
      %v510 = vadd.f32 0.0, %v509
      %v511 = vpop.f32.mrb[0].mxu0
      %v512 = vpop.f32.mrb[0].mxu0
      %v513 = vadd.f32 0.0, %v512
      %v514 = vpop.f32.mrb[0].mxu0
      %515 = vdwg.mxu0
      %v520 = vunpack.c.l.b16 %v219
      %v521 = vunpack.c.l.b16 %v220
      %v522 = vunpack.c.l.b16 %v221
      %v523 = vunpack.c.l.b16 %v222
      %v524 = vpack.c.b16 %v521, %v520
      %v525 = vpack.c.b16 %v523, %v522
      %v545 = vsel %vm407, %v524, 0
      %v548 = vsel %vm407, %v525, 0
      %550 = vmatprep.subr.bf16.mxu0 %v323
      %551 = vmatpush1.bf16.msra.mxu0 %v322
      %552 = vmatprep.subr.bf16.mxu0 %v326
      %553 = vmatpush1.bf16.msra.mxu0 %v325
      %554 = vmatprep.subr.bf16.mxu0 %v329
      %555 = vmatpush1.bf16.msra.mxu0 %v328
      %556 = vmatprep.subr.bf16.mxu0 %v332
      %557 = vmatpush1.bf16.msra.mxu0 %v331
      %558 = vmatprep.subr.bf16.mxu0 %v335
      %559 = vmatpush1.bf16.msra.mxu0 %v334
      %560 = vmatprep.subr.bf16.mxu0 %v338
      %561 = vmatpush1.bf16.msra.mxu0 %v337
      %562 = vmatprep.subr.bf16.mxu0 0
      %563 = vmatpush1.bf16.msra.mxu0 0
      %564 = vmatprep.subr.bf16.mxu0 0
      %565 = vmatpush1.bf16.msra.mxu0 0
      %566 = vmatprep.subr.bf16.mxu0 0
      %567 = vmatpush1.bf16.msra.mxu0 0
      %568 = vmatprep.subr.bf16.mxu0 0
      %569 = vmatpush1.bf16.msra.mxu0 0
      %570 = vmatprep.subr.bf16.mxu0 0
      %571 = vmatpush1.bf16.msra.mxu0 0
      %572 = vmatprep.subr.bf16.mxu0 0
      %573 = vmatpush1.bf16.msra.mxu0 0
      %574 = vmatprep.subr.bf16.mxu0 0
      %575 = vmatpush1.bf16.msra.mxu0 0
      %576 = vmatprep.subr.bf16.mxu0 0
      %577 = vmatpush1.bf16.msra.mxu0 0
      %578 = vmatprep.subr.bf16.mxu0 0
      %579 = vmatpush1.bf16.msra.mxu0 0
      %580 = vmatprep.subr.bf16.mxu0 0
      %581 = vmatpush1.bf16.msra.mxu0 0
      %582 = vmatprep.mubr.bf16.mxu0 0
      %583 = vmatmul.mubr.bf16.gmra.mrb[0].mxu0 %v545
      %v584 = vpop.f32.mrb[0].mxu0
      %v585 = vadd.f32 %v449, %v584
      %v586 = vpop.f32.mrb[0].mxu0
      %v587 = vadd.f32 %v451, %v586
      %v588 = vpop.f32.mrb[0].mxu0
      %v589 = vadd.f32 %v453, %v588
      %v590 = vpop.f32.mrb[0].mxu0
      %v591 = vadd.f32 %v455, %v590
      %592 = vmatprep.mubr.bf16.mxu0 0
      %593 = vmatmul.mubr.bf16.gmra.mrb[0].mxu0 %v548
      %v594 = vpop.f32.mrb[0].mxu0
      %v595 = vadd.f32 %v459, %v594
      %v596 = vpop.f32.mrb[0].mxu0
      %v597 = vadd.f32 %v461, %v596
      %v598 = vpop.f32.mrb[0].mxu0
      %v599 = vadd.f32 %v463, %v598
      %v600 = vpop.f32.mrb[0].mxu0
      %v601 = vadd.f32 %v465, %v600
      %602 = vdwg.mxu0
      %603 = vmatprep.subr.bf16.mxu0 0
      %604 = vmatpush1.bf16.msra.mxu0 %v324
      %605 = vmatprep.subr.bf16.mxu0 0
      %606 = vmatpush1.bf16.msra.mxu0 %v327
      %607 = vmatprep.subr.bf16.mxu0 0
      %608 = vmatpush1.bf16.msra.mxu0 %v330
      %609 = vmatprep.subr.bf16.mxu0 0
      %610 = vmatpush1.bf16.msra.mxu0 %v333
      %611 = vmatprep.subr.bf16.mxu0 0
      %612 = vmatpush1.bf16.msra.mxu0 %v336
      %613 = vmatprep.subr.bf16.mxu0 0
      %614 = vmatpush1.bf16.msra.mxu0 %v339
      %615 = vmatprep.subr.bf16.mxu0 0
      %616 = vmatpush1.bf16.msra.mxu0 0
      %617 = vmatprep.subr.bf16.mxu0 0
      %618 = vmatpush1.bf16.msra.mxu0 0
      %619 = vmatprep.subr.bf16.mxu0 0
      %620 = vmatpush1.bf16.msra.mxu0 0
      %621 = vmatprep.subr.bf16.mxu0 0
      %622 = vmatpush1.bf16.msra.mxu0 0
      %623 = vmatprep.subr.bf16.mxu0 0
      %624 = vmatpush1.bf16.msra.mxu0 0
      %625 = vmatprep.subr.bf16.mxu0 0
      %626 = vmatpush1.bf16.msra.mxu0 0
      %627 = vmatprep.subr.bf16.mxu0 0
      %628 = vmatpush1.bf16.msra.mxu0 0
      %629 = vmatprep.subr.bf16.mxu0 0
      %630 = vmatpush1.bf16.msra.mxu0 0
      %631 = vmatprep.subr.bf16.mxu0 0
      %632 = vmatpush1.bf16.msra.mxu0 0
      %633 = vmatprep.subr.bf16.mxu0 0
      %634 = vmatpush1.bf16.msra.mxu0 0
      %635 = vmatprep.mubr.bf16.mxu0 0
      %636 = vmatmul.mubr.bf16.gmra.mrb[0].mxu0 %v545
      %v637 = vpop.f32.mrb[0].mxu0
      %v638 = vadd.f32 %v502, %v637
      %v639 = vpop.f32.mrb[0].mxu0
      %v640 = vpop.f32.mrb[0].mxu0
      %v641 = vadd.f32 %v505, %v640
      %v642 = vpop.f32.mrb[0].mxu0
      %643 = vmatprep.mubr.bf16.mxu0 0
      %644 = vmatmul.mubr.bf16.gmra.mrb[0].mxu0 %v548
      %v645 = vpop.f32.mrb[0].mxu0
      %v646 = vadd.f32 %v510, %v645
      %v647 = vpop.f32.mrb[0].mxu0
      %v648 = vpop.f32.mrb[0].mxu0
      %v649 = vadd.f32 %v513, %v648
      %v650 = vpop.f32.mrb[0].mxu0
      %651 = vdwg.mxu0
      %v652 = vld [vmem:[%s2] sm:$0xff]
      %v653 = vld [vmem:[%s2 + $0x8] sm:$0xff]
      %v654 = vld [vmem:[%s2 + $0x10] sm:$0xff]
      %v655 = vld [vmem:[%s2 + $0x18] sm:$0xff]
      %657 = vset.pattern.permute.xlu0 0
      %658 = vperm.xlu0 %657, %v652
      %v659 = vpop.permute.xlu0 %658
      %662 = vset.pattern.permute.xlu0 0
      %663 = vperm.xlu0 %662, %v653
      %v664 = vpop.permute.xlu0 %663
      %667 = vset.pattern.permute.xlu0 0
      %668 = vperm.xlu0 %667, %v654
      %v669 = vpop.permute.xlu0 %668
      %672 = vset.pattern.permute.xlu0 0
      %673 = vperm.xlu0 %672, %v655
      %v674 = vpop.permute.xlu0 %673
      %v676 = vadd.f32 %v585, %v659
      %v677 = vadd.f32 %v587, %v659
      %v678 = vadd.f32 %v638, %v659
      %v679 = vadd.f32 %v589, %v664
      %v680 = vadd.f32 %v591, %v664
      %v681 = vadd.f32 %v641, %v664
      %v682 = vadd.f32 %v595, %v669
      %v683 = vadd.f32 %v597, %v669
      %v684 = vadd.f32 %v646, %v669
      %v685 = vadd.f32 %v599, %v674
      %v686 = vadd.f32 %v601, %v674
      %v687 = vadd.f32 %v649, %v674
      %v688 = vld [vmem:[%s212] sm:$0xff]
      %v689 = vld [vmem:[%s212 + $0x8] sm:$0xff]
      %v690 = vld [vmem:[%s212 + $0x10] sm:$0xff]
      %v691 = vld [vmem:[%s212 + $0x18] sm:$0xff]
      %v692 = vld [vmem:[%s212 + $0x20] sm:$0xff]
      %v693 = vld [vmem:[%s212 + $0x28] sm:$0xff]
      %v694 = vld [vmem:[%s212 + $0x30] sm:$0xff]
      %v695 = vld [vmem:[%s212 + $0x38] sm:$0xff]
      %v696 = vld [vmem:[%s212 + $0x40] sm:$0xff]
      %v697 = vld [vmem:[%s212 + $0x48] sm:$0xff]
      %v698 = vld [vmem:[%s212 + $0x50] sm:$0xff]
      %v699 = vld [vmem:[%s212 + $0x58] sm:$0xff]
      %v700 = vadd.f32 %v676, %v688
      %v701 = vadd.f32 %v677, %v689
      %v702 = vadd.f32 %v678, %v690
      %v703 = vadd.f32 %v679, %v691
      %v704 = vadd.f32 %v680, %v692
      %v705 = vadd.f32 %v681, %v693
      %v706 = vadd.f32 %v682, %v694
      %v707 = vadd.f32 %v683, %v695
      %v708 = vadd.f32 %v684, %v696
      %v709 = vadd.f32 %v685, %v697
      %v710 = vadd.f32 %v686, %v698
      %v711 = vadd.f32 %v687, %v699
      %712 = vst [vmem:[%s217] sm:$0xff] %v700
      %713 = vst [vmem:[%s217 + $0x8] sm:$0xff] %v701
      %vm714 = vcmask 916480
      %715 = vst.msk [vmem:[%s217 + $0x10] sm:$0xff] %vm714, %v702
      %716 = vst [vmem:[%s217 + $0x18] sm:$0xff] %v703
      %717 = vst [vmem:[%s217 + $0x20] sm:$0xff] %v704
      %718 = vst.msk [vmem:[%s217 + $0x28] sm:$0xff] %vm714, %v705
      %719 = vst [vmem:[%s217 + $0x30] sm:$0xff] %v706
      %720 = vst [vmem:[%s217 + $0x38] sm:$0xff] %v707
      %721 = vst.msk [vmem:[%s217 + $0x40] sm:$0xff] %vm714, %v708
      %722 = vst [vmem:[%s217 + $0x48] sm:$0xff] %v709
      %723 = vst [vmem:[%s217 + $0x50] sm:$0xff] %v710
      %724 = vst.msk [vmem:[%s217 + $0x58] sm:$0xff] %vm714, %v711
      %p725 = scmp.lt.s32.totalorder %s15, 1
      %s726 = scalar_select %p725, %s15, 1
      %s727 = smul.addr %s726, 12
      %s728 = smul.addr %s727, 8
      %s729 = scalar_lea.vmem %s4, %s728
      // Predicated region
      $region37: #{se_rawformer_front.16} parent=35 // pred_check
        %p730 = pneg %p127
      $region38: #{se_rawformer_front.16} parent=35 // pred_check_branch
        %732 = sbr.rel (%p730) target = $region40
      $region39: #{se_rawformer_front.16} parent=35 // pred_region
        _
      $region40: #{se_rawformer_front.16} parent=35 // pred_fallthru
        _
    $region36: #{se_rawformer_front.16} parent=5 // pred_fallthru
      _
    %p733 = scmp.le.s32.totalorder 2, %s10
    // Predicated region
    $region41: #{se_rawformer_front.16} parent=5 // pred_check
      %p734 = pneg %p733
    $region42: #{se_rawformer_front.16} parent=5 // pred_check_branch
      %736 = sbr.rel (%p734) target = $region44
    $region43: #{se_rawformer_front.16} parent=5 // pred_region
      %s737 = ssub.s32 %s10, 2
      // Predicated region
      $region45: #{se_rawformer_front.16} parent=43 // pred_check
        %p738 = pneg %p133
      $region46: #{se_rawformer_front.16} parent=43 // pred_check_branch
        %740 = sbr.rel (%p738) target = $region48
      $region47: #{se_rawformer_front.16} parent=43 // pred_region
        %p741 = scmp.lt.s32.totalorder %s16, 1
        %s742 = scalar_select %p741, %s16, 1
        %s743 = smul.addr %s742, 12
        %s744 = smul.addr %s743, 8
        %s745 = scalar_lea.vmem %s4, %s744
      $region48: #{se_rawformer_front.16} parent=43 // pred_fallthru
        _
    $region44: #{se_rawformer_front.16} parent=5 // pred_fallthru
      _
  $region6: #{se_rawformer_front.16} parent=0 // loop_footer
    %s14 = sadd.s32 1, %s10
  $region7: #{se_rawformer_front.16} parent=0 // loop_footer_branch
    %9 = sbr.rel target = $region3
  $region8: #{se_rawformer_front.16} parent=0 // loop_exit
    _

// kernel: se_rawformer_front.17
$region0: #{se_rawformer_front.17}
  #allocation0 [shape = 'u32[]', space=smem, size = 0x4, offset = 0x4, fixed_abs, tag = 'smem constant byte address 0x4 - core index']
  #allocation1 [shape = 'u32[144,128]{1,0:T(1,128)}', space=vmem, size = 0x12000, scoped, tag = 'internal scratch']
  %s0 = inlined_call_operand.vmem [shape: bf16[2,96,400], index: 0, kind: input, shape index: {}]
  %s1 = inlined_call_operand.vmem [shape: bf16[2,32,96], index: 1, kind: input, shape index: {}]
  %s2 = inlined_call_operand.vmem [shape: f32[32,1], index: 2, kind: input, shape index: {}]
  %s3 = inlined_call_operand.vmem [shape: f32[2,32,384], index: 3, kind: output, shape index: {}]
  %s4 = sld [smem:[#allocation0]]
  $region45: #{se_rawformer_front.17} parent=0
    _
  %s6 = ssub.s32 1, %s4
  %s7 = scalar_select 0, %s6, %s4
  loop: start=0, step=1, limit=4
  $region2: #{se_rawformer_front.17} parent=0 // loop_pre_header
    _
  $region3: #{se_rawformer_front.17} parent=0 // loop_header
    %s9 = sphi 0, %s13
    %p10 = scmp.ge.s32.totalorder %s9, 4
    %s19 = sphi 0, %s21
    %s22 = sphi 0, %s19
    %s23 = sphi 0, %s22
    %s39 = sphi 0, %s23
    %s43 = sphi 0, %s43
    %s45 = sphi 0, %s43
    %s46 = sphi 0, %s45
    %s60 = sphi 0, %s46
    %s64 = sphi 0, %s64
    %s66 = sphi 0, %s64
    %s67 = sphi 0, %s66
    %s81 = sphi 0, %s67
    %s87 = sphi 0, %s89
    %s90 = sphi 0, %s87
    %s91 = sphi 0, %s90
    %s107 = sphi 0, %s91
  $region4: #{se_rawformer_front.17} parent=0 // loop_header_branch
    %12 = sbr.rel (%p10) target = $region8
  $region5: #{se_rawformer_front.17} parent=0 // loop_body
    %s14 = ssub.s32 %s9, 1
    %s15 = ssub.s32 %s9, 2
    %s16 = sadd.s32 %s9, 1
    %s17 = ssub.s32 %s9, %s16
    %p18 = scmp.eq.s32.totalorder %s17, 0
    %s20 = sadd.s32 %s19, 1
    %s21 = scalar_select %p18, %s19, %s20
    %p24 = pneg %p18
    %p25 = scmp.eq.s32.totalorder %s9, 1
    %p26 = por %p24, %p25
    %p27 = scmp.ne.s32.totalorder %s19, %s22
    %p28 = scmp.eq.s32.totalorder %s9, 0
    %p29 = por %p27, %p28
    %p30 = scmp.ne.s32.totalorder %s19, %s22
    %p31 = scmp.eq.s32.totalorder %s14, 1
    %p32 = por %p30, %p31
    %p33 = scmp.ne.s32.totalorder %s22, %s23
    %p34 = scmp.eq.s32.totalorder %s14, 0
    %p35 = por %p33, %p34
    %p36 = scmp.ne.s32.totalorder %s22, %s23
    %p37 = scmp.eq.s32.totalorder %s15, 1
    %p38 = por %p36, %p37
    %p40 = scmp.ne.s32.totalorder %s23, %s39
    %p41 = scmp.eq.s32.totalorder %s15, 0
    %p42 = por %p40, %p41
    %s44 = sadd.s32 %s43, 1
    %p47 = scmp.eq.s32.totalorder %s9, 1
    %p48 = scmp.ne.s32.totalorder %s43, %s45
    %p49 = scmp.eq.s32.totalorder %s9, 0
    %p50 = por %p48, %p49
    %p51 = scmp.ne.s32.totalorder %s43, %s45
    %p52 = scmp.eq.s32.totalorder %s14, 1
    %p53 = por %p51, %p52
    %p54 = scmp.ne.s32.totalorder %s45, %s46
    %p55 = scmp.eq.s32.totalorder %s14, 0
    %p56 = por %p54, %p55
    %p57 = scmp.ne.s32.totalorder %s45, %s46
    %p58 = scmp.eq.s32.totalorder %s15, 1
    %p59 = por %p57, %p58
    %p61 = scmp.ne.s32.totalorder %s46, %s60
    %p62 = scmp.eq.s32.totalorder %s15, 0
    %p63 = por %p61, %p62
    %s65 = sadd.s32 %s64, 1
    %p68 = scmp.eq.s32.totalorder %s9, 1
    %p69 = scmp.ne.s32.totalorder %s64, %s66
    %p70 = scmp.eq.s32.totalorder %s9, 0
    %p71 = por %p69, %p70
    %p72 = scmp.ne.s32.totalorder %s64, %s66
    %p73 = scmp.eq.s32.totalorder %s14, 1
    %p74 = por %p72, %p73
    %p75 = scmp.ne.s32.totalorder %s66, %s67
    %p76 = scmp.eq.s32.totalorder %s14, 0
    %p77 = por %p75, %p76
    %p78 = scmp.ne.s32.totalorder %s66, %s67
    %p79 = scmp.eq.s32.totalorder %s15, 1
    %p80 = por %p78, %p79
    %p82 = scmp.ne.s32.totalorder %s67, %s81
    %p83 = scmp.eq.s32.totalorder %s15, 0
    %p84 = por %p82, %p83
    %s85 = ssub.s32 %s9, %s16
    %p86 = scmp.eq.s32.totalorder %s85, 0
    %s88 = sadd.s32 %s87, 1
    %s89 = scalar_select %p86, %s87, %s88
    %p92 = pneg %p86
    %p93 = scmp.eq.s32.totalorder %s9, 1
    %p94 = por %p92, %p93
    %p95 = scmp.ne.s32.totalorder %s87, %s90
    %p96 = scmp.eq.s32.totalorder %s9, 0
    %p97 = por %p95, %p96
    %p98 = scmp.ne.s32.totalorder %s87, %s90
    %p99 = scmp.eq.s32.totalorder %s14, 1
    %p100 = por %p98, %p99
    %p101 = scmp.ne.s32.totalorder %s90, %s91
    %p102 = scmp.eq.s32.totalorder %s14, 0
    %p103 = por %p101, %p102
    %p104 = scmp.ne.s32.totalorder %s90, %s91
    %p105 = scmp.eq.s32.totalorder %s15, 1
    %p106 = por %p104, %p105
    %p108 = scmp.ne.s32.totalorder %s91, %s107
    %p109 = scmp.eq.s32.totalorder %s15, 0
    %p110 = por %p108, %p109
    %p111 = scmp.le.s32.totalorder 1, %s9
    %p112 = scmp.lt.s32.totalorder %s9, 3
    %p113 = pnand %p111, %p112
    %p114 = pneg %p113
    // Predicated region
    $region9: #{se_rawformer_front.17} parent=5 // pred_check
      _
    $region10: #{se_rawformer_front.17} parent=5 // pred_check_branch
      %116 = sbr.rel (%p113) target = $region12
    $region11: #{se_rawformer_front.17} parent=5 // pred_region
      %s117 = ssub.s32 %s9, 1
      // Predicated region
      $region13: #{se_rawformer_front.17} parent=11 // pred_check
        %p118 = pneg %p56
      $region14: #{se_rawformer_front.17} parent=11 // pred_check_branch
        %120 = sbr.rel (%p118) target = $region16
      $region15: #{se_rawformer_front.17} parent=11 // pred_region
        _
      $region16: #{se_rawformer_front.17} parent=11 // pred_fallthru
        _
      // Predicated region
      $region17: #{se_rawformer_front.17} parent=11 // pred_check
        %p121 = pneg %p77
      $region18: #{se_rawformer_front.17} parent=11 // pred_check_branch
        %123 = sbr.rel (%p121) target = $region20
      $region19: #{se_rawformer_front.17} parent=11 // pred_region
        _
      $region20: #{se_rawformer_front.17} parent=11 // pred_fallthru
        _
    $region12: #{se_rawformer_front.17} parent=5 // pred_fallthru
      _
    %p124 = scmp.lt.s32.totalorder %s9, 2
    // Predicated region
    $region21: #{se_rawformer_front.17} parent=5 // pred_check
      %p125 = pneg %p124
    $region22: #{se_rawformer_front.17} parent=5 // pred_check_branch
      %127 = sbr.rel (%p125) target = $region24
    $region23: #{se_rawformer_front.17} parent=5 // pred_region
      // Predicated region
      $region25: #{se_rawformer_front.17} parent=23 // pred_check
        %p128 = pneg %p29
      $region26: #{se_rawformer_front.17} parent=23 // pred_check_branch
        %130 = sbr.rel (%p128) target = $region28
      $region27: #{se_rawformer_front.17} parent=23 // pred_region
        %p131 = scmp.lt.s32.totalorder %s9, 1
        %s132 = scalar_select %p131, %s9, 1
        %s133 = smul.addr %s132, 48
        %s134 = smul.addr %s133, 4
        %s135 = scalar_lea.vmem %s0, %s134
      $region28: #{se_rawformer_front.17} parent=23 // pred_fallthru
        _
    $region24: #{se_rawformer_front.17} parent=5 // pred_fallthru
      _
    %p136 = scmp.le.s32.totalorder 1, %s9
    %p137 = scmp.lt.s32.totalorder %s9, 3
    %p138 = pnand %p136, %p137
    %p139 = pneg %p138
    // Predicated region
    $region29: #{se_rawformer_front.17} parent=5 // pred_check
      _
    $region30: #{se_rawformer_front.17} parent=5 // pred_check_branch
      %141 = sbr.rel (%p138) target = $region32
    $region31: #{se_rawformer_front.17} parent=5 // pred_region
      %s142 = ssub.s32 %s9, 1
      %p143 = scmp.lt.s32.totalorder %s14, 1
      %s144 = scalar_select %p143, %s14, 1
      %s145 = smul.addr %s144, 48
      %s146 = smul.addr %s145, 4
      %s147 = scalar_lea.vmem %s0, %s146
      %p148 = pneg %p35
      %p149 = pneg %p32
      %p150 = pneg %p56
      %p151 = pneg %p53
      %p152 = pneg %p77
      %p153 = pneg %p74
      %p154 = pneg %p103
      %p155 = pneg %p100
      %p156 = scmp.lt.s32.totalorder %s14, 1
      %s157 = scalar_select %p156, %s14, 1
      %s158 = smul.addr %s157, 12
      %s159 = smul.addr %s158, 8
      %s160 = scalar_lea.vmem %s3, %s159
      %p161 = scmp.lt.s32.totalorder %s14, 1
      %s162 = scalar_select %p161, %s14, 1
      %s163 = smul.addr %s162, 48
      %s164 = smul.addr %s163, 4
      %s165 = scalar_lea.vmem %s0, %s164
      %p166 = scmp.lt.s32.totalorder %s14, 1
      %s167 = scalar_select %p166, %s14, 1
      %s168 = smul.addr %s167, 12
      %s169 = smul.addr %s168, 8
      %s170 = scalar_lea.vmem %s3, %s169
      %v172 = vld [vmem:[%s1] sm:$0xf]
      %v173 = vld [vmem:[%s1 + $0x4] sm:$0xf]
      %v174 = vld [vmem:[%s1 + $0x8] sm:$0xf]
      %v175 = vld [vmem:[%s1 + $0xc] sm:$0xf]
      %v176 = vld [vmem:[%s165] sm:$0xff]
      %v177 = vld [vmem:[%s165 + $0x8] sm:$0xf]
      %v178 = vld [vmem:[%s165 + $0x10] sm:$0xff]
      %v179 = vld [vmem:[%s165 + $0x18] sm:$0xf]
      %v180 = vld [vmem:[%s165 + $0x20] sm:$0xff]
      %v181 = vld [vmem:[%s165 + $0x28] sm:$0xf]
      %v182 = vld [vmem:[%s165 + $0x30] sm:$0xff]
      %v183 = vld [vmem:[%s165 + $0x38] sm:$0xf]
      %v184 = vld [vmem:[%s165 + $0x40] sm:$0xff]
      %v185 = vld [vmem:[%s165 + $0x48] sm:$0xf]
      %v186 = vld [vmem:[%s165 + $0x50] sm:$0xff]
      %v187 = vld [vmem:[%s165 + $0x58] sm:$0xf]
      %v188 = vld [vmem:[%s165 + $0x60] sm:$0xff]
      %v189 = vld [vmem:[%s165 + $0x68] sm:$0xf]
      %v190 = vld [vmem:[%s165 + $0x70] sm:$0xff]
      %v191 = vld [vmem:[%s165 + $0x78] sm:$0xf]
      %v192 = vld [vmem:[%s165 + $0x80] sm:$0xff]
      %v193 = vld [vmem:[%s165 + $0x88] sm:$0xf]
      %v194 = vld [vmem:[%s165 + $0x90] sm:$0xff]
      %v195 = vld [vmem:[%s165 + $0x98] sm:$0xf]
      %v196 = vld [vmem:[%s165 + $0xa0] sm:$0xff]
      %v197 = vld [vmem:[%s165 + $0xa8] sm:$0xf]
      %v198 = vld [vmem:[%s165 + $0xb0] sm:$0xff]
      %v199 = vld [vmem:[%s165 + $0xb8] sm:$0xf]
      %v200 = vld [vmem:[%s165 + $0x8] sm:$0xff]
      %v201 = vld [vmem:[%s165 + $0x18] sm:$0xff]
      %v202 = vld [vmem:[%s165 + $0x28] sm:$0xff]
      %v203 = vld [vmem:[%s165 + $0x38] sm:$0xff]
      %v204 = vld [vmem:[%s165 + $0x48] sm:$0xff]
      %v205 = vld [vmem:[%s165 + $0x58] sm:$0xff]
      %v206 = vld [vmem:[%s165 + $0x68] sm:$0xff]
      %v207 = vld [vmem:[%s165 + $0x78] sm:$0xff]
      %v208 = vld [vmem:[%s165 + $0x88] sm:$0xff]
      %v209 = vld [vmem:[%s165 + $0x98] sm:$0xff]
      %v210 = vld [vmem:[%s165 + $0xa8] sm:$0xff]
      %v211 = vld [vmem:[%s165 + $0xb8] sm:$0xff]
      %s212 = scalar_lea.vmem %s1, 16
      %v213 = vld [vmem:[%s212] sm:$0xf]
      %v214 = vld [vmem:[%s212 + $0x4] sm:$0xf]
      %v215 = vld [vmem:[%s212 + $0x8] sm:$0xf]
      %v216 = vld [vmem:[%s212 + $0xc] sm:$0xf]
      %v221 = vunpack.c.l.b16 %v213
      %v222 = vunpack.c.l.b16 %v214
      %v223 = vunpack.c.l.b16 %v215
      %v224 = vunpack.c.l.b16 %v216
      %v225 = vpack.c.b16 %v222, %v221
      %v226 = vpack.c.b16 %v224, %v223
      %v251 = vunpack.c.l.b16 %v176
      %v252 = vunpack.c.h.b16 %v176
      %v253 = vunpack.c.l.b16 %v200
      %v254 = vunpack.c.h.b16 %v200
      %v255 = vunpack.c.l.b16 %v178
      %v256 = vunpack.c.h.b16 %v178
      %v257 = vunpack.c.l.b16 %v201
      %v258 = vunpack.c.h.b16 %v201
      %v259 = vunpack.c.l.b16 %v180
      %v260 = vunpack.c.h.b16 %v180
      %v261 = vunpack.c.l.b16 %v202
      %v262 = vunpack.c.h.b16 %v202
      %v263 = vunpack.c.l.b16 %v182
      %v264 = vunpack.c.h.b16 %v182
      %v265 = vunpack.c.l.b16 %v203
      %v266 = vunpack.c.h.b16 %v203
      %v267 = vunpack.c.l.b16 %v184
      %v268 = vunpack.c.h.b16 %v184
      %v269 = vunpack.c.l.b16 %v204
      %v270 = vunpack.c.h.b16 %v204
      %v271 = vunpack.c.l.b16 %v186
      %v272 = vunpack.c.h.b16 %v186
      %v273 = vunpack.c.l.b16 %v205
      %v274 = vunpack.c.h.b16 %v205
      %v275 = vunpack.c.l.b16 %v188
      %v276 = vunpack.c.h.b16 %v188
      %v277 = vunpack.c.l.b16 %v206
      %v278 = vunpack.c.h.b16 %v206
      %v279 = vunpack.c.l.b16 %v190
      %v280 = vunpack.c.h.b16 %v190
      %v281 = vunpack.c.l.b16 %v207
      %v282 = vunpack.c.h.b16 %v207
      %v283 = vunpack.c.l.b16 %v192
      %v284 = vunpack.c.h.b16 %v192
      %v285 = vunpack.c.l.b16 %v208
      %v286 = vunpack.c.h.b16 %v208
      %v287 = vunpack.c.l.b16 %v194
      %v288 = vunpack.c.h.b16 %v194
      %v289 = vunpack.c.l.b16 %v209
      %v290 = vunpack.c.h.b16 %v209
      %v291 = vunpack.c.l.b16 %v196
      %v292 = vunpack.c.h.b16 %v196
      %v293 = vunpack.c.l.b16 %v210
      %v294 = vunpack.c.h.b16 %v210
      %v295 = vunpack.c.l.b16 %v198
      %v296 = vunpack.c.h.b16 %v198
      %v297 = vunpack.c.l.b16 %v211
      %v298 = vunpack.c.h.b16 %v211
      %v299 = vpack.c.b16 %v255, %v251
      %v300 = vpack.c.b16 %v256, %v252
      %v301 = vpack.c.b16 %v257, %v253
      %v302 = vpack.c.b16 %v258, %v254
      %v303 = vpack.c.b16 %v263, %v259
      %v304 = vpack.c.b16 %v264, %v260
      %v305 = vpack.c.b16 %v265, %v261
      %v306 = vpack.c.b16 %v266, %v262
      %v307 = vpack.c.b16 %v271, %v267
      %v308 = vpack.c.b16 %v272, %v268
      %v309 = vpack.c.b16 %v273, %v269
      %v310 = vpack.c.b16 %v274, %v270
      %v311 = vpack.c.b16 %v279, %v275
      %v312 = vpack.c.b16 %v280, %v276
      %v313 = vpack.c.b16 %v281, %v277
      %v314 = vpack.c.b16 %v282, %v278
      %v315 = vpack.c.b16 %v287, %v283
      %v316 = vpack.c.b16 %v288, %v284
      %v317 = vpack.c.b16 %v289, %v285
      %v318 = vpack.c.b16 %v290, %v286
      %v319 = vpack.c.b16 %v295, %v291
      %v320 = vpack.c.b16 %v296, %v292
      %v321 = vpack.c.b16 %v297, %v293
      %v322 = vpack.c.b16 %v298, %v294
      %323 = vrot.lane.b32.xlu0 %v299, 112
      %v324 = vpop.permute.xlu0 %323
      %325 = vrot.lane.b32.xlu0 %v300, 112
      %v326 = vpop.permute.xlu0 %325
      %327 = vrot.lane.b32.xlu0 %v301, 112
      %v328 = vpop.permute.xlu0 %327
      %329 = vrot.lane.b32.xlu0 %v302, 112
      %v330 = vpop.permute.xlu0 %329
      %331 = vrot.lane.b32.xlu0 %v303, 112
      %v332 = vpop.permute.xlu0 %331
      %333 = vrot.lane.b32.xlu0 %v304, 112
      %v334 = vpop.permute.xlu0 %333
      %335 = vrot.lane.b32.xlu0 %v305, 112
      %v336 = vpop.permute.xlu0 %335
      %337 = vrot.lane.b32.xlu0 %v306, 112
      %v338 = vpop.permute.xlu0 %337
      %339 = vrot.lane.b32.xlu0 %v307, 112
      %v340 = vpop.permute.xlu0 %339
      %341 = vrot.lane.b32.xlu0 %v308, 112
      %v342 = vpop.permute.xlu0 %341
      %343 = vrot.lane.b32.xlu0 %v309, 112
      %v344 = vpop.permute.xlu0 %343
      %345 = vrot.lane.b32.xlu0 %v310, 112
      %v346 = vpop.permute.xlu0 %345
      %347 = vrot.lane.b32.xlu0 %v311, 112
      %v348 = vpop.permute.xlu0 %347
      %349 = vrot.lane.b32.xlu0 %v312, 112
      %v350 = vpop.permute.xlu0 %349
      %351 = vrot.lane.b32.xlu0 %v313, 112
      %v352 = vpop.permute.xlu0 %351
      %353 = vrot.lane.b32.xlu0 %v314, 112
      %v354 = vpop.permute.xlu0 %353
      %355 = vrot.lane.b32.xlu0 %v315, 112
      %v356 = vpop.permute.xlu0 %355
      %357 = vrot.lane.b32.xlu0 %v316, 112
      %v358 = vpop.permute.xlu0 %357
      %359 = vrot.lane.b32.xlu0 %v317, 112
      %v360 = vpop.permute.xlu0 %359
      %361 = vrot.lane.b32.xlu0 %v318, 112
      %v362 = vpop.permute.xlu0 %361
      %363 = vrot.lane.b32.xlu0 %v319, 112
      %v364 = vpop.permute.xlu0 %363
      %365 = vrot.lane.b32.xlu0 %v320, 112
      %v366 = vpop.permute.xlu0 %365
      %367 = vrot.lane.b32.xlu0 %v321, 112
      %v368 = vpop.permute.xlu0 %367
      %369 = vrot.lane.b32.xlu0 %v322, 112
      %v370 = vpop.permute.xlu0 %369
      %vm371 = vcmask 916480
      %v372 = vsel %vm371, %v324, %v326
      %v373 = vsel %vm371, %v326, %v328
      %v374 = vsel %vm371, %v328, %v330
      %v375 = vsel %vm371, %v332, %v334
      %v376 = vsel %vm371, %v334, %v336
      %v377 = vsel %vm371, %v336, %v338
      %v378 = vsel %vm371, %v340, %v342
      %v379 = vsel %vm371, %v342, %v344
      %v380 = vsel %vm371, %v344, %v346
      %v381 = vsel %vm371, %v348, %v350
      %v382 = vsel %vm371, %v350, %v352
      %v383 = vsel %vm371, %v352, %v354
      %v384 = vsel %vm371, %v356, %v358
      %v385 = vsel %vm371, %v358, %v360
      %v386 = vsel %vm371, %v360, %v362
      %v387 = vsel %vm371, %v364, %v366
      %v388 = vsel %vm371, %v366, %v368
      %v389 = vsel %vm371, %v368, %v370
      %vm408 = vcmask 785408
      %v410 = vsel %vm408, %v225, 0
      %v413 = vsel %vm408, %v226, 0
      %415 = vmatprep.subr.bf16.mxu0 %v373
      %416 = vmatpush1.bf16.msra.mxu0 %v372
      %417 = vmatprep.subr.bf16.mxu0 %v376
      %418 = vmatpush1.bf16.msra.mxu0 %v375
      %419 = vmatprep.subr.bf16.mxu0 %v379
      %420 = vmatpush1.bf16.msra.mxu0 %v378
      %421 = vmatprep.subr.bf16.mxu0 %v382
      %422 = vmatpush1.bf16.msra.mxu0 %v381
      %423 = vmatprep.subr.bf16.mxu0 %v385
      %424 = vmatpush1.bf16.msra.mxu0 %v384
      %425 = vmatprep.subr.bf16.mxu0 %v388
      %426 = vmatpush1.bf16.msra.mxu0 %v387
      %427 = vmatprep.subr.bf16.mxu0 0
      %428 = vmatpush1.bf16.msra.mxu0 0
      %429 = vmatprep.subr.bf16.mxu0 0
      %430 = vmatpush1.bf16.msra.mxu0 0
      %431 = vmatprep.subr.bf16.mxu0 0
      %432 = vmatpush1.bf16.msra.mxu0 0
      %433 = vmatprep.subr.bf16.mxu0 0
      %434 = vmatpush1.bf16.msra.mxu0 0
      %435 = vmatprep.subr.bf16.mxu0 0
      %436 = vmatpush1.bf16.msra.mxu0 0
      %437 = vmatprep.subr.bf16.mxu0 0
      %438 = vmatpush1.bf16.msra.mxu0 0
      %439 = vmatprep.subr.bf16.mxu0 0
      %440 = vmatpush1.bf16.msra.mxu0 0
      %441 = vmatprep.subr.bf16.mxu0 0
      %442 = vmatpush1.bf16.msra.mxu0 0
      %443 = vmatprep.subr.bf16.mxu0 0
      %444 = vmatpush1.bf16.msra.mxu0 0
      %445 = vmatprep.subr.bf16.mxu0 0
      %446 = vmatpush1.bf16.msra.mxu0 0
      %447 = vmatprep.mubr.bf16.mxu0 0
      %448 = vmatmul.mubr.bf16.gmra.mrb[0].mxu0 %v410
      %v449 = vpop.f32.mrb[0].mxu0
      %v450 = vadd.f32 0.0, %v449
      %v451 = vpop.f32.mrb[0].mxu0
      %v452 = vadd.f32 0.0, %v451
      %v453 = vpop.f32.mrb[0].mxu0
      %v454 = vadd.f32 0.0, %v453
      %v455 = vpop.f32.mrb[0].mxu0
      %v456 = vadd.f32 0.0, %v455
      %457 = vmatprep.mubr.bf16.mxu0 0
      %458 = vmatmul.mubr.bf16.gmra.mrb[0].mxu0 %v413
      %v459 = vpop.f32.mrb[0].mxu0
      %v460 = vadd.f32 0.0, %v459
      %v461 = vpop.f32.mrb[0].mxu0
      %v462 = vadd.f32 0.0, %v461
      %v463 = vpop.f32.mrb[0].mxu0
      %v464 = vadd.f32 0.0, %v463
      %v465 = vpop.f32.mrb[0].mxu0
      %v466 = vadd.f32 0.0, %v465
      %467 = vdwg.mxu0
      %468 = vmatprep.subr.bf16.mxu0 0
      %469 = vmatpush1.bf16.msra.mxu0 %v374
      %470 = vmatprep.subr.bf16.mxu0 0
      %471 = vmatpush1.bf16.msra.mxu0 %v377
      %472 = vmatprep.subr.bf16.mxu0 0
      %473 = vmatpush1.bf16.msra.mxu0 %v380
      %474 = vmatprep.subr.bf16.mxu0 0
      %475 = vmatpush1.bf16.msra.mxu0 %v383
      %476 = vmatprep.subr.bf16.mxu0 0
      %477 = vmatpush1.bf16.msra.mxu0 %v386
      %478 = vmatprep.subr.bf16.mxu0 0
      %479 = vmatpush1.bf16.msra.mxu0 %v389
      %480 = vmatprep.subr.bf16.mxu0 0
      %481 = vmatpush1.bf16.msra.mxu0 0
      %482 = vmatprep.subr.bf16.mxu0 0
      %483 = vmatpush1.bf16.msra.mxu0 0
      %484 = vmatprep.subr.bf16.mxu0 0
      %485 = vmatpush1.bf16.msra.mxu0 0
      %486 = vmatprep.subr.bf16.mxu0 0
      %487 = vmatpush1.bf16.msra.mxu0 0
      %488 = vmatprep.subr.bf16.mxu0 0
      %489 = vmatpush1.bf16.msra.mxu0 0
      %490 = vmatprep.subr.bf16.mxu0 0
      %491 = vmatpush1.bf16.msra.mxu0 0
      %492 = vmatprep.subr.bf16.mxu0 0
      %493 = vmatpush1.bf16.msra.mxu0 0
      %494 = vmatprep.subr.bf16.mxu0 0
      %495 = vmatpush1.bf16.msra.mxu0 0
      %496 = vmatprep.subr.bf16.mxu0 0
      %497 = vmatpush1.bf16.msra.mxu0 0
      %498 = vmatprep.subr.bf16.mxu0 0
      %499 = vmatpush1.bf16.msra.mxu0 0
      %500 = vmatprep.mubr.bf16.mxu0 0
      %501 = vmatmul.mubr.bf16.gmra.mrb[0].mxu0 %v410
      %v502 = vpop.f32.mrb[0].mxu0
      %v503 = vadd.f32 0.0, %v502
      %v504 = vpop.f32.mrb[0].mxu0
      %v505 = vpop.f32.mrb[0].mxu0
      %v506 = vadd.f32 0.0, %v505
      %v507 = vpop.f32.mrb[0].mxu0
      %508 = vmatprep.mubr.bf16.mxu0 0
      %509 = vmatmul.mubr.bf16.gmra.mrb[0].mxu0 %v413
      %v510 = vpop.f32.mrb[0].mxu0
      %v511 = vadd.f32 0.0, %v510
      %v512 = vpop.f32.mrb[0].mxu0
      %v513 = vpop.f32.mrb[0].mxu0
      %v514 = vadd.f32 0.0, %v513
      %v515 = vpop.f32.mrb[0].mxu0
      %516 = vdwg.mxu0
      %v521 = vunpack.c.l.b16 %v172
      %v522 = vunpack.c.l.b16 %v173
      %v523 = vunpack.c.l.b16 %v174
      %v524 = vunpack.c.l.b16 %v175
      %v525 = vpack.c.b16 %v522, %v521
      %v526 = vpack.c.b16 %v524, %v523
      %v539 = vunpack.c.l.b16 %v177
      %v540 = vunpack.c.l.b16 %v179
      %v541 = vunpack.c.l.b16 %v181
      %v542 = vunpack.c.l.b16 %v183
      %v543 = vunpack.c.l.b16 %v185
      %v544 = vunpack.c.l.b16 %v187
      %v545 = vunpack.c.l.b16 %v189
      %v546 = vunpack.c.l.b16 %v191
      %v547 = vunpack.c.l.b16 %v193
      %v548 = vunpack.c.l.b16 %v195
      %v549 = vunpack.c.l.b16 %v197
      %v550 = vunpack.c.l.b16 %v199
      %v551 = vpack.c.b16 %v540, %v539
      %v552 = vpack.c.b16 %v542, %v541
      %v553 = vpack.c.b16 %v544, %v543
      %v554 = vpack.c.b16 %v546, %v545
      %v555 = vpack.c.b16 %v548, %v547
      %v556 = vpack.c.b16 %v550, %v549
      %v576 = vsel %vm408, %v525, 0
      %v579 = vsel %vm408, %v526, 0
      %581 = vmatprep.subr.bf16.mxu0 %v300
      %582 = vmatpush1.bf16.msra.mxu0 %v299
      %583 = vmatprep.subr.bf16.mxu0 %v304
      %584 = vmatpush1.bf16.msra.mxu0 %v303
      %585 = vmatprep.subr.bf16.mxu0 %v308
      %586 = vmatpush1.bf16.msra.mxu0 %v307
      %587 = vmatprep.subr.bf16.mxu0 %v312
      %588 = vmatpush1.bf16.msra.mxu0 %v311
      %589 = vmatprep.subr.bf16.mxu0 %v316
      %590 = vmatpush1.bf16.msra.mxu0 %v315
      %591 = vmatprep.subr.bf16.mxu0 %v320
      %592 = vmatpush1.bf16.msra.mxu0 %v319
      %593 = vmatprep.subr.bf16.mxu0 0
      %594 = vmatpush1.bf16.msra.mxu0 0
      %595 = vmatprep.subr.bf16.mxu0 0
      %596 = vmatpush1.bf16.msra.mxu0 0
      %597 = vmatprep.subr.bf16.mxu0 0
      %598 = vmatpush1.bf16.msra.mxu0 0
      %599 = vmatprep.subr.bf16.mxu0 0
      %600 = vmatpush1.bf16.msra.mxu0 0
      %601 = vmatprep.subr.bf16.mxu0 0
      %602 = vmatpush1.bf16.msra.mxu0 0
      %603 = vmatprep.subr.bf16.mxu0 0
      %604 = vmatpush1.bf16.msra.mxu0 0
      %605 = vmatprep.subr.bf16.mxu0 0
      %606 = vmatpush1.bf16.msra.mxu0 0
      %607 = vmatprep.subr.bf16.mxu0 0
      %608 = vmatpush1.bf16.msra.mxu0 0
      %609 = vmatprep.subr.bf16.mxu0 0
      %610 = vmatpush1.bf16.msra.mxu0 0
      %611 = vmatprep.subr.bf16.mxu0 0
      %612 = vmatpush1.bf16.msra.mxu0 0
      %613 = vmatprep.mubr.bf16.mxu0 0
      %614 = vmatmul.mubr.bf16.gmra.mrb[0].mxu0 %v576
      %v615 = vpop.f32.mrb[0].mxu0
      %v616 = vadd.f32 %v450, %v615
      %v617 = vpop.f32.mrb[0].mxu0
      %v618 = vadd.f32 %v452, %v617
      %v619 = vpop.f32.mrb[0].mxu0
      %v620 = vadd.f32 %v454, %v619
      %v621 = vpop.f32.mrb[0].mxu0
      %v622 = vadd.f32 %v456, %v621
      %623 = vmatprep.mubr.bf16.mxu0 0
      %624 = vmatmul.mubr.bf16.gmra.mrb[0].mxu0 %v579
      %v625 = vpop.f32.mrb[0].mxu0
      %v626 = vadd.f32 %v460, %v625
      %v627 = vpop.f32.mrb[0].mxu0
      %v628 = vadd.f32 %v462, %v627
      %v629 = vpop.f32.mrb[0].mxu0
      %v630 = vadd.f32 %v464, %v629
      %v631 = vpop.f32.mrb[0].mxu0
      %v632 = vadd.f32 %v466, %v631
      %633 = vdwg.mxu0
      %634 = vmatprep.subr.bf16.mxu0 0
      %635 = vmatpush1.bf16.msra.mxu0 %v551
      %636 = vmatprep.subr.bf16.mxu0 0
      %637 = vmatpush1.bf16.msra.mxu0 %v552
      %638 = vmatprep.subr.bf16.mxu0 0
      %639 = vmatpush1.bf16.msra.mxu0 %v553
      %640 = vmatprep.subr.bf16.mxu0 0
      %641 = vmatpush1.bf16.msra.mxu0 %v554
      %642 = vmatprep.subr.bf16.mxu0 0
      %643 = vmatpush1.bf16.msra.mxu0 %v555
      %644 = vmatprep.subr.bf16.mxu0 0
      %645 = vmatpush1.bf16.msra.mxu0 %v556
      %646 = vmatprep.subr.bf16.mxu0 0
      %647 = vmatpush1.bf16.msra.mxu0 0
      %648 = vmatprep.subr.bf16.mxu0 0
      %649 = vmatpush1.bf16.msra.mxu0 0
      %650 = vmatprep.subr.bf16.mxu0 0
      %651 = vmatpush1.bf16.msra.mxu0 0
      %652 = vmatprep.subr.bf16.mxu0 0
      %653 = vmatpush1.bf16.msra.mxu0 0
      %654 = vmatprep.subr.bf16.mxu0 0
      %655 = vmatpush1.bf16.msra.mxu0 0
      %656 = vmatprep.subr.bf16.mxu0 0
      %657 = vmatpush1.bf16.msra.mxu0 0
      %658 = vmatprep.subr.bf16.mxu0 0
      %659 = vmatpush1.bf16.msra.mxu0 0
      %660 = vmatprep.subr.bf16.mxu0 0
      %661 = vmatpush1.bf16.msra.mxu0 0
      %662 = vmatprep.subr.bf16.mxu0 0
      %663 = vmatpush1.bf16.msra.mxu0 0
      %664 = vmatprep.subr.bf16.mxu0 0
      %665 = vmatpush1.bf16.msra.mxu0 0
      %666 = vmatprep.mubr.bf16.mxu0 0
      %667 = vmatmul.mubr.bf16.gmra.mrb[0].mxu0 %v576
      %v668 = vpop.f32.mrb[0].mxu0
      %v669 = vadd.f32 %v503, %v668
      %v670 = vpop.f32.mrb[0].mxu0
      %v671 = vpop.f32.mrb[0].mxu0
      %v672 = vadd.f32 %v506, %v671
      %v673 = vpop.f32.mrb[0].mxu0
      %674 = vmatprep.mubr.bf16.mxu0 0
      %675 = vmatmul.mubr.bf16.gmra.mrb[0].mxu0 %v579
      %v676 = vpop.f32.mrb[0].mxu0
      %v677 = vadd.f32 %v511, %v676
      %v678 = vpop.f32.mrb[0].mxu0
      %v679 = vpop.f32.mrb[0].mxu0
      %v680 = vadd.f32 %v514, %v679
      %v681 = vpop.f32.mrb[0].mxu0
      %682 = vdwg.mxu0
      %v683 = vld [vmem:[%s2] sm:$0xff]
      %v684 = vld [vmem:[%s2 + $0x8] sm:$0xff]
      %v685 = vld [vmem:[%s2 + $0x10] sm:$0xff]
      %v686 = vld [vmem:[%s2 + $0x18] sm:$0xff]
      %688 = vset.pattern.permute.xlu0 0
      %689 = vperm.xlu0 %688, %v683
      %v690 = vpop.permute.xlu0 %689
      %693 = vset.pattern.permute.xlu0 0
      %694 = vperm.xlu0 %693, %v684
      %v695 = vpop.permute.xlu0 %694
      %698 = vset.pattern.permute.xlu0 0
      %699 = vperm.xlu0 %698, %v685
      %v700 = vpop.permute.xlu0 %699
      %703 = vset.pattern.permute.xlu0 0
      %704 = vperm.xlu0 %703, %v686
      %v705 = vpop.permute.xlu0 %704
      %v707 = vadd.f32 %v616, %v690
      %v708 = vadd.f32 %v618, %v690
      %v709 = vadd.f32 %v669, %v690
      %v710 = vadd.f32 %v620, %v695
      %v711 = vadd.f32 %v622, %v695
      %v712 = vadd.f32 %v672, %v695
      %v713 = vadd.f32 %v626, %v700
      %v714 = vadd.f32 %v628, %v700
      %v715 = vadd.f32 %v677, %v700
      %v716 = vadd.f32 %v630, %v705
      %v717 = vadd.f32 %v632, %v705
      %v718 = vadd.f32 %v680, %v705
      %719 = vst [vmem:[%s170] sm:$0xff] %v707
      %720 = vst [vmem:[%s170 + $0x8] sm:$0xff] %v708
      %721 = vst [vmem:[%s170 + $0x10] sm:$0xff] %v709
      %722 = vst [vmem:[%s170 + $0x18] sm:$0xff] %v710
      %723 = vst [vmem:[%s170 + $0x20] sm:$0xff] %v711
      %724 = vst [vmem:[%s170 + $0x28] sm:$0xff] %v712
      %725 = vst [vmem:[%s170 + $0x30] sm:$0xff] %v713
      %726 = vst [vmem:[%s170 + $0x38] sm:$0xff] %v714
      %727 = vst [vmem:[%s170 + $0x40] sm:$0xff] %v715
      %728 = vst [vmem:[%s170 + $0x48] sm:$0xff] %v716
      %729 = vst [vmem:[%s170 + $0x50] sm:$0xff] %v717
      %730 = vst [vmem:[%s170 + $0x58] sm:$0xff] %v718
      %p731 = scmp.lt.s32.totalorder %s14, 1
      %s732 = scalar_select %p731, %s14, 1
      %s733 = smul.addr %s732, 12
      %s734 = smul.addr %s733, 8
      %s735 = scalar_lea.vmem %s3, %s734
      // Predicated region
      $region33: #{se_rawformer_front.17} parent=31 // pred_check
        %p736 = pneg %p100
      $region34: #{se_rawformer_front.17} parent=31 // pred_check_branch
        %738 = sbr.rel (%p736) target = $region36
      $region35: #{se_rawformer_front.17} parent=31 // pred_region
        _
      $region36: #{se_rawformer_front.17} parent=31 // pred_fallthru
        _
    $region32: #{se_rawformer_front.17} parent=5 // pred_fallthru
      _
    %p739 = scmp.le.s32.totalorder 2, %s9
    // Predicated region
    $region37: #{se_rawformer_front.17} parent=5 // pred_check
      %p740 = pneg %p739
    $region38: #{se_rawformer_front.17} parent=5 // pred_check_branch
      %742 = sbr.rel (%p740) target = $region40
    $region39: #{se_rawformer_front.17} parent=5 // pred_region
      %s743 = ssub.s32 %s9, 2
      // Predicated region
      $region41: #{se_rawformer_front.17} parent=39 // pred_check
        %p744 = pneg %p106
      $region42: #{se_rawformer_front.17} parent=39 // pred_check_branch
        %746 = sbr.rel (%p744) target = $region44
      $region43: #{se_rawformer_front.17} parent=39 // pred_region
        %p747 = scmp.lt.s32.totalorder %s15, 1
        %s748 = scalar_select %p747, %s15, 1
        %s749 = smul.addr %s748, 12
        %s750 = smul.addr %s749, 8
        %s751 = scalar_lea.vmem %s3, %s750
      $region44: #{se_rawformer_front.17} parent=39 // pred_fallthru
        _
    $region40: #{se_rawformer_front.17} parent=5 // pred_fallthru
      _
  $region6: #{se_rawformer_front.17} parent=0 // loop_footer
    %s13 = sadd.s32 1, %s9
  $region7: #{se_rawformer_front.17} parent=0 // loop_footer_branch
    %8 = sbr.rel target = $region3
  $region8: #{se_rawformer_front.17} parent=0 // loop_exit
    _

// kernel: se_rawformer_front.18
$region0: #{se_rawformer_front.18}
  #allocation0 [shape = 'u32[]', space=smem, size = 0x4, offset = 0x4, fixed_abs, tag = 'smem constant byte address 0x4 - core index']
  #allocation1 [shape = 'u32[144,128]{1,0:T(1,128)}', space=vmem, size = 0x12000, scoped, tag = 'internal scratch']
  %s0 = inlined_call_operand.vmem [shape: bf16[2,96,192], index: 0, kind: input, shape index: {}]
  %s1 = inlined_call_operand.vmem [shape: bf16[1,32,96], index: 1, kind: input, shape index: {}]
  %s2 = inlined_call_operand.vmem [shape: f32[32,1], index: 2, kind: input, shape index: {}]
  %s3 = inlined_call_operand.vmem [shape: f32[2,32,192], index: 3, kind: output, shape index: {}]
  %s4 = sld [smem:[#allocation0]]
  $region45: #{se_rawformer_front.18} parent=0
    _
  %s6 = ssub.s32 1, %s4
  %s7 = scalar_select 0, %s6, %s4
  loop: start=0, step=1, limit=4
  $region2: #{se_rawformer_front.18} parent=0 // loop_pre_header
    _
  $region3: #{se_rawformer_front.18} parent=0 // loop_header
    %s9 = sphi 0, %s13
    %p10 = scmp.ge.s32.totalorder %s9, 4
    %s19 = sphi 0, %s21
    %s22 = sphi 0, %s19
    %s23 = sphi 0, %s22
    %s39 = sphi 0, %s23
    %s43 = sphi 0, %s43
    %s45 = sphi 0, %s43
    %s46 = sphi 0, %s45
    %s60 = sphi 0, %s46
    %s64 = sphi 0, %s64
    %s66 = sphi 0, %s64
    %s67 = sphi 0, %s66
    %s81 = sphi 0, %s67
    %s87 = sphi 0, %s89
    %s90 = sphi 0, %s87
    %s91 = sphi 0, %s90
    %s107 = sphi 0, %s91
  $region4: #{se_rawformer_front.18} parent=0 // loop_header_branch
    %12 = sbr.rel (%p10) target = $region8
  $region5: #{se_rawformer_front.18} parent=0 // loop_body
    %s14 = ssub.s32 %s9, 1
    %s15 = ssub.s32 %s9, 2
    %s16 = sadd.s32 %s9, 1
    %s17 = ssub.s32 %s9, %s16
    %p18 = scmp.eq.s32.totalorder %s17, 0
    %s20 = sadd.s32 %s19, 1
    %s21 = scalar_select %p18, %s19, %s20
    %p24 = pneg %p18
    %p25 = scmp.eq.s32.totalorder %s9, 1
    %p26 = por %p24, %p25
    %p27 = scmp.ne.s32.totalorder %s19, %s22
    %p28 = scmp.eq.s32.totalorder %s9, 0
    %p29 = por %p27, %p28
    %p30 = scmp.ne.s32.totalorder %s19, %s22
    %p31 = scmp.eq.s32.totalorder %s14, 1
    %p32 = por %p30, %p31
    %p33 = scmp.ne.s32.totalorder %s22, %s23
    %p34 = scmp.eq.s32.totalorder %s14, 0
    %p35 = por %p33, %p34
    %p36 = scmp.ne.s32.totalorder %s22, %s23
    %p37 = scmp.eq.s32.totalorder %s15, 1
    %p38 = por %p36, %p37
    %p40 = scmp.ne.s32.totalorder %s23, %s39
    %p41 = scmp.eq.s32.totalorder %s15, 0
    %p42 = por %p40, %p41
    %s44 = sadd.s32 %s43, 1
    %p47 = scmp.eq.s32.totalorder %s9, 1
    %p48 = scmp.ne.s32.totalorder %s43, %s45
    %p49 = scmp.eq.s32.totalorder %s9, 0
    %p50 = por %p48, %p49
    %p51 = scmp.ne.s32.totalorder %s43, %s45
    %p52 = scmp.eq.s32.totalorder %s14, 1
    %p53 = por %p51, %p52
    %p54 = scmp.ne.s32.totalorder %s45, %s46
    %p55 = scmp.eq.s32.totalorder %s14, 0
    %p56 = por %p54, %p55
    %p57 = scmp.ne.s32.totalorder %s45, %s46
    %p58 = scmp.eq.s32.totalorder %s15, 1
    %p59 = por %p57, %p58
    %p61 = scmp.ne.s32.totalorder %s46, %s60
    %p62 = scmp.eq.s32.totalorder %s15, 0
    %p63 = por %p61, %p62
    %s65 = sadd.s32 %s64, 1
    %p68 = scmp.eq.s32.totalorder %s9, 1
    %p69 = scmp.ne.s32.totalorder %s64, %s66
    %p70 = scmp.eq.s32.totalorder %s9, 0
    %p71 = por %p69, %p70
    %p72 = scmp.ne.s32.totalorder %s64, %s66
    %p73 = scmp.eq.s32.totalorder %s14, 1
    %p74 = por %p72, %p73
    %p75 = scmp.ne.s32.totalorder %s66, %s67
    %p76 = scmp.eq.s32.totalorder %s14, 0
    %p77 = por %p75, %p76
    %p78 = scmp.ne.s32.totalorder %s66, %s67
    %p79 = scmp.eq.s32.totalorder %s15, 1
    %p80 = por %p78, %p79
    %p82 = scmp.ne.s32.totalorder %s67, %s81
    %p83 = scmp.eq.s32.totalorder %s15, 0
    %p84 = por %p82, %p83
    %s85 = ssub.s32 %s9, %s16
    %p86 = scmp.eq.s32.totalorder %s85, 0
    %s88 = sadd.s32 %s87, 1
    %s89 = scalar_select %p86, %s87, %s88
    %p92 = pneg %p86
    %p93 = scmp.eq.s32.totalorder %s9, 1
    %p94 = por %p92, %p93
    %p95 = scmp.ne.s32.totalorder %s87, %s90
    %p96 = scmp.eq.s32.totalorder %s9, 0
    %p97 = por %p95, %p96
    %p98 = scmp.ne.s32.totalorder %s87, %s90
    %p99 = scmp.eq.s32.totalorder %s14, 1
    %p100 = por %p98, %p99
    %p101 = scmp.ne.s32.totalorder %s90, %s91
    %p102 = scmp.eq.s32.totalorder %s14, 0
    %p103 = por %p101, %p102
    %p104 = scmp.ne.s32.totalorder %s90, %s91
    %p105 = scmp.eq.s32.totalorder %s15, 1
    %p106 = por %p104, %p105
    %p108 = scmp.ne.s32.totalorder %s91, %s107
    %p109 = scmp.eq.s32.totalorder %s15, 0
    %p110 = por %p108, %p109
    %p111 = scmp.le.s32.totalorder 1, %s9
    %p112 = scmp.lt.s32.totalorder %s9, 3
    %p113 = pnand %p111, %p112
    %p114 = pneg %p113
    // Predicated region
    $region9: #{se_rawformer_front.18} parent=5 // pred_check
      _
    $region10: #{se_rawformer_front.18} parent=5 // pred_check_branch
      %116 = sbr.rel (%p113) target = $region12
    $region11: #{se_rawformer_front.18} parent=5 // pred_region
      %s117 = ssub.s32 %s9, 1
      // Predicated region
      $region13: #{se_rawformer_front.18} parent=11 // pred_check
        %p118 = pneg %p56
      $region14: #{se_rawformer_front.18} parent=11 // pred_check_branch
        %120 = sbr.rel (%p118) target = $region16
      $region15: #{se_rawformer_front.18} parent=11 // pred_region
        _
      $region16: #{se_rawformer_front.18} parent=11 // pred_fallthru
        _
      // Predicated region
      $region17: #{se_rawformer_front.18} parent=11 // pred_check
        %p121 = pneg %p77
      $region18: #{se_rawformer_front.18} parent=11 // pred_check_branch
        %123 = sbr.rel (%p121) target = $region20
      $region19: #{se_rawformer_front.18} parent=11 // pred_region
        _
      $region20: #{se_rawformer_front.18} parent=11 // pred_fallthru
        _
    $region12: #{se_rawformer_front.18} parent=5 // pred_fallthru
      _
    %p124 = scmp.lt.s32.totalorder %s9, 2
    // Predicated region
    $region21: #{se_rawformer_front.18} parent=5 // pred_check
      %p125 = pneg %p124
    $region22: #{se_rawformer_front.18} parent=5 // pred_check_branch
      %127 = sbr.rel (%p125) target = $region24
    $region23: #{se_rawformer_front.18} parent=5 // pred_region
      // Predicated region
      $region25: #{se_rawformer_front.18} parent=23 // pred_check
        %p128 = pneg %p29
      $region26: #{se_rawformer_front.18} parent=23 // pred_check_branch
        %130 = sbr.rel (%p128) target = $region28
      $region27: #{se_rawformer_front.18} parent=23 // pred_region
        %p131 = scmp.lt.s32.totalorder %s9, 1
        %s132 = scalar_select %p131, %s9, 1
        %s133 = smul.addr %s132, 24
        %s134 = smul.addr %s133, 4
        %s135 = scalar_lea.vmem %s0, %s134
      $region28: #{se_rawformer_front.18} parent=23 // pred_fallthru
        _
    $region24: #{se_rawformer_front.18} parent=5 // pred_fallthru
      _
    %p136 = scmp.le.s32.totalorder 1, %s9
    %p137 = scmp.lt.s32.totalorder %s9, 3
    %p138 = pnand %p136, %p137
    %p139 = pneg %p138
    // Predicated region
    $region29: #{se_rawformer_front.18} parent=5 // pred_check
      _
    $region30: #{se_rawformer_front.18} parent=5 // pred_check_branch
      %141 = sbr.rel (%p138) target = $region32
    $region31: #{se_rawformer_front.18} parent=5 // pred_region
      %s142 = ssub.s32 %s9, 1
      %p143 = scmp.lt.s32.totalorder %s14, 1
      %s144 = scalar_select %p143, %s14, 1
      %s145 = smul.addr %s144, 24
      %s146 = smul.addr %s145, 4
      %s147 = scalar_lea.vmem %s0, %s146
      %p148 = pneg %p35
      %p149 = pneg %p32
      %p150 = pneg %p56
      %p151 = pneg %p53
      %p152 = pneg %p77
      %p153 = pneg %p74
      %p154 = pneg %p103
      %p155 = pneg %p100
      %p156 = scmp.lt.s32.totalorder %s14, 1
      %s157 = scalar_select %p156, %s14, 1
      %s158 = smul.addr %s157, 8
      %s159 = smul.addr %s158, 8
      %s160 = scalar_lea.vmem %s3, %s159
      %p161 = scmp.lt.s32.totalorder %s14, 1
      %s162 = scalar_select %p161, %s14, 1
      %s163 = smul.addr %s162, 24
      %s164 = smul.addr %s163, 4
      %s165 = scalar_lea.vmem %s0, %s164
      %p166 = scmp.lt.s32.totalorder %s14, 1
      %s167 = scalar_select %p166, %s14, 1
      %s168 = smul.addr %s167, 8
      %s169 = smul.addr %s168, 8
      %s170 = scalar_lea.vmem %s3, %s169
      %v172 = vld [vmem:[%s1] sm:$0xf]
      %v173 = vld [vmem:[%s1 + $0x4] sm:$0xf]
      %v174 = vld [vmem:[%s1 + $0x8] sm:$0xf]
      %v175 = vld [vmem:[%s1 + $0xc] sm:$0xf]
      %v176 = vld [vmem:[%s165] sm:$0xff]
      %v177 = vld [vmem:[%s165 + $0x8] sm:$0xff]
      %v178 = vld [vmem:[%s165 + $0x10] sm:$0xff]
      %v179 = vld [vmem:[%s165 + $0x18] sm:$0xff]
      %v180 = vld [vmem:[%s165 + $0x20] sm:$0xff]
      %v181 = vld [vmem:[%s165 + $0x28] sm:$0xff]
      %v182 = vld [vmem:[%s165 + $0x30] sm:$0xff]
      %v183 = vld [vmem:[%s165 + $0x38] sm:$0xff]
      %v184 = vld [vmem:[%s165 + $0x40] sm:$0xff]
      %v185 = vld [vmem:[%s165 + $0x48] sm:$0xff]
      %v186 = vld [vmem:[%s165 + $0x50] sm:$0xff]
      %v187 = vld [vmem:[%s165 + $0x58] sm:$0xff]
      %v188 = vld [vmem:[%s2] sm:$0xff]
      %v189 = vld [vmem:[%s2 + $0x8] sm:$0xff]
      %v190 = vld [vmem:[%s2 + $0x10] sm:$0xff]
      %v191 = vld [vmem:[%s2 + $0x18] sm:$0xff]
      %193 = vset.pattern.permute.xlu0 0
      %194 = vperm.xlu0 %193, %v188
      %v195 = vpop.permute.xlu0 %194
      %198 = vset.pattern.permute.xlu0 0
      %199 = vperm.xlu0 %198, %v189
      %v200 = vpop.permute.xlu0 %199
      %203 = vset.pattern.permute.xlu0 0
      %204 = vperm.xlu0 %203, %v190
      %v205 = vpop.permute.xlu0 %204
      %208 = vset.pattern.permute.xlu0 0
      %209 = vperm.xlu0 %208, %v191
      %v210 = vpop.permute.xlu0 %209
      %v216 = vunpack.c.l.b16 %v172
      %v217 = vunpack.c.l.b16 %v173
      %v218 = vunpack.c.l.b16 %v174
      %v219 = vunpack.c.l.b16 %v175
      %v220 = vpack.c.b16 %v217, %v216
      %v221 = vpack.c.b16 %v219, %v218
      %v234 = vunpack.c.l.b16 %v176
      %v235 = vunpack.c.h.b16 %v176
      %v236 = vunpack.c.l.b16 %v177
      %v237 = vunpack.c.h.b16 %v177
      %v238 = vunpack.c.l.b16 %v178
      %v239 = vunpack.c.h.b16 %v178
      %v240 = vunpack.c.l.b16 %v179
      %v241 = vunpack.c.h.b16 %v179
      %v242 = vunpack.c.l.b16 %v180
      %v243 = vunpack.c.h.b16 %v180
      %v244 = vunpack.c.l.b16 %v181
      %v245 = vunpack.c.h.b16 %v181
      %v246 = vunpack.c.l.b16 %v182
      %v247 = vunpack.c.h.b16 %v182
      %v248 = vunpack.c.l.b16 %v183
      %v249 = vunpack.c.h.b16 %v183
      %v250 = vunpack.c.l.b16 %v184
      %v251 = vunpack.c.h.b16 %v184
      %v252 = vunpack.c.l.b16 %v185
      %v253 = vunpack.c.h.b16 %v185
      %v254 = vunpack.c.l.b16 %v186
      %v255 = vunpack.c.h.b16 %v186
      %v256 = vunpack.c.l.b16 %v187
      %v257 = vunpack.c.h.b16 %v187
      %v258 = vpack.c.b16 %v236, %v234
      %v259 = vpack.c.b16 %v237, %v235
      %v260 = vpack.c.b16 %v240, %v238
      %v261 = vpack.c.b16 %v241, %v239
      %v262 = vpack.c.b16 %v244, %v242
      %v263 = vpack.c.b16 %v245, %v243
      %v264 = vpack.c.b16 %v248, %v246
      %v265 = vpack.c.b16 %v249, %v247
      %v266 = vpack.c.b16 %v252, %v250
      %v267 = vpack.c.b16 %v253, %v251
      %v268 = vpack.c.b16 %v256, %v254
      %v269 = vpack.c.b16 %v257, %v255
      %vm282 = vcmask 785408
      %v284 = vsel %vm282, %v220, 0
      %v287 = vsel %vm282, %v221, 0
      %289 = vmatprep.subr.bf16.mxu0 %v259
      %290 = vmatpush1.bf16.msra.mxu0 %v258
      %291 = vmatprep.subr.bf16.mxu0 %v261
      %292 = vmatpush1.bf16.msra.mxu0 %v260
      %293 = vmatprep.subr.bf16.mxu0 %v263
      %294 = vmatpush1.bf16.msra.mxu0 %v262
      %295 = vmatprep.subr.bf16.mxu0 %v265
      %296 = vmatpush1.bf16.msra.mxu0 %v264
      %297 = vmatprep.subr.bf16.mxu0 %v267
      %298 = vmatpush1.bf16.msra.mxu0 %v266
      %299 = vmatprep.subr.bf16.mxu0 %v269
      %300 = vmatpush1.bf16.msra.mxu0 %v268
      %301 = vmatprep.subr.bf16.mxu0 0
      %302 = vmatpush1.bf16.msra.mxu0 0
      %303 = vmatprep.subr.bf16.mxu0 0
      %304 = vmatpush1.bf16.msra.mxu0 0
      %305 = vmatprep.subr.bf16.mxu0 0
      %306 = vmatpush1.bf16.msra.mxu0 0
      %307 = vmatprep.subr.bf16.mxu0 0
      %308 = vmatpush1.bf16.msra.mxu0 0
      %309 = vmatprep.subr.bf16.mxu0 0
      %310 = vmatpush1.bf16.msra.mxu0 0
      %311 = vmatprep.subr.bf16.mxu0 0
      %312 = vmatpush1.bf16.msra.mxu0 0
      %313 = vmatprep.subr.bf16.mxu0 0
      %314 = vmatpush1.bf16.msra.mxu0 0
      %315 = vmatprep.subr.bf16.mxu0 0
      %316 = vmatpush1.bf16.msra.mxu0 0
      %317 = vmatprep.subr.bf16.mxu0 0
      %318 = vmatpush1.bf16.msra.mxu0 0
      %319 = vmatprep.subr.bf16.mxu0 0
      %320 = vmatpush1.bf16.msra.mxu0 0
      %321 = vmatprep.mubr.bf16.mxu0 0
      %322 = vmatmul.mubr.bf16.gmra.mrb[0].mxu0 %v284
      %v323 = vpop.f32.mrb[0].mxu0
      %v324 = vadd.f32 %v195, %v323
      %v325 = vpop.f32.mrb[0].mxu0
      %v326 = vadd.f32 %v195, %v325
      %v327 = vpop.f32.mrb[0].mxu0
      %v328 = vadd.f32 %v200, %v327
      %v329 = vpop.f32.mrb[0].mxu0
      %v330 = vadd.f32 %v200, %v329
      %331 = vmatprep.mubr.bf16.mxu0 0
      %332 = vmatmul.mubr.bf16.gmra.mrb[0].mxu0 %v287
      %v333 = vpop.f32.mrb[0].mxu0
      %v334 = vadd.f32 %v205, %v333
      %v335 = vpop.f32.mrb[0].mxu0
      %v336 = vadd.f32 %v205, %v335
      %v337 = vpop.f32.mrb[0].mxu0
      %v338 = vadd.f32 %v210, %v337
      %v339 = vpop.f32.mrb[0].mxu0
      %v340 = vadd.f32 %v210, %v339
      %341 = vdwg.mxu0
      %342 = vst [vmem:[%s170] sm:$0xff] %v324
      %vm343 = vcmask 523264
      %344 = vst.msk [vmem:[%s170 + $0x8] sm:$0xff] %vm343, %v326
      %345 = vst [vmem:[%s170 + $0x10] sm:$0xff] %v328
      %346 = vst.msk [vmem:[%s170 + $0x18] sm:$0xff] %vm343, %v330
      %347 = vst [vmem:[%s170 + $0x20] sm:$0xff] %v334
      %348 = vst.msk [vmem:[%s170 + $0x28] sm:$0xff] %vm343, %v336
      %349 = vst [vmem:[%s170 + $0x30] sm:$0xff] %v338
      %350 = vst.msk [vmem:[%s170 + $0x38] sm:$0xff] %vm343, %v340
      %p351 = scmp.lt.s32.totalorder %s14, 1
      %s352 = scalar_select %p351, %s14, 1
      %s353 = smul.addr %s352, 8
      %s354 = smul.addr %s353, 8
      %s355 = scalar_lea.vmem %s3, %s354
      // Predicated region
      $region33: #{se_rawformer_front.18} parent=31 // pred_check
        %p356 = pneg %p100
      $region34: #{se_rawformer_front.18} parent=31 // pred_check_branch
        %358 = sbr.rel (%p356) target = $region36
      $region35: #{se_rawformer_front.18} parent=31 // pred_region
        _
      $region36: #{se_rawformer_front.18} parent=31 // pred_fallthru
        _
    $region32: #{se_rawformer_front.18} parent=5 // pred_fallthru
      _
    %p359 = scmp.le.s32.totalorder 2, %s9
    // Predicated region
    $region37: #{se_rawformer_front.18} parent=5 // pred_check
      %p360 = pneg %p359
    $region38: #{se_rawformer_front.18} parent=5 // pred_check_branch
      %362 = sbr.rel (%p360) target = $region40
    $region39: #{se_rawformer_front.18} parent=5 // pred_region
      %s363 = ssub.s32 %s9, 2
      // Predicated region
      $region41: #{se_rawformer_front.18} parent=39 // pred_check
        %p364 = pneg %p106
      $region42: #{se_rawformer_front.18} parent=39 // pred_check_branch
        %366 = sbr.rel (%p364) target = $region44
      $region43: #{se_rawformer_front.18} parent=39 // pred_region
        %p367 = scmp.lt.s32.totalorder %s15, 1
        %s368 = scalar_select %p367, %s15, 1
        %s369 = smul.addr %s368, 8
        %s370 = smul.addr %s369, 8
        %s371 = scalar_lea.vmem %s3, %s370
      $region44: #{se_rawformer_front.18} parent=39 // pred_fallthru
        _
    $region40: #{se_rawformer_front.18} parent=5 // pred_fallthru
      _
  $region6: #{se_rawformer_front.18} parent=0 // loop_footer
    %s13 = sadd.s32 1, %s9
  $region7: #{se_rawformer_front.18} parent=0 // loop_footer_branch
    %8 = sbr.rel target = $region3
  $region8: #{se_rawformer_front.18} parent=0 // loop_exit
    _

// kernel: se_rawformer_front.19
$region0: #{se_rawformer_front.19}
  #allocation0 [shape = 'u32[]', space=smem, size = 0x4, offset = 0x4, fixed_abs, tag = 'smem constant byte address 0x4 - core index']
  #allocation1 [shape = 'u32[144,128]{1,0:T(1,128)}', space=vmem, size = 0x12000, scoped, tag = 'internal scratch']
  %s0 = inlined_call_operand.vmem [shape: bf16[2,96,208], index: 0, kind: input, shape index: {}]
  %s1 = inlined_call_operand.vmem [shape: bf16[3,32,96], index: 1, kind: input, shape index: {}]
  %s2 = inlined_call_operand.vmem [shape: f32[32,1], index: 2, kind: input, shape index: {}]
  %s3 = inlined_call_operand.vmem [shape: f32[2,32,192], index: 3, kind: input, shape index: {}]
  %s4 = inlined_call_operand.vmem [shape: f32[8,32], index: 4, kind: input, shape index: {}]
  %s5 = inlined_call_operand.vmem [shape: f32[8,1], index: 5, kind: input, shape index: {}]
  %s6 = inlined_call_operand.vmem [shape: f32[32,8], index: 6, kind: input, shape index: {}]
  %s7 = inlined_call_operand.vmem [shape: f32[32,1], index: 7, kind: input, shape index: {}]
  %s8 = inlined_call_operand.vmem [shape: f32[2,32,192], index: 8, kind: output, shape index: {}]
  %s9 = sld [smem:[#allocation0]]
  $region65: #{se_rawformer_front.19} parent=0
    _
  %s11 = ssub.s32 1, %s9
  %s12 = scalar_select 0, %s11, %s9
  loop: start=0, step=1, limit=4
  $region2: #{se_rawformer_front.19} parent=0 // loop_pre_header
    _
  $region3: #{se_rawformer_front.19} parent=0 // loop_header
    %s14 = sphi 0, %s18
    %p15 = scmp.ge.s32.totalorder %s14, 4
    %s24 = sphi 0, %s26
    %s27 = sphi 0, %s24
    %s28 = sphi 0, %s27
    %s44 = sphi 0, %s28
    %s48 = sphi 0, %s48
    %s50 = sphi 0, %s48
    %s51 = sphi 0, %s50
    %s65 = sphi 0, %s51
    %s69 = sphi 0, %s69
    %s71 = sphi 0, %s69
    %s72 = sphi 0, %s71
    %s86 = sphi 0, %s72
    %s92 = sphi 0, %s94
    %s95 = sphi 0, %s92
    %s96 = sphi 0, %s95
    %s112 = sphi 0, %s96
    %s116 = sphi 0, %s116
    %s118 = sphi 0, %s116
    %s119 = sphi 0, %s118
    %s133 = sphi 0, %s119
    %s137 = sphi 0, %s137
    %s139 = sphi 0, %s137
    %s140 = sphi 0, %s139
    %s154 = sphi 0, %s140
    %s158 = sphi 0, %s158
    %s160 = sphi 0, %s158
    %s161 = sphi 0, %s160
    %s175 = sphi 0, %s161
    %s179 = sphi 0, %s179
    %s181 = sphi 0, %s179
    %s182 = sphi 0, %s181
    %s196 = sphi 0, %s182
    %s202 = sphi 0, %s204
    %s205 = sphi 0, %s202
    %s206 = sphi 0, %s205
    %s222 = sphi 0, %s206
  $region4: #{se_rawformer_front.19} parent=0 // loop_header_branch
    %17 = sbr.rel (%p15) target = $region8
  $region5: #{se_rawformer_front.19} parent=0 // loop_body
    %s19 = ssub.s32 %s14, 1
    %s20 = ssub.s32 %s14, 2
    %s21 = sadd.s32 %s14, 1
    %s22 = ssub.s32 %s14, %s21
    %p23 = scmp.eq.s32.totalorder %s22, 0
    %s25 = sadd.s32 %s24, 1
    %s26 = scalar_select %p23, %s24, %s25
    %p29 = pneg %p23
    %p30 = scmp.eq.s32.totalorder %s14, 1
    %p31 = por %p29, %p30
    %p32 = scmp.ne.s32.totalorder %s24, %s27
    %p33 = scmp.eq.s32.totalorder %s14, 0
    %p34 = por %p32, %p33
    %p35 = scmp.ne.s32.totalorder %s24, %s27
    %p36 = scmp.eq.s32.totalorder %s19, 1
    %p37 = por %p35, %p36
    %p38 = scmp.ne.s32.totalorder %s27, %s28
    %p39 = scmp.eq.s32.totalorder %s19, 0
    %p40 = por %p38, %p39
    %p41 = scmp.ne.s32.totalorder %s27, %s28
    %p42 = scmp.eq.s32.totalorder %s20, 1
    %p43 = por %p41, %p42
    %p45 = scmp.ne.s32.totalorder %s28, %s44
    %p46 = scmp.eq.s32.totalorder %s20, 0
    %p47 = por %p45, %p46
    %s49 = sadd.s32 %s48, 1
    %p52 = scmp.eq.s32.totalorder %s14, 1
    %p53 = scmp.ne.s32.totalorder %s48, %s50
    %p54 = scmp.eq.s32.totalorder %s14, 0
    %p55 = por %p53, %p54
    %p56 = scmp.ne.s32.totalorder %s48, %s50
    %p57 = scmp.eq.s32.totalorder %s19, 1
    %p58 = por %p56, %p57
    %p59 = scmp.ne.s32.totalorder %s50, %s51
    %p60 = scmp.eq.s32.totalorder %s19, 0
    %p61 = por %p59, %p60
    %p62 = scmp.ne.s32.totalorder %s50, %s51
    %p63 = scmp.eq.s32.totalorder %s20, 1
    %p64 = por %p62, %p63
    %p66 = scmp.ne.s32.totalorder %s51, %s65
    %p67 = scmp.eq.s32.totalorder %s20, 0
    %p68 = por %p66, %p67
    %s70 = sadd.s32 %s69, 1
    %p73 = scmp.eq.s32.totalorder %s14, 1
    %p74 = scmp.ne.s32.totalorder %s69, %s71
    %p75 = scmp.eq.s32.totalorder %s14, 0
    %p76 = por %p74, %p75
    %p77 = scmp.ne.s32.totalorder %s69, %s71
    %p78 = scmp.eq.s32.totalorder %s19, 1
    %p79 = por %p77, %p78
    %p80 = scmp.ne.s32.totalorder %s71, %s72
    %p81 = scmp.eq.s32.totalorder %s19, 0
    %p82 = por %p80, %p81
    %p83 = scmp.ne.s32.totalorder %s71, %s72
    %p84 = scmp.eq.s32.totalorder %s20, 1
    %p85 = por %p83, %p84
    %p87 = scmp.ne.s32.totalorder %s72, %s86
    %p88 = scmp.eq.s32.totalorder %s20, 0
    %p89 = por %p87, %p88
    %s90 = ssub.s32 %s14, %s21
    %p91 = scmp.eq.s32.totalorder %s90, 0
    %s93 = sadd.s32 %s92, 1
    %s94 = scalar_select %p91, %s92, %s93
    %p97 = pneg %p91
    %p98 = scmp.eq.s32.totalorder %s14, 1
    %p99 = por %p97, %p98
    %p100 = scmp.ne.s32.totalorder %s92, %s95
    %p101 = scmp.eq.s32.totalorder %s14, 0
    %p102 = por %p100, %p101
    %p103 = scmp.ne.s32.totalorder %s92, %s95
    %p104 = scmp.eq.s32.totalorder %s19, 1
    %p105 = por %p103, %p104
    %p106 = scmp.ne.s32.totalorder %s95, %s96
    %p107 = scmp.eq.s32.totalorder %s19, 0
    %p108 = por %p106, %p107
    %p109 = scmp.ne.s32.totalorder %s95, %s96
    %p110 = scmp.eq.s32.totalorder %s20, 1
    %p111 = por %p109, %p110
    %p113 = scmp.ne.s32.totalorder %s96, %s112
    %p114 = scmp.eq.s32.totalorder %s20, 0
    %p115 = por %p113, %p114
    %s117 = sadd.s32 %s116, 1
    %p120 = scmp.eq.s32.totalorder %s14, 1
    %p121 = scmp.ne.s32.totalorder %s116, %s118
    %p122 = scmp.eq.s32.totalorder %s14, 0
    %p123 = por %p121, %p122
    %p124 = scmp.ne.s32.totalorder %s116, %s118
    %p125 = scmp.eq.s32.totalorder %s19, 1
    %p126 = por %p124, %p125
    %p127 = scmp.ne.s32.totalorder %s118, %s119
    %p128 = scmp.eq.s32.totalorder %s19, 0
    %p129 = por %p127, %p128
    %p130 = scmp.ne.s32.totalorder %s118, %s119
    %p131 = scmp.eq.s32.totalorder %s20, 1
    %p132 = por %p130, %p131
    %p134 = scmp.ne.s32.totalorder %s119, %s133
    %p135 = scmp.eq.s32.totalorder %s20, 0
    %p136 = por %p134, %p135
    %s138 = sadd.s32 %s137, 1
    %p141 = scmp.eq.s32.totalorder %s14, 1
    %p142 = scmp.ne.s32.totalorder %s137, %s139
    %p143 = scmp.eq.s32.totalorder %s14, 0
    %p144 = por %p142, %p143
    %p145 = scmp.ne.s32.totalorder %s137, %s139
    %p146 = scmp.eq.s32.totalorder %s19, 1
    %p147 = por %p145, %p146
    %p148 = scmp.ne.s32.totalorder %s139, %s140
    %p149 = scmp.eq.s32.totalorder %s19, 0
    %p150 = por %p148, %p149
    %p151 = scmp.ne.s32.totalorder %s139, %s140
    %p152 = scmp.eq.s32.totalorder %s20, 1
    %p153 = por %p151, %p152
    %p155 = scmp.ne.s32.totalorder %s140, %s154
    %p156 = scmp.eq.s32.totalorder %s20, 0
    %p157 = por %p155, %p156
    %s159 = sadd.s32 %s158, 1
    %p162 = scmp.eq.s32.totalorder %s14, 1
    %p163 = scmp.ne.s32.totalorder %s158, %s160
    %p164 = scmp.eq.s32.totalorder %s14, 0
    %p165 = por %p163, %p164
    %p166 = scmp.ne.s32.totalorder %s158, %s160
    %p167 = scmp.eq.s32.totalorder %s19, 1
    %p168 = por %p166, %p167
    %p169 = scmp.ne.s32.totalorder %s160, %s161
    %p170 = scmp.eq.s32.totalorder %s19, 0
    %p171 = por %p169, %p170
    %p172 = scmp.ne.s32.totalorder %s160, %s161
    %p173 = scmp.eq.s32.totalorder %s20, 1
    %p174 = por %p172, %p173
    %p176 = scmp.ne.s32.totalorder %s161, %s175
    %p177 = scmp.eq.s32.totalorder %s20, 0
    %p178 = por %p176, %p177
    %s180 = sadd.s32 %s179, 1
    %p183 = scmp.eq.s32.totalorder %s14, 1
    %p184 = scmp.ne.s32.totalorder %s179, %s181
    %p185 = scmp.eq.s32.totalorder %s14, 0
    %p186 = por %p184, %p185
    %p187 = scmp.ne.s32.totalorder %s179, %s181
    %p188 = scmp.eq.s32.totalorder %s19, 1
    %p189 = por %p187, %p188
    %p190 = scmp.ne.s32.totalorder %s181, %s182
    %p191 = scmp.eq.s32.totalorder %s19, 0
    %p192 = por %p190, %p191
    %p193 = scmp.ne.s32.totalorder %s181, %s182
    %p194 = scmp.eq.s32.totalorder %s20, 1
    %p195 = por %p193, %p194
    %p197 = scmp.ne.s32.totalorder %s182, %s196
    %p198 = scmp.eq.s32.totalorder %s20, 0
    %p199 = por %p197, %p198
    %s200 = ssub.s32 %s14, %s21
    %p201 = scmp.eq.s32.totalorder %s200, 0
    %s203 = sadd.s32 %s202, 1
    %s204 = scalar_select %p201, %s202, %s203
    %p207 = pneg %p201
    %p208 = scmp.eq.s32.totalorder %s14, 1
    %p209 = por %p207, %p208
    %p210 = scmp.ne.s32.totalorder %s202, %s205
    %p211 = scmp.eq.s32.totalorder %s14, 0
    %p212 = por %p210, %p211
    %p213 = scmp.ne.s32.totalorder %s202, %s205
    %p214 = scmp.eq.s32.totalorder %s19, 1
    %p215 = por %p213, %p214
    %p216 = scmp.ne.s32.totalorder %s205, %s206
    %p217 = scmp.eq.s32.totalorder %s19, 0
    %p218 = por %p216, %p217
    %p219 = scmp.ne.s32.totalorder %s205, %s206
    %p220 = scmp.eq.s32.totalorder %s20, 1
    %p221 = por %p219, %p220
    %p223 = scmp.ne.s32.totalorder %s206, %s222
    %p224 = scmp.eq.s32.totalorder %s20, 0
    %p225 = por %p223, %p224
    %p226 = scmp.le.s32.totalorder 1, %s14
    %p227 = scmp.lt.s32.totalorder %s14, 3
    %p228 = pnand %p226, %p227
    %p229 = pneg %p228
    // Predicated region
    $region9: #{se_rawformer_front.19} parent=5 // pred_check
      _
    $region10: #{se_rawformer_front.19} parent=5 // pred_check_branch
      %231 = sbr.rel (%p228) target = $region12
    $region11: #{se_rawformer_front.19} parent=5 // pred_region
      %s232 = ssub.s32 %s14, 1
      // Predicated region
      $region13: #{se_rawformer_front.19} parent=11 // pred_check
        %p233 = pneg %p61
      $region14: #{se_rawformer_front.19} parent=11 // pred_check_branch
        %235 = sbr.rel (%p233) target = $region16
      $region15: #{se_rawformer_front.19} parent=11 // pred_region
        _
      $region16: #{se_rawformer_front.19} parent=11 // pred_fallthru
        _
      // Predicated region
      $region17: #{se_rawformer_front.19} parent=11 // pred_check
        %p236 = pneg %p82
      $region18: #{se_rawformer_front.19} parent=11 // pred_check_branch
        %238 = sbr.rel (%p236) target = $region20
      $region19: #{se_rawformer_front.19} parent=11 // pred_region
        _
      $region20: #{se_rawformer_front.19} parent=11 // pred_fallthru
        _
      // Predicated region
      $region21: #{se_rawformer_front.19} parent=11 // pred_check
        %p239 = pneg %p129
      $region22: #{se_rawformer_front.19} parent=11 // pred_check_branch
        %241 = sbr.rel (%p239) target = $region24
      $region23: #{se_rawformer_front.19} parent=11 // pred_region
        _
      $region24: #{se_rawformer_front.19} parent=11 // pred_fallthru
        _
      // Predicated region
      $region25: #{se_rawformer_front.19} parent=11 // pred_check
        %p242 = pneg %p150
      $region26: #{se_rawformer_front.19} parent=11 // pred_check_branch
        %244 = sbr.rel (%p242) target = $region28
      $region27: #{se_rawformer_front.19} parent=11 // pred_region
        _
      $region28: #{se_rawformer_front.19} parent=11 // pred_fallthru
        _
      // Predicated region
      $region29: #{se_rawformer_front.19} parent=11 // pred_check
        %p245 = pneg %p171
      $region30: #{se_rawformer_front.19} parent=11 // pred_check_branch
        %247 = sbr.rel (%p245) target = $region32
      $region31: #{se_rawformer_front.19} parent=11 // pred_region
        _
      $region32: #{se_rawformer_front.19} parent=11 // pred_fallthru
        _
      // Predicated region
      $region33: #{se_rawformer_front.19} parent=11 // pred_check
        %p248 = pneg %p192
      $region34: #{se_rawformer_front.19} parent=11 // pred_check_branch
        %250 = sbr.rel (%p248) target = $region36
      $region35: #{se_rawformer_front.19} parent=11 // pred_region
        _
      $region36: #{se_rawformer_front.19} parent=11 // pred_fallthru
        _
    $region12: #{se_rawformer_front.19} parent=5 // pred_fallthru
      _
    %p251 = scmp.lt.s32.totalorder %s14, 2
    // Predicated region
    $region37: #{se_rawformer_front.19} parent=5 // pred_check
      %p252 = pneg %p251
    $region38: #{se_rawformer_front.19} parent=5 // pred_check_branch
      %254 = sbr.rel (%p252) target = $region40
    $region39: #{se_rawformer_front.19} parent=5 // pred_region
      // Predicated region
      $region41: #{se_rawformer_front.19} parent=39 // pred_check
        %p255 = pneg %p34
      $region42: #{se_rawformer_front.19} parent=39 // pred_check_branch
        %257 = sbr.rel (%p255) target = $region44
      $region43: #{se_rawformer_front.19} parent=39 // pred_region
        %p258 = scmp.lt.s32.totalorder %s14, 1
        %s259 = scalar_select %p258, %s14, 1
        %s260 = smul.addr %s259, 24
        %s261 = smul.addr %s260, 4
        %s262 = scalar_lea.vmem %s0, %s261
      $region44: #{se_rawformer_front.19} parent=39 // pred_fallthru
        _
      // Predicated region
      $region45: #{se_rawformer_front.19} parent=39 // pred_check
        %p263 = pneg %p102
      $region46: #{se_rawformer_front.19} parent=39 // pred_check_branch
        %265 = sbr.rel (%p263) target = $region48
      $region47: #{se_rawformer_front.19} parent=39 // pred_region
        %p266 = scmp.lt.s32.totalorder %s14, 1
        %s267 = scalar_select %p266, %s14, 1
        %s268 = smul.addr %s267, 8
        %s269 = smul.addr %s268, 8
        %s270 = scalar_lea.vmem %s3, %s269
      $region48: #{se_rawformer_front.19} parent=39 // pred_fallthru
        _
    $region40: #{se_rawformer_front.19} parent=5 // pred_fallthru
      _
    %p271 = scmp.le.s32.totalorder 1, %s14
    %p272 = scmp.lt.s32.totalorder %s14, 3
    %p273 = pnand %p271, %p272
    %p274 = pneg %p273
    // Predicated region
    $region49: #{se_rawformer_front.19} parent=5 // pred_check
      _
    $region50: #{se_rawformer_front.19} parent=5 // pred_check_branch
      %276 = sbr.rel (%p273) target = $region52
    $region51: #{se_rawformer_front.19} parent=5 // pred_region
      %s277 = ssub.s32 %s14, 1
      %p278 = scmp.lt.s32.totalorder %s19, 1
      %s279 = scalar_select %p278, %s19, 1
      %s280 = smul.addr %s279, 24
      %s281 = smul.addr %s280, 4
      %s282 = scalar_lea.vmem %s0, %s281
      %p283 = pneg %p40
      %p284 = pneg %p37
      %p285 = pneg %p61
      %p286 = pneg %p58
      %p287 = pneg %p82
      %p288 = pneg %p79
      %p289 = scmp.lt.s32.totalorder %s19, 1
      %s290 = scalar_select %p289, %s19, 1
      %s291 = smul.addr %s290, 8
      %s292 = smul.addr %s291, 8
      %s293 = scalar_lea.vmem %s3, %s292
      %p294 = pneg %p108
      %p295 = pneg %p105
      %p296 = pneg %p129
      %p297 = pneg %p126
      %p298 = pneg %p150
      %p299 = pneg %p147
      %p300 = pneg %p171
      %p301 = pneg %p168
      %p302 = pneg %p192
      %p303 = pneg %p189
      %p304 = pneg %p218
      %p305 = pneg %p215
      %p306 = scmp.lt.s32.totalorder %s19, 1
      %s307 = scalar_select %p306, %s19, 1
      %s308 = smul.addr %s307, 8
      %s309 = smul.addr %s308, 8
      %s310 = scalar_lea.vmem %s8, %s309
      %p311 = scmp.lt.s32.totalorder %s19, 1
      %s312 = scalar_select %p311, %s19, 1
      %s313 = smul.addr %s312, 24
      %s314 = smul.addr %s313, 4
      %s315 = scalar_lea.vmem %s0, %s314
      %p316 = scmp.lt.s32.totalorder %s19, 1
      %s317 = scalar_select %p316, %s19, 1
      %s318 = smul.addr %s317, 8
      %s319 = smul.addr %s318, 8
      %s320 = scalar_lea.vmem %s3, %s319
      %p321 = scmp.lt.s32.totalorder %s19, 1
      %s322 = scalar_select %p321, %s19, 1
      %s323 = smul.addr %s322, 8
      %s324 = smul.addr %s323, 8
      %s325 = scalar_lea.vmem %s8, %s324
      %v327 = vld [vmem:[%s1] sm:$0xf]
      %v328 = vld [vmem:[%s1 + $0x4] sm:$0xf]
      %v329 = vld [vmem:[%s1 + $0x8] sm:$0xf]
      %v330 = vld [vmem:[%s1 + $0xc] sm:$0xf]
      %v331 = vld [vmem:[%s315] sm:$0xff]
      %v332 = vld [vmem:[%s315 + $0x8] sm:$0xff]
      %v333 = vld [vmem:[%s315 + $0x10] sm:$0xff]
      %v334 = vld [vmem:[%s315 + $0x18] sm:$0xff]
      %v335 = vld [vmem:[%s315 + $0x20] sm:$0xff]
      %v336 = vld [vmem:[%s315 + $0x28] sm:$0xff]
      %v337 = vld [vmem:[%s315 + $0x30] sm:$0xff]
      %v338 = vld [vmem:[%s315 + $0x38] sm:$0xff]
      %v339 = vld [vmem:[%s315 + $0x40] sm:$0xff]
      %v340 = vld [vmem:[%s315 + $0x48] sm:$0xff]
      %v341 = vld [vmem:[%s315 + $0x50] sm:$0xff]
      %v342 = vld [vmem:[%s315 + $0x58] sm:$0xff]
      %s343 = scalar_lea.vmem %s1, 16
      %v344 = vld [vmem:[%s343] sm:$0xf]
      %v345 = vld [vmem:[%s343 + $0x4] sm:$0xf]
      %v346 = vld [vmem:[%s343 + $0x8] sm:$0xf]
      %v347 = vld [vmem:[%s343 + $0xc] sm:$0xf]
      %v352 = vunpack.c.l.b16 %v344
      %v353 = vunpack.c.l.b16 %v345
      %v354 = vunpack.c.l.b16 %v346
      %v355 = vunpack.c.l.b16 %v347
      %v356 = vpack.c.b16 %v353, %v352
      %v357 = vpack.c.b16 %v355, %v354
      %v370 = vunpack.c.l.b16 %v331
      %v371 = vunpack.c.h.b16 %v331
      %v372 = vunpack.c.l.b16 %v332
      %v373 = vunpack.c.h.b16 %v332
      %v374 = vunpack.c.l.b16 %v333
      %v375 = vunpack.c.h.b16 %v333
      %v376 = vunpack.c.l.b16 %v334
      %v377 = vunpack.c.h.b16 %v334
      %v378 = vunpack.c.l.b16 %v335
      %v379 = vunpack.c.h.b16 %v335
      %v380 = vunpack.c.l.b16 %v336
      %v381 = vunpack.c.h.b16 %v336
      %v382 = vunpack.c.l.b16 %v337
      %v383 = vunpack.c.h.b16 %v337
      %v384 = vunpack.c.l.b16 %v338
      %v385 = vunpack.c.h.b16 %v338
      %v386 = vunpack.c.l.b16 %v339
      %v387 = vunpack.c.h.b16 %v339
      %v388 = vunpack.c.l.b16 %v340
      %v389 = vunpack.c.h.b16 %v340
      %v390 = vunpack.c.l.b16 %v341
      %v391 = vunpack.c.h.b16 %v341
      %v392 = vunpack.c.l.b16 %v342
      %v393 = vunpack.c.h.b16 %v342
      %v394 = vpack.c.b16 %v372, %v370
      %v395 = vpack.c.b16 %v373, %v371
      %v396 = vpack.c.b16 %v376, %v374
      %v397 = vpack.c.b16 %v377, %v375
      %v398 = vpack.c.b16 %v380, %v378
      %v399 = vpack.c.b16 %v381, %v379
      %v400 = vpack.c.b16 %v384, %v382
      %v401 = vpack.c.b16 %v385, %v383
      %v402 = vpack.c.b16 %v388, %v386
      %v403 = vpack.c.b16 %v389, %v387
      %v404 = vpack.c.b16 %v392, %v390
      %v405 = vpack.c.b16 %v393, %v391
      %406 = vrot.lane.b32.xlu0 %v394, 120
      %v407 = vpop.permute.xlu0 %406
      %408 = vrot.lane.b32.xlu0 %v395, 120
      %v409 = vpop.permute.xlu0 %408
      %410 = vrot.lane.b32.xlu0 %v396, 120
      %v411 = vpop.permute.xlu0 %410
      %412 = vrot.lane.b32.xlu0 %v397, 120
      %v413 = vpop.permute.xlu0 %412
      %414 = vrot.lane.b32.xlu0 %v398, 120
      %v415 = vpop.permute.xlu0 %414
      %416 = vrot.lane.b32.xlu0 %v399, 120
      %v417 = vpop.permute.xlu0 %416
      %418 = vrot.lane.b32.xlu0 %v400, 120
      %v419 = vpop.permute.xlu0 %418
      %420 = vrot.lane.b32.xlu0 %v401, 120
      %v421 = vpop.permute.xlu0 %420
      %422 = vrot.lane.b32.xlu0 %v402, 120
      %v423 = vpop.permute.xlu0 %422
      %424 = vrot.lane.b32.xlu0 %v403, 120
      %v425 = vpop.permute.xlu0 %424
      %426 = vrot.lane.b32.xlu0 %v404, 120
      %v427 = vpop.permute.xlu0 %426
      %428 = vrot.lane.b32.xlu0 %v405, 120
      %v429 = vpop.permute.xlu0 %428
      %vm430 = vcmask 982016
      %v431 = vsel %vm430, %v407, %v409
      %v432 = vsel %vm430, %v411, %v413
      %v433 = vsel %vm430, %v415, %v417
      %v434 = vsel %vm430, %v419, %v421
      %v435 = vsel %vm430, %v423, %v425
      %v436 = vsel %vm430, %v427, %v429
      %vm449 = vcmask 785408
      %v451 = vsel %vm449, %v356, 0
      %v454 = vsel %vm449, %v357, 0
      %456 = vmatprep.subr.bf16.mxu0 %v409
      %457 = vmatpush1.bf16.msra.mxu0 %v431
      %458 = vmatprep.subr.bf16.mxu0 %v413
      %459 = vmatpush1.bf16.msra.mxu0 %v432
      %460 = vmatprep.subr.bf16.mxu0 %v417
      %461 = vmatpush1.bf16.msra.mxu0 %v433
      %462 = vmatprep.subr.bf16.mxu0 %v421
      %463 = vmatpush1.bf16.msra.mxu0 %v434
      %464 = vmatprep.subr.bf16.mxu0 %v425
      %465 = vmatpush1.bf16.msra.mxu0 %v435
      %466 = vmatprep.subr.bf16.mxu0 %v429
      %467 = vmatpush1.bf16.msra.mxu0 %v436
      %468 = vmatprep.subr.bf16.mxu0 0
      %469 = vmatpush1.bf16.msra.mxu0 0
      %470 = vmatprep.subr.bf16.mxu0 0
      %471 = vmatpush1.bf16.msra.mxu0 0
      %472 = vmatprep.subr.bf16.mxu0 0
      %473 = vmatpush1.bf16.msra.mxu0 0
      %474 = vmatprep.subr.bf16.mxu0 0
      %475 = vmatpush1.bf16.msra.mxu0 0
      %476 = vmatprep.subr.bf16.mxu0 0
      %477 = vmatpush1.bf16.msra.mxu0 0
      %478 = vmatprep.subr.bf16.mxu0 0
      %479 = vmatpush1.bf16.msra.mxu0 0
      %480 = vmatprep.subr.bf16.mxu0 0
      %481 = vmatpush1.bf16.msra.mxu0 0
      %482 = vmatprep.subr.bf16.mxu0 0
      %483 = vmatpush1.bf16.msra.mxu0 0
      %484 = vmatprep.subr.bf16.mxu0 0
      %485 = vmatpush1.bf16.msra.mxu0 0
      %486 = vmatprep.subr.bf16.mxu0 0
      %487 = vmatpush1.bf16.msra.mxu0 0
      %488 = vmatprep.mubr.bf16.mxu0 0
      %489 = vmatmul.mubr.bf16.gmra.mrb[0].mxu0 %v451
      %v490 = vpop.f32.mrb[0].mxu0
      %v491 = vadd.f32 0.0, %v490
      %v492 = vpop.f32.mrb[0].mxu0
      %v493 = vadd.f32 0.0, %v492
      %v494 = vpop.f32.mrb[0].mxu0
      %v495 = vadd.f32 0.0, %v494
      %v496 = vpop.f32.mrb[0].mxu0
      %v497 = vadd.f32 0.0, %v496
      %498 = vmatprep.mubr.bf16.mxu0 0
      %499 = vmatmul.mubr.bf16.gmra.mrb[0].mxu0 %v454
      %v500 = vpop.f32.mrb[0].mxu0
      %v501 = vadd.f32 0.0, %v500
      %v502 = vpop.f32.mrb[0].mxu0
      %v503 = vadd.f32 0.0, %v502
      %v504 = vpop.f32.mrb[0].mxu0
      %v505 = vadd.f32 0.0, %v504
      %v506 = vpop.f32.mrb[0].mxu0
      %v507 = vadd.f32 0.0, %v506
      %508 = vdwg.mxu0
      %v513 = vunpack.c.l.b16 %v327
      %v514 = vunpack.c.l.b16 %v328
      %v515 = vunpack.c.l.b16 %v329
      %v516 = vunpack.c.l.b16 %v330
      %v517 = vpack.c.b16 %v514, %v513
      %v518 = vpack.c.b16 %v516, %v515
      %v532 = vsel %vm449, %v517, 0
      %v535 = vsel %vm449, %v518, 0
      %537 = vmatprep.subr.bf16.mxu0 %v395
      %538 = vmatpush1.bf16.msra.mxu0 %v394
      %539 = vmatprep.subr.bf16.mxu0 %v397
      %540 = vmatpush1.bf16.msra.mxu0 %v396
      %541 = vmatprep.subr.bf16.mxu0 %v399
      %542 = vmatpush1.bf16.msra.mxu0 %v398
      %543 = vmatprep.subr.bf16.mxu0 %v401
      %544 = vmatpush1.bf16.msra.mxu0 %v400
      %545 = vmatprep.subr.bf16.mxu0 %v403
      %546 = vmatpush1.bf16.msra.mxu0 %v402
      %547 = vmatprep.subr.bf16.mxu0 %v405
      %548 = vmatpush1.bf16.msra.mxu0 %v404
      %549 = vmatprep.subr.bf16.mxu0 0
      %550 = vmatpush1.bf16.msra.mxu0 0
      %551 = vmatprep.subr.bf16.mxu0 0
      %552 = vmatpush1.bf16.msra.mxu0 0
      %553 = vmatprep.subr.bf16.mxu0 0
      %554 = vmatpush1.bf16.msra.mxu0 0
      %555 = vmatprep.subr.bf16.mxu0 0
      %556 = vmatpush1.bf16.msra.mxu0 0
      %557 = vmatprep.subr.bf16.mxu0 0
      %558 = vmatpush1.bf16.msra.mxu0 0
      %559 = vmatprep.subr.bf16.mxu0 0
      %560 = vmatpush1.bf16.msra.mxu0 0
      %561 = vmatprep.subr.bf16.mxu0 0
      %562 = vmatpush1.bf16.msra.mxu0 0
      %563 = vmatprep.subr.bf16.mxu0 0
      %564 = vmatpush1.bf16.msra.mxu0 0
      %565 = vmatprep.subr.bf16.mxu0 0
      %566 = vmatpush1.bf16.msra.mxu0 0
      %567 = vmatprep.subr.bf16.mxu0 0
      %568 = vmatpush1.bf16.msra.mxu0 0
      %569 = vmatprep.mubr.bf16.mxu0 0
      %570 = vmatmul.mubr.bf16.gmra.mrb[0].mxu0 %v532
      %v571 = vpop.f32.mrb[0].mxu0
      %v572 = vadd.f32 %v491, %v571
      %v573 = vpop.f32.mrb[0].mxu0
      %v574 = vadd.f32 %v493, %v573
      %v575 = vpop.f32.mrb[0].mxu0
      %v576 = vadd.f32 %v495, %v575
      %v577 = vpop.f32.mrb[0].mxu0
      %v578 = vadd.f32 %v497, %v577
      %579 = vmatprep.mubr.bf16.mxu0 0
      %580 = vmatmul.mubr.bf16.gmra.mrb[0].mxu0 %v535
      %v581 = vpop.f32.mrb[0].mxu0
      %v582 = vadd.f32 %v501, %v581
      %v583 = vpop.f32.mrb[0].mxu0
      %v584 = vadd.f32 %v503, %v583
      %v585 = vpop.f32.mrb[0].mxu0
      %v586 = vadd.f32 %v505, %v585
      %v587 = vpop.f32.mrb[0].mxu0
      %v588 = vadd.f32 %v507, %v587
      %589 = vdwg.mxu0
      %s590 = scalar_lea.vmem %s1, 32
      %v591 = vld [vmem:[%s590] sm:$0xf]
      %v592 = vld [vmem:[%s590 + $0x4] sm:$0xf]
      %v593 = vld [vmem:[%s590 + $0x8] sm:$0xf]
      %v594 = vld [vmem:[%s590 + $0xc] sm:$0xf]
      %v599 = vunpack.c.l.b16 %v591
      %v600 = vunpack.c.l.b16 %v592
      %v601 = vunpack.c.l.b16 %v593
      %v602 = vunpack.c.l.b16 %v594
      %v603 = vpack.c.b16 %v600, %v599
      %v604 = vpack.c.b16 %v602, %v601
      %605 = vrot.lane.b32.xlu0 %v394, 112
      %v606 = vpop.permute.xlu0 %605
      %607 = vrot.lane.b32.xlu0 %v395, 112
      %v608 = vpop.permute.xlu0 %607
      %609 = vrot.lane.b32.xlu0 %v396, 112
      %v610 = vpop.permute.xlu0 %609
      %611 = vrot.lane.b32.xlu0 %v397, 112
      %v612 = vpop.permute.xlu0 %611
      %613 = vrot.lane.b32.xlu0 %v398, 112
      %v614 = vpop.permute.xlu0 %613
      %615 = vrot.lane.b32.xlu0 %v399, 112
      %v616 = vpop.permute.xlu0 %615
      %617 = vrot.lane.b32.xlu0 %v400, 112
      %v618 = vpop.permute.xlu0 %617
      %619 = vrot.lane.b32.xlu0 %v401, 112
      %v620 = vpop.permute.xlu0 %619
      %621 = vrot.lane.b32.xlu0 %v402, 112
      %v622 = vpop.permute.xlu0 %621
      %623 = vrot.lane.b32.xlu0 %v403, 112
      %v624 = vpop.permute.xlu0 %623
      %625 = vrot.lane.b32.xlu0 %v404, 112
      %v626 = vpop.permute.xlu0 %625
      %627 = vrot.lane.b32.xlu0 %v405, 112
      %v628 = vpop.permute.xlu0 %627
      %vm629 = vcmask 916480
      %v630 = vsel %vm629, %v606, %v608
      %v631 = vsel %vm629, %v610, %v612
      %v632 = vsel %vm629, %v614, %v616
      %v633 = vsel %vm629, %v618, %v620
      %v634 = vsel %vm629, %v622, %v624
      %v635 = vsel %vm629, %v626, %v628
      %v649 = vsel %vm449, %v603, 0
      %v652 = vsel %vm449, %v604, 0
      %654 = vmatprep.subr.bf16.mxu0 %v608
      %655 = vmatpush1.bf16.msra.mxu0 %v630
      %656 = vmatprep.subr.bf16.mxu0 %v612
      %657 = vmatpush1.bf16.msra.mxu0 %v631
      %658 = vmatprep.subr.bf16.mxu0 %v616
      %659 = vmatpush1.bf16.msra.mxu0 %v632
      %660 = vmatprep.subr.bf16.mxu0 %v620
      %661 = vmatpush1.bf16.msra.mxu0 %v633
      %662 = vmatprep.subr.bf16.mxu0 %v624
      %663 = vmatpush1.bf16.msra.mxu0 %v634
      %664 = vmatprep.subr.bf16.mxu0 %v628
      %665 = vmatpush1.bf16.msra.mxu0 %v635
      %666 = vmatprep.subr.bf16.mxu0 0
      %667 = vmatpush1.bf16.msra.mxu0 0
      %668 = vmatprep.subr.bf16.mxu0 0
      %669 = vmatpush1.bf16.msra.mxu0 0
      %670 = vmatprep.subr.bf16.mxu0 0
      %671 = vmatpush1.bf16.msra.mxu0 0
      %672 = vmatprep.subr.bf16.mxu0 0
      %673 = vmatpush1.bf16.msra.mxu0 0
      %674 = vmatprep.subr.bf16.mxu0 0
      %675 = vmatpush1.bf16.msra.mxu0 0
      %676 = vmatprep.subr.bf16.mxu0 0
      %677 = vmatpush1.bf16.msra.mxu0 0
      %678 = vmatprep.subr.bf16.mxu0 0
      %679 = vmatpush1.bf16.msra.mxu0 0
      %680 = vmatprep.subr.bf16.mxu0 0
      %681 = vmatpush1.bf16.msra.mxu0 0
      %682 = vmatprep.subr.bf16.mxu0 0
      %683 = vmatpush1.bf16.msra.mxu0 0
      %684 = vmatprep.subr.bf16.mxu0 0
      %685 = vmatpush1.bf16.msra.mxu0 0
      %686 = vmatprep.mubr.bf16.mxu0 0
      %687 = vmatmul.mubr.bf16.gmra.mrb[0].mxu0 %v649
      %v688 = vpop.f32.mrb[0].mxu0
      %v689 = vadd.f32 0.0, %v688
      %v690 = vpop.f32.mrb[0].mxu0
      %v691 = vadd.f32 0.0, %v690
      %v692 = vpop.f32.mrb[0].mxu0
      %v693 = vadd.f32 0.0, %v692
      %v694 = vpop.f32.mrb[0].mxu0
      %v695 = vadd.f32 0.0, %v694
      %696 = vmatprep.mubr.bf16.mxu0 0
      %697 = vmatmul.mubr.bf16.gmra.mrb[0].mxu0 %v652
      %v698 = vpop.f32.mrb[0].mxu0
      %v699 = vadd.f32 0.0, %v698
      %v700 = vpop.f32.mrb[0].mxu0
      %v701 = vadd.f32 0.0, %v700
      %v702 = vpop.f32.mrb[0].mxu0
      %v703 = vadd.f32 0.0, %v702
      %v704 = vpop.f32.mrb[0].mxu0
      %v705 = vadd.f32 0.0, %v704
      %706 = vdwg.mxu0
      %v707 = vadd.f32 %v572, %v689
      %v708 = vadd.f32 %v574, %v691
      %v709 = vadd.f32 %v576, %v693
      %v710 = vadd.f32 %v578, %v695
      %v711 = vadd.f32 %v582, %v699
      %v712 = vadd.f32 %v584, %v701
      %v713 = vadd.f32 %v586, %v703
      %v714 = vadd.f32 %v588, %v705
      %v715 = vld [vmem:[%s2] sm:$0xff]
      %v716 = vld [vmem:[%s2 + $0x8] sm:$0xff]
      %v717 = vld [vmem:[%s2 + $0x10] sm:$0xff]
      %v718 = vld [vmem:[%s2 + $0x18] sm:$0xff]
      %720 = vset.pattern.permute.xlu0 0
      %721 = vperm.xlu0 %720, %v715
      %v722 = vpop.permute.xlu0 %721
      %725 = vset.pattern.permute.xlu0 0
      %726 = vperm.xlu0 %725, %v716
      %v727 = vpop.permute.xlu0 %726
      %730 = vset.pattern.permute.xlu0 0
      %731 = vperm.xlu0 %730, %v717
      %v732 = vpop.permute.xlu0 %731
      %735 = vset.pattern.permute.xlu0 0
      %736 = vperm.xlu0 %735, %v718
      %v737 = vpop.permute.xlu0 %736
      %v739 = vadd.f32 %v707, %v722
      %v740 = vadd.f32 %v708, %v722
      %v741 = vadd.f32 %v709, %v727
      %v742 = vadd.f32 %v710, %v727
      %v743 = vadd.f32 %v711, %v732
      %v744 = vadd.f32 %v712, %v732
      %v745 = vadd.f32 %v713, %v737
      %v746 = vadd.f32 %v714, %v737
      %vm747 = vcmask 523264
      %v748 = vsel %vm747, %v740, 0.0
      %v749 = vadd.f32 %v739, %v748
      %750 = vadd.xlane.f32.xlu0 %v749
      %v751 = vpop.xlane.xlu0 %750
      %v752 = vsel %vm747, %v742, 0.0
      %v753 = vadd.f32 %v741, %v752
      %754 = vadd.xlane.f32.xlu0 %v753
      %v755 = vpop.xlane.xlu0 %754
      %v756 = vsel %vm747, %v744, 0.0
      %v757 = vadd.f32 %v743, %v756
      %758 = vadd.xlane.f32.xlu0 %v757
      %v759 = vpop.xlane.xlu0 %758
      %v760 = vsel %vm747, %v746, 0.0
      %v761 = vadd.f32 %v745, %v760
      %762 = vadd.xlane.f32.xlu0 %v761
      %v763 = vpop.xlane.xlu0 %762
      %v764 = vmul.f32 %v751, 0.0052083335
      %v765 = vmul.f32 %v755, 0.0052083335
      %v766 = vmul.f32 %v759, 0.0052083335
      %v767 = vmul.f32 %v763, 0.0052083335
      %v768 = vld [vmem:[%s4] sm:$0xff]
      %v769 = vld [vmem:[%s5] sm:$0xff]
      %vm770 = vcmask 261120
      %v772 = vsel %vm770, %v768, 0
      %774 = vmatprep.subr.mxu0 0.0
      %775 = vmatpush1.msra.mxu0 %v764
      %776 = vmatprep.subr.mxu0 0.0
      %777 = vmatpush1.msra.mxu0 %v765
      %778 = vmatprep.subr.mxu0 0.0
      %779 = vmatpush1.msra.mxu0 %v766
      %780 = vmatprep.subr.mxu0 0.0
      %781 = vmatpush1.msra.mxu0 %v767
      %782 = vmatprep.subr.mxu0 0.0
      %783 = vmatpush1.msra.mxu0 0.0
      %784 = vmatprep.subr.mxu0 0.0
      %785 = vmatpush1.msra.mxu0 0.0
      %786 = vmatprep.subr.mxu0 0.0
      %787 = vmatpush1.msra.mxu0 0.0
      %788 = vmatprep.subr.mxu0 0.0
      %789 = vmatpush1.msra.mxu0 0.0
      %790 = vmatprep.subr.mxu0 0.0
      %791 = vmatpush1.msra.mxu0 0.0
      %792 = vmatprep.subr.mxu0 0.0
      %793 = vmatpush1.msra.mxu0 0.0
      %794 = vmatprep.subr.mxu0 0.0
      %795 = vmatpush1.msra.mxu0 0.0
      %796 = vmatprep.subr.mxu0 0.0
      %797 = vmatpush1.msra.mxu0 0.0
      %798 = vmatprep.subr.mxu0 0.0
      %799 = vmatpush1.msra.mxu0 0.0
      %800 = vmatprep.subr.mxu0 0.0
      %801 = vmatpush1.msra.mxu0 0.0
      %802 = vmatprep.subr.mxu0 0.0
      %803 = vmatpush1.msra.mxu0 0.0
      %804 = vmatprep.subr.mxu0 0.0
      %805 = vmatpush1.msra.mxu0 0.0
      %806 = vmatprep.subr.mxu0 0.0
      %807 = vmatpush1.msra.mxu0 0.0
      %808 = vmatprep.subr.mxu0 0.0
      %809 = vmatpush1.msra.mxu0 0.0
      %810 = vmatprep.subr.mxu0 0.0
      %811 = vmatpush1.msra.mxu0 0.0
      %812 = vmatprep.subr.mxu0 0.0
      %813 = vmatpush1.msra.mxu0 0.0
      %814 = vmatprep.subr.mxu0 0.0
      %815 = vmatpush1.msra.mxu0 0.0
      %816 = vmatprep.subr.mxu0 0.0
      %817 = vmatpush1.msra.mxu0 0.0
      %818 = vmatprep.subr.mxu0 0.0
      %819 = vmatpush1.msra.mxu0 0.0
      %820 = vmatprep.subr.mxu0 0.0
      %821 = vmatpush1.msra.mxu0 0.0
      %822 = vmatprep.subr.mxu0 0.0
      %823 = vmatpush1.msra.mxu0 0.0
      %824 = vmatprep.subr.mxu0 0.0
      %825 = vmatpush1.msra.mxu0 0.0
      %826 = vmatprep.subr.mxu0 0.0
      %827 = vmatpush1.msra.mxu0 0.0
      %828 = vmatprep.subr.mxu0 0.0
      %829 = vmatpush1.msra.mxu0 0.0
      %830 = vmatprep.subr.mxu0 0.0
      %831 = vmatpush1.msra.mxu0 0.0
      %832 = vmatprep.subr.mxu0 0.0
      %833 = vmatpush1.msra.mxu0 0.0
      %834 = vmatprep.subr.mxu0 0.0
      %835 = vmatpush1.msra.mxu0 0.0
      %836 = vmatprep.subr.mxu0 0.0
      %837 = vmatpush1.msra.mxu0 0.0
      %838 = vmatprep.mubr.f32.mxu0 0.0
      %839 = vmatmul.mubr.f32.gmra.mrb[0].mxu0 %v772
      %v840 = vpop.f32.mrb[0].mxu0
      %v841 = vadd.f32 %v769, %v840
      %v842 = vpop.f32.mrb[0].mxu0
      %843 = vdwg.mxu0
      %v844 = vmax.f32 %v841, 0.0
      %v845 = vld [vmem:[%s6] sm:$0xff]
      %v846 = vld [vmem:[%s6 + $0x8] sm:$0xff]
      %v847 = vld [vmem:[%s6 + $0x10] sm:$0xff]
      %v848 = vld [vmem:[%s6 + $0x18] sm:$0xff]
      %v849 = vld [vmem:[%s7] sm:$0xff]
      %v850 = vld [vmem:[%s7 + $0x8] sm:$0xff]
      %v851 = vld [vmem:[%s7 + $0x10] sm:$0xff]
      %v852 = vld [vmem:[%s7 + $0x18] sm:$0xff]
      %vm853 = vcmask 64512
      %v855 = vsel %vm853, %v845, 0
      %v858 = vsel %vm853, %v846, 0
      %v861 = vsel %vm853, %v847, 0
      %v864 = vsel %vm853, %v848, 0
      %866 = vmatprep.subr.mxu0 0.0
      %867 = vmatpush1.msra.mxu0 %v844
      %868 = vmatprep.subr.mxu0 0.0
      %869 = vmatpush1.msra.mxu0 0.0
      %870 = vmatprep.subr.mxu0 0.0
      %871 = vmatpush1.msra.mxu0 0.0
      %872 = vmatprep.subr.mxu0 0.0
      %873 = vmatpush1.msra.mxu0 0.0
      %874 = vmatprep.subr.mxu0 0.0
      %875 = vmatpush1.msra.mxu0 0.0
      %876 = vmatprep.subr.mxu0 0.0
      %877 = vmatpush1.msra.mxu0 0.0
      %878 = vmatprep.subr.mxu0 0.0
      %879 = vmatpush1.msra.mxu0 0.0
      %880 = vmatprep.subr.mxu0 0.0
      %881 = vmatpush1.msra.mxu0 0.0
      %882 = vmatprep.subr.mxu0 0.0
      %883 = vmatpush1.msra.mxu0 0.0
      %884 = vmatprep.subr.mxu0 0.0
      %885 = vmatpush1.msra.mxu0 0.0
      %886 = vmatprep.subr.mxu0 0.0
      %887 = vmatpush1.msra.mxu0 0.0
      %888 = vmatprep.subr.mxu0 0.0
      %889 = vmatpush1.msra.mxu0 0.0
      %890 = vmatprep.subr.mxu0 0.0
      %891 = vmatpush1.msra.mxu0 0.0
      %892 = vmatprep.subr.mxu0 0.0
      %893 = vmatpush1.msra.mxu0 0.0
      %894 = vmatprep.subr.mxu0 0.0
      %895 = vmatpush1.msra.mxu0 0.0
      %896 = vmatprep.subr.mxu0 0.0
      %897 = vmatpush1.msra.mxu0 0.0
      %898 = vmatprep.subr.mxu0 0.0
      %899 = vmatpush1.msra.mxu0 0.0
      %900 = vmatprep.subr.mxu0 0.0
      %901 = vmatpush1.msra.mxu0 0.0
      %902 = vmatprep.subr.mxu0 0.0
      %903 = vmatpush1.msra.mxu0 0.0
      %904 = vmatprep.subr.mxu0 0.0
      %905 = vmatpush1.msra.mxu0 0.0
      %906 = vmatprep.subr.mxu0 0.0
      %907 = vmatpush1.msra.mxu0 0.0
      %908 = vmatprep.subr.mxu0 0.0
      %909 = vmatpush1.msra.mxu0 0.0
      %910 = vmatprep.subr.mxu0 0.0
      %911 = vmatpush1.msra.mxu0 0.0
      %912 = vmatprep.subr.mxu0 0.0
      %913 = vmatpush1.msra.mxu0 0.0
      %914 = vmatprep.subr.mxu0 0.0
      %915 = vmatpush1.msra.mxu0 0.0
      %916 = vmatprep.subr.mxu0 0.0
      %917 = vmatpush1.msra.mxu0 0.0
      %918 = vmatprep.subr.mxu0 0.0
      %919 = vmatpush1.msra.mxu0 0.0
      %920 = vmatprep.subr.mxu0 0.0
      %921 = vmatpush1.msra.mxu0 0.0
      %922 = vmatprep.subr.mxu0 0.0
      %923 = vmatpush1.msra.mxu0 0.0
      %924 = vmatprep.subr.mxu0 0.0
      %925 = vmatpush1.msra.mxu0 0.0
      %926 = vmatprep.subr.mxu0 0.0
      %927 = vmatpush1.msra.mxu0 0.0
      %928 = vmatprep.subr.mxu0 0.0
      %929 = vmatpush1.msra.mxu0 0.0
      %930 = vmatprep.mubr.f32.mxu0 0.0
      %931 = vmatmul.mubr.f32.gmra.mrb[0].mxu0 %v855
      %v932 = vpop.f32.mrb[0].mxu0
      %v933 = vadd.f32 %v849, %v932
      %v934 = vpop.f32.mrb[0].mxu0
      %935 = vmatprep.mubr.f32.mxu0 0.0
      %936 = vmatmul.mubr.f32.gmra.mrb[0].mxu0 %v858
      %v937 = vpop.f32.mrb[0].mxu0
      %v938 = vadd.f32 %v850, %v937
      %v939 = vpop.f32.mrb[0].mxu0
      %940 = vmatprep.mubr.f32.mxu0 0.0
      %941 = vmatmul.mubr.f32.gmra.mrb[0].mxu0 %v861
      %v942 = vpop.f32.mrb[0].mxu0
      %v943 = vadd.f32 %v851, %v942
      %v944 = vpop.f32.mrb[0].mxu0
      %945 = vmatprep.mubr.f32.mxu0 0.0
      %946 = vmatmul.mubr.f32.gmra.mrb[0].mxu0 %v864
      %v947 = vpop.f32.mrb[0].mxu0
      %v948 = vadd.f32 %v852, %v947
      %v949 = vpop.f32.mrb[0].mxu0
      %950 = vdwg.mxu0
      %v951 = vxor.u32 %v933, 2147483648
      %v952 = vxor.u32 %v938, 2147483648
      %v953 = vxor.u32 %v943, 2147483648
      %v954 = vxor.u32 %v948, 2147483648
      %v955 = vmul.f32 %v951, 1.442695
      %v956 = vpow.pop %v955
      %v957 = vmul.f32 %v952, 1.442695
      %v958 = vpow.pop %v957
      %v959 = vmul.f32 %v953, 1.442695
      %v960 = vpow.pop %v959
      %v961 = vmul.f32 %v954, 1.442695
      %v962 = vpow.pop %v961
      %v963 = vadd.f32 %v956, 1.0
      %v964 = vadd.f32 %v958, 1.0
      %v965 = vadd.f32 %v960, 1.0
      %v966 = vadd.f32 %v962, 1.0
      %v967 = vrcp.pop %v963
      %v968 = vmul.f32 1.0, %v967
      %v969 = vrcp.pop %v964
      %v970 = vmul.f32 1.0, %v969
      %v971 = vrcp.pop %v965
      %v972 = vmul.f32 1.0, %v971
      %v973 = vrcp.pop %v966
      %v974 = vmul.f32 1.0, %v973
      %976 = vset.pattern.permute.xlu0 0
      %977 = vperm.xlu0 %976, %v968
      %v978 = vpop.permute.xlu0 %977
      %981 = vset.pattern.permute.xlu0 0
      %982 = vperm.xlu0 %981, %v970
      %v983 = vpop.permute.xlu0 %982
      %986 = vset.pattern.permute.xlu0 0
      %987 = vperm.xlu0 %986, %v972
      %v988 = vpop.permute.xlu0 %987
      %991 = vset.pattern.permute.xlu0 0
      %992 = vperm.xlu0 %991, %v974
      %v993 = vpop.permute.xlu0 %992
      %v995 = vmul.f32 %v739, %v978
      %v996 = vmul.f32 %v740, %v978
      %v997 = vmul.f32 %v741, %v983
      %v998 = vmul.f32 %v742, %v983
      %v999 = vmul.f32 %v743, %v988
      %v1000 = vmul.f32 %v744, %v988
      %v1001 = vmul.f32 %v745, %v993
      %v1002 = vmul.f32 %v746, %v993
      %v1003 = vld [vmem:[%s320] sm:$0xff]
      %v1004 = vld [vmem:[%s320 + $0x8] sm:$0xff]
      %v1005 = vld [vmem:[%s320 + $0x10] sm:$0xff]
      %v1006 = vld [vmem:[%s320 + $0x18] sm:$0xff]
      %v1007 = vld [vmem:[%s320 + $0x20] sm:$0xff]
      %v1008 = vld [vmem:[%s320 + $0x28] sm:$0xff]
      %v1009 = vld [vmem:[%s320 + $0x30] sm:$0xff]
      %v1010 = vld [vmem:[%s320 + $0x38] sm:$0xff]
      %v1011 = vadd.f32 %v995, %v1003
      %v1012 = vadd.f32 %v996, %v1004
      %v1013 = vadd.f32 %v997, %v1005
      %v1014 = vadd.f32 %v998, %v1006
      %v1015 = vadd.f32 %v999, %v1007
      %v1016 = vadd.f32 %v1000, %v1008
      %v1017 = vadd.f32 %v1001, %v1009
      %v1018 = vadd.f32 %v1002, %v1010
      %1019 = vst [vmem:[%s325] sm:$0xff] %v1011
      %1020 = vst.msk [vmem:[%s325 + $0x8] sm:$0xff] %vm747, %v1012
      %1021 = vst [vmem:[%s325 + $0x10] sm:$0xff] %v1013
      %1022 = vst.msk [vmem:[%s325 + $0x18] sm:$0xff] %vm747, %v1014
      %1023 = vst [vmem:[%s325 + $0x20] sm:$0xff] %v1015
      %1024 = vst.msk [vmem:[%s325 + $0x28] sm:$0xff] %vm747, %v1016
      %1025 = vst [vmem:[%s325 + $0x30] sm:$0xff] %v1017
      %1026 = vst.msk [vmem:[%s325 + $0x38] sm:$0xff] %vm747, %v1018
      %p1027 = scmp.lt.s32.totalorder %s19, 1
      %s1028 = scalar_select %p1027, %s19, 1
      %s1029 = smul.addr %s1028, 8
      %s1030 = smul.addr %s1029, 8
      %s1031 = scalar_lea.vmem %s8, %s1030
      // Predicated region
      $region53: #{se_rawformer_front.19} parent=51 // pred_check
        %p1032 = pneg %p215
      $region54: #{se_rawformer_front.19} parent=51 // pred_check_branch
        %1034 = sbr.rel (%p1032) target = $region56
      $region55: #{se_rawformer_front.19} parent=51 // pred_region
        _
      $region56: #{se_rawformer_front.19} parent=51 // pred_fallthru
        _
    $region52: #{se_rawformer_front.19} parent=5 // pred_fallthru
      _
    %p1035 = scmp.le.s32.totalorder 2, %s14
    // Predicated region
    $region57: #{se_rawformer_front.19} parent=5 // pred_check
      %p1036 = pneg %p1035
    $region58: #{se_rawformer_front.19} parent=5 // pred_check_branch
      %1038 = sbr.rel (%p1036) target = $region60
    $region59: #{se_rawformer_front.19} parent=5 // pred_region
      %s1039 = ssub.s32 %s14, 2
      // Predicated region
      $region61: #{se_rawformer_front.19} parent=59 // pred_check
        %p1040 = pneg %p221
      $region62: #{se_rawformer_front.19} parent=59 // pred_check_branch
        %1042 = sbr.rel (%p1040) target = $region64
      $region63: #{se_rawformer_front.19} parent=59 // pred_region
        %p1043 = scmp.lt.s32.totalorder %s20, 1
        %s1044 = scalar_select %p1043, %s20, 1
        %s1045 = smul.addr %s1044, 8
        %s1046 = smul.addr %s1045, 8
        %s1047 = scalar_lea.vmem %s8, %s1046
      $region64: #{se_rawformer_front.19} parent=59 // pred_fallthru
        _
    $region60: #{se_rawformer_front.19} parent=5 // pred_fallthru
      _
  $region6: #{se_rawformer_front.19} parent=0 // loop_footer
    %s18 = sadd.s32 1, %s14
  $region7: #{se_rawformer_front.19} parent=0 // loop_footer_branch
    %13 = sbr.rel target = $region3
  $region8: #{se_rawformer_front.19} parent=0 // loop_exit
    _

// kernel: se_rawformer_front.20
$region0: #{se_rawformer_front.20}
  #allocation0 [shape = 'u32[]', space=smem, size = 0x4, offset = 0x4, fixed_abs, tag = 'smem constant byte address 0x4 - core index']
  #allocation1 [shape = 'u32[144,128]{1,0:T(1,128)}', space=vmem, size = 0x12000, scoped, tag = 'internal scratch']
  %s0 = inlined_call_operand.vmem [shape: bf16[2,96,208], index: 0, kind: input, shape index: {}]
  %s1 = inlined_call_operand.vmem [shape: bf16[2,64,96], index: 1, kind: input, shape index: {}]
  %s2 = inlined_call_operand.vmem [shape: f32[64,1], index: 2, kind: input, shape index: {}]
  %s3 = inlined_call_operand.vmem [shape: f32[2,64,200], index: 3, kind: output, shape index: {}]
  %s4 = sld [smem:[#allocation0]]
  $region45: #{se_rawformer_front.20} parent=0
    _
  %s6 = ssub.s32 1, %s4
  %s7 = scalar_select 0, %s6, %s4
  loop: start=0, step=1, limit=4
  $region2: #{se_rawformer_front.20} parent=0 // loop_pre_header
    _
  $region3: #{se_rawformer_front.20} parent=0 // loop_header
    %s9 = sphi 0, %s13
    %p10 = scmp.ge.s32.totalorder %s9, 4
    %s19 = sphi 0, %s21
    %s22 = sphi 0, %s19
    %s23 = sphi 0, %s22
    %s39 = sphi 0, %s23
    %s43 = sphi 0, %s43
    %s45 = sphi 0, %s43
    %s46 = sphi 0, %s45
    %s60 = sphi 0, %s46
    %s64 = sphi 0, %s64
    %s66 = sphi 0, %s64
    %s67 = sphi 0, %s66
    %s81 = sphi 0, %s67
    %s87 = sphi 0, %s89
    %s90 = sphi 0, %s87
    %s91 = sphi 0, %s90
    %s107 = sphi 0, %s91
  $region4: #{se_rawformer_front.20} parent=0 // loop_header_branch
    %12 = sbr.rel (%p10) target = $region8
  $region5: #{se_rawformer_front.20} parent=0 // loop_body
    %s14 = ssub.s32 %s9, 1
    %s15 = ssub.s32 %s9, 2
    %s16 = sadd.s32 %s9, 1
    %s17 = ssub.s32 %s9, %s16
    %p18 = scmp.eq.s32.totalorder %s17, 0
    %s20 = sadd.s32 %s19, 1
    %s21 = scalar_select %p18, %s19, %s20
    %p24 = pneg %p18
    %p25 = scmp.eq.s32.totalorder %s9, 1
    %p26 = por %p24, %p25
    %p27 = scmp.ne.s32.totalorder %s19, %s22
    %p28 = scmp.eq.s32.totalorder %s9, 0
    %p29 = por %p27, %p28
    %p30 = scmp.ne.s32.totalorder %s19, %s22
    %p31 = scmp.eq.s32.totalorder %s14, 1
    %p32 = por %p30, %p31
    %p33 = scmp.ne.s32.totalorder %s22, %s23
    %p34 = scmp.eq.s32.totalorder %s14, 0
    %p35 = por %p33, %p34
    %p36 = scmp.ne.s32.totalorder %s22, %s23
    %p37 = scmp.eq.s32.totalorder %s15, 1
    %p38 = por %p36, %p37
    %p40 = scmp.ne.s32.totalorder %s23, %s39
    %p41 = scmp.eq.s32.totalorder %s15, 0
    %p42 = por %p40, %p41
    %s44 = sadd.s32 %s43, 1
    %p47 = scmp.eq.s32.totalorder %s9, 1
    %p48 = scmp.ne.s32.totalorder %s43, %s45
    %p49 = scmp.eq.s32.totalorder %s9, 0
    %p50 = por %p48, %p49
    %p51 = scmp.ne.s32.totalorder %s43, %s45
    %p52 = scmp.eq.s32.totalorder %s14, 1
    %p53 = por %p51, %p52
    %p54 = scmp.ne.s32.totalorder %s45, %s46
    %p55 = scmp.eq.s32.totalorder %s14, 0
    %p56 = por %p54, %p55
    %p57 = scmp.ne.s32.totalorder %s45, %s46
    %p58 = scmp.eq.s32.totalorder %s15, 1
    %p59 = por %p57, %p58
    %p61 = scmp.ne.s32.totalorder %s46, %s60
    %p62 = scmp.eq.s32.totalorder %s15, 0
    %p63 = por %p61, %p62
    %s65 = sadd.s32 %s64, 1
    %p68 = scmp.eq.s32.totalorder %s9, 1
    %p69 = scmp.ne.s32.totalorder %s64, %s66
    %p70 = scmp.eq.s32.totalorder %s9, 0
    %p71 = por %p69, %p70
    %p72 = scmp.ne.s32.totalorder %s64, %s66
    %p73 = scmp.eq.s32.totalorder %s14, 1
    %p74 = por %p72, %p73
    %p75 = scmp.ne.s32.totalorder %s66, %s67
    %p76 = scmp.eq.s32.totalorder %s14, 0
    %p77 = por %p75, %p76
    %p78 = scmp.ne.s32.totalorder %s66, %s67
    %p79 = scmp.eq.s32.totalorder %s15, 1
    %p80 = por %p78, %p79
    %p82 = scmp.ne.s32.totalorder %s67, %s81
    %p83 = scmp.eq.s32.totalorder %s15, 0
    %p84 = por %p82, %p83
    %s85 = ssub.s32 %s9, %s16
    %p86 = scmp.eq.s32.totalorder %s85, 0
    %s88 = sadd.s32 %s87, 1
    %s89 = scalar_select %p86, %s87, %s88
    %p92 = pneg %p86
    %p93 = scmp.eq.s32.totalorder %s9, 1
    %p94 = por %p92, %p93
    %p95 = scmp.ne.s32.totalorder %s87, %s90
    %p96 = scmp.eq.s32.totalorder %s9, 0
    %p97 = por %p95, %p96
    %p98 = scmp.ne.s32.totalorder %s87, %s90
    %p99 = scmp.eq.s32.totalorder %s14, 1
    %p100 = por %p98, %p99
    %p101 = scmp.ne.s32.totalorder %s90, %s91
    %p102 = scmp.eq.s32.totalorder %s14, 0
    %p103 = por %p101, %p102
    %p104 = scmp.ne.s32.totalorder %s90, %s91
    %p105 = scmp.eq.s32.totalorder %s15, 1
    %p106 = por %p104, %p105
    %p108 = scmp.ne.s32.totalorder %s91, %s107
    %p109 = scmp.eq.s32.totalorder %s15, 0
    %p110 = por %p108, %p109
    %p111 = scmp.le.s32.totalorder 1, %s9
    %p112 = scmp.lt.s32.totalorder %s9, 3
    %p113 = pnand %p111, %p112
    %p114 = pneg %p113
    // Predicated region
    $region9: #{se_rawformer_front.20} parent=5 // pred_check
      _
    $region10: #{se_rawformer_front.20} parent=5 // pred_check_branch
      %116 = sbr.rel (%p113) target = $region12
    $region11: #{se_rawformer_front.20} parent=5 // pred_region
      %s117 = ssub.s32 %s9, 1
      // Predicated region
      $region13: #{se_rawformer_front.20} parent=11 // pred_check
        %p118 = pneg %p56
      $region14: #{se_rawformer_front.20} parent=11 // pred_check_branch
        %120 = sbr.rel (%p118) target = $region16
      $region15: #{se_rawformer_front.20} parent=11 // pred_region
        _
      $region16: #{se_rawformer_front.20} parent=11 // pred_fallthru
        _
      // Predicated region
      $region17: #{se_rawformer_front.20} parent=11 // pred_check
        %p121 = pneg %p77
      $region18: #{se_rawformer_front.20} parent=11 // pred_check_branch
        %123 = sbr.rel (%p121) target = $region20
      $region19: #{se_rawformer_front.20} parent=11 // pred_region
        _
      $region20: #{se_rawformer_front.20} parent=11 // pred_fallthru
        _
    $region12: #{se_rawformer_front.20} parent=5 // pred_fallthru
      _
    %p124 = scmp.lt.s32.totalorder %s9, 2
    // Predicated region
    $region21: #{se_rawformer_front.20} parent=5 // pred_check
      %p125 = pneg %p124
    $region22: #{se_rawformer_front.20} parent=5 // pred_check_branch
      %127 = sbr.rel (%p125) target = $region24
    $region23: #{se_rawformer_front.20} parent=5 // pred_region
      // Predicated region
      $region25: #{se_rawformer_front.20} parent=23 // pred_check
        %p128 = pneg %p29
      $region26: #{se_rawformer_front.20} parent=23 // pred_check_branch
        %130 = sbr.rel (%p128) target = $region28
      $region27: #{se_rawformer_front.20} parent=23 // pred_region
        %p131 = scmp.lt.s32.totalorder %s9, 1
        %s132 = scalar_select %p131, %s9, 1
        %s133 = smul.addr %s132, 24
        %s134 = smul.addr %s133, 4
        %s135 = scalar_lea.vmem %s0, %s134
      $region28: #{se_rawformer_front.20} parent=23 // pred_fallthru
        _
    $region24: #{se_rawformer_front.20} parent=5 // pred_fallthru
      _
    %p136 = scmp.le.s32.totalorder 1, %s9
    %p137 = scmp.lt.s32.totalorder %s9, 3
    %p138 = pnand %p136, %p137
    %p139 = pneg %p138
    // Predicated region
    $region29: #{se_rawformer_front.20} parent=5 // pred_check
      _
    $region30: #{se_rawformer_front.20} parent=5 // pred_check_branch
      %141 = sbr.rel (%p138) target = $region32
    $region31: #{se_rawformer_front.20} parent=5 // pred_region
      %s142 = ssub.s32 %s9, 1
      %p143 = scmp.lt.s32.totalorder %s14, 1
      %s144 = scalar_select %p143, %s14, 1
      %s145 = smul.addr %s144, 24
      %s146 = smul.addr %s145, 4
      %s147 = scalar_lea.vmem %s0, %s146
      %p148 = pneg %p35
      %p149 = pneg %p32
      %p150 = pneg %p56
      %p151 = pneg %p53
      %p152 = pneg %p77
      %p153 = pneg %p74
      %p154 = pneg %p103
      %p155 = pneg %p100
      %p156 = scmp.lt.s32.totalorder %s14, 1
      %s157 = scalar_select %p156, %s14, 1
      %s158 = smul.addr %s157, 16
      %s159 = smul.addr %s158, 8
      %s160 = scalar_lea.vmem %s3, %s159
      %p161 = scmp.lt.s32.totalorder %s14, 1
      %s162 = scalar_select %p161, %s14, 1
      %s163 = smul.addr %s162, 24
      %s164 = smul.addr %s163, 4
      %s165 = scalar_lea.vmem %s0, %s164
      %p166 = scmp.lt.s32.totalorder %s14, 1
      %s167 = scalar_select %p166, %s14, 1
      %s168 = smul.addr %s167, 16
      %s169 = smul.addr %s168, 8
      %s170 = scalar_lea.vmem %s3, %s169
      %v172 = vld [vmem:[%s1] sm:$0xf]
      %v173 = vld [vmem:[%s1 + $0x4] sm:$0xf]
      %v174 = vld [vmem:[%s1 + $0x8] sm:$0xf]
      %v175 = vld [vmem:[%s1 + $0xc] sm:$0xf]
      %v176 = vld [vmem:[%s1 + $0x10] sm:$0xf]
      %v177 = vld [vmem:[%s1 + $0x14] sm:$0xf]
      %v178 = vld [vmem:[%s1 + $0x18] sm:$0xf]
      %v179 = vld [vmem:[%s1 + $0x1c] sm:$0xf]
      %v180 = vld [vmem:[%s165] sm:$0xff]
      %v181 = vld [vmem:[%s165 + $0x8] sm:$0xff]
      %v182 = vld [vmem:[%s165 + $0x10] sm:$0xff]
      %v183 = vld [vmem:[%s165 + $0x18] sm:$0xff]
      %v184 = vld [vmem:[%s165 + $0x20] sm:$0xff]
      %v185 = vld [vmem:[%s165 + $0x28] sm:$0xff]
      %v186 = vld [vmem:[%s165 + $0x30] sm:$0xff]
      %v187 = vld [vmem:[%s165 + $0x38] sm:$0xff]
      %v188 = vld [vmem:[%s165 + $0x40] sm:$0xff]
      %v189 = vld [vmem:[%s165 + $0x48] sm:$0xff]
      %v190 = vld [vmem:[%s165 + $0x50] sm:$0xff]
      %v191 = vld [vmem:[%s165 + $0x58] sm:$0xff]
      %s192 = scalar_lea.vmem %s1, 32
      %v193 = vld [vmem:[%s192] sm:$0xf]
      %v194 = vld [vmem:[%s192 + $0x4] sm:$0xf]
      %v195 = vld [vmem:[%s192 + $0x8] sm:$0xf]
      %v196 = vld [vmem:[%s192 + $0xc] sm:$0xf]
      %v197 = vld [vmem:[%s192 + $0x10] sm:$0xf]
      %v198 = vld [vmem:[%s192 + $0x14] sm:$0xf]
      %v199 = vld [vmem:[%s192 + $0x18] sm:$0xf]
      %v200 = vld [vmem:[%s192 + $0x1c] sm:$0xf]
      %v209 = vunpack.c.l.b16 %v193
      %v210 = vunpack.c.l.b16 %v194
      %v211 = vunpack.c.l.b16 %v195
      %v212 = vunpack.c.l.b16 %v196
      %v213 = vunpack.c.l.b16 %v197
      %v214 = vunpack.c.l.b16 %v198
      %v215 = vunpack.c.l.b16 %v199
      %v216 = vunpack.c.l.b16 %v200
      %v217 = vpack.c.b16 %v210, %v209
      %v218 = vpack.c.b16 %v212, %v211
      %v219 = vpack.c.b16 %v214, %v213
      %v220 = vpack.c.b16 %v216, %v215
      %v233 = vunpack.c.l.b16 %v180
      %v234 = vunpack.c.h.b16 %v180
      %v235 = vunpack.c.l.b16 %v181
      %v236 = vunpack.c.h.b16 %v181
      %v237 = vunpack.c.l.b16 %v182
      %v238 = vunpack.c.h.b16 %v182
      %v239 = vunpack.c.l.b16 %v183
      %v240 = vunpack.c.h.b16 %v183
      %v241 = vunpack.c.l.b16 %v184
      %v242 = vunpack.c.h.b16 %v184
      %v243 = vunpack.c.l.b16 %v185
      %v244 = vunpack.c.h.b16 %v185
      %v245 = vunpack.c.l.b16 %v186
      %v246 = vunpack.c.h.b16 %v186
      %v247 = vunpack.c.l.b16 %v187
      %v248 = vunpack.c.h.b16 %v187
      %v249 = vunpack.c.l.b16 %v188
      %v250 = vunpack.c.h.b16 %v188
      %v251 = vunpack.c.l.b16 %v189
      %v252 = vunpack.c.h.b16 %v189
      %v253 = vunpack.c.l.b16 %v190
      %v254 = vunpack.c.h.b16 %v190
      %v255 = vunpack.c.l.b16 %v191
      %v256 = vunpack.c.h.b16 %v191
      %v257 = vpack.c.b16 %v235, %v233
      %v258 = vpack.c.b16 %v236, %v234
      %v259 = vpack.c.b16 %v239, %v237
      %v260 = vpack.c.b16 %v240, %v238
      %v261 = vpack.c.b16 %v243, %v241
      %v262 = vpack.c.b16 %v244, %v242
      %v263 = vpack.c.b16 %v247, %v245
      %v264 = vpack.c.b16 %v248, %v246
      %v265 = vpack.c.b16 %v251, %v249
      %v266 = vpack.c.b16 %v252, %v250
      %v267 = vpack.c.b16 %v255, %v253
      %v268 = vpack.c.b16 %v256, %v254
      %269 = vrot.lane.b32.xlu0 %v257, 120
      %v270 = vpop.permute.xlu0 %269
      %271 = vrot.lane.b32.xlu0 %v258, 120
      %v272 = vpop.permute.xlu0 %271
      %273 = vrot.lane.b32.xlu0 %v259, 120
      %v274 = vpop.permute.xlu0 %273
      %275 = vrot.lane.b32.xlu0 %v260, 120
      %v276 = vpop.permute.xlu0 %275
      %277 = vrot.lane.b32.xlu0 %v261, 120
      %v278 = vpop.permute.xlu0 %277
      %279 = vrot.lane.b32.xlu0 %v262, 120
      %v280 = vpop.permute.xlu0 %279
      %281 = vrot.lane.b32.xlu0 %v263, 120
      %v282 = vpop.permute.xlu0 %281
      %283 = vrot.lane.b32.xlu0 %v264, 120
      %v284 = vpop.permute.xlu0 %283
      %285 = vrot.lane.b32.xlu0 %v265, 120
      %v286 = vpop.permute.xlu0 %285
      %287 = vrot.lane.b32.xlu0 %v266, 120
      %v288 = vpop.permute.xlu0 %287
      %289 = vrot.lane.b32.xlu0 %v267, 120
      %v290 = vpop.permute.xlu0 %289
      %291 = vrot.lane.b32.xlu0 %v268, 120
      %v292 = vpop.permute.xlu0 %291
      %vm293 = vcmask 982016
      %v294 = vsel %vm293, %v270, %v272
      %v295 = vsel %vm293, %v274, %v276
      %v296 = vsel %vm293, %v278, %v280
      %v297 = vsel %vm293, %v282, %v284
      %v298 = vsel %vm293, %v286, %v288
      %v299 = vsel %vm293, %v290, %v292
      %vm312 = vcmask 785408
      %v314 = vsel %vm312, %v217, 0
      %v317 = vsel %vm312, %v218, 0
      %v320 = vsel %vm312, %v219, 0
      %v323 = vsel %vm312, %v220, 0
      %325 = vmatprep.subr.bf16.mxu0 %v272
      %326 = vmatpush1.bf16.msra.mxu0 %v294
      %327 = vmatprep.subr.bf16.mxu0 %v276
      %328 = vmatpush1.bf16.msra.mxu0 %v295
      %329 = vmatprep.subr.bf16.mxu0 %v280
      %330 = vmatpush1.bf16.msra.mxu0 %v296
      %331 = vmatprep.subr.bf16.mxu0 %v284
      %332 = vmatpush1.bf16.msra.mxu0 %v297
      %333 = vmatprep.subr.bf16.mxu0 %v288
      %334 = vmatpush1.bf16.msra.mxu0 %v298
      %335 = vmatprep.subr.bf16.mxu0 %v292
      %336 = vmatpush1.bf16.msra.mxu0 %v299
      %337 = vmatprep.subr.bf16.mxu0 0
      %338 = vmatpush1.bf16.msra.mxu0 0
      %339 = vmatprep.subr.bf16.mxu0 0
      %340 = vmatpush1.bf16.msra.mxu0 0
      %341 = vmatprep.subr.bf16.mxu0 0
      %342 = vmatpush1.bf16.msra.mxu0 0
      %343 = vmatprep.subr.bf16.mxu0 0
      %344 = vmatpush1.bf16.msra.mxu0 0
      %345 = vmatprep.subr.bf16.mxu0 0
      %346 = vmatpush1.bf16.msra.mxu0 0
      %347 = vmatprep.subr.bf16.mxu0 0
      %348 = vmatpush1.bf16.msra.mxu0 0
      %349 = vmatprep.subr.bf16.mxu0 0
      %350 = vmatpush1.bf16.msra.mxu0 0
      %351 = vmatprep.subr.bf16.mxu0 0
      %352 = vmatpush1.bf16.msra.mxu0 0
      %353 = vmatprep.subr.bf16.mxu0 0
      %354 = vmatpush1.bf16.msra.mxu0 0
      %355 = vmatprep.subr.bf16.mxu0 0
      %356 = vmatpush1.bf16.msra.mxu0 0
      %357 = vmatprep.mubr.bf16.mxu0 0
      %358 = vmatmul.mubr.bf16.gmra.mrb[0].mxu0 %v314
      %v359 = vpop.f32.mrb[0].mxu0
      %v360 = vadd.f32 0.0, %v359
      %v361 = vpop.f32.mrb[0].mxu0
      %v362 = vadd.f32 0.0, %v361
      %v363 = vpop.f32.mrb[0].mxu0
      %v364 = vadd.f32 0.0, %v363
      %v365 = vpop.f32.mrb[0].mxu0
      %v366 = vadd.f32 0.0, %v365
      %367 = vmatprep.mubr.bf16.mxu0 0
      %368 = vmatmul.mubr.bf16.gmra.mrb[0].mxu0 %v317
      %v369 = vpop.f32.mrb[0].mxu0
      %v370 = vadd.f32 0.0, %v369
      %v371 = vpop.f32.mrb[0].mxu0
      %v372 = vadd.f32 0.0, %v371
      %v373 = vpop.f32.mrb[0].mxu0
      %v374 = vadd.f32 0.0, %v373
      %v375 = vpop.f32.mrb[0].mxu0
      %v376 = vadd.f32 0.0, %v375
      %377 = vmatprep.mubr.bf16.mxu0 0
      %378 = vmatmul.mubr.bf16.gmra.mrb[0].mxu0 %v320
      %v379 = vpop.f32.mrb[0].mxu0
      %v380 = vadd.f32 0.0, %v379
      %v381 = vpop.f32.mrb[0].mxu0
      %v382 = vadd.f32 0.0, %v381
      %v383 = vpop.f32.mrb[0].mxu0
      %v384 = vadd.f32 0.0, %v383
      %v385 = vpop.f32.mrb[0].mxu0
      %v386 = vadd.f32 0.0, %v385
      %387 = vmatprep.mubr.bf16.mxu0 0
      %388 = vmatmul.mubr.bf16.gmra.mrb[0].mxu0 %v323
      %v389 = vpop.f32.mrb[0].mxu0
      %v390 = vadd.f32 0.0, %v389
      %v391 = vpop.f32.mrb[0].mxu0
      %v392 = vadd.f32 0.0, %v391
      %v393 = vpop.f32.mrb[0].mxu0
      %v394 = vadd.f32 0.0, %v393
      %v395 = vpop.f32.mrb[0].mxu0
      %v396 = vadd.f32 0.0, %v395
      %397 = vdwg.mxu0
      %v406 = vunpack.c.l.b16 %v172
      %v407 = vunpack.c.l.b16 %v173
      %v408 = vunpack.c.l.b16 %v174
      %v409 = vunpack.c.l.b16 %v175
      %v410 = vunpack.c.l.b16 %v176
      %v411 = vunpack.c.l.b16 %v177
      %v412 = vunpack.c.l.b16 %v178
      %v413 = vunpack.c.l.b16 %v179
      %v414 = vpack.c.b16 %v407, %v406
      %v415 = vpack.c.b16 %v409, %v408
      %v416 = vpack.c.b16 %v411, %v410
      %v417 = vpack.c.b16 %v413, %v412
      %v431 = vsel %vm312, %v414, 0
      %v434 = vsel %vm312, %v415, 0
      %v437 = vsel %vm312, %v416, 0
      %v440 = vsel %vm312, %v417, 0
      %442 = vmatprep.subr.bf16.mxu0 %v258
      %443 = vmatpush1.bf16.msra.mxu0 %v257
      %444 = vmatprep.subr.bf16.mxu0 %v260
      %445 = vmatpush1.bf16.msra.mxu0 %v259
      %446 = vmatprep.subr.bf16.mxu0 %v262
      %447 = vmatpush1.bf16.msra.mxu0 %v261
      %448 = vmatprep.subr.bf16.mxu0 %v264
      %449 = vmatpush1.bf16.msra.mxu0 %v263
      %450 = vmatprep.subr.bf16.mxu0 %v266
      %451 = vmatpush1.bf16.msra.mxu0 %v265
      %452 = vmatprep.subr.bf16.mxu0 %v268
      %453 = vmatpush1.bf16.msra.mxu0 %v267
      %454 = vmatprep.subr.bf16.mxu0 0
      %455 = vmatpush1.bf16.msra.mxu0 0
      %456 = vmatprep.subr.bf16.mxu0 0
      %457 = vmatpush1.bf16.msra.mxu0 0
      %458 = vmatprep.subr.bf16.mxu0 0
      %459 = vmatpush1.bf16.msra.mxu0 0
      %460 = vmatprep.subr.bf16.mxu0 0
      %461 = vmatpush1.bf16.msra.mxu0 0
      %462 = vmatprep.subr.bf16.mxu0 0
      %463 = vmatpush1.bf16.msra.mxu0 0
      %464 = vmatprep.subr.bf16.mxu0 0
      %465 = vmatpush1.bf16.msra.mxu0 0
      %466 = vmatprep.subr.bf16.mxu0 0
      %467 = vmatpush1.bf16.msra.mxu0 0
      %468 = vmatprep.subr.bf16.mxu0 0
      %469 = vmatpush1.bf16.msra.mxu0 0
      %470 = vmatprep.subr.bf16.mxu0 0
      %471 = vmatpush1.bf16.msra.mxu0 0
      %472 = vmatprep.subr.bf16.mxu0 0
      %473 = vmatpush1.bf16.msra.mxu0 0
      %474 = vmatprep.mubr.bf16.mxu0 0
      %475 = vmatmul.mubr.bf16.gmra.mrb[0].mxu0 %v431
      %v476 = vpop.f32.mrb[0].mxu0
      %v477 = vadd.f32 %v360, %v476
      %v478 = vpop.f32.mrb[0].mxu0
      %v479 = vadd.f32 %v362, %v478
      %v480 = vpop.f32.mrb[0].mxu0
      %v481 = vadd.f32 %v364, %v480
      %v482 = vpop.f32.mrb[0].mxu0
      %v483 = vadd.f32 %v366, %v482
      %484 = vmatprep.mubr.bf16.mxu0 0
      %485 = vmatmul.mubr.bf16.gmra.mrb[0].mxu0 %v434
      %v486 = vpop.f32.mrb[0].mxu0
      %v487 = vadd.f32 %v370, %v486
      %v488 = vpop.f32.mrb[0].mxu0
      %v489 = vadd.f32 %v372, %v488
      %v490 = vpop.f32.mrb[0].mxu0
      %v491 = vadd.f32 %v374, %v490
      %v492 = vpop.f32.mrb[0].mxu0
      %v493 = vadd.f32 %v376, %v492
      %494 = vmatprep.mubr.bf16.mxu0 0
      %495 = vmatmul.mubr.bf16.gmra.mrb[0].mxu0 %v437
      %v496 = vpop.f32.mrb[0].mxu0
      %v497 = vadd.f32 %v380, %v496
      %v498 = vpop.f32.mrb[0].mxu0
      %v499 = vadd.f32 %v382, %v498
      %v500 = vpop.f32.mrb[0].mxu0
      %v501 = vadd.f32 %v384, %v500
      %v502 = vpop.f32.mrb[0].mxu0
      %v503 = vadd.f32 %v386, %v502
      %504 = vmatprep.mubr.bf16.mxu0 0
      %505 = vmatmul.mubr.bf16.gmra.mrb[0].mxu0 %v440
      %v506 = vpop.f32.mrb[0].mxu0
      %v507 = vadd.f32 %v390, %v506
      %v508 = vpop.f32.mrb[0].mxu0
      %v509 = vadd.f32 %v392, %v508
      %v510 = vpop.f32.mrb[0].mxu0
      %v511 = vadd.f32 %v394, %v510
      %v512 = vpop.f32.mrb[0].mxu0
      %v513 = vadd.f32 %v396, %v512
      %514 = vdwg.mxu0
      %v515 = vld [vmem:[%s2] sm:$0xff]
      %v516 = vld [vmem:[%s2 + $0x8] sm:$0xff]
      %v517 = vld [vmem:[%s2 + $0x10] sm:$0xff]
      %v518 = vld [vmem:[%s2 + $0x18] sm:$0xff]
      %v519 = vld [vmem:[%s2 + $0x20] sm:$0xff]
      %v520 = vld [vmem:[%s2 + $0x28] sm:$0xff]
      %v521 = vld [vmem:[%s2 + $0x30] sm:$0xff]
      %v522 = vld [vmem:[%s2 + $0x38] sm:$0xff]
      %524 = vset.pattern.permute.xlu0 0
      %525 = vperm.xlu0 %524, %v515
      %v526 = vpop.permute.xlu0 %525
      %529 = vset.pattern.permute.xlu0 0
      %530 = vperm.xlu0 %529, %v516
      %v531 = vpop.permute.xlu0 %530
      %534 = vset.pattern.permute.xlu0 0
      %535 = vperm.xlu0 %534, %v517
      %v536 = vpop.permute.xlu0 %535
      %539 = vset.pattern.permute.xlu0 0
      %540 = vperm.xlu0 %539, %v518
      %v541 = vpop.permute.xlu0 %540
      %544 = vset.pattern.permute.xlu0 0
      %545 = vperm.xlu0 %544, %v519
      %v546 = vpop.permute.xlu0 %545
      %549 = vset.pattern.permute.xlu0 0
      %550 = vperm.xlu0 %549, %v520
      %v551 = vpop.permute.xlu0 %550
      %554 = vset.pattern.permute.xlu0 0
      %555 = vperm.xlu0 %554, %v521
      %v556 = vpop.permute.xlu0 %555
      %559 = vset.pattern.permute.xlu0 0
      %560 = vperm.xlu0 %559, %v522
      %v561 = vpop.permute.xlu0 %560
      %v563 = vadd.f32 %v477, %v526
      %v564 = vadd.f32 %v479, %v526
      %v565 = vadd.f32 %v481, %v531
      %v566 = vadd.f32 %v483, %v531
      %v567 = vadd.f32 %v487, %v536
      %v568 = vadd.f32 %v489, %v536
      %v569 = vadd.f32 %v491, %v541
      %v570 = vadd.f32 %v493, %v541
      %v571 = vadd.f32 %v497, %v546
      %v572 = vadd.f32 %v499, %v546
      %v573 = vadd.f32 %v501, %v551
      %v574 = vadd.f32 %v503, %v551
      %v575 = vadd.f32 %v507, %v556
      %v576 = vadd.f32 %v509, %v556
      %v577 = vadd.f32 %v511, %v561
      %v578 = vadd.f32 %v513, %v561
      %579 = vst [vmem:[%s170] sm:$0xff] %v563
      %vm580 = vcmask 588800
      %581 = vst.msk [vmem:[%s170 + $0x8] sm:$0xff] %vm580, %v564
      %582 = vst [vmem:[%s170 + $0x10] sm:$0xff] %v565
      %583 = vst.msk [vmem:[%s170 + $0x18] sm:$0xff] %vm580, %v566
      %584 = vst [vmem:[%s170 + $0x20] sm:$0xff] %v567
      %585 = vst.msk [vmem:[%s170 + $0x28] sm:$0xff] %vm580, %v568
      %586 = vst [vmem:[%s170 + $0x30] sm:$0xff] %v569
      %587 = vst.msk [vmem:[%s170 + $0x38] sm:$0xff] %vm580, %v570
      %588 = vst [vmem:[%s170 + $0x40] sm:$0xff] %v571
      %589 = vst.msk [vmem:[%s170 + $0x48] sm:$0xff] %vm580, %v572
      %590 = vst [vmem:[%s170 + $0x50] sm:$0xff] %v573
      %591 = vst.msk [vmem:[%s170 + $0x58] sm:$0xff] %vm580, %v574
      %592 = vst [vmem:[%s170 + $0x60] sm:$0xff] %v575
      %593 = vst.msk [vmem:[%s170 + $0x68] sm:$0xff] %vm580, %v576
      %594 = vst [vmem:[%s170 + $0x70] sm:$0xff] %v577
      %595 = vst.msk [vmem:[%s170 + $0x78] sm:$0xff] %vm580, %v578
      %p596 = scmp.lt.s32.totalorder %s14, 1
      %s597 = scalar_select %p596, %s14, 1
      %s598 = smul.addr %s597, 16
      %s599 = smul.addr %s598, 8
      %s600 = scalar_lea.vmem %s3, %s599
      // Predicated region
      $region33: #{se_rawformer_front.20} parent=31 // pred_check
        %p601 = pneg %p100
      $region34: #{se_rawformer_front.20} parent=31 // pred_check_branch
        %603 = sbr.rel (%p601) target = $region36
      $region35: #{se_rawformer_front.20} parent=31 // pred_region
        _
      $region36: #{se_rawformer_front.20} parent=31 // pred_fallthru
        _
    $region32: #{se_rawformer_front.20} parent=5 // pred_fallthru
      _
    %p604 = scmp.le.s32.totalorder 2, %s9
    // Predicated region
    $region37: #{se_rawformer_front.20} parent=5 // pred_check
      %p605 = pneg %p604
    $region38: #{se_rawformer_front.20} parent=5 // pred_check_branch
      %607 = sbr.rel (%p605) target = $region40
    $region39: #{se_rawformer_front.20} parent=5 // pred_region
      %s608 = ssub.s32 %s9, 2
      // Predicated region
      $region41: #{se_rawformer_front.20} parent=39 // pred_check
        %p609 = pneg %p106
      $region42: #{se_rawformer_front.20} parent=39 // pred_check_branch
        %611 = sbr.rel (%p609) target = $region44
      $region43: #{se_rawformer_front.20} parent=39 // pred_region
        %p612 = scmp.lt.s32.totalorder %s15, 1
        %s613 = scalar_select %p612, %s15, 1
        %s614 = smul.addr %s613, 16
        %s615 = smul.addr %s614, 8
        %s616 = scalar_lea.vmem %s3, %s615
      $region44: #{se_rawformer_front.20} parent=39 // pred_fallthru
        _
    $region40: #{se_rawformer_front.20} parent=5 // pred_fallthru
      _
  $region6: #{se_rawformer_front.20} parent=0 // loop_footer
    %s13 = sadd.s32 1, %s9
  $region7: #{se_rawformer_front.20} parent=0 // loop_footer_branch
    %8 = sbr.rel target = $region3
  $region8: #{se_rawformer_front.20} parent=0 // loop_exit
    _

// kernel: se_rawformer_front.21
$region0: #{se_rawformer_front.21}
  #allocation0 [shape = 'u32[]', space=smem, size = 0x4, offset = 0x4, fixed_abs, tag = 'smem constant byte address 0x4 - core index']
  #allocation1 [shape = 'u32[144,128]{1,0:T(1,128)}', space=vmem, size = 0x12000, scoped, tag = 'internal scratch']
  %s0 = inlined_call_operand.vmem [shape: bf16[2,192,100], index: 0, kind: input, shape index: {}]
  %s1 = inlined_call_operand.vmem [shape: bf16[1,64,192], index: 1, kind: input, shape index: {}]
  %s2 = inlined_call_operand.vmem [shape: f32[64,1], index: 2, kind: input, shape index: {}]
  %s3 = inlined_call_operand.vmem [shape: f32[2,64,100], index: 3, kind: output, shape index: {}]
  %s4 = sld [smem:[#allocation0]]
  $region45: #{se_rawformer_front.21} parent=0
    _
  %s6 = ssub.s32 1, %s4
  %s7 = scalar_select 0, %s6, %s4
  loop: start=0, step=1, limit=4
  $region2: #{se_rawformer_front.21} parent=0 // loop_pre_header
    _
  $region3: #{se_rawformer_front.21} parent=0 // loop_header
    %s9 = sphi 0, %s13
    %p10 = scmp.ge.s32.totalorder %s9, 4
    %s19 = sphi 0, %s21
    %s22 = sphi 0, %s19
    %s23 = sphi 0, %s22
    %s39 = sphi 0, %s23
    %s43 = sphi 0, %s43
    %s45 = sphi 0, %s43
    %s46 = sphi 0, %s45
    %s60 = sphi 0, %s46
    %s64 = sphi 0, %s64
    %s66 = sphi 0, %s64
    %s67 = sphi 0, %s66
    %s81 = sphi 0, %s67
    %s87 = sphi 0, %s89
    %s90 = sphi 0, %s87
    %s91 = sphi 0, %s90
    %s107 = sphi 0, %s91
  $region4: #{se_rawformer_front.21} parent=0 // loop_header_branch
    %12 = sbr.rel (%p10) target = $region8
  $region5: #{se_rawformer_front.21} parent=0 // loop_body
    %s14 = ssub.s32 %s9, 1
    %s15 = ssub.s32 %s9, 2
    %s16 = sadd.s32 %s9, 1
    %s17 = ssub.s32 %s9, %s16
    %p18 = scmp.eq.s32.totalorder %s17, 0
    %s20 = sadd.s32 %s19, 1
    %s21 = scalar_select %p18, %s19, %s20
    %p24 = pneg %p18
    %p25 = scmp.eq.s32.totalorder %s9, 1
    %p26 = por %p24, %p25
    %p27 = scmp.ne.s32.totalorder %s19, %s22
    %p28 = scmp.eq.s32.totalorder %s9, 0
    %p29 = por %p27, %p28
    %p30 = scmp.ne.s32.totalorder %s19, %s22
    %p31 = scmp.eq.s32.totalorder %s14, 1
    %p32 = por %p30, %p31
    %p33 = scmp.ne.s32.totalorder %s22, %s23
    %p34 = scmp.eq.s32.totalorder %s14, 0
    %p35 = por %p33, %p34
    %p36 = scmp.ne.s32.totalorder %s22, %s23
    %p37 = scmp.eq.s32.totalorder %s15, 1
    %p38 = por %p36, %p37
    %p40 = scmp.ne.s32.totalorder %s23, %s39
    %p41 = scmp.eq.s32.totalorder %s15, 0
    %p42 = por %p40, %p41
    %s44 = sadd.s32 %s43, 1
    %p47 = scmp.eq.s32.totalorder %s9, 1
    %p48 = scmp.ne.s32.totalorder %s43, %s45
    %p49 = scmp.eq.s32.totalorder %s9, 0
    %p50 = por %p48, %p49
    %p51 = scmp.ne.s32.totalorder %s43, %s45
    %p52 = scmp.eq.s32.totalorder %s14, 1
    %p53 = por %p51, %p52
    %p54 = scmp.ne.s32.totalorder %s45, %s46
    %p55 = scmp.eq.s32.totalorder %s14, 0
    %p56 = por %p54, %p55
    %p57 = scmp.ne.s32.totalorder %s45, %s46
    %p58 = scmp.eq.s32.totalorder %s15, 1
    %p59 = por %p57, %p58
    %p61 = scmp.ne.s32.totalorder %s46, %s60
    %p62 = scmp.eq.s32.totalorder %s15, 0
    %p63 = por %p61, %p62
    %s65 = sadd.s32 %s64, 1
    %p68 = scmp.eq.s32.totalorder %s9, 1
    %p69 = scmp.ne.s32.totalorder %s64, %s66
    %p70 = scmp.eq.s32.totalorder %s9, 0
    %p71 = por %p69, %p70
    %p72 = scmp.ne.s32.totalorder %s64, %s66
    %p73 = scmp.eq.s32.totalorder %s14, 1
    %p74 = por %p72, %p73
    %p75 = scmp.ne.s32.totalorder %s66, %s67
    %p76 = scmp.eq.s32.totalorder %s14, 0
    %p77 = por %p75, %p76
    %p78 = scmp.ne.s32.totalorder %s66, %s67
    %p79 = scmp.eq.s32.totalorder %s15, 1
    %p80 = por %p78, %p79
    %p82 = scmp.ne.s32.totalorder %s67, %s81
    %p83 = scmp.eq.s32.totalorder %s15, 0
    %p84 = por %p82, %p83
    %s85 = ssub.s32 %s9, %s16
    %p86 = scmp.eq.s32.totalorder %s85, 0
    %s88 = sadd.s32 %s87, 1
    %s89 = scalar_select %p86, %s87, %s88
    %p92 = pneg %p86
    %p93 = scmp.eq.s32.totalorder %s9, 1
    %p94 = por %p92, %p93
    %p95 = scmp.ne.s32.totalorder %s87, %s90
    %p96 = scmp.eq.s32.totalorder %s9, 0
    %p97 = por %p95, %p96
    %p98 = scmp.ne.s32.totalorder %s87, %s90
    %p99 = scmp.eq.s32.totalorder %s14, 1
    %p100 = por %p98, %p99
    %p101 = scmp.ne.s32.totalorder %s90, %s91
    %p102 = scmp.eq.s32.totalorder %s14, 0
    %p103 = por %p101, %p102
    %p104 = scmp.ne.s32.totalorder %s90, %s91
    %p105 = scmp.eq.s32.totalorder %s15, 1
    %p106 = por %p104, %p105
    %p108 = scmp.ne.s32.totalorder %s91, %s107
    %p109 = scmp.eq.s32.totalorder %s15, 0
    %p110 = por %p108, %p109
    %p111 = scmp.le.s32.totalorder 1, %s9
    %p112 = scmp.lt.s32.totalorder %s9, 3
    %p113 = pnand %p111, %p112
    %p114 = pneg %p113
    // Predicated region
    $region9: #{se_rawformer_front.21} parent=5 // pred_check
      _
    $region10: #{se_rawformer_front.21} parent=5 // pred_check_branch
      %116 = sbr.rel (%p113) target = $region12
    $region11: #{se_rawformer_front.21} parent=5 // pred_region
      %s117 = ssub.s32 %s9, 1
      // Predicated region
      $region13: #{se_rawformer_front.21} parent=11 // pred_check
        %p118 = pneg %p56
      $region14: #{se_rawformer_front.21} parent=11 // pred_check_branch
        %120 = sbr.rel (%p118) target = $region16
      $region15: #{se_rawformer_front.21} parent=11 // pred_region
        _
      $region16: #{se_rawformer_front.21} parent=11 // pred_fallthru
        _
      // Predicated region
      $region17: #{se_rawformer_front.21} parent=11 // pred_check
        %p121 = pneg %p77
      $region18: #{se_rawformer_front.21} parent=11 // pred_check_branch
        %123 = sbr.rel (%p121) target = $region20
      $region19: #{se_rawformer_front.21} parent=11 // pred_region
        _
      $region20: #{se_rawformer_front.21} parent=11 // pred_fallthru
        _
    $region12: #{se_rawformer_front.21} parent=5 // pred_fallthru
      _
    %p124 = scmp.lt.s32.totalorder %s9, 2
    // Predicated region
    $region21: #{se_rawformer_front.21} parent=5 // pred_check
      %p125 = pneg %p124
    $region22: #{se_rawformer_front.21} parent=5 // pred_check_branch
      %127 = sbr.rel (%p125) target = $region24
    $region23: #{se_rawformer_front.21} parent=5 // pred_region
      // Predicated region
      $region25: #{se_rawformer_front.21} parent=23 // pred_check
        %p128 = pneg %p29
      $region26: #{se_rawformer_front.21} parent=23 // pred_check_branch
        %130 = sbr.rel (%p128) target = $region28
      $region27: #{se_rawformer_front.21} parent=23 // pred_region
        %p131 = scmp.lt.s32.totalorder %s9, 1
        %s132 = scalar_select %p131, %s9, 1
        %s133 = smul.addr %s132, 24
        %s134 = smul.addr %s133, 4
        %s135 = scalar_lea.vmem %s0, %s134
      $region28: #{se_rawformer_front.21} parent=23 // pred_fallthru
        _
    $region24: #{se_rawformer_front.21} parent=5 // pred_fallthru
      _
    %p136 = scmp.le.s32.totalorder 1, %s9
    %p137 = scmp.lt.s32.totalorder %s9, 3
    %p138 = pnand %p136, %p137
    %p139 = pneg %p138
    // Predicated region
    $region29: #{se_rawformer_front.21} parent=5 // pred_check
      _
    $region30: #{se_rawformer_front.21} parent=5 // pred_check_branch
      %141 = sbr.rel (%p138) target = $region32
    $region31: #{se_rawformer_front.21} parent=5 // pred_region
      %s142 = ssub.s32 %s9, 1
      %p143 = scmp.lt.s32.totalorder %s14, 1
      %s144 = scalar_select %p143, %s14, 1
      %s145 = smul.addr %s144, 24
      %s146 = smul.addr %s145, 4
      %s147 = scalar_lea.vmem %s0, %s146
      %p148 = pneg %p35
      %p149 = pneg %p32
      %p150 = pneg %p56
      %p151 = pneg %p53
      %p152 = pneg %p77
      %p153 = pneg %p74
      %p154 = pneg %p103
      %p155 = pneg %p100
      %p156 = scmp.lt.s32.totalorder %s14, 1
      %s157 = scalar_select %p156, %s14, 1
      %s158 = smul.addr %s157, 8
      %s159 = smul.addr %s158, 8
      %s160 = scalar_lea.vmem %s3, %s159
      %p161 = scmp.lt.s32.totalorder %s14, 1
      %s162 = scalar_select %p161, %s14, 1
      %s163 = smul.addr %s162, 24
      %s164 = smul.addr %s163, 4
      %s165 = scalar_lea.vmem %s0, %s164
      %p166 = scmp.lt.s32.totalorder %s14, 1
      %s167 = scalar_select %p166, %s14, 1
      %s168 = smul.addr %s167, 8
      %s169 = smul.addr %s168, 8
      %s170 = scalar_lea.vmem %s3, %s169
      %v172 = vld [vmem:[%s1] sm:$0xff]
      %v173 = vld [vmem:[%s1 + $0x8] sm:$0xff]
      %v174 = vld [vmem:[%s1 + $0x10] sm:$0xff]
      %v175 = vld [vmem:[%s1 + $0x18] sm:$0xff]
      %v176 = vld [vmem:[%s1 + $0x20] sm:$0xff]
      %v177 = vld [vmem:[%s1 + $0x28] sm:$0xff]
      %v178 = vld [vmem:[%s1 + $0x30] sm:$0xff]
      %v179 = vld [vmem:[%s1 + $0x38] sm:$0xff]
      %v180 = vld [vmem:[%s165] sm:$0xf]
      %v181 = vld [vmem:[%s165 + $0x4] sm:$0xf]
      %v182 = vld [vmem:[%s165 + $0x8] sm:$0xf]
      %v183 = vld [vmem:[%s165 + $0xc] sm:$0xf]
      %v184 = vld [vmem:[%s165 + $0x10] sm:$0xf]
      %v185 = vld [vmem:[%s165 + $0x14] sm:$0xf]
      %v186 = vld [vmem:[%s165 + $0x18] sm:$0xf]
      %v187 = vld [vmem:[%s165 + $0x1c] sm:$0xf]
      %v188 = vld [vmem:[%s165 + $0x20] sm:$0xf]
      %v189 = vld [vmem:[%s165 + $0x24] sm:$0xf]
      %v190 = vld [vmem:[%s165 + $0x28] sm:$0xf]
      %v191 = vld [vmem:[%s165 + $0x2c] sm:$0xf]
      %v192 = vld [vmem:[%s165 + $0x30] sm:$0xf]
      %v193 = vld [vmem:[%s165 + $0x34] sm:$0xf]
      %v194 = vld [vmem:[%s165 + $0x38] sm:$0xf]
      %v195 = vld [vmem:[%s165 + $0x3c] sm:$0xf]
      %v196 = vld [vmem:[%s165 + $0x40] sm:$0xf]
      %v197 = vld [vmem:[%s165 + $0x44] sm:$0xf]
      %v198 = vld [vmem:[%s165 + $0x48] sm:$0xf]
      %v199 = vld [vmem:[%s165 + $0x4c] sm:$0xf]
      %v200 = vld [vmem:[%s165 + $0x50] sm:$0xf]
      %v201 = vld [vmem:[%s165 + $0x54] sm:$0xf]
      %v202 = vld [vmem:[%s165 + $0x58] sm:$0xf]
      %v203 = vld [vmem:[%s165 + $0x5c] sm:$0xf]
      %v204 = vld [vmem:[%s2] sm:$0xff]
      %v205 = vld [vmem:[%s2 + $0x8] sm:$0xff]
      %v206 = vld [vmem:[%s2 + $0x10] sm:$0xff]
      %v207 = vld [vmem:[%s2 + $0x18] sm:$0xff]
      %v208 = vld [vmem:[%s2 + $0x20] sm:$0xff]
      %v209 = vld [vmem:[%s2 + $0x28] sm:$0xff]
      %v210 = vld [vmem:[%s2 + $0x30] sm:$0xff]
      %v211 = vld [vmem:[%s2 + $0x38] sm:$0xff]
      %213 = vset.pattern.permute.xlu0 0
      %214 = vperm.xlu0 %213, %v204
      %v215 = vpop.permute.xlu0 %214
      %218 = vset.pattern.permute.xlu0 0
      %219 = vperm.xlu0 %218, %v205
      %v220 = vpop.permute.xlu0 %219
      %223 = vset.pattern.permute.xlu0 0
      %224 = vperm.xlu0 %223, %v206
      %v225 = vpop.permute.xlu0 %224
      %228 = vset.pattern.permute.xlu0 0
      %229 = vperm.xlu0 %228, %v207
      %v230 = vpop.permute.xlu0 %229
      %233 = vset.pattern.permute.xlu0 0
      %234 = vperm.xlu0 %233, %v208
      %v235 = vpop.permute.xlu0 %234
      %238 = vset.pattern.permute.xlu0 0
      %239 = vperm.xlu0 %238, %v209
      %v240 = vpop.permute.xlu0 %239
      %243 = vset.pattern.permute.xlu0 0
      %244 = vperm.xlu0 %243, %v210
      %v245 = vpop.permute.xlu0 %244
      %248 = vset.pattern.permute.xlu0 0
      %249 = vperm.xlu0 %248, %v211
      %v250 = vpop.permute.xlu0 %249
      %v260 = vunpack.c.l.b16 %v172
      %v261 = vunpack.c.h.b16 %v172
      %v262 = vunpack.c.l.b16 %v173
      %v263 = vunpack.c.h.b16 %v173
      %v264 = vunpack.c.l.b16 %v174
      %v265 = vunpack.c.h.b16 %v174
      %v266 = vunpack.c.l.b16 %v175
      %v267 = vunpack.c.h.b16 %v175
      %v268 = vunpack.c.l.b16 %v176
      %v269 = vunpack.c.h.b16 %v176
      %v270 = vunpack.c.l.b16 %v177
      %v271 = vunpack.c.h.b16 %v177
      %v272 = vunpack.c.l.b16 %v178
      %v273 = vunpack.c.h.b16 %v178
      %v274 = vunpack.c.l.b16 %v179
      %v275 = vunpack.c.h.b16 %v179
      %v276 = vpack.c.b16 %v262, %v260
      %v277 = vpack.c.b16 %v263, %v261
      %v278 = vpack.c.b16 %v266, %v264
      %v279 = vpack.c.b16 %v267, %v265
      %v280 = vpack.c.b16 %v270, %v268
      %v281 = vpack.c.b16 %v271, %v269
      %v282 = vpack.c.b16 %v274, %v272
      %v283 = vpack.c.b16 %v275, %v273
      %v312 = vunpack.c.l.b16 %v180
      %v313 = vunpack.c.l.b16 %v181
      %v314 = vunpack.c.l.b16 %v182
      %v315 = vunpack.c.l.b16 %v183
      %v316 = vunpack.c.l.b16 %v184
      %v317 = vunpack.c.l.b16 %v185
      %v318 = vunpack.c.l.b16 %v186
      %v319 = vunpack.c.l.b16 %v187
      %v320 = vunpack.c.l.b16 %v188
      %v321 = vunpack.c.l.b16 %v189
      %v322 = vunpack.c.l.b16 %v190
      %v323 = vunpack.c.l.b16 %v191
      %v324 = vunpack.c.l.b16 %v192
      %v325 = vunpack.c.l.b16 %v193
      %v326 = vunpack.c.l.b16 %v194
      %v327 = vunpack.c.l.b16 %v195
      %v328 = vunpack.c.l.b16 %v196
      %v329 = vunpack.c.l.b16 %v197
      %v330 = vunpack.c.l.b16 %v198
      %v331 = vunpack.c.l.b16 %v199
      %v332 = vunpack.c.l.b16 %v200
      %v333 = vunpack.c.l.b16 %v201
      %v334 = vunpack.c.l.b16 %v202
      %v335 = vunpack.c.l.b16 %v203
      %v336 = vpack.c.b16 %v313, %v312
      %v337 = vpack.c.b16 %v315, %v314
      %v338 = vpack.c.b16 %v317, %v316
      %v339 = vpack.c.b16 %v319, %v318
      %v340 = vpack.c.b16 %v321, %v320
      %v341 = vpack.c.b16 %v323, %v322
      %v342 = vpack.c.b16 %v325, %v324
      %v343 = vpack.c.b16 %v327, %v326
      %v344 = vpack.c.b16 %v329, %v328
      %v345 = vpack.c.b16 %v331, %v330
      %v346 = vpack.c.b16 %v333, %v332
      %v347 = vpack.c.b16 %v335, %v334
      %vm360 = vcmask 523264
      %v362 = vsel %vm360, %v277, 0
      %v365 = vsel %vm360, %v279, 0
      %v368 = vsel %vm360, %v281, 0
      %v371 = vsel %vm360, %v283, 0
      %373 = vmatprep.subr.bf16.mxu0 0
      %374 = vmatpush1.bf16.msra.mxu0 %v336
      %375 = vmatprep.subr.bf16.mxu0 0
      %376 = vmatpush1.bf16.msra.mxu0 %v337
      %377 = vmatprep.subr.bf16.mxu0 0
      %378 = vmatpush1.bf16.msra.mxu0 %v338
      %379 = vmatprep.subr.bf16.mxu0 0
      %380 = vmatpush1.bf16.msra.mxu0 %v339
      %381 = vmatprep.subr.bf16.mxu0 0
      %382 = vmatpush1.bf16.msra.mxu0 %v340
      %383 = vmatprep.subr.bf16.mxu0 0
      %384 = vmatpush1.bf16.msra.mxu0 %v341
      %385 = vmatprep.subr.bf16.mxu0 0
      %386 = vmatpush1.bf16.msra.mxu0 %v342
      %387 = vmatprep.subr.bf16.mxu0 0
      %388 = vmatpush1.bf16.msra.mxu0 %v343
      %389 = vmatprep.subr.bf16.mxu0 0
      %390 = vmatpush1.bf16.msra.mxu0 %v344
      %391 = vmatprep.subr.bf16.mxu0 0
      %392 = vmatpush1.bf16.msra.mxu0 %v345
      %393 = vmatprep.subr.bf16.mxu0 0
      %394 = vmatpush1.bf16.msra.mxu0 %v346
      %395 = vmatprep.subr.bf16.mxu0 0
      %396 = vmatpush1.bf16.msra.mxu0 %v347
      %397 = vmatprep.subr.bf16.mxu0 0
      %398 = vmatpush1.bf16.msra.mxu0 0
      %399 = vmatprep.subr.bf16.mxu0 0
      %400 = vmatpush1.bf16.msra.mxu0 0
      %401 = vmatprep.subr.bf16.mxu0 0
      %402 = vmatpush1.bf16.msra.mxu0 0
      %403 = vmatprep.subr.bf16.mxu0 0
      %404 = vmatpush1.bf16.msra.mxu0 0
      %405 = vmatprep.mubr.bf16.mxu0 %v362
      %406 = vmatmul.mubr.bf16.gmra.mrb[0].mxu0 %v276
      %v407 = vpop.f32.mrb[0].mxu0
      %v408 = vadd.f32 %v215, %v407
      %v409 = vpop.f32.mrb[0].mxu0
      %v410 = vpop.f32.mrb[0].mxu0
      %v411 = vadd.f32 %v220, %v410
      %v412 = vpop.f32.mrb[0].mxu0
      %413 = vmatprep.mubr.bf16.mxu0 %v365
      %414 = vmatmul.mubr.bf16.gmra.mrb[0].mxu0 %v278
      %v415 = vpop.f32.mrb[0].mxu0
      %v416 = vadd.f32 %v225, %v415
      %v417 = vpop.f32.mrb[0].mxu0
      %v418 = vpop.f32.mrb[0].mxu0
      %v419 = vadd.f32 %v230, %v418
      %v420 = vpop.f32.mrb[0].mxu0
      %421 = vmatprep.mubr.bf16.mxu0 %v368
      %422 = vmatmul.mubr.bf16.gmra.mrb[0].mxu0 %v280
      %v423 = vpop.f32.mrb[0].mxu0
      %v424 = vadd.f32 %v235, %v423
      %v425 = vpop.f32.mrb[0].mxu0
      %v426 = vpop.f32.mrb[0].mxu0
      %v427 = vadd.f32 %v240, %v426
      %v428 = vpop.f32.mrb[0].mxu0
      %429 = vmatprep.mubr.bf16.mxu0 %v371
      %430 = vmatmul.mubr.bf16.gmra.mrb[0].mxu0 %v282
      %v431 = vpop.f32.mrb[0].mxu0
      %v432 = vadd.f32 %v245, %v431
      %v433 = vpop.f32.mrb[0].mxu0
      %v434 = vpop.f32.mrb[0].mxu0
      %v435 = vadd.f32 %v250, %v434
      %v436 = vpop.f32.mrb[0].mxu0
      %437 = vdwg.mxu0
      %vm438 = vcmask 818176
      %439 = vst.msk [vmem:[%s170] sm:$0xff] %vm438, %v408
      %440 = vst.msk [vmem:[%s170 + $0x8] sm:$0xff] %vm438, %v411
      %441 = vst.msk [vmem:[%s170 + $0x10] sm:$0xff] %vm438, %v416
      %442 = vst.msk [vmem:[%s170 + $0x18] sm:$0xff] %vm438, %v419
      %443 = vst.msk [vmem:[%s170 + $0x20] sm:$0xff] %vm438, %v424
      %444 = vst.msk [vmem:[%s170 + $0x28] sm:$0xff] %vm438, %v427
      %445 = vst.msk [vmem:[%s170 + $0x30] sm:$0xff] %vm438, %v432
      %446 = vst.msk [vmem:[%s170 + $0x38] sm:$0xff] %vm438, %v435
      %p447 = scmp.lt.s32.totalorder %s14, 1
      %s448 = scalar_select %p447, %s14, 1
      %s449 = smul.addr %s448, 8
      %s450 = smul.addr %s449, 8
      %s451 = scalar_lea.vmem %s3, %s450
      // Predicated region
      $region33: #{se_rawformer_front.21} parent=31 // pred_check
        %p452 = pneg %p100
      $region34: #{se_rawformer_front.21} parent=31 // pred_check_branch
        %454 = sbr.rel (%p452) target = $region36
      $region35: #{se_rawformer_front.21} parent=31 // pred_region
        _
      $region36: #{se_rawformer_front.21} parent=31 // pred_fallthru
        _
    $region32: #{se_rawformer_front.21} parent=5 // pred_fallthru
      _
    %p455 = scmp.le.s32.totalorder 2, %s9
    // Predicated region
    $region37: #{se_rawformer_front.21} parent=5 // pred_check
      %p456 = pneg %p455
    $region38: #{se_rawformer_front.21} parent=5 // pred_check_branch
      %458 = sbr.rel (%p456) target = $region40
    $region39: #{se_rawformer_front.21} parent=5 // pred_region
      %s459 = ssub.s32 %s9, 2
      // Predicated region
      $region41: #{se_rawformer_front.21} parent=39 // pred_check
        %p460 = pneg %p106
      $region42: #{se_rawformer_front.21} parent=39 // pred_check_branch
        %462 = sbr.rel (%p460) target = $region44
      $region43: #{se_rawformer_front.21} parent=39 // pred_region
        %p463 = scmp.lt.s32.totalorder %s15, 1
        %s464 = scalar_select %p463, %s15, 1
        %s465 = smul.addr %s464, 8
        %s466 = smul.addr %s465, 8
        %s467 = scalar_lea.vmem %s3, %s466
      $region44: #{se_rawformer_front.21} parent=39 // pred_fallthru
        _
    $region40: #{se_rawformer_front.21} parent=5 // pred_fallthru
      _
  $region6: #{se_rawformer_front.21} parent=0 // loop_footer
    %s13 = sadd.s32 1, %s9
  $region7: #{se_rawformer_front.21} parent=0 // loop_footer_branch
    %8 = sbr.rel target = $region3
  $region8: #{se_rawformer_front.21} parent=0 // loop_exit
    _

// kernel: se_rawformer_front.22
$region0: #{se_rawformer_front.22}
  #allocation0 [shape = 'u32[]', space=smem, size = 0x4, offset = 0x4, fixed_abs, tag = 'smem constant byte address 0x4 - core index']
  #allocation1 [shape = 'u32[144,128]{1,0:T(1,128)}', space=vmem, size = 0x12000, scoped, tag = 'internal scratch']
  %s0 = inlined_call_operand.vmem [shape: bf16[2,192,108], index: 0, kind: input, shape index: {}]
  %s1 = inlined_call_operand.vmem [shape: bf16[3,64,192], index: 1, kind: input, shape index: {}]
  %s2 = inlined_call_operand.vmem [shape: f32[64,1], index: 2, kind: input, shape index: {}]
  %s3 = inlined_call_operand.vmem [shape: f32[2,64,100], index: 3, kind: input, shape index: {}]
  %s4 = inlined_call_operand.vmem [shape: f32[16,64], index: 4, kind: input, shape index: {}]
  %s5 = inlined_call_operand.vmem [shape: f32[16,1], index: 5, kind: input, shape index: {}]
  %s6 = inlined_call_operand.vmem [shape: f32[64,16], index: 6, kind: input, shape index: {}]
  %s7 = inlined_call_operand.vmem [shape: f32[64,1], index: 7, kind: input, shape index: {}]
  %s8 = inlined_call_operand.vmem [shape: f32[2,64,100], index: 8, kind: output, shape index: {}]
  %s9 = sld [smem:[#allocation0]]
  $region65: #{se_rawformer_front.22} parent=0
    _
  %s11 = ssub.s32 1, %s9
  %s12 = scalar_select 0, %s11, %s9
  loop: start=0, step=1, limit=4
  $region2: #{se_rawformer_front.22} parent=0 // loop_pre_header
    _
  $region3: #{se_rawformer_front.22} parent=0 // loop_header
    %s14 = sphi 0, %s18
    %p15 = scmp.ge.s32.totalorder %s14, 4
    %s24 = sphi 0, %s26
    %s27 = sphi 0, %s24
    %s28 = sphi 0, %s27
    %s44 = sphi 0, %s28
    %s48 = sphi 0, %s48
    %s50 = sphi 0, %s48
    %s51 = sphi 0, %s50
    %s65 = sphi 0, %s51
    %s69 = sphi 0, %s69
    %s71 = sphi 0, %s69
    %s72 = sphi 0, %s71
    %s86 = sphi 0, %s72
    %s92 = sphi 0, %s94
    %s95 = sphi 0, %s92
    %s96 = sphi 0, %s95
    %s112 = sphi 0, %s96
    %s116 = sphi 0, %s116
    %s118 = sphi 0, %s116
    %s119 = sphi 0, %s118
    %s133 = sphi 0, %s119
    %s137 = sphi 0, %s137
    %s139 = sphi 0, %s137
    %s140 = sphi 0, %s139
    %s154 = sphi 0, %s140
    %s158 = sphi 0, %s158
    %s160 = sphi 0, %s158
    %s161 = sphi 0, %s160
    %s175 = sphi 0, %s161
    %s179 = sphi 0, %s179
    %s181 = sphi 0, %s179
    %s182 = sphi 0, %s181
    %s196 = sphi 0, %s182
    %s202 = sphi 0, %s204
    %s205 = sphi 0, %s202
    %s206 = sphi 0, %s205
    %s222 = sphi 0, %s206
  $region4: #{se_rawformer_front.22} parent=0 // loop_header_branch
    %17 = sbr.rel (%p15) target = $region8
  $region5: #{se_rawformer_front.22} parent=0 // loop_body
    %s19 = ssub.s32 %s14, 1
    %s20 = ssub.s32 %s14, 2
    %s21 = sadd.s32 %s14, 1
    %s22 = ssub.s32 %s14, %s21
    %p23 = scmp.eq.s32.totalorder %s22, 0
    %s25 = sadd.s32 %s24, 1
    %s26 = scalar_select %p23, %s24, %s25
    %p29 = pneg %p23
    %p30 = scmp.eq.s32.totalorder %s14, 1
    %p31 = por %p29, %p30
    %p32 = scmp.ne.s32.totalorder %s24, %s27
    %p33 = scmp.eq.s32.totalorder %s14, 0
    %p34 = por %p32, %p33
    %p35 = scmp.ne.s32.totalorder %s24, %s27
    %p36 = scmp.eq.s32.totalorder %s19, 1
    %p37 = por %p35, %p36
    %p38 = scmp.ne.s32.totalorder %s27, %s28
    %p39 = scmp.eq.s32.totalorder %s19, 0
    %p40 = por %p38, %p39
    %p41 = scmp.ne.s32.totalorder %s27, %s28
    %p42 = scmp.eq.s32.totalorder %s20, 1
    %p43 = por %p41, %p42
    %p45 = scmp.ne.s32.totalorder %s28, %s44
    %p46 = scmp.eq.s32.totalorder %s20, 0
    %p47 = por %p45, %p46
    %s49 = sadd.s32 %s48, 1
    %p52 = scmp.eq.s32.totalorder %s14, 1
    %p53 = scmp.ne.s32.totalorder %s48, %s50
    %p54 = scmp.eq.s32.totalorder %s14, 0
    %p55 = por %p53, %p54
    %p56 = scmp.ne.s32.totalorder %s48, %s50
    %p57 = scmp.eq.s32.totalorder %s19, 1
    %p58 = por %p56, %p57
    %p59 = scmp.ne.s32.totalorder %s50, %s51
    %p60 = scmp.eq.s32.totalorder %s19, 0
    %p61 = por %p59, %p60
    %p62 = scmp.ne.s32.totalorder %s50, %s51
    %p63 = scmp.eq.s32.totalorder %s20, 1
    %p64 = por %p62, %p63
    %p66 = scmp.ne.s32.totalorder %s51, %s65
    %p67 = scmp.eq.s32.totalorder %s20, 0
    %p68 = por %p66, %p67
    %s70 = sadd.s32 %s69, 1
    %p73 = scmp.eq.s32.totalorder %s14, 1
    %p74 = scmp.ne.s32.totalorder %s69, %s71
    %p75 = scmp.eq.s32.totalorder %s14, 0
    %p76 = por %p74, %p75
    %p77 = scmp.ne.s32.totalorder %s69, %s71
    %p78 = scmp.eq.s32.totalorder %s19, 1
    %p79 = por %p77, %p78
    %p80 = scmp.ne.s32.totalorder %s71, %s72
    %p81 = scmp.eq.s32.totalorder %s19, 0
    %p82 = por %p80, %p81
    %p83 = scmp.ne.s32.totalorder %s71, %s72
    %p84 = scmp.eq.s32.totalorder %s20, 1
    %p85 = por %p83, %p84
    %p87 = scmp.ne.s32.totalorder %s72, %s86
    %p88 = scmp.eq.s32.totalorder %s20, 0
    %p89 = por %p87, %p88
    %s90 = ssub.s32 %s14, %s21
    %p91 = scmp.eq.s32.totalorder %s90, 0
    %s93 = sadd.s32 %s92, 1
    %s94 = scalar_select %p91, %s92, %s93
    %p97 = pneg %p91
    %p98 = scmp.eq.s32.totalorder %s14, 1
    %p99 = por %p97, %p98
    %p100 = scmp.ne.s32.totalorder %s92, %s95
    %p101 = scmp.eq.s32.totalorder %s14, 0
    %p102 = por %p100, %p101
    %p103 = scmp.ne.s32.totalorder %s92, %s95
    %p104 = scmp.eq.s32.totalorder %s19, 1
    %p105 = por %p103, %p104
    %p106 = scmp.ne.s32.totalorder %s95, %s96
    %p107 = scmp.eq.s32.totalorder %s19, 0
    %p108 = por %p106, %p107
    %p109 = scmp.ne.s32.totalorder %s95, %s96
    %p110 = scmp.eq.s32.totalorder %s20, 1
    %p111 = por %p109, %p110
    %p113 = scmp.ne.s32.totalorder %s96, %s112
    %p114 = scmp.eq.s32.totalorder %s20, 0
    %p115 = por %p113, %p114
    %s117 = sadd.s32 %s116, 1
    %p120 = scmp.eq.s32.totalorder %s14, 1
    %p121 = scmp.ne.s32.totalorder %s116, %s118
    %p122 = scmp.eq.s32.totalorder %s14, 0
    %p123 = por %p121, %p122
    %p124 = scmp.ne.s32.totalorder %s116, %s118
    %p125 = scmp.eq.s32.totalorder %s19, 1
    %p126 = por %p124, %p125
    %p127 = scmp.ne.s32.totalorder %s118, %s119
    %p128 = scmp.eq.s32.totalorder %s19, 0
    %p129 = por %p127, %p128
    %p130 = scmp.ne.s32.totalorder %s118, %s119
    %p131 = scmp.eq.s32.totalorder %s20, 1
    %p132 = por %p130, %p131
    %p134 = scmp.ne.s32.totalorder %s119, %s133
    %p135 = scmp.eq.s32.totalorder %s20, 0
    %p136 = por %p134, %p135
    %s138 = sadd.s32 %s137, 1
    %p141 = scmp.eq.s32.totalorder %s14, 1
    %p142 = scmp.ne.s32.totalorder %s137, %s139
    %p143 = scmp.eq.s32.totalorder %s14, 0
    %p144 = por %p142, %p143
    %p145 = scmp.ne.s32.totalorder %s137, %s139
    %p146 = scmp.eq.s32.totalorder %s19, 1
    %p147 = por %p145, %p146
    %p148 = scmp.ne.s32.totalorder %s139, %s140
    %p149 = scmp.eq.s32.totalorder %s19, 0
    %p150 = por %p148, %p149
    %p151 = scmp.ne.s32.totalorder %s139, %s140
    %p152 = scmp.eq.s32.totalorder %s20, 1
    %p153 = por %p151, %p152
    %p155 = scmp.ne.s32.totalorder %s140, %s154
    %p156 = scmp.eq.s32.totalorder %s20, 0
    %p157 = por %p155, %p156
    %s159 = sadd.s32 %s158, 1
    %p162 = scmp.eq.s32.totalorder %s14, 1
    %p163 = scmp.ne.s32.totalorder %s158, %s160
    %p164 = scmp.eq.s32.totalorder %s14, 0
    %p165 = por %p163, %p164
    %p166 = scmp.ne.s32.totalorder %s158, %s160
    %p167 = scmp.eq.s32.totalorder %s19, 1
    %p168 = por %p166, %p167
    %p169 = scmp.ne.s32.totalorder %s160, %s161
    %p170 = scmp.eq.s32.totalorder %s19, 0
    %p171 = por %p169, %p170
    %p172 = scmp.ne.s32.totalorder %s160, %s161
    %p173 = scmp.eq.s32.totalorder %s20, 1
    %p174 = por %p172, %p173
    %p176 = scmp.ne.s32.totalorder %s161, %s175
    %p177 = scmp.eq.s32.totalorder %s20, 0
    %p178 = por %p176, %p177
    %s180 = sadd.s32 %s179, 1
    %p183 = scmp.eq.s32.totalorder %s14, 1
    %p184 = scmp.ne.s32.totalorder %s179, %s181
    %p185 = scmp.eq.s32.totalorder %s14, 0
    %p186 = por %p184, %p185
    %p187 = scmp.ne.s32.totalorder %s179, %s181
    %p188 = scmp.eq.s32.totalorder %s19, 1
    %p189 = por %p187, %p188
    %p190 = scmp.ne.s32.totalorder %s181, %s182
    %p191 = scmp.eq.s32.totalorder %s19, 0
    %p192 = por %p190, %p191
    %p193 = scmp.ne.s32.totalorder %s181, %s182
    %p194 = scmp.eq.s32.totalorder %s20, 1
    %p195 = por %p193, %p194
    %p197 = scmp.ne.s32.totalorder %s182, %s196
    %p198 = scmp.eq.s32.totalorder %s20, 0
    %p199 = por %p197, %p198
    %s200 = ssub.s32 %s14, %s21
    %p201 = scmp.eq.s32.totalorder %s200, 0
    %s203 = sadd.s32 %s202, 1
    %s204 = scalar_select %p201, %s202, %s203
    %p207 = pneg %p201
    %p208 = scmp.eq.s32.totalorder %s14, 1
    %p209 = por %p207, %p208
    %p210 = scmp.ne.s32.totalorder %s202, %s205
    %p211 = scmp.eq.s32.totalorder %s14, 0
    %p212 = por %p210, %p211
    %p213 = scmp.ne.s32.totalorder %s202, %s205
    %p214 = scmp.eq.s32.totalorder %s19, 1
    %p215 = por %p213, %p214
    %p216 = scmp.ne.s32.totalorder %s205, %s206
    %p217 = scmp.eq.s32.totalorder %s19, 0
    %p218 = por %p216, %p217
    %p219 = scmp.ne.s32.totalorder %s205, %s206
    %p220 = scmp.eq.s32.totalorder %s20, 1
    %p221 = por %p219, %p220
    %p223 = scmp.ne.s32.totalorder %s206, %s222
    %p224 = scmp.eq.s32.totalorder %s20, 0
    %p225 = por %p223, %p224
    %p226 = scmp.le.s32.totalorder 1, %s14
    %p227 = scmp.lt.s32.totalorder %s14, 3
    %p228 = pnand %p226, %p227
    %p229 = pneg %p228
    // Predicated region
    $region9: #{se_rawformer_front.22} parent=5 // pred_check
      _
    $region10: #{se_rawformer_front.22} parent=5 // pred_check_branch
      %231 = sbr.rel (%p228) target = $region12
    $region11: #{se_rawformer_front.22} parent=5 // pred_region
      %s232 = ssub.s32 %s14, 1
      // Predicated region
      $region13: #{se_rawformer_front.22} parent=11 // pred_check
        %p233 = pneg %p61
      $region14: #{se_rawformer_front.22} parent=11 // pred_check_branch
        %235 = sbr.rel (%p233) target = $region16
      $region15: #{se_rawformer_front.22} parent=11 // pred_region
        _
      $region16: #{se_rawformer_front.22} parent=11 // pred_fallthru
        _
      // Predicated region
      $region17: #{se_rawformer_front.22} parent=11 // pred_check
        %p236 = pneg %p82
      $region18: #{se_rawformer_front.22} parent=11 // pred_check_branch
        %238 = sbr.rel (%p236) target = $region20
      $region19: #{se_rawformer_front.22} parent=11 // pred_region
        _
      $region20: #{se_rawformer_front.22} parent=11 // pred_fallthru
        _
      // Predicated region
      $region21: #{se_rawformer_front.22} parent=11 // pred_check
        %p239 = pneg %p129
      $region22: #{se_rawformer_front.22} parent=11 // pred_check_branch
        %241 = sbr.rel (%p239) target = $region24
      $region23: #{se_rawformer_front.22} parent=11 // pred_region
        _
      $region24: #{se_rawformer_front.22} parent=11 // pred_fallthru
        _
      // Predicated region
      $region25: #{se_rawformer_front.22} parent=11 // pred_check
        %p242 = pneg %p150
      $region26: #{se_rawformer_front.22} parent=11 // pred_check_branch
        %244 = sbr.rel (%p242) target = $region28
      $region27: #{se_rawformer_front.22} parent=11 // pred_region
        _
      $region28: #{se_rawformer_front.22} parent=11 // pred_fallthru
        _
      // Predicated region
      $region29: #{se_rawformer_front.22} parent=11 // pred_check
        %p245 = pneg %p171
      $region30: #{se_rawformer_front.22} parent=11 // pred_check_branch
        %247 = sbr.rel (%p245) target = $region32
      $region31: #{se_rawformer_front.22} parent=11 // pred_region
        _
      $region32: #{se_rawformer_front.22} parent=11 // pred_fallthru
        _
      // Predicated region
      $region33: #{se_rawformer_front.22} parent=11 // pred_check
        %p248 = pneg %p192
      $region34: #{se_rawformer_front.22} parent=11 // pred_check_branch
        %250 = sbr.rel (%p248) target = $region36
      $region35: #{se_rawformer_front.22} parent=11 // pred_region
        _
      $region36: #{se_rawformer_front.22} parent=11 // pred_fallthru
        _
    $region12: #{se_rawformer_front.22} parent=5 // pred_fallthru
      _
    %p251 = scmp.lt.s32.totalorder %s14, 2
    // Predicated region
    $region37: #{se_rawformer_front.22} parent=5 // pred_check
      %p252 = pneg %p251
    $region38: #{se_rawformer_front.22} parent=5 // pred_check_branch
      %254 = sbr.rel (%p252) target = $region40
    $region39: #{se_rawformer_front.22} parent=5 // pred_region
      // Predicated region
      $region41: #{se_rawformer_front.22} parent=39 // pred_check
        %p255 = pneg %p34
      $region42: #{se_rawformer_front.22} parent=39 // pred_check_branch
        %257 = sbr.rel (%p255) target = $region44
      $region43: #{se_rawformer_front.22} parent=39 // pred_region
        %p258 = scmp.lt.s32.totalorder %s14, 1
        %s259 = scalar_select %p258, %s14, 1
        %s260 = smul.addr %s259, 24
        %s261 = smul.addr %s260, 4
        %s262 = scalar_lea.vmem %s0, %s261
      $region44: #{se_rawformer_front.22} parent=39 // pred_fallthru
        _
      // Predicated region
      $region45: #{se_rawformer_front.22} parent=39 // pred_check
        %p263 = pneg %p102
      $region46: #{se_rawformer_front.22} parent=39 // pred_check_branch
        %265 = sbr.rel (%p263) target = $region48
      $region47: #{se_rawformer_front.22} parent=39 // pred_region
        %p266 = scmp.lt.s32.totalorder %s14, 1
        %s267 = scalar_select %p266, %s14, 1
        %s268 = smul.addr %s267, 8
        %s269 = smul.addr %s268, 8
        %s270 = scalar_lea.vmem %s3, %s269
      $region48: #{se_rawformer_front.22} parent=39 // pred_fallthru
        _
    $region40: #{se_rawformer_front.22} parent=5 // pred_fallthru
      _
    %p271 = scmp.le.s32.totalorder 1, %s14
    %p272 = scmp.lt.s32.totalorder %s14, 3
    %p273 = pnand %p271, %p272
    %p274 = pneg %p273
    // Predicated region
    $region49: #{se_rawformer_front.22} parent=5 // pred_check
      _
    $region50: #{se_rawformer_front.22} parent=5 // pred_check_branch
      %276 = sbr.rel (%p273) target = $region52
    $region51: #{se_rawformer_front.22} parent=5 // pred_region
      %s277 = ssub.s32 %s14, 1
      %p278 = scmp.lt.s32.totalorder %s19, 1
      %s279 = scalar_select %p278, %s19, 1
      %s280 = smul.addr %s279, 24
      %s281 = smul.addr %s280, 4
      %s282 = scalar_lea.vmem %s0, %s281
      %p283 = pneg %p40
      %p284 = pneg %p37
      %p285 = pneg %p61
      %p286 = pneg %p58
      %p287 = pneg %p82
      %p288 = pneg %p79
      %p289 = scmp.lt.s32.totalorder %s19, 1
      %s290 = scalar_select %p289, %s19, 1
      %s291 = smul.addr %s290, 8
      %s292 = smul.addr %s291, 8
      %s293 = scalar_lea.vmem %s3, %s292
      %p294 = pneg %p108
      %p295 = pneg %p105
      %p296 = pneg %p129
      %p297 = pneg %p126
      %p298 = pneg %p150
      %p299 = pneg %p147
      %p300 = pneg %p171
      %p301 = pneg %p168
      %p302 = pneg %p192
      %p303 = pneg %p189
      %p304 = pneg %p218
      %p305 = pneg %p215
      %p306 = scmp.lt.s32.totalorder %s19, 1
      %s307 = scalar_select %p306, %s19, 1
      %s308 = smul.addr %s307, 8
      %s309 = smul.addr %s308, 8
      %s310 = scalar_lea.vmem %s8, %s309
      %p311 = scmp.lt.s32.totalorder %s19, 1
      %s312 = scalar_select %p311, %s19, 1
      %s313 = smul.addr %s312, 24
      %s314 = smul.addr %s313, 4
      %s315 = scalar_lea.vmem %s0, %s314
      %p316 = scmp.lt.s32.totalorder %s19, 1
      %s317 = scalar_select %p316, %s19, 1
      %s318 = smul.addr %s317, 8
      %s319 = smul.addr %s318, 8
      %s320 = scalar_lea.vmem %s3, %s319
      %p321 = scmp.lt.s32.totalorder %s19, 1
      %s322 = scalar_select %p321, %s19, 1
      %s323 = smul.addr %s322, 8
      %s324 = smul.addr %s323, 8
      %s325 = scalar_lea.vmem %s8, %s324
      %v327 = vld [vmem:[%s1] sm:$0xff]
      %v328 = vld [vmem:[%s1 + $0x8] sm:$0xff]
      %v329 = vld [vmem:[%s1 + $0x10] sm:$0xff]
      %v330 = vld [vmem:[%s1 + $0x18] sm:$0xff]
      %v331 = vld [vmem:[%s1 + $0x20] sm:$0xff]
      %v332 = vld [vmem:[%s1 + $0x28] sm:$0xff]
      %v333 = vld [vmem:[%s1 + $0x30] sm:$0xff]
      %v334 = vld [vmem:[%s1 + $0x38] sm:$0xff]
      %v335 = vld [vmem:[%s315] sm:$0xf]
      %v336 = vld [vmem:[%s315 + $0x4] sm:$0xf]
      %v337 = vld [vmem:[%s315 + $0x8] sm:$0xf]
      %v338 = vld [vmem:[%s315 + $0xc] sm:$0xf]
      %v339 = vld [vmem:[%s315 + $0x10] sm:$0xf]
      %v340 = vld [vmem:[%s315 + $0x14] sm:$0xf]
      %v341 = vld [vmem:[%s315 + $0x18] sm:$0xf]
      %v342 = vld [vmem:[%s315 + $0x1c] sm:$0xf]
      %v343 = vld [vmem:[%s315 + $0x20] sm:$0xf]
      %v344 = vld [vmem:[%s315 + $0x24] sm:$0xf]
      %v345 = vld [vmem:[%s315 + $0x28] sm:$0xf]
      %v346 = vld [vmem:[%s315 + $0x2c] sm:$0xf]
      %v347 = vld [vmem:[%s315 + $0x30] sm:$0xf]
      %v348 = vld [vmem:[%s315 + $0x34] sm:$0xf]
      %v349 = vld [vmem:[%s315 + $0x38] sm:$0xf]
      %v350 = vld [vmem:[%s315 + $0x3c] sm:$0xf]
      %v351 = vld [vmem:[%s315 + $0x40] sm:$0xf]
      %v352 = vld [vmem:[%s315 + $0x44] sm:$0xf]
      %v353 = vld [vmem:[%s315 + $0x48] sm:$0xf]
      %v354 = vld [vmem:[%s315 + $0x4c] sm:$0xf]
      %v355 = vld [vmem:[%s315 + $0x50] sm:$0xf]
      %v356 = vld [vmem:[%s315 + $0x54] sm:$0xf]
      %v357 = vld [vmem:[%s315 + $0x58] sm:$0xf]
      %v358 = vld [vmem:[%s315 + $0x5c] sm:$0xf]
      %s359 = scalar_lea.vmem %s1, 64
      %v360 = vld [vmem:[%s359] sm:$0xff]
      %v361 = vld [vmem:[%s359 + $0x8] sm:$0xff]
      %v362 = vld [vmem:[%s359 + $0x10] sm:$0xff]
      %v363 = vld [vmem:[%s359 + $0x18] sm:$0xff]
      %v364 = vld [vmem:[%s359 + $0x20] sm:$0xff]
      %v365 = vld [vmem:[%s359 + $0x28] sm:$0xff]
      %v366 = vld [vmem:[%s359 + $0x30] sm:$0xff]
      %v367 = vld [vmem:[%s359 + $0x38] sm:$0xff]
      %v376 = vunpack.c.l.b16 %v360
      %v377 = vunpack.c.h.b16 %v360
      %v378 = vunpack.c.l.b16 %v361
      %v379 = vunpack.c.h.b16 %v361
      %v380 = vunpack.c.l.b16 %v362
      %v381 = vunpack.c.h.b16 %v362
      %v382 = vunpack.c.l.b16 %v363
      %v383 = vunpack.c.h.b16 %v363
      %v384 = vunpack.c.l.b16 %v364
      %v385 = vunpack.c.h.b16 %v364
      %v386 = vunpack.c.l.b16 %v365
      %v387 = vunpack.c.h.b16 %v365
      %v388 = vunpack.c.l.b16 %v366
      %v389 = vunpack.c.h.b16 %v366
      %v390 = vunpack.c.l.b16 %v367
      %v391 = vunpack.c.h.b16 %v367
      %v392 = vpack.c.b16 %v378, %v376
      %v393 = vpack.c.b16 %v379, %v377
      %v394 = vpack.c.b16 %v382, %v380
      %v395 = vpack.c.b16 %v383, %v381
      %v396 = vpack.c.b16 %v386, %v384
      %v397 = vpack.c.b16 %v387, %v385
      %v398 = vpack.c.b16 %v390, %v388
      %v399 = vpack.c.b16 %v391, %v389
      %v428 = vunpack.c.l.b16 %v335
      %v429 = vunpack.c.l.b16 %v336
      %v430 = vunpack.c.l.b16 %v337
      %v431 = vunpack.c.l.b16 %v338
      %v432 = vunpack.c.l.b16 %v339
      %v433 = vunpack.c.l.b16 %v340
      %v434 = vunpack.c.l.b16 %v341
      %v435 = vunpack.c.l.b16 %v342
      %v436 = vunpack.c.l.b16 %v343
      %v437 = vunpack.c.l.b16 %v344
      %v438 = vunpack.c.l.b16 %v345
      %v439 = vunpack.c.l.b16 %v346
      %v440 = vunpack.c.l.b16 %v347
      %v441 = vunpack.c.l.b16 %v348
      %v442 = vunpack.c.l.b16 %v349
      %v443 = vunpack.c.l.b16 %v350
      %v444 = vunpack.c.l.b16 %v351
      %v445 = vunpack.c.l.b16 %v352
      %v446 = vunpack.c.l.b16 %v353
      %v447 = vunpack.c.l.b16 %v354
      %v448 = vunpack.c.l.b16 %v355
      %v449 = vunpack.c.l.b16 %v356
      %v450 = vunpack.c.l.b16 %v357
      %v451 = vunpack.c.l.b16 %v358
      %v452 = vpack.c.b16 %v429, %v428
      %v453 = vpack.c.b16 %v431, %v430
      %v454 = vpack.c.b16 %v433, %v432
      %v455 = vpack.c.b16 %v435, %v434
      %v456 = vpack.c.b16 %v437, %v436
      %v457 = vpack.c.b16 %v439, %v438
      %v458 = vpack.c.b16 %v441, %v440
      %v459 = vpack.c.b16 %v443, %v442
      %v460 = vpack.c.b16 %v445, %v444
      %v461 = vpack.c.b16 %v447, %v446
      %v462 = vpack.c.b16 %v449, %v448
      %v463 = vpack.c.b16 %v451, %v450
      %464 = vrot.lane.b32.xlu0 %v452, 124
      %v465 = vpop.permute.xlu0 %464
      %466 = vrot.lane.b32.xlu0 %v453, 124
      %v467 = vpop.permute.xlu0 %466
      %468 = vrot.lane.b32.xlu0 %v454, 124
      %v469 = vpop.permute.xlu0 %468
      %470 = vrot.lane.b32.xlu0 %v455, 124
      %v471 = vpop.permute.xlu0 %470
      %472 = vrot.lane.b32.xlu0 %v456, 124
      %v473 = vpop.permute.xlu0 %472
      %474 = vrot.lane.b32.xlu0 %v457, 124
      %v475 = vpop.permute.xlu0 %474
      %476 = vrot.lane.b32.xlu0 %v458, 124
      %v477 = vpop.permute.xlu0 %476
      %478 = vrot.lane.b32.xlu0 %v459, 124
      %v479 = vpop.permute.xlu0 %478
      %480 = vrot.lane.b32.xlu0 %v460, 124
      %v481 = vpop.permute.xlu0 %480
      %482 = vrot.lane.b32.xlu0 %v461, 124
      %v483 = vpop.permute.xlu0 %482
      %484 = vrot.lane.b32.xlu0 %v462, 124
      %v485 = vpop.permute.xlu0 %484
      %486 = vrot.lane.b32.xlu0 %v463, 124
      %v487 = vpop.permute.xlu0 %486
      %vm500 = vcmask 523264
      %v502 = vsel %vm500, %v393, 0
      %v505 = vsel %vm500, %v395, 0
      %v508 = vsel %vm500, %v397, 0
      %v511 = vsel %vm500, %v399, 0
      %513 = vmatprep.subr.bf16.mxu0 0
      %514 = vmatpush1.bf16.msra.mxu0 %v465
      %515 = vmatprep.subr.bf16.mxu0 0
      %516 = vmatpush1.bf16.msra.mxu0 %v467
      %517 = vmatprep.subr.bf16.mxu0 0
      %518 = vmatpush1.bf16.msra.mxu0 %v469
      %519 = vmatprep.subr.bf16.mxu0 0
      %520 = vmatpush1.bf16.msra.mxu0 %v471
      %521 = vmatprep.subr.bf16.mxu0 0
      %522 = vmatpush1.bf16.msra.mxu0 %v473
      %523 = vmatprep.subr.bf16.mxu0 0
      %524 = vmatpush1.bf16.msra.mxu0 %v475
      %525 = vmatprep.subr.bf16.mxu0 0
      %526 = vmatpush1.bf16.msra.mxu0 %v477
      %527 = vmatprep.subr.bf16.mxu0 0
      %528 = vmatpush1.bf16.msra.mxu0 %v479
      %529 = vmatprep.subr.bf16.mxu0 0
      %530 = vmatpush1.bf16.msra.mxu0 %v481
      %531 = vmatprep.subr.bf16.mxu0 0
      %532 = vmatpush1.bf16.msra.mxu0 %v483
      %533 = vmatprep.subr.bf16.mxu0 0
      %534 = vmatpush1.bf16.msra.mxu0 %v485
      %535 = vmatprep.subr.bf16.mxu0 0
      %536 = vmatpush1.bf16.msra.mxu0 %v487
      %537 = vmatprep.subr.bf16.mxu0 0
      %538 = vmatpush1.bf16.msra.mxu0 0
      %539 = vmatprep.subr.bf16.mxu0 0
      %540 = vmatpush1.bf16.msra.mxu0 0
      %541 = vmatprep.subr.bf16.mxu0 0
      %542 = vmatpush1.bf16.msra.mxu0 0
      %543 = vmatprep.subr.bf16.mxu0 0
      %544 = vmatpush1.bf16.msra.mxu0 0
      %545 = vmatprep.mubr.bf16.mxu0 %v502
      %546 = vmatmul.mubr.bf16.gmra.mrb[0].mxu0 %v392
      %v547 = vpop.f32.mrb[0].mxu0
      %v548 = vadd.f32 0.0, %v547
      %v549 = vpop.f32.mrb[0].mxu0
      %v550 = vpop.f32.mrb[0].mxu0
      %v551 = vadd.f32 0.0, %v550
      %v552 = vpop.f32.mrb[0].mxu0
      %553 = vmatprep.mubr.bf16.mxu0 %v505
      %554 = vmatmul.mubr.bf16.gmra.mrb[0].mxu0 %v394
      %v555 = vpop.f32.mrb[0].mxu0
      %v556 = vadd.f32 0.0, %v555
      %v557 = vpop.f32.mrb[0].mxu0
      %v558 = vpop.f32.mrb[0].mxu0
      %v559 = vadd.f32 0.0, %v558
      %v560 = vpop.f32.mrb[0].mxu0
      %561 = vmatprep.mubr.bf16.mxu0 %v508
      %562 = vmatmul.mubr.bf16.gmra.mrb[0].mxu0 %v396
      %v563 = vpop.f32.mrb[0].mxu0
      %v564 = vadd.f32 0.0, %v563
      %v565 = vpop.f32.mrb[0].mxu0
      %v566 = vpop.f32.mrb[0].mxu0
      %v567 = vadd.f32 0.0, %v566
      %v568 = vpop.f32.mrb[0].mxu0
      %569 = vmatprep.mubr.bf16.mxu0 %v511
      %570 = vmatmul.mubr.bf16.gmra.mrb[0].mxu0 %v398
      %v571 = vpop.f32.mrb[0].mxu0
      %v572 = vadd.f32 0.0, %v571
      %v573 = vpop.f32.mrb[0].mxu0
      %v574 = vpop.f32.mrb[0].mxu0
      %v575 = vadd.f32 0.0, %v574
      %v576 = vpop.f32.mrb[0].mxu0
      %577 = vdwg.mxu0
      %v586 = vunpack.c.l.b16 %v327
      %v587 = vunpack.c.h.b16 %v327
      %v588 = vunpack.c.l.b16 %v328
      %v589 = vunpack.c.h.b16 %v328
      %v590 = vunpack.c.l.b16 %v329
      %v591 = vunpack.c.h.b16 %v329
      %v592 = vunpack.c.l.b16 %v330
      %v593 = vunpack.c.h.b16 %v330
      %v594 = vunpack.c.l.b16 %v331
      %v595 = vunpack.c.h.b16 %v331
      %v596 = vunpack.c.l.b16 %v332
      %v597 = vunpack.c.h.b16 %v332
      %v598 = vunpack.c.l.b16 %v333
      %v599 = vunpack.c.h.b16 %v333
      %v600 = vunpack.c.l.b16 %v334
      %v601 = vunpack.c.h.b16 %v334
      %v602 = vpack.c.b16 %v588, %v586
      %v603 = vpack.c.b16 %v589, %v587
      %v604 = vpack.c.b16 %v592, %v590
      %v605 = vpack.c.b16 %v593, %v591
      %v606 = vpack.c.b16 %v596, %v594
      %v607 = vpack.c.b16 %v597, %v595
      %v608 = vpack.c.b16 %v600, %v598
      %v609 = vpack.c.b16 %v601, %v599
      %v627 = vsel %vm500, %v603, 0
      %v630 = vsel %vm500, %v605, 0
      %v633 = vsel %vm500, %v607, 0
      %v636 = vsel %vm500, %v609, 0
      %638 = vmatprep.subr.bf16.mxu0 0
      %639 = vmatpush1.bf16.msra.mxu0 %v452
      %640 = vmatprep.subr.bf16.mxu0 0
      %641 = vmatpush1.bf16.msra.mxu0 %v453
      %642 = vmatprep.subr.bf16.mxu0 0
      %643 = vmatpush1.bf16.msra.mxu0 %v454
      %644 = vmatprep.subr.bf16.mxu0 0
      %645 = vmatpush1.bf16.msra.mxu0 %v455
      %646 = vmatprep.subr.bf16.mxu0 0
      %647 = vmatpush1.bf16.msra.mxu0 %v456
      %648 = vmatprep.subr.bf16.mxu0 0
      %649 = vmatpush1.bf16.msra.mxu0 %v457
      %650 = vmatprep.subr.bf16.mxu0 0
      %651 = vmatpush1.bf16.msra.mxu0 %v458
      %652 = vmatprep.subr.bf16.mxu0 0
      %653 = vmatpush1.bf16.msra.mxu0 %v459
      %654 = vmatprep.subr.bf16.mxu0 0
      %655 = vmatpush1.bf16.msra.mxu0 %v460
      %656 = vmatprep.subr.bf16.mxu0 0
      %657 = vmatpush1.bf16.msra.mxu0 %v461
      %658 = vmatprep.subr.bf16.mxu0 0
      %659 = vmatpush1.bf16.msra.mxu0 %v462
      %660 = vmatprep.subr.bf16.mxu0 0
      %661 = vmatpush1.bf16.msra.mxu0 %v463
      %662 = vmatprep.subr.bf16.mxu0 0
      %663 = vmatpush1.bf16.msra.mxu0 0
      %664 = vmatprep.subr.bf16.mxu0 0
      %665 = vmatpush1.bf16.msra.mxu0 0
      %666 = vmatprep.subr.bf16.mxu0 0
      %667 = vmatpush1.bf16.msra.mxu0 0
      %668 = vmatprep.subr.bf16.mxu0 0
      %669 = vmatpush1.bf16.msra.mxu0 0
      %670 = vmatprep.mubr.bf16.mxu0 %v627
      %671 = vmatmul.mubr.bf16.gmra.mrb[0].mxu0 %v602
      %v672 = vpop.f32.mrb[0].mxu0
      %v673 = vadd.f32 %v548, %v672
      %v674 = vpop.f32.mrb[0].mxu0
      %v675 = vpop.f32.mrb[0].mxu0
      %v676 = vadd.f32 %v551, %v675
      %v677 = vpop.f32.mrb[0].mxu0
      %678 = vmatprep.mubr.bf16.mxu0 %v630
      %679 = vmatmul.mubr.bf16.gmra.mrb[0].mxu0 %v604
      %v680 = vpop.f32.mrb[0].mxu0
      %v681 = vadd.f32 %v556, %v680
      %v682 = vpop.f32.mrb[0].mxu0
      %v683 = vpop.f32.mrb[0].mxu0
      %v684 = vadd.f32 %v559, %v683
      %v685 = vpop.f32.mrb[0].mxu0
      %686 = vmatprep.mubr.bf16.mxu0 %v633
      %687 = vmatmul.mubr.bf16.gmra.mrb[0].mxu0 %v606
      %v688 = vpop.f32.mrb[0].mxu0
      %v689 = vadd.f32 %v564, %v688
      %v690 = vpop.f32.mrb[0].mxu0
      %v691 = vpop.f32.mrb[0].mxu0
      %v692 = vadd.f32 %v567, %v691
      %v693 = vpop.f32.mrb[0].mxu0
      %694 = vmatprep.mubr.bf16.mxu0 %v636
      %695 = vmatmul.mubr.bf16.gmra.mrb[0].mxu0 %v608
      %v696 = vpop.f32.mrb[0].mxu0
      %v697 = vadd.f32 %v572, %v696
      %v698 = vpop.f32.mrb[0].mxu0
      %v699 = vpop.f32.mrb[0].mxu0
      %v700 = vadd.f32 %v575, %v699
      %v701 = vpop.f32.mrb[0].mxu0
      %702 = vdwg.mxu0
      %s703 = scalar_lea.vmem %s1, 128
      %v704 = vld [vmem:[%s703] sm:$0xff]
      %v705 = vld [vmem:[%s703 + $0x8] sm:$0xff]
      %v706 = vld [vmem:[%s703 + $0x10] sm:$0xff]
      %v707 = vld [vmem:[%s703 + $0x18] sm:$0xff]
      %v708 = vld [vmem:[%s703 + $0x20] sm:$0xff]
      %v709 = vld [vmem:[%s703 + $0x28] sm:$0xff]
      %v710 = vld [vmem:[%s703 + $0x30] sm:$0xff]
      %v711 = vld [vmem:[%s703 + $0x38] sm:$0xff]
      %v720 = vunpack.c.l.b16 %v704
      %v721 = vunpack.c.h.b16 %v704
      %v722 = vunpack.c.l.b16 %v705
      %v723 = vunpack.c.h.b16 %v705
      %v724 = vunpack.c.l.b16 %v706
      %v725 = vunpack.c.h.b16 %v706
      %v726 = vunpack.c.l.b16 %v707
      %v727 = vunpack.c.h.b16 %v707
      %v728 = vunpack.c.l.b16 %v708
      %v729 = vunpack.c.h.b16 %v708
      %v730 = vunpack.c.l.b16 %v709
      %v731 = vunpack.c.h.b16 %v709
      %v732 = vunpack.c.l.b16 %v710
      %v733 = vunpack.c.h.b16 %v710
      %v734 = vunpack.c.l.b16 %v711
      %v735 = vunpack.c.h.b16 %v711
      %v736 = vpack.c.b16 %v722, %v720
      %v737 = vpack.c.b16 %v723, %v721
      %v738 = vpack.c.b16 %v726, %v724
      %v739 = vpack.c.b16 %v727, %v725
      %v740 = vpack.c.b16 %v730, %v728
      %v741 = vpack.c.b16 %v731, %v729
      %v742 = vpack.c.b16 %v734, %v732
      %v743 = vpack.c.b16 %v735, %v733
      %748 = vrot.lane.b32.xlu0 %v452, 120
      %v749 = vpop.permute.xlu0 %748
      %750 = vrot.lane.b32.xlu0 %v453, 120
      %v751 = vpop.permute.xlu0 %750
      %752 = vrot.lane.b32.xlu0 %v454, 120
      %v753 = vpop.permute.xlu0 %752
      %754 = vrot.lane.b32.xlu0 %v455, 120
      %v755 = vpop.permute.xlu0 %754
      %756 = vrot.lane.b32.xlu0 %v456, 120
      %v757 = vpop.permute.xlu0 %756
      %758 = vrot.lane.b32.xlu0 %v457, 120
      %v759 = vpop.permute.xlu0 %758
      %760 = vrot.lane.b32.xlu0 %v458, 120
      %v761 = vpop.permute.xlu0 %760
      %762 = vrot.lane.b32.xlu0 %v459, 120
      %v763 = vpop.permute.xlu0 %762
      %764 = vrot.lane.b32.xlu0 %v460, 120
      %v765 = vpop.permute.xlu0 %764
      %766 = vrot.lane.b32.xlu0 %v461, 120
      %v767 = vpop.permute.xlu0 %766
      %768 = vrot.lane.b32.xlu0 %v462, 120
      %v769 = vpop.permute.xlu0 %768
      %770 = vrot.lane.b32.xlu0 %v463, 120
      %v771 = vpop.permute.xlu0 %770
      %v785 = vsel %vm500, %v737, 0
      %v788 = vsel %vm500, %v739, 0
      %v791 = vsel %vm500, %v741, 0
      %v794 = vsel %vm500, %v743, 0
      %796 = vmatprep.subr.bf16.mxu0 0
      %797 = vmatpush1.bf16.msra.mxu0 %v749
      %798 = vmatprep.subr.bf16.mxu0 0
      %799 = vmatpush1.bf16.msra.mxu0 %v751
      %800 = vmatprep.subr.bf16.mxu0 0
      %801 = vmatpush1.bf16.msra.mxu0 %v753
      %802 = vmatprep.subr.bf16.mxu0 0
      %803 = vmatpush1.bf16.msra.mxu0 %v755
      %804 = vmatprep.subr.bf16.mxu0 0
      %805 = vmatpush1.bf16.msra.mxu0 %v757
      %806 = vmatprep.subr.bf16.mxu0 0
      %807 = vmatpush1.bf16.msra.mxu0 %v759
      %808 = vmatprep.subr.bf16.mxu0 0
      %809 = vmatpush1.bf16.msra.mxu0 %v761
      %810 = vmatprep.subr.bf16.mxu0 0
      %811 = vmatpush1.bf16.msra.mxu0 %v763
      %812 = vmatprep.subr.bf16.mxu0 0
      %813 = vmatpush1.bf16.msra.mxu0 %v765
      %814 = vmatprep.subr.bf16.mxu0 0
      %815 = vmatpush1.bf16.msra.mxu0 %v767
      %816 = vmatprep.subr.bf16.mxu0 0
      %817 = vmatpush1.bf16.msra.mxu0 %v769
      %818 = vmatprep.subr.bf16.mxu0 0
      %819 = vmatpush1.bf16.msra.mxu0 %v771
      %820 = vmatprep.subr.bf16.mxu0 0
      %821 = vmatpush1.bf16.msra.mxu0 0
      %822 = vmatprep.subr.bf16.mxu0 0
      %823 = vmatpush1.bf16.msra.mxu0 0
      %824 = vmatprep.subr.bf16.mxu0 0
      %825 = vmatpush1.bf16.msra.mxu0 0
      %826 = vmatprep.subr.bf16.mxu0 0
      %827 = vmatpush1.bf16.msra.mxu0 0
      %828 = vmatprep.mubr.bf16.mxu0 %v785
      %829 = vmatmul.mubr.bf16.gmra.mrb[0].mxu0 %v736
      %v830 = vpop.f32.mrb[0].mxu0
      %v831 = vadd.f32 0.0, %v830
      %v832 = vpop.f32.mrb[0].mxu0
      %v833 = vpop.f32.mrb[0].mxu0
      %v834 = vadd.f32 0.0, %v833
      %v835 = vpop.f32.mrb[0].mxu0
      %836 = vmatprep.mubr.bf16.mxu0 %v788
      %837 = vmatmul.mubr.bf16.gmra.mrb[0].mxu0 %v738
      %v838 = vpop.f32.mrb[0].mxu0
      %v839 = vadd.f32 0.0, %v838
      %v840 = vpop.f32.mrb[0].mxu0
      %v841 = vpop.f32.mrb[0].mxu0
      %v842 = vadd.f32 0.0, %v841
      %v843 = vpop.f32.mrb[0].mxu0
      %844 = vmatprep.mubr.bf16.mxu0 %v791
      %845 = vmatmul.mubr.bf16.gmra.mrb[0].mxu0 %v740
      %v846 = vpop.f32.mrb[0].mxu0
      %v847 = vadd.f32 0.0, %v846
      %v848 = vpop.f32.mrb[0].mxu0
      %v849 = vpop.f32.mrb[0].mxu0
      %v850 = vadd.f32 0.0, %v849
      %v851 = vpop.f32.mrb[0].mxu0
      %852 = vmatprep.mubr.bf16.mxu0 %v794
      %853 = vmatmul.mubr.bf16.gmra.mrb[0].mxu0 %v742
      %v854 = vpop.f32.mrb[0].mxu0
      %v855 = vadd.f32 0.0, %v854
      %v856 = vpop.f32.mrb[0].mxu0
      %v857 = vpop.f32.mrb[0].mxu0
      %v858 = vadd.f32 0.0, %v857
      %v859 = vpop.f32.mrb[0].mxu0
      %860 = vdwg.mxu0
      %v861 = vadd.f32 %v673, %v831
      %v862 = vadd.f32 %v676, %v834
      %v863 = vadd.f32 %v681, %v839
      %v864 = vadd.f32 %v684, %v842
      %v865 = vadd.f32 %v689, %v847
      %v866 = vadd.f32 %v692, %v850
      %v867 = vadd.f32 %v697, %v855
      %v868 = vadd.f32 %v700, %v858
      %v869 = vld [vmem:[%s2] sm:$0xff]
      %v870 = vld [vmem:[%s2 + $0x8] sm:$0xff]
      %v871 = vld [vmem:[%s2 + $0x10] sm:$0xff]
      %v872 = vld [vmem:[%s2 + $0x18] sm:$0xff]
      %v873 = vld [vmem:[%s2 + $0x20] sm:$0xff]
      %v874 = vld [vmem:[%s2 + $0x28] sm:$0xff]
      %v875 = vld [vmem:[%s2 + $0x30] sm:$0xff]
      %v876 = vld [vmem:[%s2 + $0x38] sm:$0xff]
      %878 = vset.pattern.permute.xlu0 0
      %879 = vperm.xlu0 %878, %v869
      %v880 = vpop.permute.xlu0 %879
      %883 = vset.pattern.permute.xlu0 0
      %884 = vperm.xlu0 %883, %v870
      %v885 = vpop.permute.xlu0 %884
      %888 = vset.pattern.permute.xlu0 0
      %889 = vperm.xlu0 %888, %v871
      %v890 = vpop.permute.xlu0 %889
      %893 = vset.pattern.permute.xlu0 0
      %894 = vperm.xlu0 %893, %v872
      %v895 = vpop.permute.xlu0 %894
      %898 = vset.pattern.permute.xlu0 0
      %899 = vperm.xlu0 %898, %v873
      %v900 = vpop.permute.xlu0 %899
      %903 = vset.pattern.permute.xlu0 0
      %904 = vperm.xlu0 %903, %v874
      %v905 = vpop.permute.xlu0 %904
      %908 = vset.pattern.permute.xlu0 0
      %909 = vperm.xlu0 %908, %v875
      %v910 = vpop.permute.xlu0 %909
      %913 = vset.pattern.permute.xlu0 0
      %914 = vperm.xlu0 %913, %v876
      %v915 = vpop.permute.xlu0 %914
      %v917 = vadd.f32 %v861, %v880
      %v918 = vadd.f32 %v862, %v885
      %v919 = vadd.f32 %v863, %v890
      %v920 = vadd.f32 %v864, %v895
      %v921 = vadd.f32 %v865, %v900
      %v922 = vadd.f32 %v866, %v905
      %v923 = vadd.f32 %v867, %v910
      %v924 = vadd.f32 %v868, %v915
      %vm925 = vcmask 818176
      %v926 = vsel %vm925, %v917, 0.0
      %927 = vadd.xlane.f32.xlu0 %v926
      %v928 = vpop.xlane.xlu0 %927
      %v929 = vsel %vm925, %v918, 0.0
      %930 = vadd.xlane.f32.xlu0 %v929
      %v931 = vpop.xlane.xlu0 %930
      %v932 = vsel %vm925, %v919, 0.0
      %933 = vadd.xlane.f32.xlu0 %v932
      %v934 = vpop.xlane.xlu0 %933
      %v935 = vsel %vm925, %v920, 0.0
      %936 = vadd.xlane.f32.xlu0 %v935
      %v937 = vpop.xlane.xlu0 %936
      %v938 = vsel %vm925, %v921, 0.0
      %939 = vadd.xlane.f32.xlu0 %v938
      %v940 = vpop.xlane.xlu0 %939
      %v941 = vsel %vm925, %v922, 0.0
      %942 = vadd.xlane.f32.xlu0 %v941
      %v943 = vpop.xlane.xlu0 %942
      %v944 = vsel %vm925, %v923, 0.0
      %945 = vadd.xlane.f32.xlu0 %v944
      %v946 = vpop.xlane.xlu0 %945
      %v947 = vsel %vm925, %v924, 0.0
      %948 = vadd.xlane.f32.xlu0 %v947
      %v949 = vpop.xlane.xlu0 %948
      %v950 = vmul.f32 %v928, 0.01
      %v951 = vmul.f32 %v931, 0.01
      %v952 = vmul.f32 %v934, 0.01
      %v953 = vmul.f32 %v937, 0.01
      %v954 = vmul.f32 %v940, 0.01
      %v955 = vmul.f32 %v943, 0.01
      %v956 = vmul.f32 %v946, 0.01
      %v957 = vmul.f32 %v949, 0.01
      %v958 = vld [vmem:[%s4] sm:$0xff]
      %v959 = vld [vmem:[%s4 + $0x8] sm:$0xff]
      %v960 = vld [vmem:[%s5] sm:$0xff]
      %v961 = vld [vmem:[%s5 + $0x8] sm:$0xff]
      %v963 = vsel %vm500, %v958, 0
      %v966 = vsel %vm500, %v959, 0
      %968 = vmatprep.subr.mxu0 0.0
      %969 = vmatpush1.msra.mxu0 %v950
      %970 = vmatprep.subr.mxu0 0.0
      %971 = vmatpush1.msra.mxu0 %v951
      %972 = vmatprep.subr.mxu0 0.0
      %973 = vmatpush1.msra.mxu0 %v952
      %974 = vmatprep.subr.mxu0 0.0
      %975 = vmatpush1.msra.mxu0 %v953
      %976 = vmatprep.subr.mxu0 0.0
      %977 = vmatpush1.msra.mxu0 %v954
      %978 = vmatprep.subr.mxu0 0.0
      %979 = vmatpush1.msra.mxu0 %v955
      %980 = vmatprep.subr.mxu0 0.0
      %981 = vmatpush1.msra.mxu0 %v956
      %982 = vmatprep.subr.mxu0 0.0
      %983 = vmatpush1.msra.mxu0 %v957
      %984 = vmatprep.subr.mxu0 0.0
      %985 = vmatpush1.msra.mxu0 0.0
      %986 = vmatprep.subr.mxu0 0.0
      %987 = vmatpush1.msra.mxu0 0.0
      %988 = vmatprep.subr.mxu0 0.0
      %989 = vmatpush1.msra.mxu0 0.0
      %990 = vmatprep.subr.mxu0 0.0
      %991 = vmatpush1.msra.mxu0 0.0
      %992 = vmatprep.subr.mxu0 0.0
      %993 = vmatpush1.msra.mxu0 0.0
      %994 = vmatprep.subr.mxu0 0.0
      %995 = vmatpush1.msra.mxu0 0.0
      %996 = vmatprep.subr.mxu0 0.0
      %997 = vmatpush1.msra.mxu0 0.0
      %998 = vmatprep.subr.mxu0 0.0
      %999 = vmatpush1.msra.mxu0 0.0
      %1000 = vmatprep.subr.mxu0 0.0
      %1001 = vmatpush1.msra.mxu0 0.0
      %1002 = vmatprep.subr.mxu0 0.0
      %1003 = vmatpush1.msra.mxu0 0.0
      %1004 = vmatprep.subr.mxu0 0.0
      %1005 = vmatpush1.msra.mxu0 0.0
      %1006 = vmatprep.subr.mxu0 0.0
      %1007 = vmatpush1.msra.mxu0 0.0
      %1008 = vmatprep.subr.mxu0 0.0
      %1009 = vmatpush1.msra.mxu0 0.0
      %1010 = vmatprep.subr.mxu0 0.0
      %1011 = vmatpush1.msra.mxu0 0.0
      %1012 = vmatprep.subr.mxu0 0.0
      %1013 = vmatpush1.msra.mxu0 0.0
      %1014 = vmatprep.subr.mxu0 0.0
      %1015 = vmatpush1.msra.mxu0 0.0
      %1016 = vmatprep.subr.mxu0 0.0
      %1017 = vmatpush1.msra.mxu0 0.0
      %1018 = vmatprep.subr.mxu0 0.0
      %1019 = vmatpush1.msra.mxu0 0.0
      %1020 = vmatprep.subr.mxu0 0.0
      %1021 = vmatpush1.msra.mxu0 0.0
      %1022 = vmatprep.subr.mxu0 0.0
      %1023 = vmatpush1.msra.mxu0 0.0
      %1024 = vmatprep.subr.mxu0 0.0
      %1025 = vmatpush1.msra.mxu0 0.0
      %1026 = vmatprep.subr.mxu0 0.0
      %1027 = vmatpush1.msra.mxu0 0.0
      %1028 = vmatprep.subr.mxu0 0.0
      %1029 = vmatpush1.msra.mxu0 0.0
      %1030 = vmatprep.subr.mxu0 0.0
      %1031 = vmatpush1.msra.mxu0 0.0
      %1032 = vmatprep.mubr.f32.mxu0 0.0
      %1033 = vmatmul.mubr.f32.gmra.mrb[0].mxu0 %v963
      %v1034 = vpop.f32.mrb[0].mxu0
      %v1035 = vadd.f32 %v960, %v1034
      %v1036 = vpop.f32.mrb[0].mxu0
      %1037 = vmatprep.mubr.f32.mxu0 0.0
      %1038 = vmatmul.mubr.f32.gmra.mrb[0].mxu0 %v966
      %v1039 = vpop.f32.mrb[0].mxu0
      %v1040 = vadd.f32 %v961, %v1039
      %v1041 = vpop.f32.mrb[0].mxu0
      %1042 = vdwg.mxu0
      %v1043 = vmax.f32 %v1035, 0.0
      %v1044 = vmax.f32 %v1040, 0.0
      %v1045 = vld [vmem:[%s6] sm:$0xff]
      %v1046 = vld [vmem:[%s6 + $0x8] sm:$0xff]
      %v1047 = vld [vmem:[%s6 + $0x10] sm:$0xff]
      %v1048 = vld [vmem:[%s6 + $0x18] sm:$0xff]
      %v1049 = vld [vmem:[%s6 + $0x20] sm:$0xff]
      %v1050 = vld [vmem:[%s6 + $0x28] sm:$0xff]
      %v1051 = vld [vmem:[%s6 + $0x30] sm:$0xff]
      %v1052 = vld [vmem:[%s6 + $0x38] sm:$0xff]
      %v1053 = vld [vmem:[%s7] sm:$0xff]
      %v1054 = vld [vmem:[%s7 + $0x8] sm:$0xff]
      %v1055 = vld [vmem:[%s7 + $0x10] sm:$0xff]
      %v1056 = vld [vmem:[%s7 + $0x18] sm:$0xff]
      %v1057 = vld [vmem:[%s7 + $0x20] sm:$0xff]
      %v1058 = vld [vmem:[%s7 + $0x28] sm:$0xff]
      %v1059 = vld [vmem:[%s7 + $0x30] sm:$0xff]
      %v1060 = vld [vmem:[%s7 + $0x38] sm:$0xff]
      %vm1061 = vcmask 130048
      %v1063 = vsel %vm1061, %v1045, 0
      %v1066 = vsel %vm1061, %v1046, 0
      %v1069 = vsel %vm1061, %v1047, 0
      %v1072 = vsel %vm1061, %v1048, 0
      %v1075 = vsel %vm1061, %v1049, 0
      %v1078 = vsel %vm1061, %v1050, 0
      %v1081 = vsel %vm1061, %v1051, 0
      %v1084 = vsel %vm1061, %v1052, 0
      %1086 = vmatprep.subr.mxu0 0.0
      %1087 = vmatpush1.msra.mxu0 %v1043
      %1088 = vmatprep.subr.mxu0 0.0
      %1089 = vmatpush1.msra.mxu0 %v1044
      %1090 = vmatprep.subr.mxu0 0.0
      %1091 = vmatpush1.msra.mxu0 0.0
      %1092 = vmatprep.subr.mxu0 0.0
      %1093 = vmatpush1.msra.mxu0 0.0
      %1094 = vmatprep.subr.mxu0 0.0
      %1095 = vmatpush1.msra.mxu0 0.0
      %1096 = vmatprep.subr.mxu0 0.0
      %1097 = vmatpush1.msra.mxu0 0.0
      %1098 = vmatprep.subr.mxu0 0.0
      %1099 = vmatpush1.msra.mxu0 0.0
      %1100 = vmatprep.subr.mxu0 0.0
      %1101 = vmatpush1.msra.mxu0 0.0
      %1102 = vmatprep.subr.mxu0 0.0
      %1103 = vmatpush1.msra.mxu0 0.0
      %1104 = vmatprep.subr.mxu0 0.0
      %1105 = vmatpush1.msra.mxu0 0.0
      %1106 = vmatprep.subr.mxu0 0.0
      %1107 = vmatpush1.msra.mxu0 0.0
      %1108 = vmatprep.subr.mxu0 0.0
      %1109 = vmatpush1.msra.mxu0 0.0
      %1110 = vmatprep.subr.mxu0 0.0
      %1111 = vmatpush1.msra.mxu0 0.0
      %1112 = vmatprep.subr.mxu0 0.0
      %1113 = vmatpush1.msra.mxu0 0.0
      %1114 = vmatprep.subr.mxu0 0.0
      %1115 = vmatpush1.msra.mxu0 0.0
      %1116 = vmatprep.subr.mxu0 0.0
      %1117 = vmatpush1.msra.mxu0 0.0
      %1118 = vmatprep.subr.mxu0 0.0
      %1119 = vmatpush1.msra.mxu0 0.0
      %1120 = vmatprep.subr.mxu0 0.0
      %1121 = vmatpush1.msra.mxu0 0.0
      %1122 = vmatprep.subr.mxu0 0.0
      %1123 = vmatpush1.msra.mxu0 0.0
      %1124 = vmatprep.subr.mxu0 0.0
      %1125 = vmatpush1.msra.mxu0 0.0
      %1126 = vmatprep.subr.mxu0 0.0
      %1127 = vmatpush1.msra.mxu0 0.0
      %1128 = vmatprep.subr.mxu0 0.0
      %1129 = vmatpush1.msra.mxu0 0.0
      %1130 = vmatprep.subr.mxu0 0.0
      %1131 = vmatpush1.msra.mxu0 0.0
      %1132 = vmatprep.subr.mxu0 0.0
      %1133 = vmatpush1.msra.mxu0 0.0
      %1134 = vmatprep.subr.mxu0 0.0
      %1135 = vmatpush1.msra.mxu0 0.0
      %1136 = vmatprep.subr.mxu0 0.0
      %1137 = vmatpush1.msra.mxu0 0.0
      %1138 = vmatprep.subr.mxu0 0.0
      %1139 = vmatpush1.msra.mxu0 0.0
      %1140 = vmatprep.subr.mxu0 0.0
      %1141 = vmatpush1.msra.mxu0 0.0
      %1142 = vmatprep.subr.mxu0 0.0
      %1143 = vmatpush1.msra.mxu0 0.0
      %1144 = vmatprep.subr.mxu0 0.0
      %1145 = vmatpush1.msra.mxu0 0.0
      %1146 = vmatprep.subr.mxu0 0.0
      %1147 = vmatpush1.msra.mxu0 0.0
      %1148 = vmatprep.subr.mxu0 0.0
      %1149 = vmatpush1.msra.mxu0 0.0
      %1150 = vmatprep.mubr.f32.mxu0 0.0
      %1151 = vmatmul.mubr.f32.gmra.mrb[0].mxu0 %v1063
      %v1152 = vpop.f32.mrb[0].mxu0
      %v1153 = vadd.f32 %v1053, %v1152
      %v1154 = vpop.f32.mrb[0].mxu0
      %1155 = vmatprep.mubr.f32.mxu0 0.0
      %1156 = vmatmul.mubr.f32.gmra.mrb[0].mxu0 %v1066
      %v1157 = vpop.f32.mrb[0].mxu0
      %v1158 = vadd.f32 %v1054, %v1157
      %v1159 = vpop.f32.mrb[0].mxu0
      %1160 = vmatprep.mubr.f32.mxu0 0.0
      %1161 = vmatmul.mubr.f32.gmra.mrb[0].mxu0 %v1069
      %v1162 = vpop.f32.mrb[0].mxu0
      %v1163 = vadd.f32 %v1055, %v1162
      %v1164 = vpop.f32.mrb[0].mxu0
      %1165 = vmatprep.mubr.f32.mxu0 0.0
      %1166 = vmatmul.mubr.f32.gmra.mrb[0].mxu0 %v1072
      %v1167 = vpop.f32.mrb[0].mxu0
      %v1168 = vadd.f32 %v1056, %v1167
      %v1169 = vpop.f32.mrb[0].mxu0
      %1170 = vmatprep.mubr.f32.mxu0 0.0
      %1171 = vmatmul.mubr.f32.gmra.mrb[0].mxu0 %v1075
      %v1172 = vpop.f32.mrb[0].mxu0
      %v1173 = vadd.f32 %v1057, %v1172
      %v1174 = vpop.f32.mrb[0].mxu0
      %1175 = vmatprep.mubr.f32.mxu0 0.0
      %1176 = vmatmul.mubr.f32.gmra.mrb[0].mxu0 %v1078
      %v1177 = vpop.f32.mrb[0].mxu0
      %v1178 = vadd.f32 %v1058, %v1177
      %v1179 = vpop.f32.mrb[0].mxu0
      %1180 = vmatprep.mubr.f32.mxu0 0.0
      %1181 = vmatmul.mubr.f32.gmra.mrb[0].mxu0 %v1081
      %v1182 = vpop.f32.mrb[0].mxu0
      %v1183 = vadd.f32 %v1059, %v1182
      %v1184 = vpop.f32.mrb[0].mxu0
      %1185 = vmatprep.mubr.f32.mxu0 0.0
      %1186 = vmatmul.mubr.f32.gmra.mrb[0].mxu0 %v1084
      %v1187 = vpop.f32.mrb[0].mxu0
      %v1188 = vadd.f32 %v1060, %v1187
      %v1189 = vpop.f32.mrb[0].mxu0
      %1190 = vdwg.mxu0
      %v1191 = vxor.u32 %v1153, 2147483648
      %v1192 = vxor.u32 %v1158, 2147483648
      %v1193 = vxor.u32 %v1163, 2147483648
      %v1194 = vxor.u32 %v1168, 2147483648
      %v1195 = vxor.u32 %v1173, 2147483648
      %v1196 = vxor.u32 %v1178, 2147483648
      %v1197 = vxor.u32 %v1183, 2147483648
      %v1198 = vxor.u32 %v1188, 2147483648
      %v1199 = vmul.f32 %v1191, 1.442695
      %v1200 = vpow.pop %v1199
      %v1201 = vmul.f32 %v1192, 1.442695
      %v1202 = vpow.pop %v1201
      %v1203 = vmul.f32 %v1193, 1.442695
      %v1204 = vpow.pop %v1203
      %v1205 = vmul.f32 %v1194, 1.442695
      %v1206 = vpow.pop %v1205
      %v1207 = vmul.f32 %v1195, 1.442695
      %v1208 = vpow.pop %v1207
      %v1209 = vmul.f32 %v1196, 1.442695
      %v1210 = vpow.pop %v1209
      %v1211 = vmul.f32 %v1197, 1.442695
      %v1212 = vpow.pop %v1211
      %v1213 = vmul.f32 %v1198, 1.442695
      %v1214 = vpow.pop %v1213
      %v1215 = vadd.f32 %v1200, 1.0
      %v1216 = vadd.f32 %v1202, 1.0
      %v1217 = vadd.f32 %v1204, 1.0
      %v1218 = vadd.f32 %v1206, 1.0
      %v1219 = vadd.f32 %v1208, 1.0
      %v1220 = vadd.f32 %v1210, 1.0
      %v1221 = vadd.f32 %v1212, 1.0
      %v1222 = vadd.f32 %v1214, 1.0
      %v1223 = vrcp.pop %v1215
      %v1224 = vmul.f32 1.0, %v1223
      %v1225 = vrcp.pop %v1216
      %v1226 = vmul.f32 1.0, %v1225
      %v1227 = vrcp.pop %v1217
      %v1228 = vmul.f32 1.0, %v1227
      %v1229 = vrcp.pop %v1218
      %v1230 = vmul.f32 1.0, %v1229
      %v1231 = vrcp.pop %v1219
      %v1232 = vmul.f32 1.0, %v1231
      %v1233 = vrcp.pop %v1220
      %v1234 = vmul.f32 1.0, %v1233
      %v1235 = vrcp.pop %v1221
      %v1236 = vmul.f32 1.0, %v1235
      %v1237 = vrcp.pop %v1222
      %v1238 = vmul.f32 1.0, %v1237
      %1240 = vset.pattern.permute.xlu0 0
      %1241 = vperm.xlu0 %1240, %v1224
      %v1242 = vpop.permute.xlu0 %1241
      %1245 = vset.pattern.permute.xlu0 0
      %1246 = vperm.xlu0 %1245, %v1226
      %v1247 = vpop.permute.xlu0 %1246
      %1250 = vset.pattern.permute.xlu0 0
      %1251 = vperm.xlu0 %1250, %v1228
      %v1252 = vpop.permute.xlu0 %1251
      %1255 = vset.pattern.permute.xlu0 0
      %1256 = vperm.xlu0 %1255, %v1230
      %v1257 = vpop.permute.xlu0 %1256
      %1260 = vset.pattern.permute.xlu0 0
      %1261 = vperm.xlu0 %1260, %v1232
      %v1262 = vpop.permute.xlu0 %1261
      %1265 = vset.pattern.permute.xlu0 0
      %1266 = vperm.xlu0 %1265, %v1234
      %v1267 = vpop.permute.xlu0 %1266
      %1270 = vset.pattern.permute.xlu0 0
      %1271 = vperm.xlu0 %1270, %v1236
      %v1272 = vpop.permute.xlu0 %1271
      %1275 = vset.pattern.permute.xlu0 0
      %1276 = vperm.xlu0 %1275, %v1238
      %v1277 = vpop.permute.xlu0 %1276
      %v1279 = vmul.f32 %v917, %v1242
      %v1280 = vmul.f32 %v918, %v1247
      %v1281 = vmul.f32 %v919, %v1252
      %v1282 = vmul.f32 %v920, %v1257
      %v1283 = vmul.f32 %v921, %v1262
      %v1284 = vmul.f32 %v922, %v1267
      %v1285 = vmul.f32 %v923, %v1272
      %v1286 = vmul.f32 %v924, %v1277
      %v1287 = vld [vmem:[%s320] sm:$0xff]
      %v1288 = vld [vmem:[%s320 + $0x8] sm:$0xff]
      %v1289 = vld [vmem:[%s320 + $0x10] sm:$0xff]
      %v1290 = vld [vmem:[%s320 + $0x18] sm:$0xff]
      %v1291 = vld [vmem:[%s320 + $0x20] sm:$0xff]
      %v1292 = vld [vmem:[%s320 + $0x28] sm:$0xff]
      %v1293 = vld [vmem:[%s320 + $0x30] sm:$0xff]
      %v1294 = vld [vmem:[%s320 + $0x38] sm:$0xff]
      %v1295 = vadd.f32 %v1279, %v1287
      %v1296 = vadd.f32 %v1280, %v1288
      %v1297 = vadd.f32 %v1281, %v1289
      %v1298 = vadd.f32 %v1282, %v1290
      %v1299 = vadd.f32 %v1283, %v1291
      %v1300 = vadd.f32 %v1284, %v1292
      %v1301 = vadd.f32 %v1285, %v1293
      %v1302 = vadd.f32 %v1286, %v1294
      %1303 = vst.msk [vmem:[%s325] sm:$0xff] %vm925, %v1295
      %1304 = vst.msk [vmem:[%s325 + $0x8] sm:$0xff] %vm925, %v1296
      %1305 = vst.msk [vmem:[%s325 + $0x10] sm:$0xff] %vm925, %v1297
      %1306 = vst.msk [vmem:[%s325 + $0x18] sm:$0xff] %vm925, %v1298
      %1307 = vst.msk [vmem:[%s325 + $0x20] sm:$0xff] %vm925, %v1299
      %1308 = vst.msk [vmem:[%s325 + $0x28] sm:$0xff] %vm925, %v1300
      %1309 = vst.msk [vmem:[%s325 + $0x30] sm:$0xff] %vm925, %v1301
      %1310 = vst.msk [vmem:[%s325 + $0x38] sm:$0xff] %vm925, %v1302
      %p1311 = scmp.lt.s32.totalorder %s19, 1
      %s1312 = scalar_select %p1311, %s19, 1
      %s1313 = smul.addr %s1312, 8
      %s1314 = smul.addr %s1313, 8
      %s1315 = scalar_lea.vmem %s8, %s1314
      // Predicated region
      $region53: #{se_rawformer_front.22} parent=51 // pred_check
        %p1316 = pneg %p215
      $region54: #{se_rawformer_front.22} parent=51 // pred_check_branch
        %1318 = sbr.rel (%p1316) target = $region56
      $region55: #{se_rawformer_front.22} parent=51 // pred_region
        _
      $region56: #{se_rawformer_front.22} parent=51 // pred_fallthru
        _
    $region52: #{se_rawformer_front.22} parent=5 // pred_fallthru
      _
    %p1319 = scmp.le.s32.totalorder 2, %s14
    // Predicated region
    $region57: #{se_rawformer_front.22} parent=5 // pred_check
      %p1320 = pneg %p1319
    $region58: #{se_rawformer_front.22} parent=5 // pred_check_branch
      %1322 = sbr.rel (%p1320) target = $region60
    $region59: #{se_rawformer_front.22} parent=5 // pred_region
      %s1323 = ssub.s32 %s14, 2
      // Predicated region
      $region61: #{se_rawformer_front.22} parent=59 // pred_check
        %p1324 = pneg %p221
      $region62: #{se_rawformer_front.22} parent=59 // pred_check_branch
        %1326 = sbr.rel (%p1324) target = $region64
      $region63: #{se_rawformer_front.22} parent=59 // pred_region
        %p1327 = scmp.lt.s32.totalorder %s20, 1
        %s1328 = scalar_select %p1327, %s20, 1
        %s1329 = smul.addr %s1328, 8
        %s1330 = smul.addr %s1329, 8
        %s1331 = scalar_lea.vmem %s8, %s1330
      $region64: #{se_rawformer_front.22} parent=59 // pred_fallthru
        _
    $region60: #{se_rawformer_front.22} parent=5 // pred_fallthru
      _
  $region6: #{se_rawformer_front.22} parent=0 // loop_footer
    %s18 = sadd.s32 1, %s14
  $region7: #{se_rawformer_front.22} parent=0 // loop_footer_branch
    %13 = sbr.rel target = $region3
  $region8: #{se_rawformer_front.22} parent=0 // loop_exit
    _

// kernel: se_rawformer_front.23
$region0: #{se_rawformer_front.23}
  #allocation0 [shape = 'u32[]', space=smem, size = 0x4, offset = 0x4, fixed_abs, tag = 'smem constant byte address 0x4 - core index']
  #allocation1 [shape = 'u32[144,128]{1,0:T(1,128)}', space=vmem, size = 0x12000, scoped, tag = 'internal scratch']
  %s0 = inlined_call_operand.vmem [shape: bf16[2,192,108], index: 0, kind: input, shape index: {}]
  %s1 = inlined_call_operand.vmem [shape: bf16[2,64,192], index: 1, kind: input, shape index: {}]
  %s2 = inlined_call_operand.vmem [shape: f32[64,1], index: 2, kind: input, shape index: {}]
  %s3 = inlined_call_operand.vmem [shape: f32[2,64,104], index: 3, kind: output, shape index: {}]
  %s4 = sld [smem:[#allocation0]]
  $region45: #{se_rawformer_front.23} parent=0
    _
  %s6 = ssub.s32 1, %s4
  %s7 = scalar_select 0, %s6, %s4
  loop: start=0, step=1, limit=4
  $region2: #{se_rawformer_front.23} parent=0 // loop_pre_header
    _
  $region3: #{se_rawformer_front.23} parent=0 // loop_header
    %s9 = sphi 0, %s13
    %p10 = scmp.ge.s32.totalorder %s9, 4
    %s19 = sphi 0, %s21
    %s22 = sphi 0, %s19
    %s23 = sphi 0, %s22
    %s39 = sphi 0, %s23
    %s43 = sphi 0, %s43
    %s45 = sphi 0, %s43
    %s46 = sphi 0, %s45
    %s60 = sphi 0, %s46
    %s64 = sphi 0, %s64
    %s66 = sphi 0, %s64
    %s67 = sphi 0, %s66
    %s81 = sphi 0, %s67
    %s87 = sphi 0, %s89
    %s90 = sphi 0, %s87
    %s91 = sphi 0, %s90
    %s107 = sphi 0, %s91
  $region4: #{se_rawformer_front.23} parent=0 // loop_header_branch
    %12 = sbr.rel (%p10) target = $region8
  $region5: #{se_rawformer_front.23} parent=0 // loop_body
    %s14 = ssub.s32 %s9, 1
    %s15 = ssub.s32 %s9, 2
    %s16 = sadd.s32 %s9, 1
    %s17 = ssub.s32 %s9, %s16
    %p18 = scmp.eq.s32.totalorder %s17, 0
    %s20 = sadd.s32 %s19, 1
    %s21 = scalar_select %p18, %s19, %s20
    %p24 = pneg %p18
    %p25 = scmp.eq.s32.totalorder %s9, 1
    %p26 = por %p24, %p25
    %p27 = scmp.ne.s32.totalorder %s19, %s22
    %p28 = scmp.eq.s32.totalorder %s9, 0
    %p29 = por %p27, %p28
    %p30 = scmp.ne.s32.totalorder %s19, %s22
    %p31 = scmp.eq.s32.totalorder %s14, 1
    %p32 = por %p30, %p31
    %p33 = scmp.ne.s32.totalorder %s22, %s23
    %p34 = scmp.eq.s32.totalorder %s14, 0
    %p35 = por %p33, %p34
    %p36 = scmp.ne.s32.totalorder %s22, %s23
    %p37 = scmp.eq.s32.totalorder %s15, 1
    %p38 = por %p36, %p37
    %p40 = scmp.ne.s32.totalorder %s23, %s39
    %p41 = scmp.eq.s32.totalorder %s15, 0
    %p42 = por %p40, %p41
    %s44 = sadd.s32 %s43, 1
    %p47 = scmp.eq.s32.totalorder %s9, 1
    %p48 = scmp.ne.s32.totalorder %s43, %s45
    %p49 = scmp.eq.s32.totalorder %s9, 0
    %p50 = por %p48, %p49
    %p51 = scmp.ne.s32.totalorder %s43, %s45
    %p52 = scmp.eq.s32.totalorder %s14, 1
    %p53 = por %p51, %p52
    %p54 = scmp.ne.s32.totalorder %s45, %s46
    %p55 = scmp.eq.s32.totalorder %s14, 0
    %p56 = por %p54, %p55
    %p57 = scmp.ne.s32.totalorder %s45, %s46
    %p58 = scmp.eq.s32.totalorder %s15, 1
    %p59 = por %p57, %p58
    %p61 = scmp.ne.s32.totalorder %s46, %s60
    %p62 = scmp.eq.s32.totalorder %s15, 0
    %p63 = por %p61, %p62
    %s65 = sadd.s32 %s64, 1
    %p68 = scmp.eq.s32.totalorder %s9, 1
    %p69 = scmp.ne.s32.totalorder %s64, %s66
    %p70 = scmp.eq.s32.totalorder %s9, 0
    %p71 = por %p69, %p70
    %p72 = scmp.ne.s32.totalorder %s64, %s66
    %p73 = scmp.eq.s32.totalorder %s14, 1
    %p74 = por %p72, %p73
    %p75 = scmp.ne.s32.totalorder %s66, %s67
    %p76 = scmp.eq.s32.totalorder %s14, 0
    %p77 = por %p75, %p76
    %p78 = scmp.ne.s32.totalorder %s66, %s67
    %p79 = scmp.eq.s32.totalorder %s15, 1
    %p80 = por %p78, %p79
    %p82 = scmp.ne.s32.totalorder %s67, %s81
    %p83 = scmp.eq.s32.totalorder %s15, 0
    %p84 = por %p82, %p83
    %s85 = ssub.s32 %s9, %s16
    %p86 = scmp.eq.s32.totalorder %s85, 0
    %s88 = sadd.s32 %s87, 1
    %s89 = scalar_select %p86, %s87, %s88
    %p92 = pneg %p86
    %p93 = scmp.eq.s32.totalorder %s9, 1
    %p94 = por %p92, %p93
    %p95 = scmp.ne.s32.totalorder %s87, %s90
    %p96 = scmp.eq.s32.totalorder %s9, 0
    %p97 = por %p95, %p96
    %p98 = scmp.ne.s32.totalorder %s87, %s90
    %p99 = scmp.eq.s32.totalorder %s14, 1
    %p100 = por %p98, %p99
    %p101 = scmp.ne.s32.totalorder %s90, %s91
    %p102 = scmp.eq.s32.totalorder %s14, 0
    %p103 = por %p101, %p102
    %p104 = scmp.ne.s32.totalorder %s90, %s91
    %p105 = scmp.eq.s32.totalorder %s15, 1
    %p106 = por %p104, %p105
    %p108 = scmp.ne.s32.totalorder %s91, %s107
    %p109 = scmp.eq.s32.totalorder %s15, 0
    %p110 = por %p108, %p109
    %p111 = scmp.le.s32.totalorder 1, %s9
    %p112 = scmp.lt.s32.totalorder %s9, 3
    %p113 = pnand %p111, %p112
    %p114 = pneg %p113
    // Predicated region
    $region9: #{se_rawformer_front.23} parent=5 // pred_check
      _
    $region10: #{se_rawformer_front.23} parent=5 // pred_check_branch
      %116 = sbr.rel (%p113) target = $region12
    $region11: #{se_rawformer_front.23} parent=5 // pred_region
      %s117 = ssub.s32 %s9, 1
      // Predicated region
      $region13: #{se_rawformer_front.23} parent=11 // pred_check
        %p118 = pneg %p56
      $region14: #{se_rawformer_front.23} parent=11 // pred_check_branch
        %120 = sbr.rel (%p118) target = $region16
      $region15: #{se_rawformer_front.23} parent=11 // pred_region
        _
      $region16: #{se_rawformer_front.23} parent=11 // pred_fallthru
        _
      // Predicated region
      $region17: #{se_rawformer_front.23} parent=11 // pred_check
        %p121 = pneg %p77
      $region18: #{se_rawformer_front.23} parent=11 // pred_check_branch
        %123 = sbr.rel (%p121) target = $region20
      $region19: #{se_rawformer_front.23} parent=11 // pred_region
        _
      $region20: #{se_rawformer_front.23} parent=11 // pred_fallthru
        _
    $region12: #{se_rawformer_front.23} parent=5 // pred_fallthru
      _
    %p124 = scmp.lt.s32.totalorder %s9, 2
    // Predicated region
    $region21: #{se_rawformer_front.23} parent=5 // pred_check
      %p125 = pneg %p124
    $region22: #{se_rawformer_front.23} parent=5 // pred_check_branch
      %127 = sbr.rel (%p125) target = $region24
    $region23: #{se_rawformer_front.23} parent=5 // pred_region
      // Predicated region
      $region25: #{se_rawformer_front.23} parent=23 // pred_check
        %p128 = pneg %p29
      $region26: #{se_rawformer_front.23} parent=23 // pred_check_branch
        %130 = sbr.rel (%p128) target = $region28
      $region27: #{se_rawformer_front.23} parent=23 // pred_region
        %p131 = scmp.lt.s32.totalorder %s9, 1
        %s132 = scalar_select %p131, %s9, 1
        %s133 = smul.addr %s132, 24
        %s134 = smul.addr %s133, 4
        %s135 = scalar_lea.vmem %s0, %s134
      $region28: #{se_rawformer_front.23} parent=23 // pred_fallthru
        _
    $region24: #{se_rawformer_front.23} parent=5 // pred_fallthru
      _
    %p136 = scmp.le.s32.totalorder 1, %s9
    %p137 = scmp.lt.s32.totalorder %s9, 3
    %p138 = pnand %p136, %p137
    %p139 = pneg %p138
    // Predicated region
    $region29: #{se_rawformer_front.23} parent=5 // pred_check
      _
    $region30: #{se_rawformer_front.23} parent=5 // pred_check_branch
      %141 = sbr.rel (%p138) target = $region32
    $region31: #{se_rawformer_front.23} parent=5 // pred_region
      %s142 = ssub.s32 %s9, 1
      %p143 = scmp.lt.s32.totalorder %s14, 1
      %s144 = scalar_select %p143, %s14, 1
      %s145 = smul.addr %s144, 24
      %s146 = smul.addr %s145, 4
      %s147 = scalar_lea.vmem %s0, %s146
      %p148 = pneg %p35
      %p149 = pneg %p32
      %p150 = pneg %p56
      %p151 = pneg %p53
      %p152 = pneg %p77
      %p153 = pneg %p74
      %p154 = pneg %p103
      %p155 = pneg %p100
      %p156 = scmp.lt.s32.totalorder %s14, 1
      %s157 = scalar_select %p156, %s14, 1
      %s158 = smul.addr %s157, 8
      %s159 = smul.addr %s158, 8
      %s160 = scalar_lea.vmem %s3, %s159
      %p161 = scmp.lt.s32.totalorder %s14, 1
      %s162 = scalar_select %p161, %s14, 1
      %s163 = smul.addr %s162, 24
      %s164 = smul.addr %s163, 4
      %s165 = scalar_lea.vmem %s0, %s164
      %p166 = scmp.lt.s32.totalorder %s14, 1
      %s167 = scalar_select %p166, %s14, 1
      %s168 = smul.addr %s167, 8
      %s169 = smul.addr %s168, 8
      %s170 = scalar_lea.vmem %s3, %s169
      %v172 = vld [vmem:[%s1] sm:$0xff]
      %v173 = vld [vmem:[%s1 + $0x8] sm:$0xff]
      %v174 = vld [vmem:[%s1 + $0x10] sm:$0xff]
      %v175 = vld [vmem:[%s1 + $0x18] sm:$0xff]
      %v176 = vld [vmem:[%s1 + $0x20] sm:$0xff]
      %v177 = vld [vmem:[%s1 + $0x28] sm:$0xff]
      %v178 = vld [vmem:[%s1 + $0x30] sm:$0xff]
      %v179 = vld [vmem:[%s1 + $0x38] sm:$0xff]
      %v180 = vld [vmem:[%s165] sm:$0xf]
      %v181 = vld [vmem:[%s165 + $0x4] sm:$0xf]
      %v182 = vld [vmem:[%s165 + $0x8] sm:$0xf]
      %v183 = vld [vmem:[%s165 + $0xc] sm:$0xf]
      %v184 = vld [vmem:[%s165 + $0x10] sm:$0xf]
      %v185 = vld [vmem:[%s165 + $0x14] sm:$0xf]
      %v186 = vld [vmem:[%s165 + $0x18] sm:$0xf]
      %v187 = vld [vmem:[%s165 + $0x1c] sm:$0xf]
      %v188 = vld [vmem:[%s165 + $0x20] sm:$0xf]
      %v189 = vld [vmem:[%s165 + $0x24] sm:$0xf]
      %v190 = vld [vmem:[%s165 + $0x28] sm:$0xf]
      %v191 = vld [vmem:[%s165 + $0x2c] sm:$0xf]
      %v192 = vld [vmem:[%s165 + $0x30] sm:$0xf]
      %v193 = vld [vmem:[%s165 + $0x34] sm:$0xf]
      %v194 = vld [vmem:[%s165 + $0x38] sm:$0xf]
      %v195 = vld [vmem:[%s165 + $0x3c] sm:$0xf]
      %v196 = vld [vmem:[%s165 + $0x40] sm:$0xf]
      %v197 = vld [vmem:[%s165 + $0x44] sm:$0xf]
      %v198 = vld [vmem:[%s165 + $0x48] sm:$0xf]
      %v199 = vld [vmem:[%s165 + $0x4c] sm:$0xf]
      %v200 = vld [vmem:[%s165 + $0x50] sm:$0xf]
      %v201 = vld [vmem:[%s165 + $0x54] sm:$0xf]
      %v202 = vld [vmem:[%s165 + $0x58] sm:$0xf]
      %v203 = vld [vmem:[%s165 + $0x5c] sm:$0xf]
      %s204 = scalar_lea.vmem %s1, 64
      %v205 = vld [vmem:[%s204] sm:$0xff]
      %v206 = vld [vmem:[%s204 + $0x8] sm:$0xff]
      %v207 = vld [vmem:[%s204 + $0x10] sm:$0xff]
      %v208 = vld [vmem:[%s204 + $0x18] sm:$0xff]
      %v209 = vld [vmem:[%s204 + $0x20] sm:$0xff]
      %v210 = vld [vmem:[%s204 + $0x28] sm:$0xff]
      %v211 = vld [vmem:[%s204 + $0x30] sm:$0xff]
      %v212 = vld [vmem:[%s204 + $0x38] sm:$0xff]
      %v221 = vunpack.c.l.b16 %v205
      %v222 = vunpack.c.h.b16 %v205
      %v223 = vunpack.c.l.b16 %v206
      %v224 = vunpack.c.h.b16 %v206
      %v225 = vunpack.c.l.b16 %v207
      %v226 = vunpack.c.h.b16 %v207
      %v227 = vunpack.c.l.b16 %v208
      %v228 = vunpack.c.h.b16 %v208
      %v229 = vunpack.c.l.b16 %v209
      %v230 = vunpack.c.h.b16 %v209
      %v231 = vunpack.c.l.b16 %v210
      %v232 = vunpack.c.h.b16 %v210
      %v233 = vunpack.c.l.b16 %v211
      %v234 = vunpack.c.h.b16 %v211
      %v235 = vunpack.c.l.b16 %v212
      %v236 = vunpack.c.h.b16 %v212
      %v237 = vpack.c.b16 %v223, %v221
      %v238 = vpack.c.b16 %v224, %v222
      %v239 = vpack.c.b16 %v227, %v225
      %v240 = vpack.c.b16 %v228, %v226
      %v241 = vpack.c.b16 %v231, %v229
      %v242 = vpack.c.b16 %v232, %v230
      %v243 = vpack.c.b16 %v235, %v233
      %v244 = vpack.c.b16 %v236, %v234
      %v273 = vunpack.c.l.b16 %v180
      %v274 = vunpack.c.l.b16 %v181
      %v275 = vunpack.c.l.b16 %v182
      %v276 = vunpack.c.l.b16 %v183
      %v277 = vunpack.c.l.b16 %v184
      %v278 = vunpack.c.l.b16 %v185
      %v279 = vunpack.c.l.b16 %v186
      %v280 = vunpack.c.l.b16 %v187
      %v281 = vunpack.c.l.b16 %v188
      %v282 = vunpack.c.l.b16 %v189
      %v283 = vunpack.c.l.b16 %v190
      %v284 = vunpack.c.l.b16 %v191
      %v285 = vunpack.c.l.b16 %v192
      %v286 = vunpack.c.l.b16 %v193
      %v287 = vunpack.c.l.b16 %v194
      %v288 = vunpack.c.l.b16 %v195
      %v289 = vunpack.c.l.b16 %v196
      %v290 = vunpack.c.l.b16 %v197
      %v291 = vunpack.c.l.b16 %v198
      %v292 = vunpack.c.l.b16 %v199
      %v293 = vunpack.c.l.b16 %v200
      %v294 = vunpack.c.l.b16 %v201
      %v295 = vunpack.c.l.b16 %v202
      %v296 = vunpack.c.l.b16 %v203
      %v297 = vpack.c.b16 %v274, %v273
      %v298 = vpack.c.b16 %v276, %v275
      %v299 = vpack.c.b16 %v278, %v277
      %v300 = vpack.c.b16 %v280, %v279
      %v301 = vpack.c.b16 %v282, %v281
      %v302 = vpack.c.b16 %v284, %v283
      %v303 = vpack.c.b16 %v286, %v285
      %v304 = vpack.c.b16 %v288, %v287
      %v305 = vpack.c.b16 %v290, %v289
      %v306 = vpack.c.b16 %v292, %v291
      %v307 = vpack.c.b16 %v294, %v293
      %v308 = vpack.c.b16 %v296, %v295
      %309 = vrot.lane.b32.xlu0 %v297, 124
      %v310 = vpop.permute.xlu0 %309
      %311 = vrot.lane.b32.xlu0 %v298, 124
      %v312 = vpop.permute.xlu0 %311
      %313 = vrot.lane.b32.xlu0 %v299, 124
      %v314 = vpop.permute.xlu0 %313
      %315 = vrot.lane.b32.xlu0 %v300, 124
      %v316 = vpop.permute.xlu0 %315
      %317 = vrot.lane.b32.xlu0 %v301, 124
      %v318 = vpop.permute.xlu0 %317
      %319 = vrot.lane.b32.xlu0 %v302, 124
      %v320 = vpop.permute.xlu0 %319
      %321 = vrot.lane.b32.xlu0 %v303, 124
      %v322 = vpop.permute.xlu0 %321
      %323 = vrot.lane.b32.xlu0 %v304, 124
      %v324 = vpop.permute.xlu0 %323
      %325 = vrot.lane.b32.xlu0 %v305, 124
      %v326 = vpop.permute.xlu0 %325
      %327 = vrot.lane.b32.xlu0 %v306, 124
      %v328 = vpop.permute.xlu0 %327
      %329 = vrot.lane.b32.xlu0 %v307, 124
      %v330 = vpop.permute.xlu0 %329
      %331 = vrot.lane.b32.xlu0 %v308, 124
      %v332 = vpop.permute.xlu0 %331
      %vm345 = vcmask 523264
      %v347 = vsel %vm345, %v238, 0
      %v350 = vsel %vm345, %v240, 0
      %v353 = vsel %vm345, %v242, 0
      %v356 = vsel %vm345, %v244, 0
      %358 = vmatprep.subr.bf16.mxu0 0
      %359 = vmatpush1.bf16.msra.mxu0 %v310
      %360 = vmatprep.subr.bf16.mxu0 0
      %361 = vmatpush1.bf16.msra.mxu0 %v312
      %362 = vmatprep.subr.bf16.mxu0 0
      %363 = vmatpush1.bf16.msra.mxu0 %v314
      %364 = vmatprep.subr.bf16.mxu0 0
      %365 = vmatpush1.bf16.msra.mxu0 %v316
      %366 = vmatprep.subr.bf16.mxu0 0
      %367 = vmatpush1.bf16.msra.mxu0 %v318
      %368 = vmatprep.subr.bf16.mxu0 0
      %369 = vmatpush1.bf16.msra.mxu0 %v320
      %370 = vmatprep.subr.bf16.mxu0 0
      %371 = vmatpush1.bf16.msra.mxu0 %v322
      %372 = vmatprep.subr.bf16.mxu0 0
      %373 = vmatpush1.bf16.msra.mxu0 %v324
      %374 = vmatprep.subr.bf16.mxu0 0
      %375 = vmatpush1.bf16.msra.mxu0 %v326
      %376 = vmatprep.subr.bf16.mxu0 0
      %377 = vmatpush1.bf16.msra.mxu0 %v328
      %378 = vmatprep.subr.bf16.mxu0 0
      %379 = vmatpush1.bf16.msra.mxu0 %v330
      %380 = vmatprep.subr.bf16.mxu0 0
      %381 = vmatpush1.bf16.msra.mxu0 %v332
      %382 = vmatprep.subr.bf16.mxu0 0
      %383 = vmatpush1.bf16.msra.mxu0 0
      %384 = vmatprep.subr.bf16.mxu0 0
      %385 = vmatpush1.bf16.msra.mxu0 0
      %386 = vmatprep.subr.bf16.mxu0 0
      %387 = vmatpush1.bf16.msra.mxu0 0
      %388 = vmatprep.subr.bf16.mxu0 0
      %389 = vmatpush1.bf16.msra.mxu0 0
      %390 = vmatprep.mubr.bf16.mxu0 %v347
      %391 = vmatmul.mubr.bf16.gmra.mrb[0].mxu0 %v237
      %v392 = vpop.f32.mrb[0].mxu0
      %v393 = vadd.f32 0.0, %v392
      %v394 = vpop.f32.mrb[0].mxu0
      %v395 = vpop.f32.mrb[0].mxu0
      %v396 = vadd.f32 0.0, %v395
      %v397 = vpop.f32.mrb[0].mxu0
      %398 = vmatprep.mubr.bf16.mxu0 %v350
      %399 = vmatmul.mubr.bf16.gmra.mrb[0].mxu0 %v239
      %v400 = vpop.f32.mrb[0].mxu0
      %v401 = vadd.f32 0.0, %v400
      %v402 = vpop.f32.mrb[0].mxu0
      %v403 = vpop.f32.mrb[0].mxu0
      %v404 = vadd.f32 0.0, %v403
      %v405 = vpop.f32.mrb[0].mxu0
      %406 = vmatprep.mubr.bf16.mxu0 %v353
      %407 = vmatmul.mubr.bf16.gmra.mrb[0].mxu0 %v241
      %v408 = vpop.f32.mrb[0].mxu0
      %v409 = vadd.f32 0.0, %v408
      %v410 = vpop.f32.mrb[0].mxu0
      %v411 = vpop.f32.mrb[0].mxu0
      %v412 = vadd.f32 0.0, %v411
      %v413 = vpop.f32.mrb[0].mxu0
      %414 = vmatprep.mubr.bf16.mxu0 %v356
      %415 = vmatmul.mubr.bf16.gmra.mrb[0].mxu0 %v243
      %v416 = vpop.f32.mrb[0].mxu0
      %v417 = vadd.f32 0.0, %v416
      %v418 = vpop.f32.mrb[0].mxu0
      %v419 = vpop.f32.mrb[0].mxu0
      %v420 = vadd.f32 0.0, %v419
      %v421 = vpop.f32.mrb[0].mxu0
      %422 = vdwg.mxu0
      %v431 = vunpack.c.l.b16 %v172
      %v432 = vunpack.c.h.b16 %v172
      %v433 = vunpack.c.l.b16 %v173
      %v434 = vunpack.c.h.b16 %v173
      %v435 = vunpack.c.l.b16 %v174
      %v436 = vunpack.c.h.b16 %v174
      %v437 = vunpack.c.l.b16 %v175
      %v438 = vunpack.c.h.b16 %v175
      %v439 = vunpack.c.l.b16 %v176
      %v440 = vunpack.c.h.b16 %v176
      %v441 = vunpack.c.l.b16 %v177
      %v442 = vunpack.c.h.b16 %v177
      %v443 = vunpack.c.l.b16 %v178
      %v444 = vunpack.c.h.b16 %v178
      %v445 = vunpack.c.l.b16 %v179
      %v446 = vunpack.c.h.b16 %v179
      %v447 = vpack.c.b16 %v433, %v431
      %v448 = vpack.c.b16 %v434, %v432
      %v449 = vpack.c.b16 %v437, %v435
      %v450 = vpack.c.b16 %v438, %v436
      %v451 = vpack.c.b16 %v441, %v439
      %v452 = vpack.c.b16 %v442, %v440
      %v453 = vpack.c.b16 %v445, %v443
      %v454 = vpack.c.b16 %v446, %v444
      %v472 = vsel %vm345, %v448, 0
      %v475 = vsel %vm345, %v450, 0
      %v478 = vsel %vm345, %v452, 0
      %v481 = vsel %vm345, %v454, 0
      %483 = vmatprep.subr.bf16.mxu0 0
      %484 = vmatpush1.bf16.msra.mxu0 %v297
      %485 = vmatprep.subr.bf16.mxu0 0
      %486 = vmatpush1.bf16.msra.mxu0 %v298
      %487 = vmatprep.subr.bf16.mxu0 0
      %488 = vmatpush1.bf16.msra.mxu0 %v299
      %489 = vmatprep.subr.bf16.mxu0 0
      %490 = vmatpush1.bf16.msra.mxu0 %v300
      %491 = vmatprep.subr.bf16.mxu0 0
      %492 = vmatpush1.bf16.msra.mxu0 %v301
      %493 = vmatprep.subr.bf16.mxu0 0
      %494 = vmatpush1.bf16.msra.mxu0 %v302
      %495 = vmatprep.subr.bf16.mxu0 0
      %496 = vmatpush1.bf16.msra.mxu0 %v303
      %497 = vmatprep.subr.bf16.mxu0 0
      %498 = vmatpush1.bf16.msra.mxu0 %v304
      %499 = vmatprep.subr.bf16.mxu0 0
      %500 = vmatpush1.bf16.msra.mxu0 %v305
      %501 = vmatprep.subr.bf16.mxu0 0
      %502 = vmatpush1.bf16.msra.mxu0 %v306
      %503 = vmatprep.subr.bf16.mxu0 0
      %504 = vmatpush1.bf16.msra.mxu0 %v307
      %505 = vmatprep.subr.bf16.mxu0 0
      %506 = vmatpush1.bf16.msra.mxu0 %v308
      %507 = vmatprep.subr.bf16.mxu0 0
      %508 = vmatpush1.bf16.msra.mxu0 0
      %509 = vmatprep.subr.bf16.mxu0 0
      %510 = vmatpush1.bf16.msra.mxu0 0
      %511 = vmatprep.subr.bf16.mxu0 0
      %512 = vmatpush1.bf16.msra.mxu0 0
      %513 = vmatprep.subr.bf16.mxu0 0
      %514 = vmatpush1.bf16.msra.mxu0 0
      %515 = vmatprep.mubr.bf16.mxu0 %v472
      %516 = vmatmul.mubr.bf16.gmra.mrb[0].mxu0 %v447
      %v517 = vpop.f32.mrb[0].mxu0
      %v518 = vadd.f32 %v393, %v517
      %v519 = vpop.f32.mrb[0].mxu0
      %v520 = vpop.f32.mrb[0].mxu0
      %v521 = vadd.f32 %v396, %v520
      %v522 = vpop.f32.mrb[0].mxu0
      %523 = vmatprep.mubr.bf16.mxu0 %v475
      %524 = vmatmul.mubr.bf16.gmra.mrb[0].mxu0 %v449
      %v525 = vpop.f32.mrb[0].mxu0
      %v526 = vadd.f32 %v401, %v525
      %v527 = vpop.f32.mrb[0].mxu0
      %v528 = vpop.f32.mrb[0].mxu0
      %v529 = vadd.f32 %v404, %v528
      %v530 = vpop.f32.mrb[0].mxu0
      %531 = vmatprep.mubr.bf16.mxu0 %v478
      %532 = vmatmul.mubr.bf16.gmra.mrb[0].mxu0 %v451
      %v533 = vpop.f32.mrb[0].mxu0
      %v534 = vadd.f32 %v409, %v533
      %v535 = vpop.f32.mrb[0].mxu0
      %v536 = vpop.f32.mrb[0].mxu0
      %v537 = vadd.f32 %v412, %v536
      %v538 = vpop.f32.mrb[0].mxu0
      %539 = vmatprep.mubr.bf16.mxu0 %v481
      %540 = vmatmul.mubr.bf16.gmra.mrb[0].mxu0 %v453
      %v541 = vpop.f32.mrb[0].mxu0
      %v542 = vadd.f32 %v417, %v541
      %v543 = vpop.f32.mrb[0].mxu0
      %v544 = vpop.f32.mrb[0].mxu0
      %v545 = vadd.f32 %v420, %v544
      %v546 = vpop.f32.mrb[0].mxu0
      %547 = vdwg.mxu0
      %v548 = vld [vmem:[%s2] sm:$0xff]
      %v549 = vld [vmem:[%s2 + $0x8] sm:$0xff]
      %v550 = vld [vmem:[%s2 + $0x10] sm:$0xff]
      %v551 = vld [vmem:[%s2 + $0x18] sm:$0xff]
      %v552 = vld [vmem:[%s2 + $0x20] sm:$0xff]
      %v553 = vld [vmem:[%s2 + $0x28] sm:$0xff]
      %v554 = vld [vmem:[%s2 + $0x30] sm:$0xff]
      %v555 = vld [vmem:[%s2 + $0x38] sm:$0xff]
      %557 = vset.pattern.permute.xlu0 0
      %558 = vperm.xlu0 %557, %v548
      %v559 = vpop.permute.xlu0 %558
      %562 = vset.pattern.permute.xlu0 0
      %563 = vperm.xlu0 %562, %v549
      %v564 = vpop.permute.xlu0 %563
      %567 = vset.pattern.permute.xlu0 0
      %568 = vperm.xlu0 %567, %v550
      %v569 = vpop.permute.xlu0 %568
      %572 = vset.pattern.permute.xlu0 0
      %573 = vperm.xlu0 %572, %v551
      %v574 = vpop.permute.xlu0 %573
      %577 = vset.pattern.permute.xlu0 0
      %578 = vperm.xlu0 %577, %v552
      %v579 = vpop.permute.xlu0 %578
      %582 = vset.pattern.permute.xlu0 0
      %583 = vperm.xlu0 %582, %v553
      %v584 = vpop.permute.xlu0 %583
      %587 = vset.pattern.permute.xlu0 0
      %588 = vperm.xlu0 %587, %v554
      %v589 = vpop.permute.xlu0 %588
      %592 = vset.pattern.permute.xlu0 0
      %593 = vperm.xlu0 %592, %v555
      %v594 = vpop.permute.xlu0 %593
      %v596 = vadd.f32 %v518, %v559
      %v597 = vadd.f32 %v521, %v564
      %v598 = vadd.f32 %v526, %v569
      %v599 = vadd.f32 %v529, %v574
      %v600 = vadd.f32 %v534, %v579
      %v601 = vadd.f32 %v537, %v584
      %v602 = vadd.f32 %v542, %v589
      %v603 = vadd.f32 %v545, %v594
      %vm604 = vcmask 850944
      %605 = vst.msk [vmem:[%s170] sm:$0xff] %vm604, %v596
      %606 = vst.msk [vmem:[%s170 + $0x8] sm:$0xff] %vm604, %v597
      %607 = vst.msk [vmem:[%s170 + $0x10] sm:$0xff] %vm604, %v598
      %608 = vst.msk [vmem:[%s170 + $0x18] sm:$0xff] %vm604, %v599
      %609 = vst.msk [vmem:[%s170 + $0x20] sm:$0xff] %vm604, %v600
      %610 = vst.msk [vmem:[%s170 + $0x28] sm:$0xff] %vm604, %v601
      %611 = vst.msk [vmem:[%s170 + $0x30] sm:$0xff] %vm604, %v602
      %612 = vst.msk [vmem:[%s170 + $0x38] sm:$0xff] %vm604, %v603
      %p613 = scmp.lt.s32.totalorder %s14, 1
      %s614 = scalar_select %p613, %s14, 1
      %s615 = smul.addr %s614, 8
      %s616 = smul.addr %s615, 8
      %s617 = scalar_lea.vmem %s3, %s616
      // Predicated region
      $region33: #{se_rawformer_front.23} parent=31 // pred_check
        %p618 = pneg %p100
      $region34: #{se_rawformer_front.23} parent=31 // pred_check_branch
        %620 = sbr.rel (%p618) target = $region36
      $region35: #{se_rawformer_front.23} parent=31 // pred_region
        _
      $region36: #{se_rawformer_front.23} parent=31 // pred_fallthru
        _
    $region32: #{se_rawformer_front.23} parent=5 // pred_fallthru
      _
    %p621 = scmp.le.s32.totalorder 2, %s9
    // Predicated region
    $region37: #{se_rawformer_front.23} parent=5 // pred_check
      %p622 = pneg %p621
    $region38: #{se_rawformer_front.23} parent=5 // pred_check_branch
      %624 = sbr.rel (%p622) target = $region40
    $region39: #{se_rawformer_front.23} parent=5 // pred_region
      %s625 = ssub.s32 %s9, 2
      // Predicated region
      $region41: #{se_rawformer_front.23} parent=39 // pred_check
        %p626 = pneg %p106
      $region42: #{se_rawformer_front.23} parent=39 // pred_check_branch
        %628 = sbr.rel (%p626) target = $region44
      $region43: #{se_rawformer_front.23} parent=39 // pred_region
        %p629 = scmp.lt.s32.totalorder %s15, 1
        %s630 = scalar_select %p629, %s15, 1
        %s631 = smul.addr %s630, 8
        %s632 = smul.addr %s631, 8
        %s633 = scalar_lea.vmem %s3, %s632
      $region44: #{se_rawformer_front.23} parent=39 // pred_fallthru
        _
    $region40: #{se_rawformer_front.23} parent=5 // pred_fallthru
      _
  $region6: #{se_rawformer_front.23} parent=0 // loop_footer
    %s13 = sadd.s32 1, %s9
  $region7: #{se_rawformer_front.23} parent=0 // loop_footer_branch
    %8 = sbr.rel target = $region3
  $region8: #{se_rawformer_front.23} parent=0 // loop_exit
    _

// kernel: se_rawformer_front.24
$region0: #{se_rawformer_front.24}
  #allocation0 [shape = 'u32[]', space=smem, size = 0x4, offset = 0x4, fixed_abs, tag = 'smem constant byte address 0x4 - core index']
  #allocation1 [shape = 'u32[144,128]{1,0:T(1,128)}', space=vmem, size = 0x12000, scoped, tag = 'internal scratch']
  %s0 = inlined_call_operand.vmem [shape: bf16[2,192,52], index: 0, kind: input, shape index: {}]
  %s1 = inlined_call_operand.vmem [shape: bf16[1,64,192], index: 1, kind: input, shape index: {}]
  %s2 = inlined_call_operand.vmem [shape: f32[64,1], index: 2, kind: input, shape index: {}]
  %s3 = inlined_call_operand.vmem [shape: f32[2,64,52], index: 3, kind: output, shape index: {}]
  %s4 = sld [smem:[#allocation0]]
  $region45: #{se_rawformer_front.24} parent=0
    _
  %s6 = ssub.s32 1, %s4
  %s7 = scalar_select 0, %s6, %s4
  loop: start=0, step=1, limit=4
  $region2: #{se_rawformer_front.24} parent=0 // loop_pre_header
    _
  $region3: #{se_rawformer_front.24} parent=0 // loop_header
    %s9 = sphi 0, %s13
    %p10 = scmp.ge.s32.totalorder %s9, 4
    %s19 = sphi 0, %s21
    %s22 = sphi 0, %s19
    %s23 = sphi 0, %s22
    %s39 = sphi 0, %s23
    %s43 = sphi 0, %s43
    %s45 = sphi 0, %s43
    %s46 = sphi 0, %s45
    %s60 = sphi 0, %s46
    %s64 = sphi 0, %s64
    %s66 = sphi 0, %s64
    %s67 = sphi 0, %s66
    %s81 = sphi 0, %s67
    %s87 = sphi 0, %s89
    %s90 = sphi 0, %s87
    %s91 = sphi 0, %s90
    %s107 = sphi 0, %s91
  $region4: #{se_rawformer_front.24} parent=0 // loop_header_branch
    %12 = sbr.rel (%p10) target = $region8
  $region5: #{se_rawformer_front.24} parent=0 // loop_body
    %s14 = ssub.s32 %s9, 1
    %s15 = ssub.s32 %s9, 2
    %s16 = sadd.s32 %s9, 1
    %s17 = ssub.s32 %s9, %s16
    %p18 = scmp.eq.s32.totalorder %s17, 0
    %s20 = sadd.s32 %s19, 1
    %s21 = scalar_select %p18, %s19, %s20
    %p24 = pneg %p18
    %p25 = scmp.eq.s32.totalorder %s9, 1
    %p26 = por %p24, %p25
    %p27 = scmp.ne.s32.totalorder %s19, %s22
    %p28 = scmp.eq.s32.totalorder %s9, 0
    %p29 = por %p27, %p28
    %p30 = scmp.ne.s32.totalorder %s19, %s22
    %p31 = scmp.eq.s32.totalorder %s14, 1
    %p32 = por %p30, %p31
    %p33 = scmp.ne.s32.totalorder %s22, %s23
    %p34 = scmp.eq.s32.totalorder %s14, 0
    %p35 = por %p33, %p34
    %p36 = scmp.ne.s32.totalorder %s22, %s23
    %p37 = scmp.eq.s32.totalorder %s15, 1
    %p38 = por %p36, %p37
    %p40 = scmp.ne.s32.totalorder %s23, %s39
    %p41 = scmp.eq.s32.totalorder %s15, 0
    %p42 = por %p40, %p41
    %s44 = sadd.s32 %s43, 1
    %p47 = scmp.eq.s32.totalorder %s9, 1
    %p48 = scmp.ne.s32.totalorder %s43, %s45
    %p49 = scmp.eq.s32.totalorder %s9, 0
    %p50 = por %p48, %p49
    %p51 = scmp.ne.s32.totalorder %s43, %s45
    %p52 = scmp.eq.s32.totalorder %s14, 1
    %p53 = por %p51, %p52
    %p54 = scmp.ne.s32.totalorder %s45, %s46
    %p55 = scmp.eq.s32.totalorder %s14, 0
    %p56 = por %p54, %p55
    %p57 = scmp.ne.s32.totalorder %s45, %s46
    %p58 = scmp.eq.s32.totalorder %s15, 1
    %p59 = por %p57, %p58
    %p61 = scmp.ne.s32.totalorder %s46, %s60
    %p62 = scmp.eq.s32.totalorder %s15, 0
    %p63 = por %p61, %p62
    %s65 = sadd.s32 %s64, 1
    %p68 = scmp.eq.s32.totalorder %s9, 1
    %p69 = scmp.ne.s32.totalorder %s64, %s66
    %p70 = scmp.eq.s32.totalorder %s9, 0
    %p71 = por %p69, %p70
    %p72 = scmp.ne.s32.totalorder %s64, %s66
    %p73 = scmp.eq.s32.totalorder %s14, 1
    %p74 = por %p72, %p73
    %p75 = scmp.ne.s32.totalorder %s66, %s67
    %p76 = scmp.eq.s32.totalorder %s14, 0
    %p77 = por %p75, %p76
    %p78 = scmp.ne.s32.totalorder %s66, %s67
    %p79 = scmp.eq.s32.totalorder %s15, 1
    %p80 = por %p78, %p79
    %p82 = scmp.ne.s32.totalorder %s67, %s81
    %p83 = scmp.eq.s32.totalorder %s15, 0
    %p84 = por %p82, %p83
    %s85 = ssub.s32 %s9, %s16
    %p86 = scmp.eq.s32.totalorder %s85, 0
    %s88 = sadd.s32 %s87, 1
    %s89 = scalar_select %p86, %s87, %s88
    %p92 = pneg %p86
    %p93 = scmp.eq.s32.totalorder %s9, 1
    %p94 = por %p92, %p93
    %p95 = scmp.ne.s32.totalorder %s87, %s90
    %p96 = scmp.eq.s32.totalorder %s9, 0
    %p97 = por %p95, %p96
    %p98 = scmp.ne.s32.totalorder %s87, %s90
    %p99 = scmp.eq.s32.totalorder %s14, 1
    %p100 = por %p98, %p99
    %p101 = scmp.ne.s32.totalorder %s90, %s91
    %p102 = scmp.eq.s32.totalorder %s14, 0
    %p103 = por %p101, %p102
    %p104 = scmp.ne.s32.totalorder %s90, %s91
    %p105 = scmp.eq.s32.totalorder %s15, 1
    %p106 = por %p104, %p105
    %p108 = scmp.ne.s32.totalorder %s91, %s107
    %p109 = scmp.eq.s32.totalorder %s15, 0
    %p110 = por %p108, %p109
    %p111 = scmp.le.s32.totalorder 1, %s9
    %p112 = scmp.lt.s32.totalorder %s9, 3
    %p113 = pnand %p111, %p112
    %p114 = pneg %p113
    // Predicated region
    $region9: #{se_rawformer_front.24} parent=5 // pred_check
      _
    $region10: #{se_rawformer_front.24} parent=5 // pred_check_branch
      %116 = sbr.rel (%p113) target = $region12
    $region11: #{se_rawformer_front.24} parent=5 // pred_region
      %s117 = ssub.s32 %s9, 1
      // Predicated region
      $region13: #{se_rawformer_front.24} parent=11 // pred_check
        %p118 = pneg %p56
      $region14: #{se_rawformer_front.24} parent=11 // pred_check_branch
        %120 = sbr.rel (%p118) target = $region16
      $region15: #{se_rawformer_front.24} parent=11 // pred_region
        _
      $region16: #{se_rawformer_front.24} parent=11 // pred_fallthru
        _
      // Predicated region
      $region17: #{se_rawformer_front.24} parent=11 // pred_check
        %p121 = pneg %p77
      $region18: #{se_rawformer_front.24} parent=11 // pred_check_branch
        %123 = sbr.rel (%p121) target = $region20
      $region19: #{se_rawformer_front.24} parent=11 // pred_region
        _
      $region20: #{se_rawformer_front.24} parent=11 // pred_fallthru
        _
    $region12: #{se_rawformer_front.24} parent=5 // pred_fallthru
      _
    %p124 = scmp.lt.s32.totalorder %s9, 2
    // Predicated region
    $region21: #{se_rawformer_front.24} parent=5 // pred_check
      %p125 = pneg %p124
    $region22: #{se_rawformer_front.24} parent=5 // pred_check_branch
      %127 = sbr.rel (%p125) target = $region24
    $region23: #{se_rawformer_front.24} parent=5 // pred_region
      // Predicated region
      $region25: #{se_rawformer_front.24} parent=23 // pred_check
        %p128 = pneg %p29
      $region26: #{se_rawformer_front.24} parent=23 // pred_check_branch
        %130 = sbr.rel (%p128) target = $region28
      $region27: #{se_rawformer_front.24} parent=23 // pred_region
        %p131 = scmp.lt.s32.totalorder %s9, 1
        %s132 = scalar_select %p131, %s9, 1
        %s133 = smul.addr %s132, 24
        %s134 = smul.addr %s133, 4
        %s135 = scalar_lea.vmem %s0, %s134
      $region28: #{se_rawformer_front.24} parent=23 // pred_fallthru
        _
    $region24: #{se_rawformer_front.24} parent=5 // pred_fallthru
      _
    %p136 = scmp.le.s32.totalorder 1, %s9
    %p137 = scmp.lt.s32.totalorder %s9, 3
    %p138 = pnand %p136, %p137
    %p139 = pneg %p138
    // Predicated region
    $region29: #{se_rawformer_front.24} parent=5 // pred_check
      _
    $region30: #{se_rawformer_front.24} parent=5 // pred_check_branch
      %141 = sbr.rel (%p138) target = $region32
    $region31: #{se_rawformer_front.24} parent=5 // pred_region
      %s142 = ssub.s32 %s9, 1
      %p143 = scmp.lt.s32.totalorder %s14, 1
      %s144 = scalar_select %p143, %s14, 1
      %s145 = smul.addr %s144, 24
      %s146 = smul.addr %s145, 4
      %s147 = scalar_lea.vmem %s0, %s146
      %p148 = pneg %p35
      %p149 = pneg %p32
      %p150 = pneg %p56
      %p151 = pneg %p53
      %p152 = pneg %p77
      %p153 = pneg %p74
      %p154 = pneg %p103
      %p155 = pneg %p100
      %p156 = scmp.lt.s32.totalorder %s14, 1
      %s157 = scalar_select %p156, %s14, 1
      %s158 = smul.addr %s157, 8
      %s159 = smul.addr %s158, 8
      %s160 = scalar_lea.vmem %s3, %s159
      %p161 = scmp.lt.s32.totalorder %s14, 1
      %s162 = scalar_select %p161, %s14, 1
      %s163 = smul.addr %s162, 24
      %s164 = smul.addr %s163, 4
      %s165 = scalar_lea.vmem %s0, %s164
      %p166 = scmp.lt.s32.totalorder %s14, 1
      %s167 = scalar_select %p166, %s14, 1
      %s168 = smul.addr %s167, 8
      %s169 = smul.addr %s168, 8
      %s170 = scalar_lea.vmem %s3, %s169
      %v172 = vld [vmem:[%s1] sm:$0xff]
      %v173 = vld [vmem:[%s1 + $0x8] sm:$0xff]
      %v174 = vld [vmem:[%s1 + $0x10] sm:$0xff]
      %v175 = vld [vmem:[%s1 + $0x18] sm:$0xff]
      %v176 = vld [vmem:[%s1 + $0x20] sm:$0xff]
      %v177 = vld [vmem:[%s1 + $0x28] sm:$0xff]
      %v178 = vld [vmem:[%s1 + $0x30] sm:$0xff]
      %v179 = vld [vmem:[%s1 + $0x38] sm:$0xff]
      %v180 = vld [vmem:[%s165] sm:$0xf]
      %v181 = vld [vmem:[%s165 + $0x4] sm:$0xf]
      %v182 = vld [vmem:[%s165 + $0x8] sm:$0xf]
      %v183 = vld [vmem:[%s165 + $0xc] sm:$0xf]
      %v184 = vld [vmem:[%s165 + $0x10] sm:$0xf]
      %v185 = vld [vmem:[%s165 + $0x14] sm:$0xf]
      %v186 = vld [vmem:[%s165 + $0x18] sm:$0xf]
      %v187 = vld [vmem:[%s165 + $0x1c] sm:$0xf]
      %v188 = vld [vmem:[%s165 + $0x20] sm:$0xf]
      %v189 = vld [vmem:[%s165 + $0x24] sm:$0xf]
      %v190 = vld [vmem:[%s165 + $0x28] sm:$0xf]
      %v191 = vld [vmem:[%s165 + $0x2c] sm:$0xf]
      %v192 = vld [vmem:[%s165 + $0x30] sm:$0xf]
      %v193 = vld [vmem:[%s165 + $0x34] sm:$0xf]
      %v194 = vld [vmem:[%s165 + $0x38] sm:$0xf]
      %v195 = vld [vmem:[%s165 + $0x3c] sm:$0xf]
      %v196 = vld [vmem:[%s165 + $0x40] sm:$0xf]
      %v197 = vld [vmem:[%s165 + $0x44] sm:$0xf]
      %v198 = vld [vmem:[%s165 + $0x48] sm:$0xf]
      %v199 = vld [vmem:[%s165 + $0x4c] sm:$0xf]
      %v200 = vld [vmem:[%s165 + $0x50] sm:$0xf]
      %v201 = vld [vmem:[%s165 + $0x54] sm:$0xf]
      %v202 = vld [vmem:[%s165 + $0x58] sm:$0xf]
      %v203 = vld [vmem:[%s165 + $0x5c] sm:$0xf]
      %v204 = vld [vmem:[%s2] sm:$0xff]
      %v205 = vld [vmem:[%s2 + $0x8] sm:$0xff]
      %v206 = vld [vmem:[%s2 + $0x10] sm:$0xff]
      %v207 = vld [vmem:[%s2 + $0x18] sm:$0xff]
      %v208 = vld [vmem:[%s2 + $0x20] sm:$0xff]
      %v209 = vld [vmem:[%s2 + $0x28] sm:$0xff]
      %v210 = vld [vmem:[%s2 + $0x30] sm:$0xff]
      %v211 = vld [vmem:[%s2 + $0x38] sm:$0xff]
      %213 = vset.pattern.permute.xlu0 0
      %214 = vperm.xlu0 %213, %v204
      %v215 = vpop.permute.xlu0 %214
      %218 = vset.pattern.permute.xlu0 0
      %219 = vperm.xlu0 %218, %v205
      %v220 = vpop.permute.xlu0 %219
      %223 = vset.pattern.permute.xlu0 0
      %224 = vperm.xlu0 %223, %v206
      %v225 = vpop.permute.xlu0 %224
      %228 = vset.pattern.permute.xlu0 0
      %229 = vperm.xlu0 %228, %v207
      %v230 = vpop.permute.xlu0 %229
      %233 = vset.pattern.permute.xlu0 0
      %234 = vperm.xlu0 %233, %v208
      %v235 = vpop.permute.xlu0 %234
      %238 = vset.pattern.permute.xlu0 0
      %239 = vperm.xlu0 %238, %v209
      %v240 = vpop.permute.xlu0 %239
      %243 = vset.pattern.permute.xlu0 0
      %244 = vperm.xlu0 %243, %v210
      %v245 = vpop.permute.xlu0 %244
      %248 = vset.pattern.permute.xlu0 0
      %249 = vperm.xlu0 %248, %v211
      %v250 = vpop.permute.xlu0 %249
      %v260 = vunpack.c.l.b16 %v172
      %v261 = vunpack.c.h.b16 %v172
      %v262 = vunpack.c.l.b16 %v173
      %v263 = vunpack.c.h.b16 %v173
      %v264 = vunpack.c.l.b16 %v174
      %v265 = vunpack.c.h.b16 %v174
      %v266 = vunpack.c.l.b16 %v175
      %v267 = vunpack.c.h.b16 %v175
      %v268 = vunpack.c.l.b16 %v176
      %v269 = vunpack.c.h.b16 %v176
      %v270 = vunpack.c.l.b16 %v177
      %v271 = vunpack.c.h.b16 %v177
      %v272 = vunpack.c.l.b16 %v178
      %v273 = vunpack.c.h.b16 %v178
      %v274 = vunpack.c.l.b16 %v179
      %v275 = vunpack.c.h.b16 %v179
      %v276 = vpack.c.b16 %v262, %v260
      %v277 = vpack.c.b16 %v263, %v261
      %v278 = vpack.c.b16 %v266, %v264
      %v279 = vpack.c.b16 %v267, %v265
      %v280 = vpack.c.b16 %v270, %v268
      %v281 = vpack.c.b16 %v271, %v269
      %v282 = vpack.c.b16 %v274, %v272
      %v283 = vpack.c.b16 %v275, %v273
      %v312 = vunpack.c.l.b16 %v180
      %v313 = vunpack.c.l.b16 %v181
      %v314 = vunpack.c.l.b16 %v182
      %v315 = vunpack.c.l.b16 %v183
      %v316 = vunpack.c.l.b16 %v184
      %v317 = vunpack.c.l.b16 %v185
      %v318 = vunpack.c.l.b16 %v186
      %v319 = vunpack.c.l.b16 %v187
      %v320 = vunpack.c.l.b16 %v188
      %v321 = vunpack.c.l.b16 %v189
      %v322 = vunpack.c.l.b16 %v190
      %v323 = vunpack.c.l.b16 %v191
      %v324 = vunpack.c.l.b16 %v192
      %v325 = vunpack.c.l.b16 %v193
      %v326 = vunpack.c.l.b16 %v194
      %v327 = vunpack.c.l.b16 %v195
      %v328 = vunpack.c.l.b16 %v196
      %v329 = vunpack.c.l.b16 %v197
      %v330 = vunpack.c.l.b16 %v198
      %v331 = vunpack.c.l.b16 %v199
      %v332 = vunpack.c.l.b16 %v200
      %v333 = vunpack.c.l.b16 %v201
      %v334 = vunpack.c.l.b16 %v202
      %v335 = vunpack.c.l.b16 %v203
      %v336 = vpack.c.b16 %v313, %v312
      %v337 = vpack.c.b16 %v315, %v314
      %v338 = vpack.c.b16 %v317, %v316
      %v339 = vpack.c.b16 %v319, %v318
      %v340 = vpack.c.b16 %v321, %v320
      %v341 = vpack.c.b16 %v323, %v322
      %v342 = vpack.c.b16 %v325, %v324
      %v343 = vpack.c.b16 %v327, %v326
      %v344 = vpack.c.b16 %v329, %v328
      %v345 = vpack.c.b16 %v331, %v330
      %v346 = vpack.c.b16 %v333, %v332
      %v347 = vpack.c.b16 %v335, %v334
      %vm360 = vcmask 523264
      %v362 = vsel %vm360, %v277, 0
      %v365 = vsel %vm360, %v279, 0
      %v368 = vsel %vm360, %v281, 0
      %v371 = vsel %vm360, %v283, 0
      %373 = vmatprep.subr.bf16.mxu0 0
      %374 = vmatpush1.bf16.msra.mxu0 %v336
      %375 = vmatprep.subr.bf16.mxu0 0
      %376 = vmatpush1.bf16.msra.mxu0 %v337
      %377 = vmatprep.subr.bf16.mxu0 0
      %378 = vmatpush1.bf16.msra.mxu0 %v338
      %379 = vmatprep.subr.bf16.mxu0 0
      %380 = vmatpush1.bf16.msra.mxu0 %v339
      %381 = vmatprep.subr.bf16.mxu0 0
      %382 = vmatpush1.bf16.msra.mxu0 %v340
      %383 = vmatprep.subr.bf16.mxu0 0
      %384 = vmatpush1.bf16.msra.mxu0 %v341
      %385 = vmatprep.subr.bf16.mxu0 0
      %386 = vmatpush1.bf16.msra.mxu0 %v342
      %387 = vmatprep.subr.bf16.mxu0 0
      %388 = vmatpush1.bf16.msra.mxu0 %v343
      %389 = vmatprep.subr.bf16.mxu0 0
      %390 = vmatpush1.bf16.msra.mxu0 %v344
      %391 = vmatprep.subr.bf16.mxu0 0
      %392 = vmatpush1.bf16.msra.mxu0 %v345
      %393 = vmatprep.subr.bf16.mxu0 0
      %394 = vmatpush1.bf16.msra.mxu0 %v346
      %395 = vmatprep.subr.bf16.mxu0 0
      %396 = vmatpush1.bf16.msra.mxu0 %v347
      %397 = vmatprep.subr.bf16.mxu0 0
      %398 = vmatpush1.bf16.msra.mxu0 0
      %399 = vmatprep.subr.bf16.mxu0 0
      %400 = vmatpush1.bf16.msra.mxu0 0
      %401 = vmatprep.subr.bf16.mxu0 0
      %402 = vmatpush1.bf16.msra.mxu0 0
      %403 = vmatprep.subr.bf16.mxu0 0
      %404 = vmatpush1.bf16.msra.mxu0 0
      %405 = vmatprep.mubr.bf16.mxu0 %v362
      %406 = vmatmul.mubr.bf16.gmra.mrb[0].mxu0 %v276
      %v407 = vpop.f32.mrb[0].mxu0
      %v408 = vadd.f32 %v215, %v407
      %v409 = vpop.f32.mrb[0].mxu0
      %v410 = vpop.f32.mrb[0].mxu0
      %v411 = vadd.f32 %v220, %v410
      %v412 = vpop.f32.mrb[0].mxu0
      %413 = vmatprep.mubr.bf16.mxu0 %v365
      %414 = vmatmul.mubr.bf16.gmra.mrb[0].mxu0 %v278
      %v415 = vpop.f32.mrb[0].mxu0
      %v416 = vadd.f32 %v225, %v415
      %v417 = vpop.f32.mrb[0].mxu0
      %v418 = vpop.f32.mrb[0].mxu0
      %v419 = vadd.f32 %v230, %v418
      %v420 = vpop.f32.mrb[0].mxu0
      %421 = vmatprep.mubr.bf16.mxu0 %v368
      %422 = vmatmul.mubr.bf16.gmra.mrb[0].mxu0 %v280
      %v423 = vpop.f32.mrb[0].mxu0
      %v424 = vadd.f32 %v235, %v423
      %v425 = vpop.f32.mrb[0].mxu0
      %v426 = vpop.f32.mrb[0].mxu0
      %v427 = vadd.f32 %v240, %v426
      %v428 = vpop.f32.mrb[0].mxu0
      %429 = vmatprep.mubr.bf16.mxu0 %v371
      %430 = vmatmul.mubr.bf16.gmra.mrb[0].mxu0 %v282
      %v431 = vpop.f32.mrb[0].mxu0
      %v432 = vadd.f32 %v245, %v431
      %v433 = vpop.f32.mrb[0].mxu0
      %v434 = vpop.f32.mrb[0].mxu0
      %v435 = vadd.f32 %v250, %v434
      %v436 = vpop.f32.mrb[0].mxu0
      %437 = vdwg.mxu0
      %vm438 = vcmask 424960
      %439 = vst.msk [vmem:[%s170] sm:$0xff] %vm438, %v408
      %440 = vst.msk [vmem:[%s170 + $0x8] sm:$0xff] %vm438, %v411
      %441 = vst.msk [vmem:[%s170 + $0x10] sm:$0xff] %vm438, %v416
      %442 = vst.msk [vmem:[%s170 + $0x18] sm:$0xff] %vm438, %v419
      %443 = vst.msk [vmem:[%s170 + $0x20] sm:$0xff] %vm438, %v424
      %444 = vst.msk [vmem:[%s170 + $0x28] sm:$0xff] %vm438, %v427
      %445 = vst.msk [vmem:[%s170 + $0x30] sm:$0xff] %vm438, %v432
      %446 = vst.msk [vmem:[%s170 + $0x38] sm:$0xff] %vm438, %v435
      %p447 = scmp.lt.s32.totalorder %s14, 1
      %s448 = scalar_select %p447, %s14, 1
      %s449 = smul.addr %s448, 8
      %s450 = smul.addr %s449, 8
      %s451 = scalar_lea.vmem %s3, %s450
      // Predicated region
      $region33: #{se_rawformer_front.24} parent=31 // pred_check
        %p452 = pneg %p100
      $region34: #{se_rawformer_front.24} parent=31 // pred_check_branch
        %454 = sbr.rel (%p452) target = $region36
      $region35: #{se_rawformer_front.24} parent=31 // pred_region
        _
      $region36: #{se_rawformer_front.24} parent=31 // pred_fallthru
        _
    $region32: #{se_rawformer_front.24} parent=5 // pred_fallthru
      _
    %p455 = scmp.le.s32.totalorder 2, %s9
    // Predicated region
    $region37: #{se_rawformer_front.24} parent=5 // pred_check
      %p456 = pneg %p455
    $region38: #{se_rawformer_front.24} parent=5 // pred_check_branch
      %458 = sbr.rel (%p456) target = $region40
    $region39: #{se_rawformer_front.24} parent=5 // pred_region
      %s459 = ssub.s32 %s9, 2
      // Predicated region
      $region41: #{se_rawformer_front.24} parent=39 // pred_check
        %p460 = pneg %p106
      $region42: #{se_rawformer_front.24} parent=39 // pred_check_branch
        %462 = sbr.rel (%p460) target = $region44
      $region43: #{se_rawformer_front.24} parent=39 // pred_region
        %p463 = scmp.lt.s32.totalorder %s15, 1
        %s464 = scalar_select %p463, %s15, 1
        %s465 = smul.addr %s464, 8
        %s466 = smul.addr %s465, 8
        %s467 = scalar_lea.vmem %s3, %s466
      $region44: #{se_rawformer_front.24} parent=39 // pred_fallthru
        _
    $region40: #{se_rawformer_front.24} parent=5 // pred_fallthru
      _
  $region6: #{se_rawformer_front.24} parent=0 // loop_footer
    %s13 = sadd.s32 1, %s9
  $region7: #{se_rawformer_front.24} parent=0 // loop_footer_branch
    %8 = sbr.rel target = $region3
  $region8: #{se_rawformer_front.24} parent=0 // loop_exit
    _

// kernel: se_rawformer_front.25
$region0: #{se_rawformer_front.25}
  #allocation0 [shape = 'u32[]', space=smem, size = 0x4, offset = 0x4, fixed_abs, tag = 'smem constant byte address 0x4 - core index']
  #allocation1 [shape = 'u32[144,128]{1,0:T(1,128)}', space=vmem, size = 0x12000, scoped, tag = 'internal scratch']
  %s0 = inlined_call_operand.vmem [shape: bf16[2,192,56], index: 0, kind: input, shape index: {}]
  %s1 = inlined_call_operand.vmem [shape: bf16[3,64,192], index: 1, kind: input, shape index: {}]
  %s2 = inlined_call_operand.vmem [shape: f32[64,1], index: 2, kind: input, shape index: {}]
  %s3 = inlined_call_operand.vmem [shape: f32[2,64,52], index: 3, kind: input, shape index: {}]
  %s4 = inlined_call_operand.vmem [shape: f32[16,64], index: 4, kind: input, shape index: {}]
  %s5 = inlined_call_operand.vmem [shape: f32[16,1], index: 5, kind: input, shape index: {}]
  %s6 = inlined_call_operand.vmem [shape: f32[64,16], index: 6, kind: input, shape index: {}]
  %s7 = inlined_call_operand.vmem [shape: f32[64,1], index: 7, kind: input, shape index: {}]
  %s8 = inlined_call_operand.vmem [shape: f32[2,64,52], index: 8, kind: output, shape index: {}]
  %s9 = sld [smem:[#allocation0]]
  $region65: #{se_rawformer_front.25} parent=0
    _
  %s11 = ssub.s32 1, %s9
  %s12 = scalar_select 0, %s11, %s9
  loop: start=0, step=1, limit=4
  $region2: #{se_rawformer_front.25} parent=0 // loop_pre_header
    _
  $region3: #{se_rawformer_front.25} parent=0 // loop_header
    %s14 = sphi 0, %s18
    %p15 = scmp.ge.s32.totalorder %s14, 4
    %s24 = sphi 0, %s26
    %s27 = sphi 0, %s24
    %s28 = sphi 0, %s27
    %s44 = sphi 0, %s28
    %s48 = sphi 0, %s48
    %s50 = sphi 0, %s48
    %s51 = sphi 0, %s50
    %s65 = sphi 0, %s51
    %s69 = sphi 0, %s69
    %s71 = sphi 0, %s69
    %s72 = sphi 0, %s71
    %s86 = sphi 0, %s72
    %s92 = sphi 0, %s94
    %s95 = sphi 0, %s92
    %s96 = sphi 0, %s95
    %s112 = sphi 0, %s96
    %s116 = sphi 0, %s116
    %s118 = sphi 0, %s116
    %s119 = sphi 0, %s118
    %s133 = sphi 0, %s119
    %s137 = sphi 0, %s137
    %s139 = sphi 0, %s137
    %s140 = sphi 0, %s139
    %s154 = sphi 0, %s140
    %s158 = sphi 0, %s158
    %s160 = sphi 0, %s158
    %s161 = sphi 0, %s160
    %s175 = sphi 0, %s161
    %s179 = sphi 0, %s179
    %s181 = sphi 0, %s179
    %s182 = sphi 0, %s181
    %s196 = sphi 0, %s182
    %s202 = sphi 0, %s204
    %s205 = sphi 0, %s202
    %s206 = sphi 0, %s205
    %s222 = sphi 0, %s206
  $region4: #{se_rawformer_front.25} parent=0 // loop_header_branch
    %17 = sbr.rel (%p15) target = $region8
  $region5: #{se_rawformer_front.25} parent=0 // loop_body
    %s19 = ssub.s32 %s14, 1
    %s20 = ssub.s32 %s14, 2
    %s21 = sadd.s32 %s14, 1
    %s22 = ssub.s32 %s14, %s21
    %p23 = scmp.eq.s32.totalorder %s22, 0
    %s25 = sadd.s32 %s24, 1
    %s26 = scalar_select %p23, %s24, %s25
    %p29 = pneg %p23
    %p30 = scmp.eq.s32.totalorder %s14, 1
    %p31 = por %p29, %p30
    %p32 = scmp.ne.s32.totalorder %s24, %s27
    %p33 = scmp.eq.s32.totalorder %s14, 0
    %p34 = por %p32, %p33
    %p35 = scmp.ne.s32.totalorder %s24, %s27
    %p36 = scmp.eq.s32.totalorder %s19, 1
    %p37 = por %p35, %p36
    %p38 = scmp.ne.s32.totalorder %s27, %s28
    %p39 = scmp.eq.s32.totalorder %s19, 0
    %p40 = por %p38, %p39
    %p41 = scmp.ne.s32.totalorder %s27, %s28
    %p42 = scmp.eq.s32.totalorder %s20, 1
    %p43 = por %p41, %p42
    %p45 = scmp.ne.s32.totalorder %s28, %s44
    %p46 = scmp.eq.s32.totalorder %s20, 0
    %p47 = por %p45, %p46
    %s49 = sadd.s32 %s48, 1
    %p52 = scmp.eq.s32.totalorder %s14, 1
    %p53 = scmp.ne.s32.totalorder %s48, %s50
    %p54 = scmp.eq.s32.totalorder %s14, 0
    %p55 = por %p53, %p54
    %p56 = scmp.ne.s32.totalorder %s48, %s50
    %p57 = scmp.eq.s32.totalorder %s19, 1
    %p58 = por %p56, %p57
    %p59 = scmp.ne.s32.totalorder %s50, %s51
    %p60 = scmp.eq.s32.totalorder %s19, 0
    %p61 = por %p59, %p60
    %p62 = scmp.ne.s32.totalorder %s50, %s51
    %p63 = scmp.eq.s32.totalorder %s20, 1
    %p64 = por %p62, %p63
    %p66 = scmp.ne.s32.totalorder %s51, %s65
    %p67 = scmp.eq.s32.totalorder %s20, 0
    %p68 = por %p66, %p67
    %s70 = sadd.s32 %s69, 1
    %p73 = scmp.eq.s32.totalorder %s14, 1
    %p74 = scmp.ne.s32.totalorder %s69, %s71
    %p75 = scmp.eq.s32.totalorder %s14, 0
    %p76 = por %p74, %p75
    %p77 = scmp.ne.s32.totalorder %s69, %s71
    %p78 = scmp.eq.s32.totalorder %s19, 1
    %p79 = por %p77, %p78
    %p80 = scmp.ne.s32.totalorder %s71, %s72
    %p81 = scmp.eq.s32.totalorder %s19, 0
    %p82 = por %p80, %p81
    %p83 = scmp.ne.s32.totalorder %s71, %s72
    %p84 = scmp.eq.s32.totalorder %s20, 1
    %p85 = por %p83, %p84
    %p87 = scmp.ne.s32.totalorder %s72, %s86
    %p88 = scmp.eq.s32.totalorder %s20, 0
    %p89 = por %p87, %p88
    %s90 = ssub.s32 %s14, %s21
    %p91 = scmp.eq.s32.totalorder %s90, 0
    %s93 = sadd.s32 %s92, 1
    %s94 = scalar_select %p91, %s92, %s93
    %p97 = pneg %p91
    %p98 = scmp.eq.s32.totalorder %s14, 1
    %p99 = por %p97, %p98
    %p100 = scmp.ne.s32.totalorder %s92, %s95
    %p101 = scmp.eq.s32.totalorder %s14, 0
    %p102 = por %p100, %p101
    %p103 = scmp.ne.s32.totalorder %s92, %s95
    %p104 = scmp.eq.s32.totalorder %s19, 1
    %p105 = por %p103, %p104
    %p106 = scmp.ne.s32.totalorder %s95, %s96
    %p107 = scmp.eq.s32.totalorder %s19, 0
    %p108 = por %p106, %p107
    %p109 = scmp.ne.s32.totalorder %s95, %s96
    %p110 = scmp.eq.s32.totalorder %s20, 1
    %p111 = por %p109, %p110
    %p113 = scmp.ne.s32.totalorder %s96, %s112
    %p114 = scmp.eq.s32.totalorder %s20, 0
    %p115 = por %p113, %p114
    %s117 = sadd.s32 %s116, 1
    %p120 = scmp.eq.s32.totalorder %s14, 1
    %p121 = scmp.ne.s32.totalorder %s116, %s118
    %p122 = scmp.eq.s32.totalorder %s14, 0
    %p123 = por %p121, %p122
    %p124 = scmp.ne.s32.totalorder %s116, %s118
    %p125 = scmp.eq.s32.totalorder %s19, 1
    %p126 = por %p124, %p125
    %p127 = scmp.ne.s32.totalorder %s118, %s119
    %p128 = scmp.eq.s32.totalorder %s19, 0
    %p129 = por %p127, %p128
    %p130 = scmp.ne.s32.totalorder %s118, %s119
    %p131 = scmp.eq.s32.totalorder %s20, 1
    %p132 = por %p130, %p131
    %p134 = scmp.ne.s32.totalorder %s119, %s133
    %p135 = scmp.eq.s32.totalorder %s20, 0
    %p136 = por %p134, %p135
    %s138 = sadd.s32 %s137, 1
    %p141 = scmp.eq.s32.totalorder %s14, 1
    %p142 = scmp.ne.s32.totalorder %s137, %s139
    %p143 = scmp.eq.s32.totalorder %s14, 0
    %p144 = por %p142, %p143
    %p145 = scmp.ne.s32.totalorder %s137, %s139
    %p146 = scmp.eq.s32.totalorder %s19, 1
    %p147 = por %p145, %p146
    %p148 = scmp.ne.s32.totalorder %s139, %s140
    %p149 = scmp.eq.s32.totalorder %s19, 0
    %p150 = por %p148, %p149
    %p151 = scmp.ne.s32.totalorder %s139, %s140
    %p152 = scmp.eq.s32.totalorder %s20, 1
    %p153 = por %p151, %p152
    %p155 = scmp.ne.s32.totalorder %s140, %s154
    %p156 = scmp.eq.s32.totalorder %s20, 0
    %p157 = por %p155, %p156
    %s159 = sadd.s32 %s158, 1
    %p162 = scmp.eq.s32.totalorder %s14, 1
    %p163 = scmp.ne.s32.totalorder %s158, %s160
    %p164 = scmp.eq.s32.totalorder %s14, 0
    %p165 = por %p163, %p164
    %p166 = scmp.ne.s32.totalorder %s158, %s160
    %p167 = scmp.eq.s32.totalorder %s19, 1
    %p168 = por %p166, %p167
    %p169 = scmp.ne.s32.totalorder %s160, %s161
    %p170 = scmp.eq.s32.totalorder %s19, 0
    %p171 = por %p169, %p170
    %p172 = scmp.ne.s32.totalorder %s160, %s161
    %p173 = scmp.eq.s32.totalorder %s20, 1
    %p174 = por %p172, %p173
    %p176 = scmp.ne.s32.totalorder %s161, %s175
    %p177 = scmp.eq.s32.totalorder %s20, 0
    %p178 = por %p176, %p177
    %s180 = sadd.s32 %s179, 1
    %p183 = scmp.eq.s32.totalorder %s14, 1
    %p184 = scmp.ne.s32.totalorder %s179, %s181
    %p185 = scmp.eq.s32.totalorder %s14, 0
    %p186 = por %p184, %p185
    %p187 = scmp.ne.s32.totalorder %s179, %s181
    %p188 = scmp.eq.s32.totalorder %s19, 1
    %p189 = por %p187, %p188
    %p190 = scmp.ne.s32.totalorder %s181, %s182
    %p191 = scmp.eq.s32.totalorder %s19, 0
    %p192 = por %p190, %p191
    %p193 = scmp.ne.s32.totalorder %s181, %s182
    %p194 = scmp.eq.s32.totalorder %s20, 1
    %p195 = por %p193, %p194
    %p197 = scmp.ne.s32.totalorder %s182, %s196
    %p198 = scmp.eq.s32.totalorder %s20, 0
    %p199 = por %p197, %p198
    %s200 = ssub.s32 %s14, %s21
    %p201 = scmp.eq.s32.totalorder %s200, 0
    %s203 = sadd.s32 %s202, 1
    %s204 = scalar_select %p201, %s202, %s203
    %p207 = pneg %p201
    %p208 = scmp.eq.s32.totalorder %s14, 1
    %p209 = por %p207, %p208
    %p210 = scmp.ne.s32.totalorder %s202, %s205
    %p211 = scmp.eq.s32.totalorder %s14, 0
    %p212 = por %p210, %p211
    %p213 = scmp.ne.s32.totalorder %s202, %s205
    %p214 = scmp.eq.s32.totalorder %s19, 1
    %p215 = por %p213, %p214
    %p216 = scmp.ne.s32.totalorder %s205, %s206
    %p217 = scmp.eq.s32.totalorder %s19, 0
    %p218 = por %p216, %p217
    %p219 = scmp.ne.s32.totalorder %s205, %s206
    %p220 = scmp.eq.s32.totalorder %s20, 1
    %p221 = por %p219, %p220
    %p223 = scmp.ne.s32.totalorder %s206, %s222
    %p224 = scmp.eq.s32.totalorder %s20, 0
    %p225 = por %p223, %p224
    %p226 = scmp.le.s32.totalorder 1, %s14
    %p227 = scmp.lt.s32.totalorder %s14, 3
    %p228 = pnand %p226, %p227
    %p229 = pneg %p228
    // Predicated region
    $region9: #{se_rawformer_front.25} parent=5 // pred_check
      _
    $region10: #{se_rawformer_front.25} parent=5 // pred_check_branch
      %231 = sbr.rel (%p228) target = $region12
    $region11: #{se_rawformer_front.25} parent=5 // pred_region
      %s232 = ssub.s32 %s14, 1
      // Predicated region
      $region13: #{se_rawformer_front.25} parent=11 // pred_check
        %p233 = pneg %p61
      $region14: #{se_rawformer_front.25} parent=11 // pred_check_branch
        %235 = sbr.rel (%p233) target = $region16
      $region15: #{se_rawformer_front.25} parent=11 // pred_region
        _
      $region16: #{se_rawformer_front.25} parent=11 // pred_fallthru
        _
      // Predicated region
      $region17: #{se_rawformer_front.25} parent=11 // pred_check
        %p236 = pneg %p82
      $region18: #{se_rawformer_front.25} parent=11 // pred_check_branch
        %238 = sbr.rel (%p236) target = $region20
      $region19: #{se_rawformer_front.25} parent=11 // pred_region
        _
      $region20: #{se_rawformer_front.25} parent=11 // pred_fallthru
        _
      // Predicated region
      $region21: #{se_rawformer_front.25} parent=11 // pred_check
        %p239 = pneg %p129
      $region22: #{se_rawformer_front.25} parent=11 // pred_check_branch
        %241 = sbr.rel (%p239) target = $region24
      $region23: #{se_rawformer_front.25} parent=11 // pred_region
        _
      $region24: #{se_rawformer_front.25} parent=11 // pred_fallthru
        _
      // Predicated region
      $region25: #{se_rawformer_front.25} parent=11 // pred_check
        %p242 = pneg %p150
      $region26: #{se_rawformer_front.25} parent=11 // pred_check_branch
        %244 = sbr.rel (%p242) target = $region28
      $region27: #{se_rawformer_front.25} parent=11 // pred_region
        _
      $region28: #{se_rawformer_front.25} parent=11 // pred_fallthru
        _
      // Predicated region
      $region29: #{se_rawformer_front.25} parent=11 // pred_check
        %p245 = pneg %p171
      $region30: #{se_rawformer_front.25} parent=11 // pred_check_branch
        %247 = sbr.rel (%p245) target = $region32
      $region31: #{se_rawformer_front.25} parent=11 // pred_region
        _
      $region32: #{se_rawformer_front.25} parent=11 // pred_fallthru
        _
      // Predicated region
      $region33: #{se_rawformer_front.25} parent=11 // pred_check
        %p248 = pneg %p192
      $region34: #{se_rawformer_front.25} parent=11 // pred_check_branch
        %250 = sbr.rel (%p248) target = $region36
      $region35: #{se_rawformer_front.25} parent=11 // pred_region
        _
      $region36: #{se_rawformer_front.25} parent=11 // pred_fallthru
        _
    $region12: #{se_rawformer_front.25} parent=5 // pred_fallthru
      _
    %p251 = scmp.lt.s32.totalorder %s14, 2
    // Predicated region
    $region37: #{se_rawformer_front.25} parent=5 // pred_check
      %p252 = pneg %p251
    $region38: #{se_rawformer_front.25} parent=5 // pred_check_branch
      %254 = sbr.rel (%p252) target = $region40
    $region39: #{se_rawformer_front.25} parent=5 // pred_region
      // Predicated region
      $region41: #{se_rawformer_front.25} parent=39 // pred_check
        %p255 = pneg %p34
      $region42: #{se_rawformer_front.25} parent=39 // pred_check_branch
        %257 = sbr.rel (%p255) target = $region44
      $region43: #{se_rawformer_front.25} parent=39 // pred_region
        %p258 = scmp.lt.s32.totalorder %s14, 1
        %s259 = scalar_select %p258, %s14, 1
        %s260 = smul.addr %s259, 24
        %s261 = smul.addr %s260, 4
        %s262 = scalar_lea.vmem %s0, %s261
      $region44: #{se_rawformer_front.25} parent=39 // pred_fallthru
        _
      // Predicated region
      $region45: #{se_rawformer_front.25} parent=39 // pred_check
        %p263 = pneg %p102
      $region46: #{se_rawformer_front.25} parent=39 // pred_check_branch
        %265 = sbr.rel (%p263) target = $region48
      $region47: #{se_rawformer_front.25} parent=39 // pred_region
        %p266 = scmp.lt.s32.totalorder %s14, 1
        %s267 = scalar_select %p266, %s14, 1
        %s268 = smul.addr %s267, 8
        %s269 = smul.addr %s268, 8
        %s270 = scalar_lea.vmem %s3, %s269
      $region48: #{se_rawformer_front.25} parent=39 // pred_fallthru
        _
    $region40: #{se_rawformer_front.25} parent=5 // pred_fallthru
      _
    %p271 = scmp.le.s32.totalorder 1, %s14
    %p272 = scmp.lt.s32.totalorder %s14, 3
    %p273 = pnand %p271, %p272
    %p274 = pneg %p273
    // Predicated region
    $region49: #{se_rawformer_front.25} parent=5 // pred_check
      _
    $region50: #{se_rawformer_front.25} parent=5 // pred_check_branch
      %276 = sbr.rel (%p273) target = $region52
    $region51: #{se_rawformer_front.25} parent=5 // pred_region
      %s277 = ssub.s32 %s14, 1
      %p278 = scmp.lt.s32.totalorder %s19, 1
      %s279 = scalar_select %p278, %s19, 1
      %s280 = smul.addr %s279, 24
      %s281 = smul.addr %s280, 4
      %s282 = scalar_lea.vmem %s0, %s281
      %p283 = pneg %p40
      %p284 = pneg %p37
      %p285 = pneg %p61
      %p286 = pneg %p58
      %p287 = pneg %p82
      %p288 = pneg %p79
      %p289 = scmp.lt.s32.totalorder %s19, 1
      %s290 = scalar_select %p289, %s19, 1
      %s291 = smul.addr %s290, 8
      %s292 = smul.addr %s291, 8
      %s293 = scalar_lea.vmem %s3, %s292
      %p294 = pneg %p108
      %p295 = pneg %p105
      %p296 = pneg %p129
      %p297 = pneg %p126
      %p298 = pneg %p150
      %p299 = pneg %p147
      %p300 = pneg %p171
      %p301 = pneg %p168
      %p302 = pneg %p192
      %p303 = pneg %p189
      %p304 = pneg %p218
      %p305 = pneg %p215
      %p306 = scmp.lt.s32.totalorder %s19, 1
      %s307 = scalar_select %p306, %s19, 1
      %s308 = smul.addr %s307, 8
      %s309 = smul.addr %s308, 8
      %s310 = scalar_lea.vmem %s8, %s309
      %p311 = scmp.lt.s32.totalorder %s19, 1
      %s312 = scalar_select %p311, %s19, 1
      %s313 = smul.addr %s312, 24
      %s314 = smul.addr %s313, 4
      %s315 = scalar_lea.vmem %s0, %s314
      %p316 = scmp.lt.s32.totalorder %s19, 1
      %s317 = scalar_select %p316, %s19, 1
      %s318 = smul.addr %s317, 8
      %s319 = smul.addr %s318, 8
      %s320 = scalar_lea.vmem %s3, %s319
      %p321 = scmp.lt.s32.totalorder %s19, 1
      %s322 = scalar_select %p321, %s19, 1
      %s323 = smul.addr %s322, 8
      %s324 = smul.addr %s323, 8
      %s325 = scalar_lea.vmem %s8, %s324
      %v327 = vld [vmem:[%s1] sm:$0xff]
      %v328 = vld [vmem:[%s1 + $0x8] sm:$0xff]
      %v329 = vld [vmem:[%s1 + $0x10] sm:$0xff]
      %v330 = vld [vmem:[%s1 + $0x18] sm:$0xff]
      %v331 = vld [vmem:[%s1 + $0x20] sm:$0xff]
      %v332 = vld [vmem:[%s1 + $0x28] sm:$0xff]
      %v333 = vld [vmem:[%s1 + $0x30] sm:$0xff]
      %v334 = vld [vmem:[%s1 + $0x38] sm:$0xff]
      %v335 = vld [vmem:[%s315] sm:$0xf]
      %v336 = vld [vmem:[%s315 + $0x4] sm:$0xf]
      %v337 = vld [vmem:[%s315 + $0x8] sm:$0xf]
      %v338 = vld [vmem:[%s315 + $0xc] sm:$0xf]
      %v339 = vld [vmem:[%s315 + $0x10] sm:$0xf]
      %v340 = vld [vmem:[%s315 + $0x14] sm:$0xf]
      %v341 = vld [vmem:[%s315 + $0x18] sm:$0xf]
      %v342 = vld [vmem:[%s315 + $0x1c] sm:$0xf]
      %v343 = vld [vmem:[%s315 + $0x20] sm:$0xf]
      %v344 = vld [vmem:[%s315 + $0x24] sm:$0xf]
      %v345 = vld [vmem:[%s315 + $0x28] sm:$0xf]
      %v346 = vld [vmem:[%s315 + $0x2c] sm:$0xf]
      %v347 = vld [vmem:[%s315 + $0x30] sm:$0xf]
      %v348 = vld [vmem:[%s315 + $0x34] sm:$0xf]
      %v349 = vld [vmem:[%s315 + $0x38] sm:$0xf]
      %v350 = vld [vmem:[%s315 + $0x3c] sm:$0xf]
      %v351 = vld [vmem:[%s315 + $0x40] sm:$0xf]
      %v352 = vld [vmem:[%s315 + $0x44] sm:$0xf]
      %v353 = vld [vmem:[%s315 + $0x48] sm:$0xf]
      %v354 = vld [vmem:[%s315 + $0x4c] sm:$0xf]
      %v355 = vld [vmem:[%s315 + $0x50] sm:$0xf]
      %v356 = vld [vmem:[%s315 + $0x54] sm:$0xf]
      %v357 = vld [vmem:[%s315 + $0x58] sm:$0xf]
      %v358 = vld [vmem:[%s315 + $0x5c] sm:$0xf]
      %s359 = scalar_lea.vmem %s1, 64
      %v360 = vld [vmem:[%s359] sm:$0xff]
      %v361 = vld [vmem:[%s359 + $0x8] sm:$0xff]
      %v362 = vld [vmem:[%s359 + $0x10] sm:$0xff]
      %v363 = vld [vmem:[%s359 + $0x18] sm:$0xff]
      %v364 = vld [vmem:[%s359 + $0x20] sm:$0xff]
      %v365 = vld [vmem:[%s359 + $0x28] sm:$0xff]
      %v366 = vld [vmem:[%s359 + $0x30] sm:$0xff]
      %v367 = vld [vmem:[%s359 + $0x38] sm:$0xff]
      %v376 = vunpack.c.l.b16 %v360
      %v377 = vunpack.c.h.b16 %v360
      %v378 = vunpack.c.l.b16 %v361
      %v379 = vunpack.c.h.b16 %v361
      %v380 = vunpack.c.l.b16 %v362
      %v381 = vunpack.c.h.b16 %v362
      %v382 = vunpack.c.l.b16 %v363
      %v383 = vunpack.c.h.b16 %v363
      %v384 = vunpack.c.l.b16 %v364
      %v385 = vunpack.c.h.b16 %v364
      %v386 = vunpack.c.l.b16 %v365
      %v387 = vunpack.c.h.b16 %v365
      %v388 = vunpack.c.l.b16 %v366
      %v389 = vunpack.c.h.b16 %v366
      %v390 = vunpack.c.l.b16 %v367
      %v391 = vunpack.c.h.b16 %v367
      %v392 = vpack.c.b16 %v378, %v376
      %v393 = vpack.c.b16 %v379, %v377
      %v394 = vpack.c.b16 %v382, %v380
      %v395 = vpack.c.b16 %v383, %v381
      %v396 = vpack.c.b16 %v386, %v384
      %v397 = vpack.c.b16 %v387, %v385
      %v398 = vpack.c.b16 %v390, %v388
      %v399 = vpack.c.b16 %v391, %v389
      %v428 = vunpack.c.l.b16 %v335
      %v429 = vunpack.c.l.b16 %v336
      %v430 = vunpack.c.l.b16 %v337
      %v431 = vunpack.c.l.b16 %v338
      %v432 = vunpack.c.l.b16 %v339
      %v433 = vunpack.c.l.b16 %v340
      %v434 = vunpack.c.l.b16 %v341
      %v435 = vunpack.c.l.b16 %v342
      %v436 = vunpack.c.l.b16 %v343
      %v437 = vunpack.c.l.b16 %v344
      %v438 = vunpack.c.l.b16 %v345
      %v439 = vunpack.c.l.b16 %v346
      %v440 = vunpack.c.l.b16 %v347
      %v441 = vunpack.c.l.b16 %v348
      %v442 = vunpack.c.l.b16 %v349
      %v443 = vunpack.c.l.b16 %v350
      %v444 = vunpack.c.l.b16 %v351
      %v445 = vunpack.c.l.b16 %v352
      %v446 = vunpack.c.l.b16 %v353
      %v447 = vunpack.c.l.b16 %v354
      %v448 = vunpack.c.l.b16 %v355
      %v449 = vunpack.c.l.b16 %v356
      %v450 = vunpack.c.l.b16 %v357
      %v451 = vunpack.c.l.b16 %v358
      %v452 = vpack.c.b16 %v429, %v428
      %v453 = vpack.c.b16 %v431, %v430
      %v454 = vpack.c.b16 %v433, %v432
      %v455 = vpack.c.b16 %v435, %v434
      %v456 = vpack.c.b16 %v437, %v436
      %v457 = vpack.c.b16 %v439, %v438
      %v458 = vpack.c.b16 %v441, %v440
      %v459 = vpack.c.b16 %v443, %v442
      %v460 = vpack.c.b16 %v445, %v444
      %v461 = vpack.c.b16 %v447, %v446
      %v462 = vpack.c.b16 %v449, %v448
      %v463 = vpack.c.b16 %v451, %v450
      %464 = vrot.lane.b32.xlu0 %v452, 126
      %v465 = vpop.permute.xlu0 %464
      %466 = vrot.lane.b32.xlu0 %v453, 126
      %v467 = vpop.permute.xlu0 %466
      %468 = vrot.lane.b32.xlu0 %v454, 126
      %v469 = vpop.permute.xlu0 %468
      %470 = vrot.lane.b32.xlu0 %v455, 126
      %v471 = vpop.permute.xlu0 %470
      %472 = vrot.lane.b32.xlu0 %v456, 126
      %v473 = vpop.permute.xlu0 %472
      %474 = vrot.lane.b32.xlu0 %v457, 126
      %v475 = vpop.permute.xlu0 %474
      %476 = vrot.lane.b32.xlu0 %v458, 126
      %v477 = vpop.permute.xlu0 %476
      %478 = vrot.lane.b32.xlu0 %v459, 126
      %v479 = vpop.permute.xlu0 %478
      %480 = vrot.lane.b32.xlu0 %v460, 126
      %v481 = vpop.permute.xlu0 %480
      %482 = vrot.lane.b32.xlu0 %v461, 126
      %v483 = vpop.permute.xlu0 %482
      %484 = vrot.lane.b32.xlu0 %v462, 126
      %v485 = vpop.permute.xlu0 %484
      %486 = vrot.lane.b32.xlu0 %v463, 126
      %v487 = vpop.permute.xlu0 %486
      %vm500 = vcmask 523264
      %v502 = vsel %vm500, %v393, 0
      %v505 = vsel %vm500, %v395, 0
      %v508 = vsel %vm500, %v397, 0
      %v511 = vsel %vm500, %v399, 0
      %513 = vmatprep.subr.bf16.mxu0 0
      %514 = vmatpush1.bf16.msra.mxu0 %v465
      %515 = vmatprep.subr.bf16.mxu0 0
      %516 = vmatpush1.bf16.msra.mxu0 %v467
      %517 = vmatprep.subr.bf16.mxu0 0
      %518 = vmatpush1.bf16.msra.mxu0 %v469
      %519 = vmatprep.subr.bf16.mxu0 0
      %520 = vmatpush1.bf16.msra.mxu0 %v471
      %521 = vmatprep.subr.bf16.mxu0 0
      %522 = vmatpush1.bf16.msra.mxu0 %v473
      %523 = vmatprep.subr.bf16.mxu0 0
      %524 = vmatpush1.bf16.msra.mxu0 %v475
      %525 = vmatprep.subr.bf16.mxu0 0
      %526 = vmatpush1.bf16.msra.mxu0 %v477
      %527 = vmatprep.subr.bf16.mxu0 0
      %528 = vmatpush1.bf16.msra.mxu0 %v479
      %529 = vmatprep.subr.bf16.mxu0 0
      %530 = vmatpush1.bf16.msra.mxu0 %v481
      %531 = vmatprep.subr.bf16.mxu0 0
      %532 = vmatpush1.bf16.msra.mxu0 %v483
      %533 = vmatprep.subr.bf16.mxu0 0
      %534 = vmatpush1.bf16.msra.mxu0 %v485
      %535 = vmatprep.subr.bf16.mxu0 0
      %536 = vmatpush1.bf16.msra.mxu0 %v487
      %537 = vmatprep.subr.bf16.mxu0 0
      %538 = vmatpush1.bf16.msra.mxu0 0
      %539 = vmatprep.subr.bf16.mxu0 0
      %540 = vmatpush1.bf16.msra.mxu0 0
      %541 = vmatprep.subr.bf16.mxu0 0
      %542 = vmatpush1.bf16.msra.mxu0 0
      %543 = vmatprep.subr.bf16.mxu0 0
      %544 = vmatpush1.bf16.msra.mxu0 0
      %545 = vmatprep.mubr.bf16.mxu0 %v502
      %546 = vmatmul.mubr.bf16.gmra.mrb[0].mxu0 %v392
      %v547 = vpop.f32.mrb[0].mxu0
      %v548 = vadd.f32 0.0, %v547
      %v549 = vpop.f32.mrb[0].mxu0
      %v550 = vpop.f32.mrb[0].mxu0
      %v551 = vadd.f32 0.0, %v550
      %v552 = vpop.f32.mrb[0].mxu0
      %553 = vmatprep.mubr.bf16.mxu0 %v505
      %554 = vmatmul.mubr.bf16.gmra.mrb[0].mxu0 %v394
      %v555 = vpop.f32.mrb[0].mxu0
      %v556 = vadd.f32 0.0, %v555
      %v557 = vpop.f32.mrb[0].mxu0
      %v558 = vpop.f32.mrb[0].mxu0
      %v559 = vadd.f32 0.0, %v558
      %v560 = vpop.f32.mrb[0].mxu0
      %561 = vmatprep.mubr.bf16.mxu0 %v508
      %562 = vmatmul.mubr.bf16.gmra.mrb[0].mxu0 %v396
      %v563 = vpop.f32.mrb[0].mxu0
      %v564 = vadd.f32 0.0, %v563
      %v565 = vpop.f32.mrb[0].mxu0
      %v566 = vpop.f32.mrb[0].mxu0
      %v567 = vadd.f32 0.0, %v566
      %v568 = vpop.f32.mrb[0].mxu0
      %569 = vmatprep.mubr.bf16.mxu0 %v511
      %570 = vmatmul.mubr.bf16.gmra.mrb[0].mxu0 %v398
      %v571 = vpop.f32.mrb[0].mxu0
      %v572 = vadd.f32 0.0, %v571
      %v573 = vpop.f32.mrb[0].mxu0
      %v574 = vpop.f32.mrb[0].mxu0
      %v575 = vadd.f32 0.0, %v574
      %v576 = vpop.f32.mrb[0].mxu0
      %577 = vdwg.mxu0
      %v586 = vunpack.c.l.b16 %v327
      %v587 = vunpack.c.h.b16 %v327
      %v588 = vunpack.c.l.b16 %v328
      %v589 = vunpack.c.h.b16 %v328
      %v590 = vunpack.c.l.b16 %v329
      %v591 = vunpack.c.h.b16 %v329
      %v592 = vunpack.c.l.b16 %v330
      %v593 = vunpack.c.h.b16 %v330
      %v594 = vunpack.c.l.b16 %v331
      %v595 = vunpack.c.h.b16 %v331
      %v596 = vunpack.c.l.b16 %v332
      %v597 = vunpack.c.h.b16 %v332
      %v598 = vunpack.c.l.b16 %v333
      %v599 = vunpack.c.h.b16 %v333
      %v600 = vunpack.c.l.b16 %v334
      %v601 = vunpack.c.h.b16 %v334
      %v602 = vpack.c.b16 %v588, %v586
      %v603 = vpack.c.b16 %v589, %v587
      %v604 = vpack.c.b16 %v592, %v590
      %v605 = vpack.c.b16 %v593, %v591
      %v606 = vpack.c.b16 %v596, %v594
      %v607 = vpack.c.b16 %v597, %v595
      %v608 = vpack.c.b16 %v600, %v598
      %v609 = vpack.c.b16 %v601, %v599
      %v627 = vsel %vm500, %v603, 0
      %v630 = vsel %vm500, %v605, 0
      %v633 = vsel %vm500, %v607, 0
      %v636 = vsel %vm500, %v609, 0
      %638 = vmatprep.subr.bf16.mxu0 0
      %639 = vmatpush1.bf16.msra.mxu0 %v452
      %640 = vmatprep.subr.bf16.mxu0 0
      %641 = vmatpush1.bf16.msra.mxu0 %v453
      %642 = vmatprep.subr.bf16.mxu0 0
      %643 = vmatpush1.bf16.msra.mxu0 %v454
      %644 = vmatprep.subr.bf16.mxu0 0
      %645 = vmatpush1.bf16.msra.mxu0 %v455
      %646 = vmatprep.subr.bf16.mxu0 0
      %647 = vmatpush1.bf16.msra.mxu0 %v456
      %648 = vmatprep.subr.bf16.mxu0 0
      %649 = vmatpush1.bf16.msra.mxu0 %v457
      %650 = vmatprep.subr.bf16.mxu0 0
      %651 = vmatpush1.bf16.msra.mxu0 %v458
      %652 = vmatprep.subr.bf16.mxu0 0
      %653 = vmatpush1.bf16.msra.mxu0 %v459
      %654 = vmatprep.subr.bf16.mxu0 0
      %655 = vmatpush1.bf16.msra.mxu0 %v460
      %656 = vmatprep.subr.bf16.mxu0 0
      %657 = vmatpush1.bf16.msra.mxu0 %v461
      %658 = vmatprep.subr.bf16.mxu0 0
      %659 = vmatpush1.bf16.msra.mxu0 %v462
      %660 = vmatprep.subr.bf16.mxu0 0
      %661 = vmatpush1.bf16.msra.mxu0 %v463
      %662 = vmatprep.subr.bf16.mxu0 0
      %663 = vmatpush1.bf16.msra.mxu0 0
      %664 = vmatprep.subr.bf16.mxu0 0
      %665 = vmatpush1.bf16.msra.mxu0 0
      %666 = vmatprep.subr.bf16.mxu0 0
      %667 = vmatpush1.bf16.msra.mxu0 0
      %668 = vmatprep.subr.bf16.mxu0 0
      %669 = vmatpush1.bf16.msra.mxu0 0
      %670 = vmatprep.mubr.bf16.mxu0 %v627
      %671 = vmatmul.mubr.bf16.gmra.mrb[0].mxu0 %v602
      %v672 = vpop.f32.mrb[0].mxu0
      %v673 = vadd.f32 %v548, %v672
      %v674 = vpop.f32.mrb[0].mxu0
      %v675 = vpop.f32.mrb[0].mxu0
      %v676 = vadd.f32 %v551, %v675
      %v677 = vpop.f32.mrb[0].mxu0
      %678 = vmatprep.mubr.bf16.mxu0 %v630
      %679 = vmatmul.mubr.bf16.gmra.mrb[0].mxu0 %v604
      %v680 = vpop.f32.mrb[0].mxu0
      %v681 = vadd.f32 %v556, %v680
      %v682 = vpop.f32.mrb[0].mxu0
      %v683 = vpop.f32.mrb[0].mxu0
      %v684 = vadd.f32 %v559, %v683
      %v685 = vpop.f32.mrb[0].mxu0
      %686 = vmatprep.mubr.bf16.mxu0 %v633
      %687 = vmatmul.mubr.bf16.gmra.mrb[0].mxu0 %v606
      %v688 = vpop.f32.mrb[0].mxu0
      %v689 = vadd.f32 %v564, %v688
      %v690 = vpop.f32.mrb[0].mxu0
      %v691 = vpop.f32.mrb[0].mxu0
      %v692 = vadd.f32 %v567, %v691
      %v693 = vpop.f32.mrb[0].mxu0
      %694 = vmatprep.mubr.bf16.mxu0 %v636
      %695 = vmatmul.mubr.bf16.gmra.mrb[0].mxu0 %v608
      %v696 = vpop.f32.mrb[0].mxu0
      %v697 = vadd.f32 %v572, %v696
      %v698 = vpop.f32.mrb[0].mxu0
      %v699 = vpop.f32.mrb[0].mxu0
      %v700 = vadd.f32 %v575, %v699
      %v701 = vpop.f32.mrb[0].mxu0
      %702 = vdwg.mxu0
      %s703 = scalar_lea.vmem %s1, 128
      %v704 = vld [vmem:[%s703] sm:$0xff]
      %v705 = vld [vmem:[%s703 + $0x8] sm:$0xff]
      %v706 = vld [vmem:[%s703 + $0x10] sm:$0xff]
      %v707 = vld [vmem:[%s703 + $0x18] sm:$0xff]
      %v708 = vld [vmem:[%s703 + $0x20] sm:$0xff]
      %v709 = vld [vmem:[%s703 + $0x28] sm:$0xff]
      %v710 = vld [vmem:[%s703 + $0x30] sm:$0xff]
      %v711 = vld [vmem:[%s703 + $0x38] sm:$0xff]
      %v720 = vunpack.c.l.b16 %v704
      %v721 = vunpack.c.h.b16 %v704
      %v722 = vunpack.c.l.b16 %v705
      %v723 = vunpack.c.h.b16 %v705
      %v724 = vunpack.c.l.b16 %v706
      %v725 = vunpack.c.h.b16 %v706
      %v726 = vunpack.c.l.b16 %v707
      %v727 = vunpack.c.h.b16 %v707
      %v728 = vunpack.c.l.b16 %v708
      %v729 = vunpack.c.h.b16 %v708
      %v730 = vunpack.c.l.b16 %v709
      %v731 = vunpack.c.h.b16 %v709
      %v732 = vunpack.c.l.b16 %v710
      %v733 = vunpack.c.h.b16 %v710
      %v734 = vunpack.c.l.b16 %v711
      %v735 = vunpack.c.h.b16 %v711
      %v736 = vpack.c.b16 %v722, %v720
      %v737 = vpack.c.b16 %v723, %v721
      %v738 = vpack.c.b16 %v726, %v724
      %v739 = vpack.c.b16 %v727, %v725
      %v740 = vpack.c.b16 %v730, %v728
      %v741 = vpack.c.b16 %v731, %v729
      %v742 = vpack.c.b16 %v734, %v732
      %v743 = vpack.c.b16 %v735, %v733
      %748 = vrot.lane.b32.xlu0 %v452, 124
      %v749 = vpop.permute.xlu0 %748
      %750 = vrot.lane.b32.xlu0 %v453, 124
      %v751 = vpop.permute.xlu0 %750
      %752 = vrot.lane.b32.xlu0 %v454, 124
      %v753 = vpop.permute.xlu0 %752
      %754 = vrot.lane.b32.xlu0 %v455, 124
      %v755 = vpop.permute.xlu0 %754
      %756 = vrot.lane.b32.xlu0 %v456, 124
      %v757 = vpop.permute.xlu0 %756
      %758 = vrot.lane.b32.xlu0 %v457, 124
      %v759 = vpop.permute.xlu0 %758
      %760 = vrot.lane.b32.xlu0 %v458, 124
      %v761 = vpop.permute.xlu0 %760
      %762 = vrot.lane.b32.xlu0 %v459, 124
      %v763 = vpop.permute.xlu0 %762
      %764 = vrot.lane.b32.xlu0 %v460, 124
      %v765 = vpop.permute.xlu0 %764
      %766 = vrot.lane.b32.xlu0 %v461, 124
      %v767 = vpop.permute.xlu0 %766
      %768 = vrot.lane.b32.xlu0 %v462, 124
      %v769 = vpop.permute.xlu0 %768
      %770 = vrot.lane.b32.xlu0 %v463, 124
      %v771 = vpop.permute.xlu0 %770
      %v785 = vsel %vm500, %v737, 0
      %v788 = vsel %vm500, %v739, 0
      %v791 = vsel %vm500, %v741, 0
      %v794 = vsel %vm500, %v743, 0
      %796 = vmatprep.subr.bf16.mxu0 0
      %797 = vmatpush1.bf16.msra.mxu0 %v749
      %798 = vmatprep.subr.bf16.mxu0 0
      %799 = vmatpush1.bf16.msra.mxu0 %v751
      %800 = vmatprep.subr.bf16.mxu0 0
      %801 = vmatpush1.bf16.msra.mxu0 %v753
      %802 = vmatprep.subr.bf16.mxu0 0
      %803 = vmatpush1.bf16.msra.mxu0 %v755
      %804 = vmatprep.subr.bf16.mxu0 0
      %805 = vmatpush1.bf16.msra.mxu0 %v757
      %806 = vmatprep.subr.bf16.mxu0 0
      %807 = vmatpush1.bf16.msra.mxu0 %v759
      %808 = vmatprep.subr.bf16.mxu0 0
      %809 = vmatpush1.bf16.msra.mxu0 %v761
      %810 = vmatprep.subr.bf16.mxu0 0
      %811 = vmatpush1.bf16.msra.mxu0 %v763
      %812 = vmatprep.subr.bf16.mxu0 0
      %813 = vmatpush1.bf16.msra.mxu0 %v765
      %814 = vmatprep.subr.bf16.mxu0 0
      %815 = vmatpush1.bf16.msra.mxu0 %v767
      %816 = vmatprep.subr.bf16.mxu0 0
      %817 = vmatpush1.bf16.msra.mxu0 %v769
      %818 = vmatprep.subr.bf16.mxu0 0
      %819 = vmatpush1.bf16.msra.mxu0 %v771
      %820 = vmatprep.subr.bf16.mxu0 0
      %821 = vmatpush1.bf16.msra.mxu0 0
      %822 = vmatprep.subr.bf16.mxu0 0
      %823 = vmatpush1.bf16.msra.mxu0 0
      %824 = vmatprep.subr.bf16.mxu0 0
      %825 = vmatpush1.bf16.msra.mxu0 0
      %826 = vmatprep.subr.bf16.mxu0 0
      %827 = vmatpush1.bf16.msra.mxu0 0
      %828 = vmatprep.mubr.bf16.mxu0 %v785
      %829 = vmatmul.mubr.bf16.gmra.mrb[0].mxu0 %v736
      %v830 = vpop.f32.mrb[0].mxu0
      %v831 = vadd.f32 0.0, %v830
      %v832 = vpop.f32.mrb[0].mxu0
      %v833 = vpop.f32.mrb[0].mxu0
      %v834 = vadd.f32 0.0, %v833
      %v835 = vpop.f32.mrb[0].mxu0
      %836 = vmatprep.mubr.bf16.mxu0 %v788
      %837 = vmatmul.mubr.bf16.gmra.mrb[0].mxu0 %v738
      %v838 = vpop.f32.mrb[0].mxu0
      %v839 = vadd.f32 0.0, %v838
      %v840 = vpop.f32.mrb[0].mxu0
      %v841 = vpop.f32.mrb[0].mxu0
      %v842 = vadd.f32 0.0, %v841
      %v843 = vpop.f32.mrb[0].mxu0
      %844 = vmatprep.mubr.bf16.mxu0 %v791
      %845 = vmatmul.mubr.bf16.gmra.mrb[0].mxu0 %v740
      %v846 = vpop.f32.mrb[0].mxu0
      %v847 = vadd.f32 0.0, %v846
      %v848 = vpop.f32.mrb[0].mxu0
      %v849 = vpop.f32.mrb[0].mxu0
      %v850 = vadd.f32 0.0, %v849
      %v851 = vpop.f32.mrb[0].mxu0
      %852 = vmatprep.mubr.bf16.mxu0 %v794
      %853 = vmatmul.mubr.bf16.gmra.mrb[0].mxu0 %v742
      %v854 = vpop.f32.mrb[0].mxu0
      %v855 = vadd.f32 0.0, %v854
      %v856 = vpop.f32.mrb[0].mxu0
      %v857 = vpop.f32.mrb[0].mxu0
      %v858 = vadd.f32 0.0, %v857
      %v859 = vpop.f32.mrb[0].mxu0
      %860 = vdwg.mxu0
      %v861 = vadd.f32 %v673, %v831
      %v862 = vadd.f32 %v676, %v834
      %v863 = vadd.f32 %v681, %v839
      %v864 = vadd.f32 %v684, %v842
      %v865 = vadd.f32 %v689, %v847
      %v866 = vadd.f32 %v692, %v850
      %v867 = vadd.f32 %v697, %v855
      %v868 = vadd.f32 %v700, %v858
      %v869 = vld [vmem:[%s2] sm:$0xff]
      %v870 = vld [vmem:[%s2 + $0x8] sm:$0xff]
      %v871 = vld [vmem:[%s2 + $0x10] sm:$0xff]
      %v872 = vld [vmem:[%s2 + $0x18] sm:$0xff]
      %v873 = vld [vmem:[%s2 + $0x20] sm:$0xff]
      %v874 = vld [vmem:[%s2 + $0x28] sm:$0xff]
      %v875 = vld [vmem:[%s2 + $0x30] sm:$0xff]
      %v876 = vld [vmem:[%s2 + $0x38] sm:$0xff]
      %878 = vset.pattern.permute.xlu0 0
      %879 = vperm.xlu0 %878, %v869
      %v880 = vpop.permute.xlu0 %879
      %883 = vset.pattern.permute.xlu0 0
      %884 = vperm.xlu0 %883, %v870
      %v885 = vpop.permute.xlu0 %884
      %888 = vset.pattern.permute.xlu0 0
      %889 = vperm.xlu0 %888, %v871
      %v890 = vpop.permute.xlu0 %889
      %893 = vset.pattern.permute.xlu0 0
      %894 = vperm.xlu0 %893, %v872
      %v895 = vpop.permute.xlu0 %894
      %898 = vset.pattern.permute.xlu0 0
      %899 = vperm.xlu0 %898, %v873
      %v900 = vpop.permute.xlu0 %899
      %903 = vset.pattern.permute.xlu0 0
      %904 = vperm.xlu0 %903, %v874
      %v905 = vpop.permute.xlu0 %904
      %908 = vset.pattern.permute.xlu0 0
      %909 = vperm.xlu0 %908, %v875
      %v910 = vpop.permute.xlu0 %909
      %913 = vset.pattern.permute.xlu0 0
      %914 = vperm.xlu0 %913, %v876
      %v915 = vpop.permute.xlu0 %914
      %v917 = vadd.f32 %v861, %v880
      %v918 = vadd.f32 %v862, %v885
      %v919 = vadd.f32 %v863, %v890
      %v920 = vadd.f32 %v864, %v895
      %v921 = vadd.f32 %v865, %v900
      %v922 = vadd.f32 %v866, %v905
      %v923 = vadd.f32 %v867, %v910
      %v924 = vadd.f32 %v868, %v915
      %vm925 = vcmask 424960
      %v926 = vsel %vm925, %v917, 0.0
      %927 = vadd.xlane.f32.xlu0 %v926
      %v928 = vpop.xlane.xlu0 %927
      %v929 = vsel %vm925, %v918, 0.0
      %930 = vadd.xlane.f32.xlu0 %v929
      %v931 = vpop.xlane.xlu0 %930
      %v932 = vsel %vm925, %v919, 0.0
      %933 = vadd.xlane.f32.xlu0 %v932
      %v934 = vpop.xlane.xlu0 %933
      %v935 = vsel %vm925, %v920, 0.0
      %936 = vadd.xlane.f32.xlu0 %v935
      %v937 = vpop.xlane.xlu0 %936
      %v938 = vsel %vm925, %v921, 0.0
      %939 = vadd.xlane.f32.xlu0 %v938
      %v940 = vpop.xlane.xlu0 %939
      %v941 = vsel %vm925, %v922, 0.0
      %942 = vadd.xlane.f32.xlu0 %v941
      %v943 = vpop.xlane.xlu0 %942
      %v944 = vsel %vm925, %v923, 0.0
      %945 = vadd.xlane.f32.xlu0 %v944
      %v946 = vpop.xlane.xlu0 %945
      %v947 = vsel %vm925, %v924, 0.0
      %948 = vadd.xlane.f32.xlu0 %v947
      %v949 = vpop.xlane.xlu0 %948
      %v950 = vmul.f32 %v928, 0.01923077
      %v951 = vmul.f32 %v931, 0.01923077
      %v952 = vmul.f32 %v934, 0.01923077
      %v953 = vmul.f32 %v937, 0.01923077
      %v954 = vmul.f32 %v940, 0.01923077
      %v955 = vmul.f32 %v943, 0.01923077
      %v956 = vmul.f32 %v946, 0.01923077
      %v957 = vmul.f32 %v949, 0.01923077
      %v958 = vld [vmem:[%s4] sm:$0xff]
      %v959 = vld [vmem:[%s4 + $0x8] sm:$0xff]
      %v960 = vld [vmem:[%s5] sm:$0xff]
      %v961 = vld [vmem:[%s5 + $0x8] sm:$0xff]
      %v963 = vsel %vm500, %v958, 0
      %v966 = vsel %vm500, %v959, 0
      %968 = vmatprep.subr.mxu0 0.0
      %969 = vmatpush1.msra.mxu0 %v950
      %970 = vmatprep.subr.mxu0 0.0
      %971 = vmatpush1.msra.mxu0 %v951
      %972 = vmatprep.subr.mxu0 0.0
      %973 = vmatpush1.msra.mxu0 %v952
      %974 = vmatprep.subr.mxu0 0.0
      %975 = vmatpush1.msra.mxu0 %v953
      %976 = vmatprep.subr.mxu0 0.0
      %977 = vmatpush1.msra.mxu0 %v954
      %978 = vmatprep.subr.mxu0 0.0
      %979 = vmatpush1.msra.mxu0 %v955
      %980 = vmatprep.subr.mxu0 0.0
      %981 = vmatpush1.msra.mxu0 %v956
      %982 = vmatprep.subr.mxu0 0.0
      %983 = vmatpush1.msra.mxu0 %v957
      %984 = vmatprep.subr.mxu0 0.0
      %985 = vmatpush1.msra.mxu0 0.0
      %986 = vmatprep.subr.mxu0 0.0
      %987 = vmatpush1.msra.mxu0 0.0
      %988 = vmatprep.subr.mxu0 0.0
      %989 = vmatpush1.msra.mxu0 0.0
      %990 = vmatprep.subr.mxu0 0.0
      %991 = vmatpush1.msra.mxu0 0.0
      %992 = vmatprep.subr.mxu0 0.0
      %993 = vmatpush1.msra.mxu0 0.0
      %994 = vmatprep.subr.mxu0 0.0
      %995 = vmatpush1.msra.mxu0 0.0
      %996 = vmatprep.subr.mxu0 0.0
      %997 = vmatpush1.msra.mxu0 0.0
      %998 = vmatprep.subr.mxu0 0.0
      %999 = vmatpush1.msra.mxu0 0.0
      %1000 = vmatprep.subr.mxu0 0.0
      %1001 = vmatpush1.msra.mxu0 0.0
      %1002 = vmatprep.subr.mxu0 0.0
      %1003 = vmatpush1.msra.mxu0 0.0
      %1004 = vmatprep.subr.mxu0 0.0
      %1005 = vmatpush1.msra.mxu0 0.0
      %1006 = vmatprep.subr.mxu0 0.0
      %1007 = vmatpush1.msra.mxu0 0.0
      %1008 = vmatprep.subr.mxu0 0.0
      %1009 = vmatpush1.msra.mxu0 0.0
      %1010 = vmatprep.subr.mxu0 0.0
      %1011 = vmatpush1.msra.mxu0 0.0
      %1012 = vmatprep.subr.mxu0 0.0
      %1013 = vmatpush1.msra.mxu0 0.0
      %1014 = vmatprep.subr.mxu0 0.0
      %1015 = vmatpush1.msra.mxu0 0.0
      %1016 = vmatprep.subr.mxu0 0.0
      %1017 = vmatpush1.msra.mxu0 0.0
      %1018 = vmatprep.subr.mxu0 0.0
      %1019 = vmatpush1.msra.mxu0 0.0
      %1020 = vmatprep.subr.mxu0 0.0
      %1021 = vmatpush1.msra.mxu0 0.0
      %1022 = vmatprep.subr.mxu0 0.0
      %1023 = vmatpush1.msra.mxu0 0.0
      %1024 = vmatprep.subr.mxu0 0.0
      %1025 = vmatpush1.msra.mxu0 0.0
      %1026 = vmatprep.subr.mxu0 0.0
      %1027 = vmatpush1.msra.mxu0 0.0
      %1028 = vmatprep.subr.mxu0 0.0
      %1029 = vmatpush1.msra.mxu0 0.0
      %1030 = vmatprep.subr.mxu0 0.0
      %1031 = vmatpush1.msra.mxu0 0.0
      %1032 = vmatprep.mubr.f32.mxu0 0.0
      %1033 = vmatmul.mubr.f32.gmra.mrb[0].mxu0 %v963
      %v1034 = vpop.f32.mrb[0].mxu0
      %v1035 = vadd.f32 %v960, %v1034
      %v1036 = vpop.f32.mrb[0].mxu0
      %1037 = vmatprep.mubr.f32.mxu0 0.0
      %1038 = vmatmul.mubr.f32.gmra.mrb[0].mxu0 %v966
      %v1039 = vpop.f32.mrb[0].mxu0
      %v1040 = vadd.f32 %v961, %v1039
      %v1041 = vpop.f32.mrb[0].mxu0
      %1042 = vdwg.mxu0
      %v1043 = vmax.f32 %v1035, 0.0
      %v1044 = vmax.f32 %v1040, 0.0
      %v1045 = vld [vmem:[%s6] sm:$0xff]
      %v1046 = vld [vmem:[%s6 + $0x8] sm:$0xff]
      %v1047 = vld [vmem:[%s6 + $0x10] sm:$0xff]
      %v1048 = vld [vmem:[%s6 + $0x18] sm:$0xff]
      %v1049 = vld [vmem:[%s6 + $0x20] sm:$0xff]
      %v1050 = vld [vmem:[%s6 + $0x28] sm:$0xff]
      %v1051 = vld [vmem:[%s6 + $0x30] sm:$0xff]
      %v1052 = vld [vmem:[%s6 + $0x38] sm:$0xff]
      %v1053 = vld [vmem:[%s7] sm:$0xff]
      %v1054 = vld [vmem:[%s7 + $0x8] sm:$0xff]
      %v1055 = vld [vmem:[%s7 + $0x10] sm:$0xff]
      %v1056 = vld [vmem:[%s7 + $0x18] sm:$0xff]
      %v1057 = vld [vmem:[%s7 + $0x20] sm:$0xff]
      %v1058 = vld [vmem:[%s7 + $0x28] sm:$0xff]
      %v1059 = vld [vmem:[%s7 + $0x30] sm:$0xff]
      %v1060 = vld [vmem:[%s7 + $0x38] sm:$0xff]
      %vm1061 = vcmask 130048
      %v1063 = vsel %vm1061, %v1045, 0
      %v1066 = vsel %vm1061, %v1046, 0
      %v1069 = vsel %vm1061, %v1047, 0
      %v1072 = vsel %vm1061, %v1048, 0
      %v1075 = vsel %vm1061, %v1049, 0
      %v1078 = vsel %vm1061, %v1050, 0
      %v1081 = vsel %vm1061, %v1051, 0
      %v1084 = vsel %vm1061, %v1052, 0
      %1086 = vmatprep.subr.mxu0 0.0
      %1087 = vmatpush1.msra.mxu0 %v1043
      %1088 = vmatprep.subr.mxu0 0.0
      %1089 = vmatpush1.msra.mxu0 %v1044
      %1090 = vmatprep.subr.mxu0 0.0
      %1091 = vmatpush1.msra.mxu0 0.0
      %1092 = vmatprep.subr.mxu0 0.0
      %1093 = vmatpush1.msra.mxu0 0.0
      %1094 = vmatprep.subr.mxu0 0.0
      %1095 = vmatpush1.msra.mxu0 0.0
      %1096 = vmatprep.subr.mxu0 0.0
      %1097 = vmatpush1.msra.mxu0 0.0
      %1098 = vmatprep.subr.mxu0 0.0
      %1099 = vmatpush1.msra.mxu0 0.0
      %1100 = vmatprep.subr.mxu0 0.0
      %1101 = vmatpush1.msra.mxu0 0.0
      %1102 = vmatprep.subr.mxu0 0.0
      %1103 = vmatpush1.msra.mxu0 0.0
      %1104 = vmatprep.subr.mxu0 0.0
      %1105 = vmatpush1.msra.mxu0 0.0
      %1106 = vmatprep.subr.mxu0 0.0
      %1107 = vmatpush1.msra.mxu0 0.0
      %1108 = vmatprep.subr.mxu0 0.0
      %1109 = vmatpush1.msra.mxu0 0.0
      %1110 = vmatprep.subr.mxu0 0.0
      %1111 = vmatpush1.msra.mxu0 0.0
      %1112 = vmatprep.subr.mxu0 0.0
      %1113 = vmatpush1.msra.mxu0 0.0
      %1114 = vmatprep.subr.mxu0 0.0
      %1115 = vmatpush1.msra.mxu0 0.0
      %1116 = vmatprep.subr.mxu0 0.0
      %1117 = vmatpush1.msra.mxu0 0.0
      %1118 = vmatprep.subr.mxu0 0.0
      %1119 = vmatpush1.msra.mxu0 0.0
      %1120 = vmatprep.subr.mxu0 0.0
      %1121 = vmatpush1.msra.mxu0 0.0
      %1122 = vmatprep.subr.mxu0 0.0
      %1123 = vmatpush1.msra.mxu0 0.0
      %1124 = vmatprep.subr.mxu0 0.0
      %1125 = vmatpush1.msra.mxu0 0.0
      %1126 = vmatprep.subr.mxu0 0.0
      %1127 = vmatpush1.msra.mxu0 0.0
      %1128 = vmatprep.subr.mxu0 0.0
      %1129 = vmatpush1.msra.mxu0 0.0
      %1130 = vmatprep.subr.mxu0 0.0
      %1131 = vmatpush1.msra.mxu0 0.0
      %1132 = vmatprep.subr.mxu0 0.0
      %1133 = vmatpush1.msra.mxu0 0.0
      %1134 = vmatprep.subr.mxu0 0.0
      %1135 = vmatpush1.msra.mxu0 0.0
      %1136 = vmatprep.subr.mxu0 0.0
      %1137 = vmatpush1.msra.mxu0 0.0
      %1138 = vmatprep.subr.mxu0 0.0
      %1139 = vmatpush1.msra.mxu0 0.0
      %1140 = vmatprep.subr.mxu0 0.0
      %1141 = vmatpush1.msra.mxu0 0.0
      %1142 = vmatprep.subr.mxu0 0.0
      %1143 = vmatpush1.msra.mxu0 0.0
      %1144 = vmatprep.subr.mxu0 0.0
      %1145 = vmatpush1.msra.mxu0 0.0
      %1146 = vmatprep.subr.mxu0 0.0
      %1147 = vmatpush1.msra.mxu0 0.0
      %1148 = vmatprep.subr.mxu0 0.0
      %1149 = vmatpush1.msra.mxu0 0.0
      %1150 = vmatprep.mubr.f32.mxu0 0.0
      %1151 = vmatmul.mubr.f32.gmra.mrb[0].mxu0 %v1063
      %v1152 = vpop.f32.mrb[0].mxu0
      %v1153 = vadd.f32 %v1053, %v1152
      %v1154 = vpop.f32.mrb[0].mxu0
      %1155 = vmatprep.mubr.f32.mxu0 0.0
      %1156 = vmatmul.mubr.f32.gmra.mrb[0].mxu0 %v1066
      %v1157 = vpop.f32.mrb[0].mxu0
      %v1158 = vadd.f32 %v1054, %v1157
      %v1159 = vpop.f32.mrb[0].mxu0
      %1160 = vmatprep.mubr.f32.mxu0 0.0
      %1161 = vmatmul.mubr.f32.gmra.mrb[0].mxu0 %v1069
      %v1162 = vpop.f32.mrb[0].mxu0
      %v1163 = vadd.f32 %v1055, %v1162
      %v1164 = vpop.f32.mrb[0].mxu0
      %1165 = vmatprep.mubr.f32.mxu0 0.0
      %1166 = vmatmul.mubr.f32.gmra.mrb[0].mxu0 %v1072
      %v1167 = vpop.f32.mrb[0].mxu0
      %v1168 = vadd.f32 %v1056, %v1167
      %v1169 = vpop.f32.mrb[0].mxu0
      %1170 = vmatprep.mubr.f32.mxu0 0.0
      %1171 = vmatmul.mubr.f32.gmra.mrb[0].mxu0 %v1075
      %v1172 = vpop.f32.mrb[0].mxu0
      %v1173 = vadd.f32 %v1057, %v1172
      %v1174 = vpop.f32.mrb[0].mxu0
      %1175 = vmatprep.mubr.f32.mxu0 0.0
      %1176 = vmatmul.mubr.f32.gmra.mrb[0].mxu0 %v1078
      %v1177 = vpop.f32.mrb[0].mxu0
      %v1178 = vadd.f32 %v1058, %v1177
      %v1179 = vpop.f32.mrb[0].mxu0
      %1180 = vmatprep.mubr.f32.mxu0 0.0
      %1181 = vmatmul.mubr.f32.gmra.mrb[0].mxu0 %v1081
      %v1182 = vpop.f32.mrb[0].mxu0
      %v1183 = vadd.f32 %v1059, %v1182
      %v1184 = vpop.f32.mrb[0].mxu0
      %1185 = vmatprep.mubr.f32.mxu0 0.0
      %1186 = vmatmul.mubr.f32.gmra.mrb[0].mxu0 %v1084
      %v1187 = vpop.f32.mrb[0].mxu0
      %v1188 = vadd.f32 %v1060, %v1187
      %v1189 = vpop.f32.mrb[0].mxu0
      %1190 = vdwg.mxu0
      %v1191 = vxor.u32 %v1153, 2147483648
      %v1192 = vxor.u32 %v1158, 2147483648
      %v1193 = vxor.u32 %v1163, 2147483648
      %v1194 = vxor.u32 %v1168, 2147483648
      %v1195 = vxor.u32 %v1173, 2147483648
      %v1196 = vxor.u32 %v1178, 2147483648
      %v1197 = vxor.u32 %v1183, 2147483648
      %v1198 = vxor.u32 %v1188, 2147483648
      %v1199 = vmul.f32 %v1191, 1.442695
      %v1200 = vpow.pop %v1199
      %v1201 = vmul.f32 %v1192, 1.442695
      %v1202 = vpow.pop %v1201
      %v1203 = vmul.f32 %v1193, 1.442695
      %v1204 = vpow.pop %v1203
      %v1205 = vmul.f32 %v1194, 1.442695
      %v1206 = vpow.pop %v1205
      %v1207 = vmul.f32 %v1195, 1.442695
      %v1208 = vpow.pop %v1207
      %v1209 = vmul.f32 %v1196, 1.442695
      %v1210 = vpow.pop %v1209
      %v1211 = vmul.f32 %v1197, 1.442695
      %v1212 = vpow.pop %v1211
      %v1213 = vmul.f32 %v1198, 1.442695
      %v1214 = vpow.pop %v1213
      %v1215 = vadd.f32 %v1200, 1.0
      %v1216 = vadd.f32 %v1202, 1.0
      %v1217 = vadd.f32 %v1204, 1.0
      %v1218 = vadd.f32 %v1206, 1.0
      %v1219 = vadd.f32 %v1208, 1.0
      %v1220 = vadd.f32 %v1210, 1.0
      %v1221 = vadd.f32 %v1212, 1.0
      %v1222 = vadd.f32 %v1214, 1.0
      %v1223 = vrcp.pop %v1215
      %v1224 = vmul.f32 1.0, %v1223
      %v1225 = vrcp.pop %v1216
      %v1226 = vmul.f32 1.0, %v1225
      %v1227 = vrcp.pop %v1217
      %v1228 = vmul.f32 1.0, %v1227
      %v1229 = vrcp.pop %v1218
      %v1230 = vmul.f32 1.0, %v1229
      %v1231 = vrcp.pop %v1219
      %v1232 = vmul.f32 1.0, %v1231
      %v1233 = vrcp.pop %v1220
      %v1234 = vmul.f32 1.0, %v1233
      %v1235 = vrcp.pop %v1221
      %v1236 = vmul.f32 1.0, %v1235
      %v1237 = vrcp.pop %v1222
      %v1238 = vmul.f32 1.0, %v1237
      %1240 = vset.pattern.permute.xlu0 0
      %1241 = vperm.xlu0 %1240, %v1224
      %v1242 = vpop.permute.xlu0 %1241
      %1245 = vset.pattern.permute.xlu0 0
      %1246 = vperm.xlu0 %1245, %v1226
      %v1247 = vpop.permute.xlu0 %1246
      %1250 = vset.pattern.permute.xlu0 0
      %1251 = vperm.xlu0 %1250, %v1228
      %v1252 = vpop.permute.xlu0 %1251
      %1255 = vset.pattern.permute.xlu0 0
      %1256 = vperm.xlu0 %1255, %v1230
      %v1257 = vpop.permute.xlu0 %1256
      %1260 = vset.pattern.permute.xlu0 0
      %1261 = vperm.xlu0 %1260, %v1232
      %v1262 = vpop.permute.xlu0 %1261
      %1265 = vset.pattern.permute.xlu0 0
      %1266 = vperm.xlu0 %1265, %v1234
      %v1267 = vpop.permute.xlu0 %1266
      %1270 = vset.pattern.permute.xlu0 0
      %1271 = vperm.xlu0 %1270, %v1236
      %v1272 = vpop.permute.xlu0 %1271
      %1275 = vset.pattern.permute.xlu0 0
      %1276 = vperm.xlu0 %1275, %v1238
      %v1277 = vpop.permute.xlu0 %1276
      %v1279 = vmul.f32 %v917, %v1242
      %v1280 = vmul.f32 %v918, %v1247
      %v1281 = vmul.f32 %v919, %v1252
      %v1282 = vmul.f32 %v920, %v1257
      %v1283 = vmul.f32 %v921, %v1262
      %v1284 = vmul.f32 %v922, %v1267
      %v1285 = vmul.f32 %v923, %v1272
      %v1286 = vmul.f32 %v924, %v1277
      %v1287 = vld [vmem:[%s320] sm:$0xff]
      %v1288 = vld [vmem:[%s320 + $0x8] sm:$0xff]
      %v1289 = vld [vmem:[%s320 + $0x10] sm:$0xff]
      %v1290 = vld [vmem:[%s320 + $0x18] sm:$0xff]
      %v1291 = vld [vmem:[%s320 + $0x20] sm:$0xff]
      %v1292 = vld [vmem:[%s320 + $0x28] sm:$0xff]
      %v1293 = vld [vmem:[%s320 + $0x30] sm:$0xff]
      %v1294 = vld [vmem:[%s320 + $0x38] sm:$0xff]
      %v1295 = vadd.f32 %v1279, %v1287
      %v1296 = vadd.f32 %v1280, %v1288
      %v1297 = vadd.f32 %v1281, %v1289
      %v1298 = vadd.f32 %v1282, %v1290
      %v1299 = vadd.f32 %v1283, %v1291
      %v1300 = vadd.f32 %v1284, %v1292
      %v1301 = vadd.f32 %v1285, %v1293
      %v1302 = vadd.f32 %v1286, %v1294
      %1303 = vst.msk [vmem:[%s325] sm:$0xff] %vm925, %v1295
      %1304 = vst.msk [vmem:[%s325 + $0x8] sm:$0xff] %vm925, %v1296
      %1305 = vst.msk [vmem:[%s325 + $0x10] sm:$0xff] %vm925, %v1297
      %1306 = vst.msk [vmem:[%s325 + $0x18] sm:$0xff] %vm925, %v1298
      %1307 = vst.msk [vmem:[%s325 + $0x20] sm:$0xff] %vm925, %v1299
      %1308 = vst.msk [vmem:[%s325 + $0x28] sm:$0xff] %vm925, %v1300
      %1309 = vst.msk [vmem:[%s325 + $0x30] sm:$0xff] %vm925, %v1301
      %1310 = vst.msk [vmem:[%s325 + $0x38] sm:$0xff] %vm925, %v1302
      %p1311 = scmp.lt.s32.totalorder %s19, 1
      %s1312 = scalar_select %p1311, %s19, 1
      %s1313 = smul.addr %s1312, 8
      %s1314 = smul.addr %s1313, 8
      %s1315 = scalar_lea.vmem %s8, %s1314
      // Predicated region
      $region53: #{se_rawformer_front.25} parent=51 // pred_check
        %p1316 = pneg %p215
      $region54: #{se_rawformer_front.25} parent=51 // pred_check_branch
        %1318 = sbr.rel (%p1316) target = $region56
      $region55: #{se_rawformer_front.25} parent=51 // pred_region
        _
      $region56: #{se_rawformer_front.25} parent=51 // pred_fallthru
        _
    $region52: #{se_rawformer_front.25} parent=5 // pred_fallthru
      _
    %p1319 = scmp.le.s32.totalorder 2, %s14
    // Predicated region
    $region57: #{se_rawformer_front.25} parent=5 // pred_check
      %p1320 = pneg %p1319
    $region58: #{se_rawformer_front.25} parent=5 // pred_check_branch
      %1322 = sbr.rel (%p1320) target = $region60
    $region59: #{se_rawformer_front.25} parent=5 // pred_region
      %s1323 = ssub.s32 %s14, 2
      // Predicated region
      $region61: #{se_rawformer_front.25} parent=59 // pred_check
        %p1324 = pneg %p221
      $region62: #{se_rawformer_front.25} parent=59 // pred_check_branch
        %1326 = sbr.rel (%p1324) target = $region64
      $region63: #{se_rawformer_front.25} parent=59 // pred_region
        %p1327 = scmp.lt.s32.totalorder %s20, 1
        %s1328 = scalar_select %p1327, %s20, 1
        %s1329 = smul.addr %s1328, 8
        %s1330 = smul.addr %s1329, 8
        %s1331 = scalar_lea.vmem %s8, %s1330
      $region64: #{se_rawformer_front.25} parent=59 // pred_fallthru
        _
    $region60: #{se_rawformer_front.25} parent=5 // pred_fallthru
      _
  $region6: #{se_rawformer_front.25} parent=0 // loop_footer
    %s18 = sadd.s32 1, %s14
  $region7: #{se_rawformer_front.25} parent=0 // loop_footer_branch
    %13 = sbr.rel target = $region3
  $region8: #{se_rawformer_front.25} parent=0 // loop_exit
    _

</llo_original>
